<compile_context>
chip_gen: v7x
topology: tpu7x:2x2x1
jax: 0.10.0
libtpu: 0.0.40
codegen_flags: <defaults>
</compile_context>

<pallas_src>
import functools

import jax
import jax.numpy as jnp
from jax import lax
from jax.experimental import pallas as pl
from jax.experimental.pallas import tpu as pltpu


_LANE_TILE = 128        # max batch tile (lane width) processed per grid step
_VMEM_LIMIT = 32 * 1024 * 1024


def _round_up(x, m):
  return (x + m - 1) // m * m


# ----------------------------------------------------------------------------
# Fused 3x3 SAME conv + bias + ReLU + 2x2 max-pool kernel.
# ----------------------------------------------------------------------------
def _conv_relu_pool_kernel(w_ref, b_ref, xe_ref, xo_ref, out_ref, *, C, O, H, W):
  """One batch tile of relu(conv3x3(x) + b) followed by maxpool(2, 2).

  w_ref : (O*C*9,) f32 SMEM      -- PyTorch (O, C, 3, 3) weights, flattened.
  b_ref : (O,)     f32 SMEM
  xe_ref: (C, H+2, (W+2)//2, T)  -- even padded-column planes (batch on lanes).
  xo_ref: (C, H+2, (W+2)//2, T)  -- odd  padded-column planes.
  out_ref: (O, H//2, W//2, T)    -- pooled, ReLU'd activations.
  """
  W2 = W // 2
  H2 = H // 2
  T = out_ref.shape[-1]

  def one_output_channel(o, carry):
    acc_e = jnp.zeros((H, W2, T), jnp.float32)   # conv at even columns w = 2j
    acc_o = jnp.zeros((H, W2, T), jnp.float32)   # conv at odd  columns w = 2j+1
    for c in range(C):
      for kh in range(3):
        # xpad[c, h+kh, 2j], xpad[c, h+kh, 2j+1], xpad[c, h+kh, 2j+2], [.., 2j+3]
        e0 = xe_ref[c, kh:kh + H, 0:W2, :]
        d0 = xo_ref[c, kh:kh + H, 0:W2, :]
        e1 = xe_ref[c, kh:kh + H, 1:W2 + 1, :]
        d1 = xo_ref[c, kh:kh + H, 1:W2 + 1, :]
        base = ((o * C + c) * 3 + kh) * 3
        w0 = w_ref[base + 0]
        w1 = w_ref[base + 1]
        w2 = w_ref[base + 2]
        # out[h, 2j]   uses taps (kw=0,1,2) -> xpad cols 2j, 2j+1, 2j+2
        # out[h, 2j+1] uses taps (kw=0,1,2) -> xpad cols 2j+1, 2j+2, 2j+3
        acc_e = acc_e + w0 * e0 + w1 * d0 + w2 * e1
        acc_o = acc_o + w0 * d0 + w1 * e1 + w2 * d1
    bias = b_ref[o]
    relu_e = jnp.maximum(acc_e + bias, 0.0)
    relu_o = jnp.maximum(acc_o + bias, 0.0)
    m_w = jnp.maximum(relu_e, relu_o)            # max over the 2 window columns
    for i in range(H2):                          # max over the 2 window rows
      out_ref[o, i, :, :] = jnp.maximum(m_w[2 * i], m_w[2 * i + 1])
    return carry

  lax.fori_loop(0, O, one_output_channel, 0)


def _conv_relu_pool(x, w_flat, b, *, C, O, H, W, tile_n):
  """x: (C, H, W, Npad) f32 (batch on lanes) -> (O, H//2, W//2, Npad)."""
  npad = x.shape[-1]
  h2, w2 = H // 2, W // 2
  w2p = (W + 2) // 2

  # Cheap XLA glue: SAME zero-padding + split the padded columns into even/odd
  # parity planes so every in-kernel access is a contiguous static slice.
  xp = jnp.pad(x, ((0, 0), (1, 1), (1, 1), (0, 0)))
  xe = xp[:, :, 0::2, :]                          # (C, H+2, w2p, Npad)
  xo = xp[:, :, 1::2, :]

  kernel = functools.partial(_conv_relu_pool_kernel, C=C, O=O, H=H, W=W)
  flops = 2 * O * C * 9 * H * W * npad
  bytes_accessed = 4 * (2 * C * (H + 2) * w2p * npad + O * h2 * w2 * npad
                        + O * C * 9 + O)
  return pl.pallas_call(
      kernel,
      out_shape=jax.ShapeDtypeStruct((O, h2, w2, npad), jnp.float32),
      grid=(npad // tile_n,),
      in_specs=[
          pl.BlockSpec(memory_space=pltpu.MemorySpace.SMEM),      # weights
          pl.BlockSpec(memory_space=pltpu.MemorySpace.SMEM),      # bias
          pl.BlockSpec((C, H + 2, w2p, tile_n), lambda n: (0, 0, 0, n)),
          pl.BlockSpec((C, H + 2, w2p, tile_n), lambda n: (0, 0, 0, n)),
      ],
      out_specs=pl.BlockSpec((O, h2, w2, tile_n), lambda n: (0, 0, 0, n)),
      compiler_params=pltpu.CompilerParams(
          dimension_semantics=("parallel",),
          vmem_limit_bytes=_VMEM_LIMIT,
      ),
      cost_estimate=pl.CostEstimate(
          flops=flops, transcendentals=0, bytes_accessed=bytes_accessed),
  )(w_flat, b, xe, xo)


# ----------------------------------------------------------------------------
# fc1: weight-stationary matmul with lane-dense (classes, batch) output.
# ----------------------------------------------------------------------------
def _fc_kernel(w_ref, b_ref, x_ref, o_ref):
  acc = jnp.dot(w_ref[...], x_ref[...], preferred_element_type=jnp.float32)
  o_ref[...] = (acc + b_ref[...]).astype(o_ref.dtype)


def _fc(x, w, b, *, tile_n):
  """x: (K, Npad), w: (NC, K), b: (NC, 1) -> (NC, Npad)."""
  k, npad = x.shape
  nc = w.shape[0]
  return pl.pallas_call(
      _fc_kernel,
      out_shape=jax.ShapeDtypeStruct((nc, npad), jnp.float32),
      grid=(npad // tile_n,),
      in_specs=[
          pl.BlockSpec(memory_space=pltpu.MemorySpace.VMEM),      # weights
          pl.BlockSpec(memory_space=pltpu.MemorySpace.VMEM),      # bias
          pl.BlockSpec((k, tile_n), lambda n: (0, n)),
      ],
      out_specs=pl.BlockSpec((nc, tile_n), lambda n: (0, n)),
      compiler_params=pltpu.CompilerParams(
          dimension_semantics=("parallel",),
          vmem_limit_bytes=_VMEM_LIMIT,
      ),
      cost_estimate=pl.CostEstimate(
          flops=2 * nc * k * npad, transcendentals=0,
          bytes_accessed=4 * (k * npad + nc * k + nc + nc * npad)),
  )(w, b, x)


# ----------------------------------------------------------------------------
# Parameters (pre-flattened / pre-laid-out once, per the review) and forward.
# ----------------------------------------------------------------------------
def init_params(in_channels, num_classes, key):
  k1, k2, k3 = jax.random.split(key, 3)
  conv1_w = 0.1 * jax.random.normal(k1, (6, in_channels, 3, 3), jnp.float32)
  conv2_w = 0.1 * jax.random.normal(k2, (16, 6, 3, 3), jnp.float32)
  fc1_w = 0.05 * jax.random.normal(k3, (num_classes, 16 * 7 * 7), jnp.float32)
  return {
      "conv1_w": conv1_w.reshape(-1),                 # (6*C*9,)  flat, row-major
      "conv1_b": jnp.linspace(-0.05, 0.05, 6, dtype=jnp.float32),
      "conv2_w": conv2_w.reshape(-1),                 # (16*6*9,)
      "conv2_b": jnp.linspace(-0.05, 0.05, 16, dtype=jnp.float32),
      "fc1_w": fc1_w,                                 # PyTorch (out, in) layout
      "fc1_b": jnp.linspace(-0.1, 0.1, num_classes,
                            dtype=jnp.float32).reshape(num_classes, 1),
  }


@jax.jit
def mnist_cnn_forward(params, x):
  """x: (N, in_channels, 28, 28) float32 -> logits (N, num_classes)."""
  n, c_in, h, w = x.shape
  tile_n = min(_LANE_TILE, _round_up(n, 8))
  npad = _round_up(n, tile_n)

  # NCHW -> (C, H, W, Npad): batch on the minor (lane) dim for every kernel.
  xt = jnp.transpose(x.astype(jnp.float32), (1, 2, 3, 0))
  xt = jnp.pad(xt, ((0, 0), (0, 0), (0, 0), (0, npad - n)))

  a1 = _conv_relu_pool(xt, params["conv1_w"], params["conv1_b"],
                       C=c_in, O=6, H=h, W=w, tile_n=tile_n)       # (6,14,14,Np)
  a2 = _conv_relu_pool(a1, params["conv2_w"], params["conv2_b"],
                       C=6, O=16, H=h // 2, W=w // 2, tile_n=tile_n)  # (16,7,7,Np)

  # (16, 7, 7, Npad) -> (784, Npad): feature order (c, h, w) == NCHW flatten.
  feat = a2.reshape(16 * (h // 4) * (w // 4), npad)
  logits_t = _fc(feat, params["fc1_w"], params["fc1_b"], tile_n=tile_n)
  return jnp.transpose(logits_t)[:n]                               # (N, classes)


# ----------------------------------------------------------------------------
# Pure-JAX reference (same math as the PyTorch module) for a correctness check.
# ----------------------------------------------------------------------------
def _reference_forward(params, x):
  def conv_relu(xx, w_flat, b, cin, cout):
    w = w_flat.reshape(cout, cin, 3, 3)
    y = lax.conv_general_dilated(
        xx, w, window_strides=(1, 1), padding=((1, 1), (1, 1)),
        dimension_numbers=("NCHW", "OIHW", "NCHW"),
        precision=lax.Precision.HIGHEST)
    return jnp.maximum(y + b.reshape(1, cout, 1, 1), 0.0)

  def pool(xx):
    return jnp.maximum(
        jnp.maximum(xx[:, :, 0::2, 0::2], xx[:, :, 0::2, 1::2]),
        jnp.maximum(xx[:, :, 1::2, 0::2], xx[:, :, 1::2, 1::2]))

  y = pool(conv_relu(x, params["conv1_w"], params["conv1_b"], x.shape[1], 6))
  y = pool(conv_relu(y, params["conv2_w"], params["conv2_b"], 6, 16))
  y = y.reshape(y.shape[0], -1)
  return (jnp.dot(y, params["fc1_w"].T, precision=lax.Precision.HIGHEST)
          + params["fc1_b"].reshape(-1))


if __name__ == "__main__":
  # fc1 expects 16*7*7 features, which pins the spatial size to 28x28 (MNIST).
  batch, in_channels, num_classes = 2, 1, 10
  key = jax.random.PRNGKey(0)
  pkey, xkey = jax.random.split(key)

  params = init_params(in_channels, num_classes, pkey)
  x = jax.random.normal(xkey, (batch, in_channels, 28, 28), jnp.float32)

  logits = mnist_cnn_forward(params, x)
  jax.block_until_ready(logits)
  assert logits.shape == (batch, num_classes)

  ref = _reference_forward(params, x)
  assert jnp.allclose(logits, ref, rtol=5e-2, atol=5e-2), (
      "Pallas forward does not match the pure-JAX reference")
  print("KERNEL_OK")
</pallas_src>

<mosaic_0001>
module attributes {stable_mosaic.version = 11 : i64} {
  func.func @_conv_relu_pool_kernel(%arg0: i32, %arg1: memref<54xf32, #tpu.memory_space<smem>>, %arg2: memref<6xf32, #tpu.memory_space<smem>>, %arg3: memref<1x30x15x8xf32, #tpu.memory_space<vmem>>, %arg4: memref<1x30x15x8xf32, #tpu.memory_space<vmem>>, %arg5: memref<6x14x14x8xf32, #tpu.memory_space<vmem>>) attributes {dimension_semantics = [#tpu.dimension_semantics<parallel>], iteration_bounds = array<i64: 1>, scalar_prefetch = 0 : i64, scratch_operands = 0 : i64, tpu.core_type = #tpu.core_type<tc>, window_params = [{transform_indices = @transform_0, window_bounds = array<i64: 54>}, {transform_indices = @transform_1, window_bounds = array<i64: 6>}, {transform_indices = @transform_2, window_bounds = array<i64: 1, 30, 15, 8>}, {transform_indices = @transform_3, window_bounds = array<i64: 1, 30, 15, 8>}, {transform_indices = @transform_4, window_bounds = array<i64: 6, 14, 14, 8>}]} {
    %c0_i32 = arith.constant 0 : i32
    %c6_i32 = arith.constant 6 : i32
    %0 = arith.addi %c0_i32, %c6_i32 : i32
    %c1_i32 = arith.constant 1 : i32
    scf.for %arg6 = %c0_i32 to %0 step %c1_i32  : i32 {
      %cst = arith.constant 0.000000e+00 : f32
      %1 = vector.broadcast %cst : f32 to vector<28x14x8xf32>
      %cst_1 = arith.constant 0.000000e+00 : f32
      %2 = vector.broadcast %cst_1 : f32 to vector<28x14x8xf32>
      %c0 = arith.constant 0 : index
      %c0_2 = arith.constant 0 : index
      %c0_3 = arith.constant 0 : index
      %c0_4 = arith.constant 0 : index
      %3 = vector.load %arg3[%c0, %c0_2, %c0_3, %c0_4] : memref<1x30x15x8xf32, #tpu.memory_space<vmem>>, vector<1x28x14x8xf32>
      %4 = vector.shape_cast %3 : vector<1x28x14x8xf32> to vector<28x14x8xf32>
      %c0_5 = arith.constant 0 : index
      %c0_6 = arith.constant 0 : index
      %c0_7 = arith.constant 0 : index
      %c0_8 = arith.constant 0 : index
      %5 = vector.load %arg4[%c0_5, %c0_6, %c0_7, %c0_8] : memref<1x30x15x8xf32, #tpu.memory_space<vmem>>, vector<1x28x14x8xf32>
      %6 = vector.shape_cast %5 : vector<1x28x14x8xf32> to vector<28x14x8xf32>
      %c0_9 = arith.constant 0 : index
      %c0_10 = arith.constant 0 : index
      %c1 = arith.constant 1 : index
      %c0_11 = arith.constant 0 : index
      %7 = vector.load %arg3[%c0_9, %c0_10, %c1, %c0_11] : memref<1x30x15x8xf32, #tpu.memory_space<vmem>>, vector<1x28x14x8xf32>
      %8 = vector.shape_cast %7 : vector<1x28x14x8xf32> to vector<28x14x8xf32>
      %c0_12 = arith.constant 0 : index
      %c0_13 = arith.constant 0 : index
      %c1_14 = arith.constant 1 : index
      %c0_15 = arith.constant 0 : index
      %9 = vector.load %arg4[%c0_12, %c0_13, %c1_14, %c0_15] : memref<1x30x15x8xf32, #tpu.memory_space<vmem>>, vector<1x28x14x8xf32>
      %10 = vector.shape_cast %9 : vector<1x28x14x8xf32> to vector<28x14x8xf32>
      %c1_i32_16 = arith.constant 1 : i32
      %11 = arith.muli %arg6, %c1_i32_16 : i32
      %c0_i32_17 = arith.constant 0 : i32
      %12 = arith.addi %11, %c0_i32_17 : i32
      %c3_i32 = arith.constant 3 : i32
      %13 = arith.muli %12, %c3_i32 : i32
      %c0_i32_18 = arith.constant 0 : i32
      %14 = arith.addi %13, %c0_i32_18 : i32
      %c3_i32_19 = arith.constant 3 : i32
      %15 = arith.muli %14, %c3_i32_19 : i32
      %c0_i32_20 = arith.constant 0 : i32
      %16 = arith.addi %15, %c0_i32_20 : i32
      %17 = arith.index_cast %16 : i32 to index
      %18 = memref.load %arg1[%17] : memref<54xf32, #tpu.memory_space<smem>>
      %c1_i32_21 = arith.constant 1 : i32
      %19 = arith.addi %15, %c1_i32_21 : i32
      %20 = arith.index_cast %19 : i32 to index
      %21 = memref.load %arg1[%20] : memref<54xf32, #tpu.memory_space<smem>>
      %c2_i32 = arith.constant 2 : i32
      %22 = arith.addi %15, %c2_i32 : i32
      %23 = arith.index_cast %22 : i32 to index
      %24 = memref.load %arg1[%23] : memref<54xf32, #tpu.memory_space<smem>>
      %25 = vector.broadcast %18 : f32 to vector<28x14x8xf32>
      %26 = arith.mulf %25, %4 : vector<28x14x8xf32>
      %27 = arith.addf %1, %26 : vector<28x14x8xf32>
      %28 = vector.broadcast %21 : f32 to vector<28x14x8xf32>
      %29 = arith.mulf %28, %6 : vector<28x14x8xf32>
      %30 = arith.addf %27, %29 : vector<28x14x8xf32>
      %31 = vector.broadcast %24 : f32 to vector<28x14x8xf32>
      %32 = arith.mulf %31, %8 : vector<28x14x8xf32>
      %33 = arith.addf %30, %32 : vector<28x14x8xf32>
      %34 = vector.broadcast %18 : f32 to vector<28x14x8xf32>
      %35 = arith.mulf %34, %6 : vector<28x14x8xf32>
      %36 = arith.addf %2, %35 : vector<28x14x8xf32>
      %37 = vector.broadcast %21 : f32 to vector<28x14x8xf32>
      %38 = arith.mulf %37, %8 : vector<28x14x8xf32>
      %39 = arith.addf %36, %38 : vector<28x14x8xf32>
      %40 = vector.broadcast %24 : f32 to vector<28x14x8xf32>
      %41 = arith.mulf %40, %10 : vector<28x14x8xf32>
      %42 = arith.addf %39, %41 : vector<28x14x8xf32>
      %c0_22 = arith.constant 0 : index
      %c1_23 = arith.constant 1 : index
      %c0_24 = arith.constant 0 : index
      %c0_25 = arith.constant 0 : index
      %43 = vector.load %arg3[%c0_22, %c1_23, %c0_24, %c0_25] : memref<1x30x15x8xf32, #tpu.memory_space<vmem>>, vector<1x28x14x8xf32>
      %44 = vector.shape_cast %43 : vector<1x28x14x8xf32> to vector<28x14x8xf32>
      %c0_26 = arith.constant 0 : index
      %c1_27 = arith.constant 1 : index
      %c0_28 = arith.constant 0 : index
      %c0_29 = arith.constant 0 : index
      %45 = vector.load %arg4[%c0_26, %c1_27, %c0_28, %c0_29] : memref<1x30x15x8xf32, #tpu.memory_space<vmem>>, vector<1x28x14x8xf32>
      %46 = vector.shape_cast %45 : vector<1x28x14x8xf32> to vector<28x14x8xf32>
      %c0_30 = arith.constant 0 : index
      %c1_31 = arith.constant 1 : index
      %c1_32 = arith.constant 1 : index
      %c0_33 = arith.constant 0 : index
      %47 = vector.load %arg3[%c0_30, %c1_31, %c1_32, %c0_33] : memref<1x30x15x8xf32, #tpu.memory_space<vmem>>, vector<1x28x14x8xf32>
      %48 = vector.shape_cast %47 : vector<1x28x14x8xf32> to vector<28x14x8xf32>
      %c0_34 = arith.constant 0 : index
      %c1_35 = arith.constant 1 : index
      %c1_36 = arith.constant 1 : index
      %c0_37 = arith.constant 0 : index
      %49 = vector.load %arg4[%c0_34, %c1_35, %c1_36, %c0_37] : memref<1x30x15x8xf32, #tpu.memory_space<vmem>>, vector<1x28x14x8xf32>
      %50 = vector.shape_cast %49 : vector<1x28x14x8xf32> to vector<28x14x8xf32>
      %c1_i32_38 = arith.constant 1 : i32
      %51 = arith.muli %arg6, %c1_i32_38 : i32
      %c0_i32_39 = arith.constant 0 : i32
      %52 = arith.addi %51, %c0_i32_39 : i32
      %c3_i32_40 = arith.constant 3 : i32
      %53 = arith.muli %52, %c3_i32_40 : i32
      %c1_i32_41 = arith.constant 1 : i32
      %54 = arith.addi %53, %c1_i32_41 : i32
      %c3_i32_42 = arith.constant 3 : i32
      %55 = arith.muli %54, %c3_i32_42 : i32
      %c0_i32_43 = arith.constant 0 : i32
      %56 = arith.addi %55, %c0_i32_43 : i32
      %57 = arith.index_cast %56 : i32 to index
      %58 = memref.load %arg1[%57] : memref<54xf32, #tpu.memory_space<smem>>
      %c1_i32_44 = arith.constant 1 : i32
      %59 = arith.addi %55, %c1_i32_44 : i32
      %60 = arith.index_cast %59 : i32 to index
      %61 = memref.load %arg1[%60] : memref<54xf32, #tpu.memory_space<smem>>
      %c2_i32_45 = arith.constant 2 : i32
      %62 = arith.addi %55, %c2_i32_45 : i32
      %63 = arith.index_cast %62 : i32 to index
      %64 = memref.load %arg1[%63] : memref<54xf32, #tpu.memory_space<smem>>
      %65 = vector.broadcast %58 : f32 to vector<28x14x8xf32>
      %66 = arith.mulf %65, %44 : vector<28x14x8xf32>
      %67 = arith.addf %33, %66 : vector<28x14x8xf32>
      %68 = vector.broadcast %61 : f32 to vector<28x14x8xf32>
      %69 = arith.mulf %68, %46 : vector<28x14x8xf32>
      %70 = arith.addf %67, %69 : vector<28x14x8xf32>
      %71 = vector.broadcast %64 : f32 to vector<28x14x8xf32>
      %72 = arith.mulf %71, %48 : vector<28x14x8xf32>
      %73 = arith.addf %70, %72 : vector<28x14x8xf32>
      %74 = vector.broadcast %58 : f32 to vector<28x14x8xf32>
      %75 = arith.mulf %74, %46 : vector<28x14x8xf32>
      %76 = arith.addf %42, %75 : vector<28x14x8xf32>
      %77 = vector.broadcast %61 : f32 to vector<28x14x8xf32>
      %78 = arith.mulf %77, %48 : vector<28x14x8xf32>
      %79 = arith.addf %76, %78 : vector<28x14x8xf32>
      %80 = vector.broadcast %64 : f32 to vector<28x14x8xf32>
      %81 = arith.mulf %80, %50 : vector<28x14x8xf32>
      %82 = arith.addf %79, %81 : vector<28x14x8xf32>
      %c0_46 = arith.constant 0 : index
      %c2 = arith.constant 2 : index
      %c0_47 = arith.constant 0 : index
      %c0_48 = arith.constant 0 : index
      %83 = vector.load %arg3[%c0_46, %c2, %c0_47, %c0_48] : memref<1x30x15x8xf32, #tpu.memory_space<vmem>>, vector<1x28x14x8xf32>
      %84 = vector.shape_cast %83 : vector<1x28x14x8xf32> to vector<28x14x8xf32>
      %c0_49 = arith.constant 0 : index
      %c2_50 = arith.constant 2 : index
      %c0_51 = arith.constant 0 : index
      %c0_52 = arith.constant 0 : index
      %85 = vector.load %arg4[%c0_49, %c2_50, %c0_51, %c0_52] : memref<1x30x15x8xf32, #tpu.memory_space<vmem>>, vector<1x28x14x8xf32>
      %86 = vector.shape_cast %85 : vector<1x28x14x8xf32> to vector<28x14x8xf32>
      %c0_53 = arith.constant 0 : index
      %c2_54 = arith.constant 2 : index
      %c1_55 = arith.constant 1 : index
      %c0_56 = arith.constant 0 : index
      %87 = vector.load %arg3[%c0_53, %c2_54, %c1_55, %c0_56] : memref<1x30x15x8xf32, #tpu.memory_space<vmem>>, vector<1x28x14x8xf32>
      %88 = vector.shape_cast %87 : vector<1x28x14x8xf32> to vector<28x14x8xf32>
      %c0_57 = arith.constant 0 : index
      %c2_58 = arith.constant 2 : index
      %c1_59 = arith.constant 1 : index
      %c0_60 = arith.constant 0 : index
      %89 = vector.load %arg4[%c0_57, %c2_58, %c1_59, %c0_60] : memref<1x30x15x8xf32, #tpu.memory_space<vmem>>, vector<1x28x14x8xf32>
      %90 = vector.shape_cast %89 : vector<1x28x14x8xf32> to vector<28x14x8xf32>
      %c1_i32_61 = arith.constant 1 : i32
      %91 = arith.muli %arg6, %c1_i32_61 : i32
      %c0_i32_62 = arith.constant 0 : i32
      %92 = arith.addi %91, %c0_i32_62 : i32
      %c3_i32_63 = arith.constant 3 : i32
      %93 = arith.muli %92, %c3_i32_63 : i32
      %c2_i32_64 = arith.constant 2 : i32
      %94 = arith.addi %93, %c2_i32_64 : i32
      %c3_i32_65 = arith.constant 3 : i32
      %95 = arith.muli %94, %c3_i32_65 : i32
      %c0_i32_66 = arith.constant 0 : i32
      %96 = arith.addi %95, %c0_i32_66 : i32
      %97 = arith.index_cast %96 : i32 to index
      %98 = memref.load %arg1[%97] : memref<54xf32, #tpu.memory_space<smem>>
      %c1_i32_67 = arith.constant 1 : i32
      %99 = arith.addi %95, %c1_i32_67 : i32
      %100 = arith.index_cast %99 : i32 to index
      %101 = memref.load %arg1[%100] : memref<54xf32, #tpu.memory_space<smem>>
      %c2_i32_68 = arith.constant 2 : i32
      %102 = arith.addi %95, %c2_i32_68 : i32
      %103 = arith.index_cast %102 : i32 to index
      %104 = memref.load %arg1[%103] : memref<54xf32, #tpu.memory_space<smem>>
      %105 = vector.broadcast %98 : f32 to vector<28x14x8xf32>
      %106 = arith.mulf %105, %84 : vector<28x14x8xf32>
      %107 = arith.addf %73, %106 : vector<28x14x8xf32>
      %108 = vector.broadcast %101 : f32 to vector<28x14x8xf32>
      %109 = arith.mulf %108, %86 : vector<28x14x8xf32>
      %110 = arith.addf %107, %109 : vector<28x14x8xf32>
      %111 = vector.broadcast %104 : f32 to vector<28x14x8xf32>
      %112 = arith.mulf %111, %88 : vector<28x14x8xf32>
      %113 = arith.addf %110, %112 : vector<28x14x8xf32>
      %114 = vector.broadcast %98 : f32 to vector<28x14x8xf32>
      %115 = arith.mulf %114, %86 : vector<28x14x8xf32>
      %116 = arith.addf %82, %115 : vector<28x14x8xf32>
      %117 = vector.broadcast %101 : f32 to vector<28x14x8xf32>
      %118 = arith.mulf %117, %88 : vector<28x14x8xf32>
      %119 = arith.addf %116, %118 : vector<28x14x8xf32>
      %120 = vector.broadcast %104 : f32 to vector<28x14x8xf32>
      %121 = arith.mulf %120, %90 : vector<28x14x8xf32>
      %122 = arith.addf %119, %121 : vector<28x14x8xf32>
      %123 = arith.index_cast %arg6 : i32 to index
      %124 = memref.load %arg2[%123] : memref<6xf32, #tpu.memory_space<smem>>
      %125 = vector.broadcast %124 : f32 to vector<28x14x8xf32>
      %126 = arith.addf %113, %125 : vector<28x14x8xf32>
      %cst_69 = arith.constant 0.000000e+00 : f32
      %127 = vector.broadcast %cst_69 : f32 to vector<28x14x8xf32>
      %128 = arith.maximumf %126, %127 : vector<28x14x8xf32>
      %129 = vector.broadcast %124 : f32 to vector<28x14x8xf32>
      %130 = arith.addf %122, %129 : vector<28x14x8xf32>
      %cst_70 = arith.constant 0.000000e+00 : f32
      %131 = vector.broadcast %cst_70 : f32 to vector<28x14x8xf32>
      %132 = arith.maximumf %130, %131 : vector<28x14x8xf32>
      %133 = arith.maximumf %128, %132 : vector<28x14x8xf32>
      %134 = vector.extract_strided_slice %133 {offsets = [0, 0, 0], sizes = [1, 14, 8], strides = [1, 1, 1]} : vector<28x14x8xf32> to vector<1x14x8xf32>
      %135 = vector.shape_cast %134 : vector<1x14x8xf32> to vector<14x8xf32>
      %136 = vector.extract_strided_slice %133 {offsets = [1, 0, 0], sizes = [1, 14, 8], strides = [1, 1, 1]} : vector<28x14x8xf32> to vector<1x14x8xf32>
      %137 = vector.shape_cast %136 : vector<1x14x8xf32> to vector<14x8xf32>
      %138 = arith.maximumf %135, %137 : vector<14x8xf32>
      %139 = arith.index_cast %arg6 : i32 to index
      %c0_71 = arith.constant 0 : index
      %c0_72 = arith.constant 0 : index
      %c0_73 = arith.constant 0 : index
      %140 = vector.load %arg5[%139, %c0_71, %c0_72, %c0_73] : memref<6x14x14x8xf32, #tpu.memory_space<vmem>>, vector<1x1x14x8xf32>
      %141 = vector.shape_cast %140 : vector<1x1x14x8xf32> to vector<14x8xf32>
      %142 = vector.shape_cast %138 : vector<14x8xf32> to vector<1x1x14x8xf32>
      tpu.vector_store %arg5[%139, %c0_71, %c0_72, %c0_73], %142 {strides = array<i32>} : memref<6x14x14x8xf32, #tpu.memory_space<vmem>>, vector<1x1x14x8xf32>,
      %143 = vector.extract_strided_slice %133 {offsets = [2, 0, 0], sizes = [1, 14, 8], strides = [1, 1, 1]} : vector<28x14x8xf32> to vector<1x14x8xf32>
      %144 = vector.shape_cast %143 : vector<1x14x8xf32> to vector<14x8xf32>
      %145 = vector.extract_strided_slice %133 {offsets = [3, 0, 0], sizes = [1, 14, 8], strides = [1, 1, 1]} : vector<28x14x8xf32> to vector<1x14x8xf32>
      %146 = vector.shape_cast %145 : vector<1x14x8xf32> to vector<14x8xf32>
      %147 = arith.maximumf %144, %146 : vector<14x8xf32>
      %148 = arith.index_cast %arg6 : i32 to index
      %c1_74 = arith.constant 1 : index
      %c0_75 = arith.constant 0 : index
      %c0_76 = arith.constant 0 : index
      %149 = vector.load %arg5[%148, %c1_74, %c0_75, %c0_76] : memref<6x14x14x8xf32, #tpu.memory_space<vmem>>, vector<1x1x14x8xf32>
      %150 = vector.shape_cast %149 : vector<1x1x14x8xf32> to vector<14x8xf32>
      %151 = vector.shape_cast %147 : vector<14x8xf32> to vector<1x1x14x8xf32>
      tpu.vector_store %arg5[%148, %c1_74, %c0_75, %c0_76], %151 {strides = array<i32>} : memref<6x14x14x8xf32, #tpu.memory_space<vmem>>, vector<1x1x14x8xf32>,
      %152 = vector.extract_strided_slice %133 {offsets = [4, 0, 0], sizes = [1, 14, 8], strides = [1, 1, 1]} : vector<28x14x8xf32> to vector<1x14x8xf32>
      %153 = vector.shape_cast %152 : vector<1x14x8xf32> to vector<14x8xf32>
      %154 = vector.extract_strided_slice %133 {offsets = [5, 0, 0], sizes = [1, 14, 8], strides = [1, 1, 1]} : vector<28x14x8xf32> to vector<1x14x8xf32>
      %155 = vector.shape_cast %154 : vector<1x14x8xf32> to vector<14x8xf32>
      %156 = arith.maximumf %153, %155 : vector<14x8xf32>
      %157 = arith.index_cast %arg6 : i32 to index
      %c2_77 = arith.constant 2 : index
      %c0_78 = arith.constant 0 : index
      %c0_79 = arith.constant 0 : index
      %158 = vector.load %arg5[%157, %c2_77, %c0_78, %c0_79] : memref<6x14x14x8xf32, #tpu.memory_space<vmem>>, vector<1x1x14x8xf32>
      %159 = vector.shape_cast %158 : vector<1x1x14x8xf32> to vector<14x8xf32>
      %160 = vector.shape_cast %156 : vector<14x8xf32> to vector<1x1x14x8xf32>
      tpu.vector_store %arg5[%157, %c2_77, %c0_78, %c0_79], %160 {strides = array<i32>} : memref<6x14x14x8xf32, #tpu.memory_space<vmem>>, vector<1x1x14x8xf32>,
      %161 = vector.extract_strided_slice %133 {offsets = [6, 0, 0], sizes = [1, 14, 8], strides = [1, 1, 1]} : vector<28x14x8xf32> to vector<1x14x8xf32>
      %162 = vector.shape_cast %161 : vector<1x14x8xf32> to vector<14x8xf32>
      %163 = vector.extract_strided_slice %133 {offsets = [7, 0, 0], sizes = [1, 14, 8], strides = [1, 1, 1]} : vector<28x14x8xf32> to vector<1x14x8xf32>
      %164 = vector.shape_cast %163 : vector<1x14x8xf32> to vector<14x8xf32>
      %165 = arith.maximumf %162, %164 : vector<14x8xf32>
      %166 = arith.index_cast %arg6 : i32 to index
      %c3 = arith.constant 3 : index
      %c0_80 = arith.constant 0 : index
      %c0_81 = arith.constant 0 : index
      %167 = vector.load %arg5[%166, %c3, %c0_80, %c0_81] : memref<6x14x14x8xf32, #tpu.memory_space<vmem>>, vector<1x1x14x8xf32>
      %168 = vector.shape_cast %167 : vector<1x1x14x8xf32> to vector<14x8xf32>
      %169 = vector.shape_cast %165 : vector<14x8xf32> to vector<1x1x14x8xf32>
      tpu.vector_store %arg5[%166, %c3, %c0_80, %c0_81], %169 {strides = array<i32>} : memref<6x14x14x8xf32, #tpu.memory_space<vmem>>, vector<1x1x14x8xf32>,
      %170 = vector.extract_strided_slice %133 {offsets = [8, 0, 0], sizes = [1, 14, 8], strides = [1, 1, 1]} : vector<28x14x8xf32> to vector<1x14x8xf32>
      %171 = vector.shape_cast %170 : vector<1x14x8xf32> to vector<14x8xf32>
      %172 = vector.extract_strided_slice %133 {offsets = [9, 0, 0], sizes = [1, 14, 8], strides = [1, 1, 1]} : vector<28x14x8xf32> to vector<1x14x8xf32>
      %173 = vector.shape_cast %172 : vector<1x14x8xf32> to vector<14x8xf32>
      %174 = arith.maximumf %171, %173 : vector<14x8xf32>
      %175 = arith.index_cast %arg6 : i32 to index
      %c4 = arith.constant 4 : index
      %c0_82 = arith.constant 0 : index
      %c0_83 = arith.constant 0 : index
      %176 = vector.load %arg5[%175, %c4, %c0_82, %c0_83] : memref<6x14x14x8xf32, #tpu.memory_space<vmem>>, vector<1x1x14x8xf32>
      %177 = vector.shape_cast %176 : vector<1x1x14x8xf32> to vector<14x8xf32>
      %178 = vector.shape_cast %174 : vector<14x8xf32> to vector<1x1x14x8xf32>
      tpu.vector_store %arg5[%175, %c4, %c0_82, %c0_83], %178 {strides = array<i32>} : memref<6x14x14x8xf32, #tpu.memory_space<vmem>>, vector<1x1x14x8xf32>,
      %179 = vector.extract_strided_slice %133 {offsets = [10, 0, 0], sizes = [1, 14, 8], strides = [1, 1, 1]} : vector<28x14x8xf32> to vector<1x14x8xf32>
      %180 = vector.shape_cast %179 : vector<1x14x8xf32> to vector<14x8xf32>
      %181 = vector.extract_strided_slice %133 {offsets = [11, 0, 0], sizes = [1, 14, 8], strides = [1, 1, 1]} : vector<28x14x8xf32> to vector<1x14x8xf32>
      %182 = vector.shape_cast %181 : vector<1x14x8xf32> to vector<14x8xf32>
      %183 = arith.maximumf %180, %182 : vector<14x8xf32>
      %184 = arith.index_cast %arg6 : i32 to index
      %c5 = arith.constant 5 : index
      %c0_84 = arith.constant 0 : index
      %c0_85 = arith.constant 0 : index
      %185 = vector.load %arg5[%184, %c5, %c0_84, %c0_85] : memref<6x14x14x8xf32, #tpu.memory_space<vmem>>, vector<1x1x14x8xf32>
      %186 = vector.shape_cast %185 : vector<1x1x14x8xf32> to vector<14x8xf32>
      %187 = vector.shape_cast %183 : vector<14x8xf32> to vector<1x1x14x8xf32>
      tpu.vector_store %arg5[%184, %c5, %c0_84, %c0_85], %187 {strides = array<i32>} : memref<6x14x14x8xf32, #tpu.memory_space<vmem>>, vector<1x1x14x8xf32>,
      %188 = vector.extract_strided_slice %133 {offsets = [12, 0, 0], sizes = [1, 14, 8], strides = [1, 1, 1]} : vector<28x14x8xf32> to vector<1x14x8xf32>
      %189 = vector.shape_cast %188 : vector<1x14x8xf32> to vector<14x8xf32>
      %190 = vector.extract_strided_slice %133 {offsets = [13, 0, 0], sizes = [1, 14, 8], strides = [1, 1, 1]} : vector<28x14x8xf32> to vector<1x14x8xf32>
      %191 = vector.shape_cast %190 : vector<1x14x8xf32> to vector<14x8xf32>
      %192 = arith.maximumf %189, %191 : vector<14x8xf32>
      %193 = arith.index_cast %arg6 : i32 to index
      %c6 = arith.constant 6 : index
      %c0_86 = arith.constant 0 : index
      %c0_87 = arith.constant 0 : index
      %194 = vector.load %arg5[%193, %c6, %c0_86, %c0_87] : memref<6x14x14x8xf32, #tpu.memory_space<vmem>>, vector<1x1x14x8xf32>
      %195 = vector.shape_cast %194 : vector<1x1x14x8xf32> to vector<14x8xf32>
      %196 = vector.shape_cast %192 : vector<14x8xf32> to vector<1x1x14x8xf32>
      tpu.vector_store %arg5[%193, %c6, %c0_86, %c0_87], %196 {strides = array<i32>} : memref<6x14x14x8xf32, #tpu.memory_space<vmem>>, vector<1x1x14x8xf32>,
      %197 = vector.extract_strided_slice %133 {offsets = [14, 0, 0], sizes = [1, 14, 8], strides = [1, 1, 1]} : vector<28x14x8xf32> to vector<1x14x8xf32>
      %198 = vector.shape_cast %197 : vector<1x14x8xf32> to vector<14x8xf32>
      %199 = vector.extract_strided_slice %133 {offsets = [15, 0, 0], sizes = [1, 14, 8], strides = [1, 1, 1]} : vector<28x14x8xf32> to vector<1x14x8xf32>
      %200 = vector.shape_cast %199 : vector<1x14x8xf32> to vector<14x8xf32>
      %201 = arith.maximumf %198, %200 : vector<14x8xf32>
      %202 = arith.index_cast %arg6 : i32 to index
      %c7 = arith.constant 7 : index
      %c0_88 = arith.constant 0 : index
      %c0_89 = arith.constant 0 : index
      %203 = vector.load %arg5[%202, %c7, %c0_88, %c0_89] : memref<6x14x14x8xf32, #tpu.memory_space<vmem>>, vector<1x1x14x8xf32>
      %204 = vector.shape_cast %203 : vector<1x1x14x8xf32> to vector<14x8xf32>
      %205 = vector.shape_cast %201 : vector<14x8xf32> to vector<1x1x14x8xf32>
      tpu.vector_store %arg5[%202, %c7, %c0_88, %c0_89], %205 {strides = array<i32>} : memref<6x14x14x8xf32, #tpu.memory_space<vmem>>, vector<1x1x14x8xf32>,
      %206 = vector.extract_strided_slice %133 {offsets = [16, 0, 0], sizes = [1, 14, 8], strides = [1, 1, 1]} : vector<28x14x8xf32> to vector<1x14x8xf32>
      %207 = vector.shape_cast %206 : vector<1x14x8xf32> to vector<14x8xf32>
      %208 = vector.extract_strided_slice %133 {offsets = [17, 0, 0], sizes = [1, 14, 8], strides = [1, 1, 1]} : vector<28x14x8xf32> to vector<1x14x8xf32>
      %209 = vector.shape_cast %208 : vector<1x14x8xf32> to vector<14x8xf32>
      %210 = arith.maximumf %207, %209 : vector<14x8xf32>
      %211 = arith.index_cast %arg6 : i32 to index
      %c8 = arith.constant 8 : index
      %c0_90 = arith.constant 0 : index
      %c0_91 = arith.constant 0 : index
      %212 = vector.load %arg5[%211, %c8, %c0_90, %c0_91] : memref<6x14x14x8xf32, #tpu.memory_space<vmem>>, vector<1x1x14x8xf32>
      %213 = vector.shape_cast %212 : vector<1x1x14x8xf32> to vector<14x8xf32>
      %214 = vector.shape_cast %210 : vector<14x8xf32> to vector<1x1x14x8xf32>
      tpu.vector_store %arg5[%211, %c8, %c0_90, %c0_91], %214 {strides = array<i32>} : memref<6x14x14x8xf32, #tpu.memory_space<vmem>>, vector<1x1x14x8xf32>,
      %215 = vector.extract_strided_slice %133 {offsets = [18, 0, 0], sizes = [1, 14, 8], strides = [1, 1, 1]} : vector<28x14x8xf32> to vector<1x14x8xf32>
      %216 = vector.shape_cast %215 : vector<1x14x8xf32> to vector<14x8xf32>
      %217 = vector.extract_strided_slice %133 {offsets = [19, 0, 0], sizes = [1, 14, 8], strides = [1, 1, 1]} : vector<28x14x8xf32> to vector<1x14x8xf32>
      %218 = vector.shape_cast %217 : vector<1x14x8xf32> to vector<14x8xf32>
      %219 = arith.maximumf %216, %218 : vector<14x8xf32>
      %220 = arith.index_cast %arg6 : i32 to index
      %c9 = arith.constant 9 : index
      %c0_92 = arith.constant 0 : index
      %c0_93 = arith.constant 0 : index
      %221 = vector.load %arg5[%220, %c9, %c0_92, %c0_93] : memref<6x14x14x8xf32, #tpu.memory_space<vmem>>, vector<1x1x14x8xf32>
      %222 = vector.shape_cast %221 : vector<1x1x14x8xf32> to vector<14x8xf32>
      %223 = vector.shape_cast %219 : vector<14x8xf32> to vector<1x1x14x8xf32>
      tpu.vector_store %arg5[%220, %c9, %c0_92, %c0_93], %223 {strides = array<i32>} : memref<6x14x14x8xf32, #tpu.memory_space<vmem>>, vector<1x1x14x8xf32>,
      %224 = vector.extract_strided_slice %133 {offsets = [20, 0, 0], sizes = [1, 14, 8], strides = [1, 1, 1]} : vector<28x14x8xf32> to vector<1x14x8xf32>
      %225 = vector.shape_cast %224 : vector<1x14x8xf32> to vector<14x8xf32>
      %226 = vector.extract_strided_slice %133 {offsets = [21, 0, 0], sizes = [1, 14, 8], strides = [1, 1, 1]} : vector<28x14x8xf32> to vector<1x14x8xf32>
      %227 = vector.shape_cast %226 : vector<1x14x8xf32> to vector<14x8xf32>
      %228 = arith.maximumf %225, %227 : vector<14x8xf32>
      %229 = arith.index_cast %arg6 : i32 to index
      %c10 = arith.constant 10 : index
      %c0_94 = arith.constant 0 : index
      %c0_95 = arith.constant 0 : index
      %230 = vector.load %arg5[%229, %c10, %c0_94, %c0_95] : memref<6x14x14x8xf32, #tpu.memory_space<vmem>>, vector<1x1x14x8xf32>
      %231 = vector.shape_cast %230 : vector<1x1x14x8xf32> to vector<14x8xf32>
      %232 = vector.shape_cast %228 : vector<14x8xf32> to vector<1x1x14x8xf32>
      tpu.vector_store %arg5[%229, %c10, %c0_94, %c0_95], %232 {strides = array<i32>} : memref<6x14x14x8xf32, #tpu.memory_space<vmem>>, vector<1x1x14x8xf32>,
      %233 = vector.extract_strided_slice %133 {offsets = [22, 0, 0], sizes = [1, 14, 8], strides = [1, 1, 1]} : vector<28x14x8xf32> to vector<1x14x8xf32>
      %234 = vector.shape_cast %233 : vector<1x14x8xf32> to vector<14x8xf32>
      %235 = vector.extract_strided_slice %133 {offsets = [23, 0, 0], sizes = [1, 14, 8], strides = [1, 1, 1]} : vector<28x14x8xf32> to vector<1x14x8xf32>
      %236 = vector.shape_cast %235 : vector<1x14x8xf32> to vector<14x8xf32>
      %237 = arith.maximumf %234, %236 : vector<14x8xf32>
      %238 = arith.index_cast %arg6 : i32 to index
      %c11 = arith.constant 11 : index
      %c0_96 = arith.constant 0 : index
      %c0_97 = arith.constant 0 : index
      %239 = vector.load %arg5[%238, %c11, %c0_96, %c0_97] : memref<6x14x14x8xf32, #tpu.memory_space<vmem>>, vector<1x1x14x8xf32>
      %240 = vector.shape_cast %239 : vector<1x1x14x8xf32> to vector<14x8xf32>
      %241 = vector.shape_cast %237 : vector<14x8xf32> to vector<1x1x14x8xf32>
      tpu.vector_store %arg5[%238, %c11, %c0_96, %c0_97], %241 {strides = array<i32>} : memref<6x14x14x8xf32, #tpu.memory_space<vmem>>, vector<1x1x14x8xf32>,
      %242 = vector.extract_strided_slice %133 {offsets = [24, 0, 0], sizes = [1, 14, 8], strides = [1, 1, 1]} : vector<28x14x8xf32> to vector<1x14x8xf32>
      %243 = vector.shape_cast %242 : vector<1x14x8xf32> to vector<14x8xf32>
      %244 = vector.extract_strided_slice %133 {offsets = [25, 0, 0], sizes = [1, 14, 8], strides = [1, 1, 1]} : vector<28x14x8xf32> to vector<1x14x8xf32>
      %245 = vector.shape_cast %244 : vector<1x14x8xf32> to vector<14x8xf32>
      %246 = arith.maximumf %243, %245 : vector<14x8xf32>
      %247 = arith.index_cast %arg6 : i32 to index
      %c12 = arith.constant 12 : index
      %c0_98 = arith.constant 0 : index
      %c0_99 = arith.constant 0 : index
      %248 = vector.load %arg5[%247, %c12, %c0_98, %c0_99] : memref<6x14x14x8xf32, #tpu.memory_space<vmem>>, vector<1x1x14x8xf32>
      %249 = vector.shape_cast %248 : vector<1x1x14x8xf32> to vector<14x8xf32>
      %250 = vector.shape_cast %246 : vector<14x8xf32> to vector<1x1x14x8xf32>
      tpu.vector_store %arg5[%247, %c12, %c0_98, %c0_99], %250 {strides = array<i32>} : memref<6x14x14x8xf32, #tpu.memory_space<vmem>>, vector<1x1x14x8xf32>,
      %251 = vector.extract_strided_slice %133 {offsets = [26, 0, 0], sizes = [1, 14, 8], strides = [1, 1, 1]} : vector<28x14x8xf32> to vector<1x14x8xf32>
      %252 = vector.shape_cast %251 : vector<1x14x8xf32> to vector<14x8xf32>
      %253 = vector.extract_strided_slice %133 {offsets = [27, 0, 0], sizes = [1, 14, 8], strides = [1, 1, 1]} : vector<28x14x8xf32> to vector<1x14x8xf32>
      %254 = vector.shape_cast %253 : vector<1x14x8xf32> to vector<14x8xf32>
      %255 = arith.maximumf %252, %254 : vector<14x8xf32>
      %256 = arith.index_cast %arg6 : i32 to index
      %c13 = arith.constant 13 : index
      %c0_100 = arith.constant 0 : index
      %c0_101 = arith.constant 0 : index
      %257 = vector.load %arg5[%256, %c13, %c0_100, %c0_101] : memref<6x14x14x8xf32, #tpu.memory_space<vmem>>, vector<1x1x14x8xf32>
      %258 = vector.shape_cast %257 : vector<1x1x14x8xf32> to vector<14x8xf32>
      %259 = vector.shape_cast %255 : vector<14x8xf32> to vector<1x1x14x8xf32>
      tpu.vector_store %arg5[%256, %c13, %c0_100, %c0_101], %259 {strides = array<i32>} : memref<6x14x14x8xf32, #tpu.memory_space<vmem>>, vector<1x1x14x8xf32>,
    }
    %c6_i32_0 = arith.constant 6 : i32
    return
  }
  func.func @transform_0(%arg0: i32) -> i32 {
    %c0_i32 = arith.constant 0 : i32
    %c0_i32_0 = arith.constant 0 : i32
    return %c0_i32 : i32
  }
  func.func @transform_1(%arg0: i32) -> i32 {
    %c0_i32 = arith.constant 0 : i32
    %c0_i32_0 = arith.constant 0 : i32
    return %c0_i32 : i32
  }
  func.func @transform_2(%arg0: i32) -> (i32, i32, i32, i32) {
    %c0_i32 = arith.constant 0 : i32
    %c0_i32_0 = arith.constant 0 : i32
    %c0_i32_1 = arith.constant 0 : i32
    %c0_i32_2 = arith.constant 0 : i32
    return %c0_i32, %c0_i32_0, %c0_i32_1, %arg0 : i32, i32, i32, i32
  }
  func.func @transform_3(%arg0: i32) -> (i32, i32, i32, i32) {
    %c0_i32 = arith.constant 0 : i32
    %c0_i32_0 = arith.constant 0 : i32
    %c0_i32_1 = arith.constant 0 : i32
    %c0_i32_2 = arith.constant 0 : i32
    return %c0_i32, %c0_i32_0, %c0_i32_1, %arg0 : i32, i32, i32, i32
  }
  func.func @transform_4(%arg0: i32) -> (i32, i32, i32, i32) {
    %c0_i32 = arith.constant 0 : i32
    %c0_i32_0 = arith.constant 0 : i32
    %c0_i32_1 = arith.constant 0 : i32
    %c0_i32_2 = arith.constant 0 : i32
    return %c0_i32, %c0_i32_0, %c0_i32_1, %arg0 : i32, i32, i32, i32
  }
}

module attributes {stable_mosaic.version = 11 : i64} {
  func.func @_conv_relu_pool_kernel(%arg0: i32, %arg1: memref<864xf32, #tpu.memory_space<smem>>, %arg2: memref<16xf32, #tpu.memory_space<smem>>, %arg3: memref<6x16x8x8xf32, #tpu.memory_space<vmem>>, %arg4: memref<6x16x8x8xf32, #tpu.memory_space<vmem>>, %arg5: memref<16x7x7x8xf32, #tpu.memory_space<vmem>>) attributes {dimension_semantics = [#tpu.dimension_semantics<parallel>], iteration_bounds = array<i64: 1>, scalar_prefetch = 0 : i64, scratch_operands = 0 : i64, tpu.core_type = #tpu.core_type<tc>, window_params = [{transform_indices = @transform_0, window_bounds = array<i64: 864>}, {transform_indices = @transform_1, window_bounds = array<i64: 16>}, {transform_indices = @transform_2, window_bounds = array<i64: 6, 16, 8, 8>}, {transform_indices = @transform_3, window_bounds = array<i64: 6, 16, 8, 8>}, {transform_indices = @transform_4, window_bounds = array<i64: 16, 7, 7, 8>}]} {
    %c0_i32 = arith.constant 0 : i32
    %c16_i32 = arith.constant 16 : i32
    %0 = arith.addi %c0_i32, %c16_i32 : i32
    %c1_i32 = arith.constant 1 : i32
    scf.for %arg6 = %c0_i32 to %0 step %c1_i32  : i32 {
      %cst = arith.constant 0.000000e+00 : f32
      %1 = vector.broadcast %cst : f32 to vector<14x7x8xf32>
      %cst_1 = arith.constant 0.000000e+00 : f32
      %2 = vector.broadcast %cst_1 : f32 to vector<14x7x8xf32>
      %c0 = arith.constant 0 : index
      %c0_2 = arith.constant 0 : index
      %c0_3 = arith.constant 0 : index
      %c0_4 = arith.constant 0 : index
      %3 = vector.load %arg3[%c0, %c0_2, %c0_3, %c0_4] : memref<6x16x8x8xf32, #tpu.memory_space<vmem>>, vector<1x14x7x8xf32>
      %4 = vector.shape_cast %3 : vector<1x14x7x8xf32> to vector<14x7x8xf32>
      %c0_5 = arith.constant 0 : index
      %c0_6 = arith.constant 0 : index
      %c0_7 = arith.constant 0 : index
      %c0_8 = arith.constant 0 : index
      %5 = vector.load %arg4[%c0_5, %c0_6, %c0_7, %c0_8] : memref<6x16x8x8xf32, #tpu.memory_space<vmem>>, vector<1x14x7x8xf32>
      %6 = vector.shape_cast %5 : vector<1x14x7x8xf32> to vector<14x7x8xf32>
      %c0_9 = arith.constant 0 : index
      %c0_10 = arith.constant 0 : index
      %c1 = arith.constant 1 : index
      %c0_11 = arith.constant 0 : index
      %7 = vector.load %arg3[%c0_9, %c0_10, %c1, %c0_11] : memref<6x16x8x8xf32, #tpu.memory_space<vmem>>, vector<1x14x7x8xf32>
      %8 = vector.shape_cast %7 : vector<1x14x7x8xf32> to vector<14x7x8xf32>
      %c0_12 = arith.constant 0 : index
      %c0_13 = arith.constant 0 : index
      %c1_14 = arith.constant 1 : index
      %c0_15 = arith.constant 0 : index
      %9 = vector.load %arg4[%c0_12, %c0_13, %c1_14, %c0_15] : memref<6x16x8x8xf32, #tpu.memory_space<vmem>>, vector<1x14x7x8xf32>
      %10 = vector.shape_cast %9 : vector<1x14x7x8xf32> to vector<14x7x8xf32>
      %c6_i32 = arith.constant 6 : i32
      %11 = arith.muli %arg6, %c6_i32 : i32
      %c0_i32_16 = arith.constant 0 : i32
      %12 = arith.addi %11, %c0_i32_16 : i32
      %c3_i32 = arith.constant 3 : i32
      %13 = arith.muli %12, %c3_i32 : i32
      %c0_i32_17 = arith.constant 0 : i32
      %14 = arith.addi %13, %c0_i32_17 : i32
      %c3_i32_18 = arith.constant 3 : i32
      %15 = arith.muli %14, %c3_i32_18 : i32
      %c0_i32_19 = arith.constant 0 : i32
      %16 = arith.addi %15, %c0_i32_19 : i32
      %17 = arith.index_cast %16 : i32 to index
      %18 = memref.load %arg1[%17] : memref<864xf32, #tpu.memory_space<smem>>
      %c1_i32_20 = arith.constant 1 : i32
      %19 = arith.addi %15, %c1_i32_20 : i32
      %20 = arith.index_cast %19 : i32 to index
      %21 = memref.load %arg1[%20] : memref<864xf32, #tpu.memory_space<smem>>
      %c2_i32 = arith.constant 2 : i32
      %22 = arith.addi %15, %c2_i32 : i32
      %23 = arith.index_cast %22 : i32 to index
      %24 = memref.load %arg1[%23] : memref<864xf32, #tpu.memory_space<smem>>
      %25 = vector.broadcast %18 : f32 to vector<14x7x8xf32>
      %26 = arith.mulf %25, %4 : vector<14x7x8xf32>
      %27 = arith.addf %1, %26 : vector<14x7x8xf32>
      %28 = vector.broadcast %21 : f32 to vector<14x7x8xf32>
      %29 = arith.mulf %28, %6 : vector<14x7x8xf32>
      %30 = arith.addf %27, %29 : vector<14x7x8xf32>
      %31 = vector.broadcast %24 : f32 to vector<14x7x8xf32>
      %32 = arith.mulf %31, %8 : vector<14x7x8xf32>
      %33 = arith.addf %30, %32 : vector<14x7x8xf32>
      %34 = vector.broadcast %18 : f32 to vector<14x7x8xf32>
      %35 = arith.mulf %34, %6 : vector<14x7x8xf32>
      %36 = arith.addf %2, %35 : vector<14x7x8xf32>
      %37 = vector.broadcast %21 : f32 to vector<14x7x8xf32>
      %38 = arith.mulf %37, %8 : vector<14x7x8xf32>
      %39 = arith.addf %36, %38 : vector<14x7x8xf32>
      %40 = vector.broadcast %24 : f32 to vector<14x7x8xf32>
      %41 = arith.mulf %40, %10 : vector<14x7x8xf32>
      %42 = arith.addf %39, %41 : vector<14x7x8xf32>
      %c0_21 = arith.constant 0 : index
      %c1_22 = arith.constant 1 : index
      %c0_23 = arith.constant 0 : index
      %c0_24 = arith.constant 0 : index
      %43 = vector.load %arg3[%c0_21, %c1_22, %c0_23, %c0_24] : memref<6x16x8x8xf32, #tpu.memory_space<vmem>>, vector<1x14x7x8xf32>
      %44 = vector.shape_cast %43 : vector<1x14x7x8xf32> to vector<14x7x8xf32>
      %c0_25 = arith.constant 0 : index
      %c1_26 = arith.constant 1 : index
      %c0_27 = arith.constant 0 : index
      %c0_28 = arith.constant 0 : index
      %45 = vector.load %arg4[%c0_25, %c1_26, %c0_27, %c0_28] : memref<6x16x8x8xf32, #tpu.memory_space<vmem>>, vector<1x14x7x8xf32>
      %46 = vector.shape_cast %45 : vector<1x14x7x8xf32> to vector<14x7x8xf32>
      %c0_29 = arith.constant 0 : index
      %c1_30 = arith.constant 1 : index
      %c1_31 = arith.constant 1 : index
      %c0_32 = arith.constant 0 : index
      %47 = vector.load %arg3[%c0_29, %c1_30, %c1_31, %c0_32] : memref<6x16x8x8xf32, #tpu.memory_space<vmem>>, vector<1x14x7x8xf32>
      %48 = vector.shape_cast %47 : vector<1x14x7x8xf32> to vector<14x7x8xf32>
      %c0_33 = arith.constant 0 : index
      %c1_34 = arith.constant 1 : index
      %c1_35 = arith.constant 1 : index
      %c0_36 = arith.constant 0 : index
      %49 = vector.load %arg4[%c0_33, %c1_34, %c1_35, %c0_36] : memref<6x16x8x8xf32, #tpu.memory_space<vmem>>, vector<1x14x7x8xf32>
      %50 = vector.shape_cast %49 : vector<1x14x7x8xf32> to vector<14x7x8xf32>
      %c6_i32_37 = arith.constant 6 : i32
      %51 = arith.muli %arg6, %c6_i32_37 : i32
      %c0_i32_38 = arith.constant 0 : i32
      %52 = arith.addi %51, %c0_i32_38 : i32
      %c3_i32_39 = arith.constant 3 : i32
      %53 = arith.muli %52, %c3_i32_39 : i32
      %c1_i32_40 = arith.constant 1 : i32
      %54 = arith.addi %53, %c1_i32_40 : i32
      %c3_i32_41 = arith.constant 3 : i32
      %55 = arith.muli %54, %c3_i32_41 : i32
      %c0_i32_42 = arith.constant 0 : i32
      %56 = arith.addi %55, %c0_i32_42 : i32
      %57 = arith.index_cast %56 : i32 to index
      %58 = memref.load %arg1[%57] : memref<864xf32, #tpu.memory_space<smem>>
      %c1_i32_43 = arith.constant 1 : i32
      %59 = arith.addi %55, %c1_i32_43 : i32
      %60 = arith.index_cast %59 : i32 to index
      %61 = memref.load %arg1[%60] : memref<864xf32, #tpu.memory_space<smem>>
      %c2_i32_44 = arith.constant 2 : i32
      %62 = arith.addi %55, %c2_i32_44 : i32
      %63 = arith.index_cast %62 : i32 to index
      %64 = memref.load %arg1[%63] : memref<864xf32, #tpu.memory_space<smem>>
      %65 = vector.broadcast %58 : f32 to vector<14x7x8xf32>
      %66 = arith.mulf %65, %44 : vector<14x7x8xf32>
      %67 = arith.addf %33, %66 : vector<14x7x8xf32>
      %68 = vector.broadcast %61 : f32 to vector<14x7x8xf32>
      %69 = arith.mulf %68, %46 : vector<14x7x8xf32>
      %70 = arith.addf %67, %69 : vector<14x7x8xf32>
      %71 = vector.broadcast %64 : f32 to vector<14x7x8xf32>
      %72 = arith.mulf %71, %48 : vector<14x7x8xf32>
      %73 = arith.addf %70, %72 : vector<14x7x8xf32>
      %74 = vector.broadcast %58 : f32 to vector<14x7x8xf32>
      %75 = arith.mulf %74, %46 : vector<14x7x8xf32>
      %76 = arith.addf %42, %75 : vector<14x7x8xf32>
      %77 = vector.broadcast %61 : f32 to vector<14x7x8xf32>
      %78 = arith.mulf %77, %48 : vector<14x7x8xf32>
      %79 = arith.addf %76, %78 : vector<14x7x8xf32>
      %80 = vector.broadcast %64 : f32 to vector<14x7x8xf32>
      %81 = arith.mulf %80, %50 : vector<14x7x8xf32>
      %82 = arith.addf %79, %81 : vector<14x7x8xf32>
      %c0_45 = arith.constant 0 : index
      %c2 = arith.constant 2 : index
      %c0_46 = arith.constant 0 : index
      %c0_47 = arith.constant 0 : index
      %83 = vector.load %arg3[%c0_45, %c2, %c0_46, %c0_47] : memref<6x16x8x8xf32, #tpu.memory_space<vmem>>, vector<1x14x7x8xf32>
      %84 = vector.shape_cast %83 : vector<1x14x7x8xf32> to vector<14x7x8xf32>
      %c0_48 = arith.constant 0 : index
      %c2_49 = arith.constant 2 : index
      %c0_50 = arith.constant 0 : index
      %c0_51 = arith.constant 0 : index
      %85 = vector.load %arg4[%c0_48, %c2_49, %c0_50, %c0_51] : memref<6x16x8x8xf32, #tpu.memory_space<vmem>>, vector<1x14x7x8xf32>
      %86 = vector.shape_cast %85 : vector<1x14x7x8xf32> to vector<14x7x8xf32>
      %c0_52 = arith.constant 0 : index
      %c2_53 = arith.constant 2 : index
      %c1_54 = arith.constant 1 : index
      %c0_55 = arith.constant 0 : index
      %87 = vector.load %arg3[%c0_52, %c2_53, %c1_54, %c0_55] : memref<6x16x8x8xf32, #tpu.memory_space<vmem>>, vector<1x14x7x8xf32>
      %88 = vector.shape_cast %87 : vector<1x14x7x8xf32> to vector<14x7x8xf32>
      %c0_56 = arith.constant 0 : index
      %c2_57 = arith.constant 2 : index
      %c1_58 = arith.constant 1 : index
      %c0_59 = arith.constant 0 : index
      %89 = vector.load %arg4[%c0_56, %c2_57, %c1_58, %c0_59] : memref<6x16x8x8xf32, #tpu.memory_space<vmem>>, vector<1x14x7x8xf32>
      %90 = vector.shape_cast %89 : vector<1x14x7x8xf32> to vector<14x7x8xf32>
      %c6_i32_60 = arith.constant 6 : i32
      %91 = arith.muli %arg6, %c6_i32_60 : i32
      %c0_i32_61 = arith.constant 0 : i32
      %92 = arith.addi %91, %c0_i32_61 : i32
      %c3_i32_62 = arith.constant 3 : i32
      %93 = arith.muli %92, %c3_i32_62 : i32
      %c2_i32_63 = arith.constant 2 : i32
      %94 = arith.addi %93, %c2_i32_63 : i32
      %c3_i32_64 = arith.constant 3 : i32
      %95 = arith.muli %94, %c3_i32_64 : i32
      %c0_i32_65 = arith.constant 0 : i32
      %96 = arith.addi %95, %c0_i32_65 : i32
      %97 = arith.index_cast %96 : i32 to index
      %98 = memref.load %arg1[%97] : memref<864xf32, #tpu.memory_space<smem>>
      %c1_i32_66 = arith.constant 1 : i32
      %99 = arith.addi %95, %c1_i32_66 : i32
      %100 = arith.index_cast %99 : i32 to index
      %101 = memref.load %arg1[%100] : memref<864xf32, #tpu.memory_space<smem>>
      %c2_i32_67 = arith.constant 2 : i32
      %102 = arith.addi %95, %c2_i32_67 : i32
      %103 = arith.index_cast %102 : i32 to index
      %104 = memref.load %arg1[%103] : memref<864xf32, #tpu.memory_space<smem>>
      %105 = vector.broadcast %98 : f32 to vector<14x7x8xf32>
      %106 = arith.mulf %105, %84 : vector<14x7x8xf32>
      %107 = arith.addf %73, %106 : vector<14x7x8xf32>
      %108 = vector.broadcast %101 : f32 to vector<14x7x8xf32>
      %109 = arith.mulf %108, %86 : vector<14x7x8xf32>
      %110 = arith.addf %107, %109 : vector<14x7x8xf32>
      %111 = vector.broadcast %104 : f32 to vector<14x7x8xf32>
      %112 = arith.mulf %111, %88 : vector<14x7x8xf32>
      %113 = arith.addf %110, %112 : vector<14x7x8xf32>
      %114 = vector.broadcast %98 : f32 to vector<14x7x8xf32>
      %115 = arith.mulf %114, %86 : vector<14x7x8xf32>
      %116 = arith.addf %82, %115 : vector<14x7x8xf32>
      %117 = vector.broadcast %101 : f32 to vector<14x7x8xf32>
      %118 = arith.mulf %117, %88 : vector<14x7x8xf32>
      %119 = arith.addf %116, %118 : vector<14x7x8xf32>
      %120 = vector.broadcast %104 : f32 to vector<14x7x8xf32>
      %121 = arith.mulf %120, %90 : vector<14x7x8xf32>
      %122 = arith.addf %119, %121 : vector<14x7x8xf32>
      %c1_68 = arith.constant 1 : index
      %c0_69 = arith.constant 0 : index
      %c0_70 = arith.constant 0 : index
      %c0_71 = arith.constant 0 : index
      %123 = vector.load %arg3[%c1_68, %c0_69, %c0_70, %c0_71] : memref<6x16x8x8xf32, #tpu.memory_space<vmem>>, vector<1x14x7x8xf32>
      %124 = vector.shape_cast %123 : vector<1x14x7x8xf32> to vector<14x7x8xf32>
      %c1_72 = arith.constant 1 : index
      %c0_73 = arith.constant 0 : index
      %c0_74 = arith.constant 0 : index
      %c0_75 = arith.constant 0 : index
      %125 = vector.load %arg4[%c1_72, %c0_73, %c0_74, %c0_75] : memref<6x16x8x8xf32, #tpu.memory_space<vmem>>, vector<1x14x7x8xf32>
      %126 = vector.shape_cast %125 : vector<1x14x7x8xf32> to vector<14x7x8xf32>
      %c1_76 = arith.constant 1 : index
      %c0_77 = arith.constant 0 : index
      %c1_78 = arith.constant 1 : index
      %c0_79 = arith.constant 0 : index
      %127 = vector.load %arg3[%c1_76, %c0_77, %c1_78, %c0_79] : memref<6x16x8x8xf32, #tpu.memory_space<vmem>>, vector<1x14x7x8xf32>
      %128 = vector.shape_cast %127 : vector<1x14x7x8xf32> to vector<14x7x8xf32>
      %c1_80 = arith.constant 1 : index
      %c0_81 = arith.constant 0 : index
      %c1_82 = arith.constant 1 : index
      %c0_83 = arith.constant 0 : index
      %129 = vector.load %arg4[%c1_80, %c0_81, %c1_82, %c0_83] : memref<6x16x8x8xf32, #tpu.memory_space<vmem>>, vector<1x14x7x8xf32>
      %130 = vector.shape_cast %129 : vector<1x14x7x8xf32> to vector<14x7x8xf32>
      %c6_i32_84 = arith.constant 6 : i32
      %131 = arith.muli %arg6, %c6_i32_84 : i32
      %c1_i32_85 = arith.constant 1 : i32
      %132 = arith.addi %131, %c1_i32_85 : i32
      %c3_i32_86 = arith.constant 3 : i32
      %133 = arith.muli %132, %c3_i32_86 : i32
      %c0_i32_87 = arith.constant 0 : i32
      %134 = arith.addi %133, %c0_i32_87 : i32
      %c3_i32_88 = arith.constant 3 : i32
      %135 = arith.muli %134, %c3_i32_88 : i32
      %c0_i32_89 = arith.constant 0 : i32
      %136 = arith.addi %135, %c0_i32_89 : i32
      %137 = arith.index_cast %136 : i32 to index
      %138 = memref.load %arg1[%137] : memref<864xf32, #tpu.memory_space<smem>>
      %c1_i32_90 = arith.constant 1 : i32
      %139 = arith.addi %135, %c1_i32_90 : i32
      %140 = arith.index_cast %139 : i32 to index
      %141 = memref.load %arg1[%140] : memref<864xf32, #tpu.memory_space<smem>>
      %c2_i32_91 = arith.constant 2 : i32
      %142 = arith.addi %135, %c2_i32_91 : i32
      %143 = arith.index_cast %142 : i32 to index
      %144 = memref.load %arg1[%143] : memref<864xf32, #tpu.memory_space<smem>>
      %145 = vector.broadcast %138 : f32 to vector<14x7x8xf32>
      %146 = arith.mulf %145, %124 : vector<14x7x8xf32>
      %147 = arith.addf %113, %146 : vector<14x7x8xf32>
      %148 = vector.broadcast %141 : f32 to vector<14x7x8xf32>
      %149 = arith.mulf %148, %126 : vector<14x7x8xf32>
      %150 = arith.addf %147, %149 : vector<14x7x8xf32>
      %151 = vector.broadcast %144 : f32 to vector<14x7x8xf32>
      %152 = arith.mulf %151, %128 : vector<14x7x8xf32>
      %153 = arith.addf %150, %152 : vector<14x7x8xf32>
      %154 = vector.broadcast %138 : f32 to vector<14x7x8xf32>
      %155 = arith.mulf %154, %126 : vector<14x7x8xf32>
      %156 = arith.addf %122, %155 : vector<14x7x8xf32>
      %157 = vector.broadcast %141 : f32 to vector<14x7x8xf32>
      %158 = arith.mulf %157, %128 : vector<14x7x8xf32>
      %159 = arith.addf %156, %158 : vector<14x7x8xf32>
      %160 = vector.broadcast %144 : f32 to vector<14x7x8xf32>
      %161 = arith.mulf %160, %130 : vector<14x7x8xf32>
      %162 = arith.addf %159, %161 : vector<14x7x8xf32>
      %c1_92 = arith.constant 1 : index
      %c1_93 = arith.constant 1 : index
      %c0_94 = arith.constant 0 : index
      %c0_95 = arith.constant 0 : index
      %163 = vector.load %arg3[%c1_92, %c1_93, %c0_94, %c0_95] : memref<6x16x8x8xf32, #tpu.memory_space<vmem>>, vector<1x14x7x8xf32>
      %164 = vector.shape_cast %163 : vector<1x14x7x8xf32> to vector<14x7x8xf32>
      %c1_96 = arith.constant 1 : index
      %c1_97 = arith.constant 1 : index
      %c0_98 = arith.constant 0 : index
      %c0_99 = arith.constant 0 : index
      %165 = vector.load %arg4[%c1_96, %c1_97, %c0_98, %c0_99] : memref<6x16x8x8xf32, #tpu.memory_space<vmem>>, vector<1x14x7x8xf32>
      %166 = vector.shape_cast %165 : vector<1x14x7x8xf32> to vector<14x7x8xf32>
      %c1_100 = arith.constant 1 : index
      %c1_101 = arith.constant 1 : index
      %c1_102 = arith.constant 1 : index
      %c0_103 = arith.constant 0 : index
      %167 = vector.load %arg3[%c1_100, %c1_101, %c1_102, %c0_103] : memref<6x16x8x8xf32, #tpu.memory_space<vmem>>, vector<1x14x7x8xf32>
      %168 = vector.shape_cast %167 : vector<1x14x7x8xf32> to vector<14x7x8xf32>
      %c1_104 = arith.constant 1 : index
      %c1_105 = arith.constant 1 : index
      %c1_106 = arith.constant 1 : index
      %c0_107 = arith.constant 0 : index
      %169 = vector.load %arg4[%c1_104, %c1_105, %c1_106, %c0_107] : memref<6x16x8x8xf32, #tpu.memory_space<vmem>>, vector<1x14x7x8xf32>
      %170 = vector.shape_cast %169 : vector<1x14x7x8xf32> to vector<14x7x8xf32>
      %c6_i32_108 = arith.constant 6 : i32
      %171 = arith.muli %arg6, %c6_i32_108 : i32
      %c1_i32_109 = arith.constant 1 : i32
      %172 = arith.addi %171, %c1_i32_109 : i32
      %c3_i32_110 = arith.constant 3 : i32
      %173 = arith.muli %172, %c3_i32_110 : i32
      %c1_i32_111 = arith.constant 1 : i32
      %174 = arith.addi %173, %c1_i32_111 : i32
      %c3_i32_112 = arith.constant 3 : i32
      %175 = arith.muli %174, %c3_i32_112 : i32
      %c0_i32_113 = arith.constant 0 : i32
      %176 = arith.addi %175, %c0_i32_113 : i32
      %177 = arith.index_cast %176 : i32 to index
      %178 = memref.load %arg1[%177] : memref<864xf32, #tpu.memory_space<smem>>
      %c1_i32_114 = arith.constant 1 : i32
      %179 = arith.addi %175, %c1_i32_114 : i32
      %180 = arith.index_cast %179 : i32 to index
      %181 = memref.load %arg1[%180] : memref<864xf32, #tpu.memory_space<smem>>
      %c2_i32_115 = arith.constant 2 : i32
      %182 = arith.addi %175, %c2_i32_115 : i32
      %183 = arith.index_cast %182 : i32 to index
      %184 = memref.load %arg1[%183] : memref<864xf32, #tpu.memory_space<smem>>
      %185 = vector.broadcast %178 : f32 to vector<14x7x8xf32>
      %186 = arith.mulf %185, %164 : vector<14x7x8xf32>
      %187 = arith.addf %153, %186 : vector<14x7x8xf32>
      %188 = vector.broadcast %181 : f32 to vector<14x7x8xf32>
      %189 = arith.mulf %188, %166 : vector<14x7x8xf32>
      %190 = arith.addf %187, %189 : vector<14x7x8xf32>
      %191 = vector.broadcast %184 : f32 to vector<14x7x8xf32>
      %192 = arith.mulf %191, %168 : vector<14x7x8xf32>
      %193 = arith.addf %190, %192 : vector<14x7x8xf32>
      %194 = vector.broadcast %178 : f32 to vector<14x7x8xf32>
      %195 = arith.mulf %194, %166 : vector<14x7x8xf32>
      %196 = arith.addf %162, %195 : vector<14x7x8xf32>
      %197 = vector.broadcast %181 : f32 to vector<14x7x8xf32>
      %198 = arith.mulf %197, %168 : vector<14x7x8xf32>
      %199 = arith.addf %196, %198 : vector<14x7x8xf32>
      %200 = vector.broadcast %184 : f32 to vector<14x7x8xf32>
      %201 = arith.mulf %200, %170 : vector<14x7x8xf32>
      %202 = arith.addf %199, %201 : vector<14x7x8xf32>
      %c1_116 = arith.constant 1 : index
      %c2_117 = arith.constant 2 : index
      %c0_118 = arith.constant 0 : index
      %c0_119 = arith.constant 0 : index
      %203 = vector.load %arg3[%c1_116, %c2_117, %c0_118, %c0_119] : memref<6x16x8x8xf32, #tpu.memory_space<vmem>>, vector<1x14x7x8xf32>
      %204 = vector.shape_cast %203 : vector<1x14x7x8xf32> to vector<14x7x8xf32>
      %c1_120 = arith.constant 1 : index
      %c2_121 = arith.constant 2 : index
      %c0_122 = arith.constant 0 : index
      %c0_123 = arith.constant 0 : index
      %205 = vector.load %arg4[%c1_120, %c2_121, %c0_122, %c0_123] : memref<6x16x8x8xf32, #tpu.memory_space<vmem>>, vector<1x14x7x8xf32>
      %206 = vector.shape_cast %205 : vector<1x14x7x8xf32> to vector<14x7x8xf32>
      %c1_124 = arith.constant 1 : index
      %c2_125 = arith.constant 2 : index
      %c1_126 = arith.constant 1 : index
      %c0_127 = arith.constant 0 : index
      %207 = vector.load %arg3[%c1_124, %c2_125, %c1_126, %c0_127] : memref<6x16x8x8xf32, #tpu.memory_space<vmem>>, vector<1x14x7x8xf32>
      %208 = vector.shape_cast %207 : vector<1x14x7x8xf32> to vector<14x7x8xf32>
      %c1_128 = arith.constant 1 : index
      %c2_129 = arith.constant 2 : index
      %c1_130 = arith.constant 1 : index
      %c0_131 = arith.constant 0 : index
      %209 = vector.load %arg4[%c1_128, %c2_129, %c1_130, %c0_131] : memref<6x16x8x8xf32, #tpu.memory_space<vmem>>, vector<1x14x7x8xf32>
      %210 = vector.shape_cast %209 : vector<1x14x7x8xf32> to vector<14x7x8xf32>
      %c6_i32_132 = arith.constant 6 : i32
      %211 = arith.muli %arg6, %c6_i32_132 : i32
      %c1_i32_133 = arith.constant 1 : i32
      %212 = arith.addi %211, %c1_i32_133 : i32
      %c3_i32_134 = arith.constant 3 : i32
      %213 = arith.muli %212, %c3_i32_134 : i32
      %c2_i32_135 = arith.constant 2 : i32
      %214 = arith.addi %213, %c2_i32_135 : i32
      %c3_i32_136 = arith.constant 3 : i32
      %215 = arith.muli %214, %c3_i32_136 : i32
      %c0_i32_137 = arith.constant 0 : i32
      %216 = arith.addi %215, %c0_i32_137 : i32
      %217 = arith.index_cast %216 : i32 to index
      %218 = memref.load %arg1[%217] : memref<864xf32, #tpu.memory_space<smem>>
      %c1_i32_138 = arith.constant 1 : i32
      %219 = arith.addi %215, %c1_i32_138 : i32
      %220 = arith.index_cast %219 : i32 to index
      %221 = memref.load %arg1[%220] : memref<864xf32, #tpu.memory_space<smem>>
      %c2_i32_139 = arith.constant 2 : i32
      %222 = arith.addi %215, %c2_i32_139 : i32
      %223 = arith.index_cast %222 : i32 to index
      %224 = memref.load %arg1[%223] : memref<864xf32, #tpu.memory_space<smem>>
      %225 = vector.broadcast %218 : f32 to vector<14x7x8xf32>
      %226 = arith.mulf %225, %204 : vector<14x7x8xf32>
      %227 = arith.addf %193, %226 : vector<14x7x8xf32>
      %228 = vector.broadcast %221 : f32 to vector<14x7x8xf32>
      %229 = arith.mulf %228, %206 : vector<14x7x8xf32>
      %230 = arith.addf %227, %229 : vector<14x7x8xf32>
      %231 = vector.broadcast %224 : f32 to vector<14x7x8xf32>
      %232 = arith.mulf %231, %208 : vector<14x7x8xf32>
      %233 = arith.addf %230, %232 : vector<14x7x8xf32>
      %234 = vector.broadcast %218 : f32 to vector<14x7x8xf32>
      %235 = arith.mulf %234, %206 : vector<14x7x8xf32>
      %236 = arith.addf %202, %235 : vector<14x7x8xf32>
      %237 = vector.broadcast %221 : f32 to vector<14x7x8xf32>
      %238 = arith.mulf %237, %208 : vector<14x7x8xf32>
      %239 = arith.addf %236, %238 : vector<14x7x8xf32>
      %240 = vector.broadcast %224 : f32 to vector<14x7x8xf32>
      %241 = arith.mulf %240, %210 : vector<14x7x8xf32>
      %242 = arith.addf %239, %241 : vector<14x7x8xf32>
      %c2_140 = arith.constant 2 : index
      %c0_141 = arith.constant 0 : index
      %c0_142 = arith.constant 0 : index
      %c0_143 = arith.constant 0 : index
      %243 = vector.load %arg3[%c2_140, %c0_141, %c0_142, %c0_143] : memref<6x16x8x8xf32, #tpu.memory_space<vmem>>, vector<1x14x7x8xf32>
      %244 = vector.shape_cast %243 : vector<1x14x7x8xf32> to vector<14x7x8xf32>
      %c2_144 = arith.constant 2 : index
      %c0_145 = arith.constant 0 : index
      %c0_146 = arith.constant 0 : index
      %c0_147 = arith.constant 0 : index
      %245 = vector.load %arg4[%c2_144, %c0_145, %c0_146, %c0_147] : memref<6x16x8x8xf32, #tpu.memory_space<vmem>>, vector<1x14x7x8xf32>
      %246 = vector.shape_cast %245 : vector<1x14x7x8xf32> to vector<14x7x8xf32>
      %c2_148 = arith.constant 2 : index
      %c0_149 = arith.constant 0 : index
      %c1_150 = arith.constant 1 : index
      %c0_151 = arith.constant 0 : index
      %247 = vector.load %arg3[%c2_148, %c0_149, %c1_150, %c0_151] : memref<6x16x8x8xf32, #tpu.memory_space<vmem>>, vector<1x14x7x8xf32>
      %248 = vector.shape_cast %247 : vector<1x14x7x8xf32> to vector<14x7x8xf32>
      %c2_152 = arith.constant 2 : index
      %c0_153 = arith.constant 0 : index
      %c1_154 = arith.constant 1 : index
      %c0_155 = arith.constant 0 : index
      %249 = vector.load %arg4[%c2_152, %c0_153, %c1_154, %c0_155] : memref<6x16x8x8xf32, #tpu.memory_space<vmem>>, vector<1x14x7x8xf32>
      %250 = vector.shape_cast %249 : vector<1x14x7x8xf32> to vector<14x7x8xf32>
      %c6_i32_156 = arith.constant 6 : i32
      %251 = arith.muli %arg6, %c6_i32_156 : i32
      %c2_i32_157 = arith.constant 2 : i32
      %252 = arith.addi %251, %c2_i32_157 : i32
      %c3_i32_158 = arith.constant 3 : i32
      %253 = arith.muli %252, %c3_i32_158 : i32
      %c0_i32_159 = arith.constant 0 : i32
      %254 = arith.addi %253, %c0_i32_159 : i32
      %c3_i32_160 = arith.constant 3 : i32
      %255 = arith.muli %254, %c3_i32_160 : i32
      %c0_i32_161 = arith.constant 0 : i32
      %256 = arith.addi %255, %c0_i32_161 : i32
      %257 = arith.index_cast %256 : i32 to index
      %258 = memref.load %arg1[%257] : memref<864xf32, #tpu.memory_space<smem>>
      %c1_i32_162 = arith.constant 1 : i32
      %259 = arith.addi %255, %c1_i32_162 : i32
      %260 = arith.index_cast %259 : i32 to index
      %261 = memref.load %arg1[%260] : memref<864xf32, #tpu.memory_space<smem>>
      %c2_i32_163 = arith.constant 2 : i32
      %262 = arith.addi %255, %c2_i32_163 : i32
      %263 = arith.index_cast %262 : i32 to index
      %264 = memref.load %arg1[%263] : memref<864xf32, #tpu.memory_space<smem>>
      %265 = vector.broadcast %258 : f32 to vector<14x7x8xf32>
      %266 = arith.mulf %265, %244 : vector<14x7x8xf32>
      %267 = arith.addf %233, %266 : vector<14x7x8xf32>
      %268 = vector.broadcast %261 : f32 to vector<14x7x8xf32>
      %269 = arith.mulf %268, %246 : vector<14x7x8xf32>
      %270 = arith.addf %267, %269 : vector<14x7x8xf32>
      %271 = vector.broadcast %264 : f32 to vector<14x7x8xf32>
      %272 = arith.mulf %271, %248 : vector<14x7x8xf32>
      %273 = arith.addf %270, %272 : vector<14x7x8xf32>
      %274 = vector.broadcast %258 : f32 to vector<14x7x8xf32>
      %275 = arith.mulf %274, %246 : vector<14x7x8xf32>
      %276 = arith.addf %242, %275 : vector<14x7x8xf32>
      %277 = vector.broadcast %261 : f32 to vector<14x7x8xf32>
      %278 = arith.mulf %277, %248 : vector<14x7x8xf32>
      %279 = arith.addf %276, %278 : vector<14x7x8xf32>
      %280 = vector.broadcast %264 : f32 to vector<14x7x8xf32>
      %281 = arith.mulf %280, %250 : vector<14x7x8xf32>
      %282 = arith.addf %279, %281 : vector<14x7x8xf32>
      %c2_164 = arith.constant 2 : index
      %c1_165 = arith.constant 1 : index
      %c0_166 = arith.constant 0 : index
      %c0_167 = arith.constant 0 : index
      %283 = vector.load %arg3[%c2_164, %c1_165, %c0_166, %c0_167] : memref<6x16x8x8xf32, #tpu.memory_space<vmem>>, vector<1x14x7x8xf32>
      %284 = vector.shape_cast %283 : vector<1x14x7x8xf32> to vector<14x7x8xf32>
      %c2_168 = arith.constant 2 : index
      %c1_169 = arith.constant 1 : index
      %c0_170 = arith.constant 0 : index
      %c0_171 = arith.constant 0 : index
      %285 = vector.load %arg4[%c2_168, %c1_169, %c0_170, %c0_171] : memref<6x16x8x8xf32, #tpu.memory_space<vmem>>, vector<1x14x7x8xf32>
      %286 = vector.shape_cast %285 : vector<1x14x7x8xf32> to vector<14x7x8xf32>
      %c2_172 = arith.constant 2 : index
      %c1_173 = arith.constant 1 : index
      %c1_174 = arith.constant 1 : index
      %c0_175 = arith.constant 0 : index
      %287 = vector.load %arg3[%c2_172, %c1_173, %c1_174, %c0_175] : memref<6x16x8x8xf32, #tpu.memory_space<vmem>>, vector<1x14x7x8xf32>
      %288 = vector.shape_cast %287 : vector<1x14x7x8xf32> to vector<14x7x8xf32>
      %c2_176 = arith.constant 2 : index
      %c1_177 = arith.constant 1 : index
      %c1_178 = arith.constant 1 : index
      %c0_179 = arith.constant 0 : index
      %289 = vector.load %arg4[%c2_176, %c1_177, %c1_178, %c0_179] : memref<6x16x8x8xf32, #tpu.memory_space<vmem>>, vector<1x14x7x8xf32>
      %290 = vector.shape_cast %289 : vector<1x14x7x8xf32> to vector<14x7x8xf32>
      %c6_i32_180 = arith.constant 6 : i32
      %291 = arith.muli %arg6, %c6_i32_180 : i32
      %c2_i32_181 = arith.constant 2 : i32
      %292 = arith.addi %291, %c2_i32_181 : i32
      %c3_i32_182 = arith.constant 3 : i32
      %293 = arith.muli %292, %c3_i32_182 : i32
      %c1_i32_183 = arith.constant 1 : i32
      %294 = arith.addi %293, %c1_i32_183 : i32
      %c3_i32_184 = arith.constant 3 : i32
      %295 = arith.muli %294, %c3_i32_184 : i32
      %c0_i32_185 = arith.constant 0 : i32
      %296 = arith.addi %295, %c0_i32_185 : i32
      %297 = arith.index_cast %296 : i32 to index
      %298 = memref.load %arg1[%297] : memref<864xf32, #tpu.memory_space<smem>>
      %c1_i32_186 = arith.constant 1 : i32
      %299 = arith.addi %295, %c1_i32_186 : i32
      %300 = arith.index_cast %299 : i32 to index
      %301 = memref.load %arg1[%300] : memref<864xf32, #tpu.memory_space<smem>>
      %c2_i32_187 = arith.constant 2 : i32
      %302 = arith.addi %295, %c2_i32_187 : i32
      %303 = arith.index_cast %302 : i32 to index
      %304 = memref.load %arg1[%303] : memref<864xf32, #tpu.memory_space<smem>>
      %305 = vector.broadcast %298 : f32 to vector<14x7x8xf32>
      %306 = arith.mulf %305, %284 : vector<14x7x8xf32>
      %307 = arith.addf %273, %306 : vector<14x7x8xf32>
      %308 = vector.broadcast %301 : f32 to vector<14x7x8xf32>
      %309 = arith.mulf %308, %286 : vector<14x7x8xf32>
      %310 = arith.addf %307, %309 : vector<14x7x8xf32>
      %311 = vector.broadcast %304 : f32 to vector<14x7x8xf32>
      %312 = arith.mulf %311, %288 : vector<14x7x8xf32>
      %313 = arith.addf %310, %312 : vector<14x7x8xf32>
      %314 = vector.broadcast %298 : f32 to vector<14x7x8xf32>
      %315 = arith.mulf %314, %286 : vector<14x7x8xf32>
      %316 = arith.addf %282, %315 : vector<14x7x8xf32>
      %317 = vector.broadcast %301 : f32 to vector<14x7x8xf32>
      %318 = arith.mulf %317, %288 : vector<14x7x8xf32>
      %319 = arith.addf %316, %318 : vector<14x7x8xf32>
      %320 = vector.broadcast %304 : f32 to vector<14x7x8xf32>
      %321 = arith.mulf %320, %290 : vector<14x7x8xf32>
      %322 = arith.addf %319, %321 : vector<14x7x8xf32>
      %c2_188 = arith.constant 2 : index
      %c2_189 = arith.constant 2 : index
      %c0_190 = arith.constant 0 : index
      %c0_191 = arith.constant 0 : index
      %323 = vector.load %arg3[%c2_188, %c2_189, %c0_190, %c0_191] : memref<6x16x8x8xf32, #tpu.memory_space<vmem>>, vector<1x14x7x8xf32>
      %324 = vector.shape_cast %323 : vector<1x14x7x8xf32> to vector<14x7x8xf32>
      %c2_192 = arith.constant 2 : index
      %c2_193 = arith.constant 2 : index
      %c0_194 = arith.constant 0 : index
      %c0_195 = arith.constant 0 : index
      %325 = vector.load %arg4[%c2_192, %c2_193, %c0_194, %c0_195] : memref<6x16x8x8xf32, #tpu.memory_space<vmem>>, vector<1x14x7x8xf32>
      %326 = vector.shape_cast %325 : vector<1x14x7x8xf32> to vector<14x7x8xf32>
      %c2_196 = arith.constant 2 : index
      %c2_197 = arith.constant 2 : index
      %c1_198 = arith.constant 1 : index
      %c0_199 = arith.constant 0 : index
      %327 = vector.load %arg3[%c2_196, %c2_197, %c1_198, %c0_199] : memref<6x16x8x8xf32, #tpu.memory_space<vmem>>, vector<1x14x7x8xf32>
      %328 = vector.shape_cast %327 : vector<1x14x7x8xf32> to vector<14x7x8xf32>
      %c2_200 = arith.constant 2 : index
      %c2_201 = arith.constant 2 : index
      %c1_202 = arith.constant 1 : index
      %c0_203 = arith.constant 0 : index
      %329 = vector.load %arg4[%c2_200, %c2_201, %c1_202, %c0_203] : memref<6x16x8x8xf32, #tpu.memory_space<vmem>>, vector<1x14x7x8xf32>
      %330 = vector.shape_cast %329 : vector<1x14x7x8xf32> to vector<14x7x8xf32>
      %c6_i32_204 = arith.constant 6 : i32
      %331 = arith.muli %arg6, %c6_i32_204 : i32
      %c2_i32_205 = arith.constant 2 : i32
      %332 = arith.addi %331, %c2_i32_205 : i32
      %c3_i32_206 = arith.constant 3 : i32
      %333 = arith.muli %332, %c3_i32_206 : i32
      %c2_i32_207 = arith.constant 2 : i32
      %334 = arith.addi %333, %c2_i32_207 : i32
      %c3_i32_208 = arith.constant 3 : i32
      %335 = arith.muli %334, %c3_i32_208 : i32
      %c0_i32_209 = arith.constant 0 : i32
      %336 = arith.addi %335, %c0_i32_209 : i32
      %337 = arith.index_cast %336 : i32 to index
      %338 = memref.load %arg1[%337] : memref<864xf32, #tpu.memory_space<smem>>
      %c1_i32_210 = arith.constant 1 : i32
      %339 = arith.addi %335, %c1_i32_210 : i32
      %340 = arith.index_cast %339 : i32 to index
      %341 = memref.load %arg1[%340] : memref<864xf32, #tpu.memory_space<smem>>
      %c2_i32_211 = arith.constant 2 : i32
      %342 = arith.addi %335, %c2_i32_211 : i32
      %343 = arith.index_cast %342 : i32 to index
      %344 = memref.load %arg1[%343] : memref<864xf32, #tpu.memory_space<smem>>
      %345 = vector.broadcast %338 : f32 to vector<14x7x8xf32>
      %346 = arith.mulf %345, %324 : vector<14x7x8xf32>
      %347 = arith.addf %313, %346 : vector<14x7x8xf32>
      %348 = vector.broadcast %341 : f32 to vector<14x7x8xf32>
      %349 = arith.mulf %348, %326 : vector<14x7x8xf32>
      %350 = arith.addf %347, %349 : vector<14x7x8xf32>
      %351 = vector.broadcast %344 : f32 to vector<14x7x8xf32>
      %352 = arith.mulf %351, %328 : vector<14x7x8xf32>
      %353 = arith.addf %350, %352 : vector<14x7x8xf32>
      %354 = vector.broadcast %338 : f32 to vector<14x7x8xf32>
      %355 = arith.mulf %354, %326 : vector<14x7x8xf32>
      %356 = arith.addf %322, %355 : vector<14x7x8xf32>
      %357 = vector.broadcast %341 : f32 to vector<14x7x8xf32>
      %358 = arith.mulf %357, %328 : vector<14x7x8xf32>
      %359 = arith.addf %356, %358 : vector<14x7x8xf32>
      %360 = vector.broadcast %344 : f32 to vector<14x7x8xf32>
      %361 = arith.mulf %360, %330 : vector<14x7x8xf32>
      %362 = arith.addf %359, %361 : vector<14x7x8xf32>
      %c3 = arith.constant 3 : index
      %c0_212 = arith.constant 0 : index
      %c0_213 = arith.constant 0 : index
      %c0_214 = arith.constant 0 : index
      %363 = vector.load %arg3[%c3, %c0_212, %c0_213, %c0_214] : memref<6x16x8x8xf32, #tpu.memory_space<vmem>>, vector<1x14x7x8xf32>
      %364 = vector.shape_cast %363 : vector<1x14x7x8xf32> to vector<14x7x8xf32>
      %c3_215 = arith.constant 3 : index
      %c0_216 = arith.constant 0 : index
      %c0_217 = arith.constant 0 : index
      %c0_218 = arith.constant 0 : index
      %365 = vector.load %arg4[%c3_215, %c0_216, %c0_217, %c0_218] : memref<6x16x8x8xf32, #tpu.memory_space<vmem>>, vector<1x14x7x8xf32>
      %366 = vector.shape_cast %365 : vector<1x14x7x8xf32> to vector<14x7x8xf32>
      %c3_219 = arith.constant 3 : index
      %c0_220 = arith.constant 0 : index
      %c1_221 = arith.constant 1 : index
      %c0_222 = arith.constant 0 : index
      %367 = vector.load %arg3[%c3_219, %c0_220, %c1_221, %c0_222] : memref<6x16x8x8xf32, #tpu.memory_space<vmem>>, vector<1x14x7x8xf32>
      %368 = vector.shape_cast %367 : vector<1x14x7x8xf32> to vector<14x7x8xf32>
      %c3_223 = arith.constant 3 : index
      %c0_224 = arith.constant 0 : index
      %c1_225 = arith.constant 1 : index
      %c0_226 = arith.constant 0 : index
      %369 = vector.load %arg4[%c3_223, %c0_224, %c1_225, %c0_226] : memref<6x16x8x8xf32, #tpu.memory_space<vmem>>, vector<1x14x7x8xf32>
      %370 = vector.shape_cast %369 : vector<1x14x7x8xf32> to vector<14x7x8xf32>
      %c6_i32_227 = arith.constant 6 : i32
      %371 = arith.muli %arg6, %c6_i32_227 : i32
      %c3_i32_228 = arith.constant 3 : i32
      %372 = arith.addi %371, %c3_i32_228 : i32
      %c3_i32_229 = arith.constant 3 : i32
      %373 = arith.muli %372, %c3_i32_229 : i32
      %c0_i32_230 = arith.constant 0 : i32
      %374 = arith.addi %373, %c0_i32_230 : i32
      %c3_i32_231 = arith.constant 3 : i32
      %375 = arith.muli %374, %c3_i32_231 : i32
      %c0_i32_232 = arith.constant 0 : i32
      %376 = arith.addi %375, %c0_i32_232 : i32
      %377 = arith.index_cast %376 : i32 to index
      %378 = memref.load %arg1[%377] : memref<864xf32, #tpu.memory_space<smem>>
      %c1_i32_233 = arith.constant 1 : i32
      %379 = arith.addi %375, %c1_i32_233 : i32
      %380 = arith.index_cast %379 : i32 to index
      %381 = memref.load %arg1[%380] : memref<864xf32, #tpu.memory_space<smem>>
      %c2_i32_234 = arith.constant 2 : i32
      %382 = arith.addi %375, %c2_i32_234 : i32
      %383 = arith.index_cast %382 : i32 to index
      %384 = memref.load %arg1[%383] : memref<864xf32, #tpu.memory_space<smem>>
      %385 = vector.broadcast %378 : f32 to vector<14x7x8xf32>
      %386 = arith.mulf %385, %364 : vector<14x7x8xf32>
      %387 = arith.addf %353, %386 : vector<14x7x8xf32>
      %388 = vector.broadcast %381 : f32 to vector<14x7x8xf32>
      %389 = arith.mulf %388, %366 : vector<14x7x8xf32>
      %390 = arith.addf %387, %389 : vector<14x7x8xf32>
      %391 = vector.broadcast %384 : f32 to vector<14x7x8xf32>
      %392 = arith.mulf %391, %368 : vector<14x7x8xf32>
      %393 = arith.addf %390, %392 : vector<14x7x8xf32>
      %394 = vector.broadcast %378 : f32 to vector<14x7x8xf32>
      %395 = arith.mulf %394, %366 : vector<14x7x8xf32>
      %396 = arith.addf %362, %395 : vector<14x7x8xf32>
      %397 = vector.broadcast %381 : f32 to vector<14x7x8xf32>
      %398 = arith.mulf %397, %368 : vector<14x7x8xf32>
      %399 = arith.addf %396, %398 : vector<14x7x8xf32>
      %400 = vector.broadcast %384 : f32 to vector<14x7x8xf32>
      %401 = arith.mulf %400, %370 : vector<14x7x8xf32>
      %402 = arith.addf %399, %401 : vector<14x7x8xf32>
      %c3_235 = arith.constant 3 : index
      %c1_236 = arith.constant 1 : index
      %c0_237 = arith.constant 0 : index
      %c0_238 = arith.constant 0 : index
      %403 = vector.load %arg3[%c3_235, %c1_236, %c0_237, %c0_238] : memref<6x16x8x8xf32, #tpu.memory_space<vmem>>, vector<1x14x7x8xf32>
      %404 = vector.shape_cast %403 : vector<1x14x7x8xf32> to vector<14x7x8xf32>
      %c3_239 = arith.constant 3 : index
      %c1_240 = arith.constant 1 : index
      %c0_241 = arith.constant 0 : index
      %c0_242 = arith.constant 0 : index
      %405 = vector.load %arg4[%c3_239, %c1_240, %c0_241, %c0_242] : memref<6x16x8x8xf32, #tpu.memory_space<vmem>>, vector<1x14x7x8xf32>
      %406 = vector.shape_cast %405 : vector<1x14x7x8xf32> to vector<14x7x8xf32>
      %c3_243 = arith.constant 3 : index
      %c1_244 = arith.constant 1 : index
      %c1_245 = arith.constant 1 : index
      %c0_246 = arith.constant 0 : index
      %407 = vector.load %arg3[%c3_243, %c1_244, %c1_245, %c0_246] : memref<6x16x8x8xf32, #tpu.memory_space<vmem>>, vector<1x14x7x8xf32>
      %408 = vector.shape_cast %407 : vector<1x14x7x8xf32> to vector<14x7x8xf32>
      %c3_247 = arith.constant 3 : index
      %c1_248 = arith.constant 1 : index
      %c1_249 = arith.constant 1 : index
      %c0_250 = arith.constant 0 : index
      %409 = vector.load %arg4[%c3_247, %c1_248, %c1_249, %c0_250] : memref<6x16x8x8xf32, #tpu.memory_space<vmem>>, vector<1x14x7x8xf32>
      %410 = vector.shape_cast %409 : vector<1x14x7x8xf32> to vector<14x7x8xf32>
      %c6_i32_251 = arith.constant 6 : i32
      %411 = arith.muli %arg6, %c6_i32_251 : i32
      %c3_i32_252 = arith.constant 3 : i32
      %412 = arith.addi %411, %c3_i32_252 : i32
      %c3_i32_253 = arith.constant 3 : i32
      %413 = arith.muli %412, %c3_i32_253 : i32
      %c1_i32_254 = arith.constant 1 : i32
      %414 = arith.addi %413, %c1_i32_254 : i32
      %c3_i32_255 = arith.constant 3 : i32
      %415 = arith.muli %414, %c3_i32_255 : i32
      %c0_i32_256 = arith.constant 0 : i32
      %416 = arith.addi %415, %c0_i32_256 : i32
      %417 = arith.index_cast %416 : i32 to index
      %418 = memref.load %arg1[%417] : memref<864xf32, #tpu.memory_space<smem>>
      %c1_i32_257 = arith.constant 1 : i32
      %419 = arith.addi %415, %c1_i32_257 : i32
      %420 = arith.index_cast %419 : i32 to index
      %421 = memref.load %arg1[%420] : memref<864xf32, #tpu.memory_space<smem>>
      %c2_i32_258 = arith.constant 2 : i32
      %422 = arith.addi %415, %c2_i32_258 : i32
      %423 = arith.index_cast %422 : i32 to index
      %424 = memref.load %arg1[%423] : memref<864xf32, #tpu.memory_space<smem>>
      %425 = vector.broadcast %418 : f32 to vector<14x7x8xf32>
      %426 = arith.mulf %425, %404 : vector<14x7x8xf32>
      %427 = arith.addf %393, %426 : vector<14x7x8xf32>
      %428 = vector.broadcast %421 : f32 to vector<14x7x8xf32>
      %429 = arith.mulf %428, %406 : vector<14x7x8xf32>
      %430 = arith.addf %427, %429 : vector<14x7x8xf32>
      %431 = vector.broadcast %424 : f32 to vector<14x7x8xf32>
      %432 = arith.mulf %431, %408 : vector<14x7x8xf32>
      %433 = arith.addf %430, %432 : vector<14x7x8xf32>
      %434 = vector.broadcast %418 : f32 to vector<14x7x8xf32>
      %435 = arith.mulf %434, %406 : vector<14x7x8xf32>
      %436 = arith.addf %402, %435 : vector<14x7x8xf32>
      %437 = vector.broadcast %421 : f32 to vector<14x7x8xf32>
      %438 = arith.mulf %437, %408 : vector<14x7x8xf32>
      %439 = arith.addf %436, %438 : vector<14x7x8xf32>
      %440 = vector.broadcast %424 : f32 to vector<14x7x8xf32>
      %441 = arith.mulf %440, %410 : vector<14x7x8xf32>
      %442 = arith.addf %439, %441 : vector<14x7x8xf32>
      %c3_259 = arith.constant 3 : index
      %c2_260 = arith.constant 2 : index
      %c0_261 = arith.constant 0 : index
      %c0_262 = arith.constant 0 : index
      %443 = vector.load %arg3[%c3_259, %c2_260, %c0_261, %c0_262] : memref<6x16x8x8xf32, #tpu.memory_space<vmem>>, vector<1x14x7x8xf32>
      %444 = vector.shape_cast %443 : vector<1x14x7x8xf32> to vector<14x7x8xf32>
      %c3_263 = arith.constant 3 : index
      %c2_264 = arith.constant 2 : index
      %c0_265 = arith.constant 0 : index
      %c0_266 = arith.constant 0 : index
      %445 = vector.load %arg4[%c3_263, %c2_264, %c0_265, %c0_266] : memref<6x16x8x8xf32, #tpu.memory_space<vmem>>, vector<1x14x7x8xf32>
      %446 = vector.shape_cast %445 : vector<1x14x7x8xf32> to vector<14x7x8xf32>
      %c3_267 = arith.constant 3 : index
      %c2_268 = arith.constant 2 : index
      %c1_269 = arith.constant 1 : index
      %c0_270 = arith.constant 0 : index
      %447 = vector.load %arg3[%c3_267, %c2_268, %c1_269, %c0_270] : memref<6x16x8x8xf32, #tpu.memory_space<vmem>>, vector<1x14x7x8xf32>
      %448 = vector.shape_cast %447 : vector<1x14x7x8xf32> to vector<14x7x8xf32>
      %c3_271 = arith.constant 3 : index
      %c2_272 = arith.constant 2 : index
      %c1_273 = arith.constant 1 : index
      %c0_274 = arith.constant 0 : index
      %449 = vector.load %arg4[%c3_271, %c2_272, %c1_273, %c0_274] : memref<6x16x8x8xf32, #tpu.memory_space<vmem>>, vector<1x14x7x8xf32>
      %450 = vector.shape_cast %449 : vector<1x14x7x8xf32> to vector<14x7x8xf32>
      %c6_i32_275 = arith.constant 6 : i32
      %451 = arith.muli %arg6, %c6_i32_275 : i32
      %c3_i32_276 = arith.constant 3 : i32
      %452 = arith.addi %451, %c3_i32_276 : i32
      %c3_i32_277 = arith.constant 3 : i32
      %453 = arith.muli %452, %c3_i32_277 : i32
      %c2_i32_278 = arith.constant 2 : i32
      %454 = arith.addi %453, %c2_i32_278 : i32
      %c3_i32_279 = arith.constant 3 : i32
      %455 = arith.muli %454, %c3_i32_279 : i32
      %c0_i32_280 = arith.constant 0 : i32
      %456 = arith.addi %455, %c0_i32_280 : i32
      %457 = arith.index_cast %456 : i32 to index
      %458 = memref.load %arg1[%457] : memref<864xf32, #tpu.memory_space<smem>>
      %c1_i32_281 = arith.constant 1 : i32
      %459 = arith.addi %455, %c1_i32_281 : i32
      %460 = arith.index_cast %459 : i32 to index
      %461 = memref.load %arg1[%460] : memref<864xf32, #tpu.memory_space<smem>>
      %c2_i32_282 = arith.constant 2 : i32
      %462 = arith.addi %455, %c2_i32_282 : i32
      %463 = arith.index_cast %462 : i32 to index
      %464 = memref.load %arg1[%463] : memref<864xf32, #tpu.memory_space<smem>>
      %465 = vector.broadcast %458 : f32 to vector<14x7x8xf32>
      %466 = arith.mulf %465, %444 : vector<14x7x8xf32>
      %467 = arith.addf %433, %466 : vector<14x7x8xf32>
      %468 = vector.broadcast %461 : f32 to vector<14x7x8xf32>
      %469 = arith.mulf %468, %446 : vector<14x7x8xf32>
      %470 = arith.addf %467, %469 : vector<14x7x8xf32>
      %471 = vector.broadcast %464 : f32 to vector<14x7x8xf32>
      %472 = arith.mulf %471, %448 : vector<14x7x8xf32>
      %473 = arith.addf %470, %472 : vector<14x7x8xf32>
      %474 = vector.broadcast %458 : f32 to vector<14x7x8xf32>
      %475 = arith.mulf %474, %446 : vector<14x7x8xf32>
      %476 = arith.addf %442, %475 : vector<14x7x8xf32>
      %477 = vector.broadcast %461 : f32 to vector<14x7x8xf32>
      %478 = arith.mulf %477, %448 : vector<14x7x8xf32>
      %479 = arith.addf %476, %478 : vector<14x7x8xf32>
      %480 = vector.broadcast %464 : f32 to vector<14x7x8xf32>
      %481 = arith.mulf %480, %450 : vector<14x7x8xf32>
      %482 = arith.addf %479, %481 : vector<14x7x8xf32>
      %c4 = arith.constant 4 : index
      %c0_283 = arith.constant 0 : index
      %c0_284 = arith.constant 0 : index
      %c0_285 = arith.constant 0 : index
      %483 = vector.load %arg3[%c4, %c0_283, %c0_284, %c0_285] : memref<6x16x8x8xf32, #tpu.memory_space<vmem>>, vector<1x14x7x8xf32>
      %484 = vector.shape_cast %483 : vector<1x14x7x8xf32> to vector<14x7x8xf32>
      %c4_286 = arith.constant 4 : index
      %c0_287 = arith.constant 0 : index
      %c0_288 = arith.constant 0 : index
      %c0_289 = arith.constant 0 : index
      %485 = vector.load %arg4[%c4_286, %c0_287, %c0_288, %c0_289] : memref<6x16x8x8xf32, #tpu.memory_space<vmem>>, vector<1x14x7x8xf32>
      %486 = vector.shape_cast %485 : vector<1x14x7x8xf32> to vector<14x7x8xf32>
      %c4_290 = arith.constant 4 : index
      %c0_291 = arith.constant 0 : index
      %c1_292 = arith.constant 1 : index
      %c0_293 = arith.constant 0 : index
      %487 = vector.load %arg3[%c4_290, %c0_291, %c1_292, %c0_293] : memref<6x16x8x8xf32, #tpu.memory_space<vmem>>, vector<1x14x7x8xf32>
      %488 = vector.shape_cast %487 : vector<1x14x7x8xf32> to vector<14x7x8xf32>
      %c4_294 = arith.constant 4 : index
      %c0_295 = arith.constant 0 : index
      %c1_296 = arith.constant 1 : index
      %c0_297 = arith.constant 0 : index
      %489 = vector.load %arg4[%c4_294, %c0_295, %c1_296, %c0_297] : memref<6x16x8x8xf32, #tpu.memory_space<vmem>>, vector<1x14x7x8xf32>
      %490 = vector.shape_cast %489 : vector<1x14x7x8xf32> to vector<14x7x8xf32>
      %c6_i32_298 = arith.constant 6 : i32
      %491 = arith.muli %arg6, %c6_i32_298 : i32
      %c4_i32 = arith.constant 4 : i32
      %492 = arith.addi %491, %c4_i32 : i32
      %c3_i32_299 = arith.constant 3 : i32
      %493 = arith.muli %492, %c3_i32_299 : i32
      %c0_i32_300 = arith.constant 0 : i32
      %494 = arith.addi %493, %c0_i32_300 : i32
      %c3_i32_301 = arith.constant 3 : i32
      %495 = arith.muli %494, %c3_i32_301 : i32
      %c0_i32_302 = arith.constant 0 : i32
      %496 = arith.addi %495, %c0_i32_302 : i32
      %497 = arith.index_cast %496 : i32 to index
      %498 = memref.load %arg1[%497] : memref<864xf32, #tpu.memory_space<smem>>
      %c1_i32_303 = arith.constant 1 : i32
      %499 = arith.addi %495, %c1_i32_303 : i32
      %500 = arith.index_cast %499 : i32 to index
      %501 = memref.load %arg1[%500] : memref<864xf32, #tpu.memory_space<smem>>
      %c2_i32_304 = arith.constant 2 : i32
      %502 = arith.addi %495, %c2_i32_304 : i32
      %503 = arith.index_cast %502 : i32 to index
      %504 = memref.load %arg1[%503] : memref<864xf32, #tpu.memory_space<smem>>
      %505 = vector.broadcast %498 : f32 to vector<14x7x8xf32>
      %506 = arith.mulf %505, %484 : vector<14x7x8xf32>
      %507 = arith.addf %473, %506 : vector<14x7x8xf32>
      %508 = vector.broadcast %501 : f32 to vector<14x7x8xf32>
      %509 = arith.mulf %508, %486 : vector<14x7x8xf32>
      %510 = arith.addf %507, %509 : vector<14x7x8xf32>
      %511 = vector.broadcast %504 : f32 to vector<14x7x8xf32>
      %512 = arith.mulf %511, %488 : vector<14x7x8xf32>
      %513 = arith.addf %510, %512 : vector<14x7x8xf32>
      %514 = vector.broadcast %498 : f32 to vector<14x7x8xf32>
      %515 = arith.mulf %514, %486 : vector<14x7x8xf32>
      %516 = arith.addf %482, %515 : vector<14x7x8xf32>
      %517 = vector.broadcast %501 : f32 to vector<14x7x8xf32>
      %518 = arith.mulf %517, %488 : vector<14x7x8xf32>
      %519 = arith.addf %516, %518 : vector<14x7x8xf32>
      %520 = vector.broadcast %504 : f32 to vector<14x7x8xf32>
      %521 = arith.mulf %520, %490 : vector<14x7x8xf32>
      %522 = arith.addf %519, %521 : vector<14x7x8xf32>
      %c4_305 = arith.constant 4 : index
      %c1_306 = arith.constant 1 : index
      %c0_307 = arith.constant 0 : index
      %c0_308 = arith.constant 0 : index
      %523 = vector.load %arg3[%c4_305, %c1_306, %c0_307, %c0_308] : memref<6x16x8x8xf32, #tpu.memory_space<vmem>>, vector<1x14x7x8xf32>
      %524 = vector.shape_cast %523 : vector<1x14x7x8xf32> to vector<14x7x8xf32>
      %c4_309 = arith.constant 4 : index
      %c1_310 = arith.constant 1 : index
      %c0_311 = arith.constant 0 : index
      %c0_312 = arith.constant 0 : index
      %525 = vector.load %arg4[%c4_309, %c1_310, %c0_311, %c0_312] : memref<6x16x8x8xf32, #tpu.memory_space<vmem>>, vector<1x14x7x8xf32>
      %526 = vector.shape_cast %525 : vector<1x14x7x8xf32> to vector<14x7x8xf32>
      %c4_313 = arith.constant 4 : index
      %c1_314 = arith.constant 1 : index
      %c1_315 = arith.constant 1 : index
      %c0_316 = arith.constant 0 : index
      %527 = vector.load %arg3[%c4_313, %c1_314, %c1_315, %c0_316] : memref<6x16x8x8xf32, #tpu.memory_space<vmem>>, vector<1x14x7x8xf32>
      %528 = vector.shape_cast %527 : vector<1x14x7x8xf32> to vector<14x7x8xf32>
      %c4_317 = arith.constant 4 : index
      %c1_318 = arith.constant 1 : index
      %c1_319 = arith.constant 1 : index
      %c0_320 = arith.constant 0 : index
      %529 = vector.load %arg4[%c4_317, %c1_318, %c1_319, %c0_320] : memref<6x16x8x8xf32, #tpu.memory_space<vmem>>, vector<1x14x7x8xf32>
      %530 = vector.shape_cast %529 : vector<1x14x7x8xf32> to vector<14x7x8xf32>
      %c6_i32_321 = arith.constant 6 : i32
      %531 = arith.muli %arg6, %c6_i32_321 : i32
      %c4_i32_322 = arith.constant 4 : i32
      %532 = arith.addi %531, %c4_i32_322 : i32
      %c3_i32_323 = arith.constant 3 : i32
      %533 = arith.muli %532, %c3_i32_323 : i32
      %c1_i32_324 = arith.constant 1 : i32
      %534 = arith.addi %533, %c1_i32_324 : i32
      %c3_i32_325 = arith.constant 3 : i32
      %535 = arith.muli %534, %c3_i32_325 : i32
      %c0_i32_326 = arith.constant 0 : i32
      %536 = arith.addi %535, %c0_i32_326 : i32
      %537 = arith.index_cast %536 : i32 to index
      %538 = memref.load %arg1[%537] : memref<864xf32, #tpu.memory_space<smem>>
      %c1_i32_327 = arith.constant 1 : i32
      %539 = arith.addi %535, %c1_i32_327 : i32
      %540 = arith.index_cast %539 : i32 to index
      %541 = memref.load %arg1[%540] : memref<864xf32, #tpu.memory_space<smem>>
      %c2_i32_328 = arith.constant 2 : i32
      %542 = arith.addi %535, %c2_i32_328 : i32
      %543 = arith.index_cast %542 : i32 to index
      %544 = memref.load %arg1[%543] : memref<864xf32, #tpu.memory_space<smem>>
      %545 = vector.broadcast %538 : f32 to vector<14x7x8xf32>
      %546 = arith.mulf %545, %524 : vector<14x7x8xf32>
      %547 = arith.addf %513, %546 : vector<14x7x8xf32>
      %548 = vector.broadcast %541 : f32 to vector<14x7x8xf32>
      %549 = arith.mulf %548, %526 : vector<14x7x8xf32>
      %550 = arith.addf %547, %549 : vector<14x7x8xf32>
      %551 = vector.broadcast %544 : f32 to vector<14x7x8xf32>
      %552 = arith.mulf %551, %528 : vector<14x7x8xf32>
      %553 = arith.addf %550, %552 : vector<14x7x8xf32>
      %554 = vector.broadcast %538 : f32 to vector<14x7x8xf32>
      %555 = arith.mulf %554, %526 : vector<14x7x8xf32>
      %556 = arith.addf %522, %555 : vector<14x7x8xf32>
      %557 = vector.broadcast %541 : f32 to vector<14x7x8xf32>
      %558 = arith.mulf %557, %528 : vector<14x7x8xf32>
      %559 = arith.addf %556, %558 : vector<14x7x8xf32>
      %560 = vector.broadcast %544 : f32 to vector<14x7x8xf32>
      %561 = arith.mulf %560, %530 : vector<14x7x8xf32>
      %562 = arith.addf %559, %561 : vector<14x7x8xf32>
      %c4_329 = arith.constant 4 : index
      %c2_330 = arith.constant 2 : index
      %c0_331 = arith.constant 0 : index
      %c0_332 = arith.constant 0 : index
      %563 = vector.load %arg3[%c4_329, %c2_330, %c0_331, %c0_332] : memref<6x16x8x8xf32, #tpu.memory_space<vmem>>, vector<1x14x7x8xf32>
      %564 = vector.shape_cast %563 : vector<1x14x7x8xf32> to vector<14x7x8xf32>
      %c4_333 = arith.constant 4 : index
      %c2_334 = arith.constant 2 : index
      %c0_335 = arith.constant 0 : index
      %c0_336 = arith.constant 0 : index
      %565 = vector.load %arg4[%c4_333, %c2_334, %c0_335, %c0_336] : memref<6x16x8x8xf32, #tpu.memory_space<vmem>>, vector<1x14x7x8xf32>
      %566 = vector.shape_cast %565 : vector<1x14x7x8xf32> to vector<14x7x8xf32>
      %c4_337 = arith.constant 4 : index
      %c2_338 = arith.constant 2 : index
      %c1_339 = arith.constant 1 : index
      %c0_340 = arith.constant 0 : index
      %567 = vector.load %arg3[%c4_337, %c2_338, %c1_339, %c0_340] : memref<6x16x8x8xf32, #tpu.memory_space<vmem>>, vector<1x14x7x8xf32>
      %568 = vector.shape_cast %567 : vector<1x14x7x8xf32> to vector<14x7x8xf32>
      %c4_341 = arith.constant 4 : index
      %c2_342 = arith.constant 2 : index
      %c1_343 = arith.constant 1 : index
      %c0_344 = arith.constant 0 : index
      %569 = vector.load %arg4[%c4_341, %c2_342, %c1_343, %c0_344] : memref<6x16x8x8xf32, #tpu.memory_space<vmem>>, vector<1x14x7x8xf32>
      %570 = vector.shape_cast %569 : vector<1x14x7x8xf32> to vector<14x7x8xf32>
      %c6_i32_345 = arith.constant 6 : i32
      %571 = arith.muli %arg6, %c6_i32_345 : i32
      %c4_i32_346 = arith.constant 4 : i32
      %572 = arith.addi %571, %c4_i32_346 : i32
      %c3_i32_347 = arith.constant 3 : i32
      %573 = arith.muli %572, %c3_i32_347 : i32
      %c2_i32_348 = arith.constant 2 : i32
      %574 = arith.addi %573, %c2_i32_348 : i32
      %c3_i32_349 = arith.constant 3 : i32
      %575 = arith.muli %574, %c3_i32_349 : i32
      %c0_i32_350 = arith.constant 0 : i32
      %576 = arith.addi %575, %c0_i32_350 : i32
      %577 = arith.index_cast %576 : i32 to index
      %578 = memref.load %arg1[%577] : memref<864xf32, #tpu.memory_space<smem>>
      %c1_i32_351 = arith.constant 1 : i32
      %579 = arith.addi %575, %c1_i32_351 : i32
      %580 = arith.index_cast %579 : i32 to index
      %581 = memref.load %arg1[%580] : memref<864xf32, #tpu.memory_space<smem>>
      %c2_i32_352 = arith.constant 2 : i32
      %582 = arith.addi %575, %c2_i32_352 : i32
      %583 = arith.index_cast %582 : i32 to index
      %584 = memref.load %arg1[%583] : memref<864xf32, #tpu.memory_space<smem>>
      %585 = vector.broadcast %578 : f32 to vector<14x7x8xf32>
      %586 = arith.mulf %585, %564 : vector<14x7x8xf32>
      %587 = arith.addf %553, %586 : vector<14x7x8xf32>
      %588 = vector.broadcast %581 : f32 to vector<14x7x8xf32>
      %589 = arith.mulf %588, %566 : vector<14x7x8xf32>
      %590 = arith.addf %587, %589 : vector<14x7x8xf32>
      %591 = vector.broadcast %584 : f32 to vector<14x7x8xf32>
      %592 = arith.mulf %591, %568 : vector<14x7x8xf32>
      %593 = arith.addf %590, %592 : vector<14x7x8xf32>
      %594 = vector.broadcast %578 : f32 to vector<14x7x8xf32>
      %595 = arith.mulf %594, %566 : vector<14x7x8xf32>
      %596 = arith.addf %562, %595 : vector<14x7x8xf32>
      %597 = vector.broadcast %581 : f32 to vector<14x7x8xf32>
      %598 = arith.mulf %597, %568 : vector<14x7x8xf32>
      %599 = arith.addf %596, %598 : vector<14x7x8xf32>
      %600 = vector.broadcast %584 : f32 to vector<14x7x8xf32>
      %601 = arith.mulf %600, %570 : vector<14x7x8xf32>
      %602 = arith.addf %599, %601 : vector<14x7x8xf32>
      %c5 = arith.constant 5 : index
      %c0_353 = arith.constant 0 : index
      %c0_354 = arith.constant 0 : index
      %c0_355 = arith.constant 0 : index
      %603 = vector.load %arg3[%c5, %c0_353, %c0_354, %c0_355] : memref<6x16x8x8xf32, #tpu.memory_space<vmem>>, vector<1x14x7x8xf32>
      %604 = vector.shape_cast %603 : vector<1x14x7x8xf32> to vector<14x7x8xf32>
      %c5_356 = arith.constant 5 : index
      %c0_357 = arith.constant 0 : index
      %c0_358 = arith.constant 0 : index
      %c0_359 = arith.constant 0 : index
      %605 = vector.load %arg4[%c5_356, %c0_357, %c0_358, %c0_359] : memref<6x16x8x8xf32, #tpu.memory_space<vmem>>, vector<1x14x7x8xf32>
      %606 = vector.shape_cast %605 : vector<1x14x7x8xf32> to vector<14x7x8xf32>
      %c5_360 = arith.constant 5 : index
      %c0_361 = arith.constant 0 : index
      %c1_362 = arith.constant 1 : index
      %c0_363 = arith.constant 0 : index
      %607 = vector.load %arg3[%c5_360, %c0_361, %c1_362, %c0_363] : memref<6x16x8x8xf32, #tpu.memory_space<vmem>>, vector<1x14x7x8xf32>
      %608 = vector.shape_cast %607 : vector<1x14x7x8xf32> to vector<14x7x8xf32>
      %c5_364 = arith.constant 5 : index
      %c0_365 = arith.constant 0 : index
      %c1_366 = arith.constant 1 : index
      %c0_367 = arith.constant 0 : index
      %609 = vector.load %arg4[%c5_364, %c0_365, %c1_366, %c0_367] : memref<6x16x8x8xf32, #tpu.memory_space<vmem>>, vector<1x14x7x8xf32>
      %610 = vector.shape_cast %609 : vector<1x14x7x8xf32> to vector<14x7x8xf32>
      %c6_i32_368 = arith.constant 6 : i32
      %611 = arith.muli %arg6, %c6_i32_368 : i32
      %c5_i32 = arith.constant 5 : i32
      %612 = arith.addi %611, %c5_i32 : i32
      %c3_i32_369 = arith.constant 3 : i32
      %613 = arith.muli %612, %c3_i32_369 : i32
      %c0_i32_370 = arith.constant 0 : i32
      %614 = arith.addi %613, %c0_i32_370 : i32
      %c3_i32_371 = arith.constant 3 : i32
      %615 = arith.muli %614, %c3_i32_371 : i32
      %c0_i32_372 = arith.constant 0 : i32
      %616 = arith.addi %615, %c0_i32_372 : i32
      %617 = arith.index_cast %616 : i32 to index
      %618 = memref.load %arg1[%617] : memref<864xf32, #tpu.memory_space<smem>>
      %c1_i32_373 = arith.constant 1 : i32
      %619 = arith.addi %615, %c1_i32_373 : i32
      %620 = arith.index_cast %619 : i32 to index
      %621 = memref.load %arg1[%620] : memref<864xf32, #tpu.memory_space<smem>>
      %c2_i32_374 = arith.constant 2 : i32
      %622 = arith.addi %615, %c2_i32_374 : i32
      %623 = arith.index_cast %622 : i32 to index
      %624 = memref.load %arg1[%623] : memref<864xf32, #tpu.memory_space<smem>>
      %625 = vector.broadcast %618 : f32 to vector<14x7x8xf32>
      %626 = arith.mulf %625, %604 : vector<14x7x8xf32>
      %627 = arith.addf %593, %626 : vector<14x7x8xf32>
      %628 = vector.broadcast %621 : f32 to vector<14x7x8xf32>
      %629 = arith.mulf %628, %606 : vector<14x7x8xf32>
      %630 = arith.addf %627, %629 : vector<14x7x8xf32>
      %631 = vector.broadcast %624 : f32 to vector<14x7x8xf32>
      %632 = arith.mulf %631, %608 : vector<14x7x8xf32>
      %633 = arith.addf %630, %632 : vector<14x7x8xf32>
      %634 = vector.broadcast %618 : f32 to vector<14x7x8xf32>
      %635 = arith.mulf %634, %606 : vector<14x7x8xf32>
      %636 = arith.addf %602, %635 : vector<14x7x8xf32>
      %637 = vector.broadcast %621 : f32 to vector<14x7x8xf32>
      %638 = arith.mulf %637, %608 : vector<14x7x8xf32>
      %639 = arith.addf %636, %638 : vector<14x7x8xf32>
      %640 = vector.broadcast %624 : f32 to vector<14x7x8xf32>
      %641 = arith.mulf %640, %610 : vector<14x7x8xf32>
      %642 = arith.addf %639, %641 : vector<14x7x8xf32>
      %c5_375 = arith.constant 5 : index
      %c1_376 = arith.constant 1 : index
      %c0_377 = arith.constant 0 : index
      %c0_378 = arith.constant 0 : index
      %643 = vector.load %arg3[%c5_375, %c1_376, %c0_377, %c0_378] : memref<6x16x8x8xf32, #tpu.memory_space<vmem>>, vector<1x14x7x8xf32>
      %644 = vector.shape_cast %643 : vector<1x14x7x8xf32> to vector<14x7x8xf32>
      %c5_379 = arith.constant 5 : index
      %c1_380 = arith.constant 1 : index
      %c0_381 = arith.constant 0 : index
      %c0_382 = arith.constant 0 : index
      %645 = vector.load %arg4[%c5_379, %c1_380, %c0_381, %c0_382] : memref<6x16x8x8xf32, #tpu.memory_space<vmem>>, vector<1x14x7x8xf32>
      %646 = vector.shape_cast %645 : vector<1x14x7x8xf32> to vector<14x7x8xf32>
      %c5_383 = arith.constant 5 : index
      %c1_384 = arith.constant 1 : index
      %c1_385 = arith.constant 1 : index
      %c0_386 = arith.constant 0 : index
      %647 = vector.load %arg3[%c5_383, %c1_384, %c1_385, %c0_386] : memref<6x16x8x8xf32, #tpu.memory_space<vmem>>, vector<1x14x7x8xf32>
      %648 = vector.shape_cast %647 : vector<1x14x7x8xf32> to vector<14x7x8xf32>
      %c5_387 = arith.constant 5 : index
      %c1_388 = arith.constant 1 : index
      %c1_389 = arith.constant 1 : index
      %c0_390 = arith.constant 0 : index
      %649 = vector.load %arg4[%c5_387, %c1_388, %c1_389, %c0_390] : memref<6x16x8x8xf32, #tpu.memory_space<vmem>>, vector<1x14x7x8xf32>
      %650 = vector.shape_cast %649 : vector<1x14x7x8xf32> to vector<14x7x8xf32>
      %c6_i32_391 = arith.constant 6 : i32
      %651 = arith.muli %arg6, %c6_i32_391 : i32
      %c5_i32_392 = arith.constant 5 : i32
      %652 = arith.addi %651, %c5_i32_392 : i32
      %c3_i32_393 = arith.constant 3 : i32
      %653 = arith.muli %652, %c3_i32_393 : i32
      %c1_i32_394 = arith.constant 1 : i32
      %654 = arith.addi %653, %c1_i32_394 : i32
      %c3_i32_395 = arith.constant 3 : i32
      %655 = arith.muli %654, %c3_i32_395 : i32
      %c0_i32_396 = arith.constant 0 : i32
      %656 = arith.addi %655, %c0_i32_396 : i32
      %657 = arith.index_cast %656 : i32 to index
      %658 = memref.load %arg1[%657] : memref<864xf32, #tpu.memory_space<smem>>
      %c1_i32_397 = arith.constant 1 : i32
      %659 = arith.addi %655, %c1_i32_397 : i32
      %660 = arith.index_cast %659 : i32 to index
      %661 = memref.load %arg1[%660] : memref<864xf32, #tpu.memory_space<smem>>
      %c2_i32_398 = arith.constant 2 : i32
      %662 = arith.addi %655, %c2_i32_398 : i32
      %663 = arith.index_cast %662 : i32 to index
      %664 = memref.load %arg1[%663] : memref<864xf32, #tpu.memory_space<smem>>
      %665 = vector.broadcast %658 : f32 to vector<14x7x8xf32>
      %666 = arith.mulf %665, %644 : vector<14x7x8xf32>
      %667 = arith.addf %633, %666 : vector<14x7x8xf32>
      %668 = vector.broadcast %661 : f32 to vector<14x7x8xf32>
      %669 = arith.mulf %668, %646 : vector<14x7x8xf32>
      %670 = arith.addf %667, %669 : vector<14x7x8xf32>
      %671 = vector.broadcast %664 : f32 to vector<14x7x8xf32>
      %672 = arith.mulf %671, %648 : vector<14x7x8xf32>
      %673 = arith.addf %670, %672 : vector<14x7x8xf32>
      %674 = vector.broadcast %658 : f32 to vector<14x7x8xf32>
      %675 = arith.mulf %674, %646 : vector<14x7x8xf32>
      %676 = arith.addf %642, %675 : vector<14x7x8xf32>
      %677 = vector.broadcast %661 : f32 to vector<14x7x8xf32>
      %678 = arith.mulf %677, %648 : vector<14x7x8xf32>
      %679 = arith.addf %676, %678 : vector<14x7x8xf32>
      %680 = vector.broadcast %664 : f32 to vector<14x7x8xf32>
      %681 = arith.mulf %680, %650 : vector<14x7x8xf32>
      %682 = arith.addf %679, %681 : vector<14x7x8xf32>
      %c5_399 = arith.constant 5 : index
      %c2_400 = arith.constant 2 : index
      %c0_401 = arith.constant 0 : index
      %c0_402 = arith.constant 0 : index
      %683 = vector.load %arg3[%c5_399, %c2_400, %c0_401, %c0_402] : memref<6x16x8x8xf32, #tpu.memory_space<vmem>>, vector<1x14x7x8xf32>
      %684 = vector.shape_cast %683 : vector<1x14x7x8xf32> to vector<14x7x8xf32>
      %c5_403 = arith.constant 5 : index
      %c2_404 = arith.constant 2 : index
      %c0_405 = arith.constant 0 : index
      %c0_406 = arith.constant 0 : index
      %685 = vector.load %arg4[%c5_403, %c2_404, %c0_405, %c0_406] : memref<6x16x8x8xf32, #tpu.memory_space<vmem>>, vector<1x14x7x8xf32>
      %686 = vector.shape_cast %685 : vector<1x14x7x8xf32> to vector<14x7x8xf32>
      %c5_407 = arith.constant 5 : index
      %c2_408 = arith.constant 2 : index
      %c1_409 = arith.constant 1 : index
      %c0_410 = arith.constant 0 : index
      %687 = vector.load %arg3[%c5_407, %c2_408, %c1_409, %c0_410] : memref<6x16x8x8xf32, #tpu.memory_space<vmem>>, vector<1x14x7x8xf32>
      %688 = vector.shape_cast %687 : vector<1x14x7x8xf32> to vector<14x7x8xf32>
      %c5_411 = arith.constant 5 : index
      %c2_412 = arith.constant 2 : index
      %c1_413 = arith.constant 1 : index
      %c0_414 = arith.constant 0 : index
      %689 = vector.load %arg4[%c5_411, %c2_412, %c1_413, %c0_414] : memref<6x16x8x8xf32, #tpu.memory_space<vmem>>, vector<1x14x7x8xf32>
      %690 = vector.shape_cast %689 : vector<1x14x7x8xf32> to vector<14x7x8xf32>
      %c6_i32_415 = arith.constant 6 : i32
      %691 = arith.muli %arg6, %c6_i32_415 : i32
      %c5_i32_416 = arith.constant 5 : i32
      %692 = arith.addi %691, %c5_i32_416 : i32
      %c3_i32_417 = arith.constant 3 : i32
      %693 = arith.muli %692, %c3_i32_417 : i32
      %c2_i32_418 = arith.constant 2 : i32
      %694 = arith.addi %693, %c2_i32_418 : i32
      %c3_i32_419 = arith.constant 3 : i32
      %695 = arith.muli %694, %c3_i32_419 : i32
      %c0_i32_420 = arith.constant 0 : i32
      %696 = arith.addi %695, %c0_i32_420 : i32
      %697 = arith.index_cast %696 : i32 to index
      %698 = memref.load %arg1[%697] : memref<864xf32, #tpu.memory_space<smem>>
      %c1_i32_421 = arith.constant 1 : i32
      %699 = arith.addi %695, %c1_i32_421 : i32
      %700 = arith.index_cast %699 : i32 to index
      %701 = memref.load %arg1[%700] : memref<864xf32, #tpu.memory_space<smem>>
      %c2_i32_422 = arith.constant 2 : i32
      %702 = arith.addi %695, %c2_i32_422 : i32
      %703 = arith.index_cast %702 : i32 to index
      %704 = memref.load %arg1[%703] : memref<864xf32, #tpu.memory_space<smem>>
      %705 = vector.broadcast %698 : f32 to vector<14x7x8xf32>
      %706 = arith.mulf %705, %684 : vector<14x7x8xf32>
      %707 = arith.addf %673, %706 : vector<14x7x8xf32>
      %708 = vector.broadcast %701 : f32 to vector<14x7x8xf32>
      %709 = arith.mulf %708, %686 : vector<14x7x8xf32>
      %710 = arith.addf %707, %709 : vector<14x7x8xf32>
      %711 = vector.broadcast %704 : f32 to vector<14x7x8xf32>
      %712 = arith.mulf %711, %688 : vector<14x7x8xf32>
      %713 = arith.addf %710, %712 : vector<14x7x8xf32>
      %714 = vector.broadcast %698 : f32 to vector<14x7x8xf32>
      %715 = arith.mulf %714, %686 : vector<14x7x8xf32>
      %716 = arith.addf %682, %715 : vector<14x7x8xf32>
      %717 = vector.broadcast %701 : f32 to vector<14x7x8xf32>
      %718 = arith.mulf %717, %688 : vector<14x7x8xf32>
      %719 = arith.addf %716, %718 : vector<14x7x8xf32>
      %720 = vector.broadcast %704 : f32 to vector<14x7x8xf32>
      %721 = arith.mulf %720, %690 : vector<14x7x8xf32>
      %722 = arith.addf %719, %721 : vector<14x7x8xf32>
      %723 = arith.index_cast %arg6 : i32 to index
      %724 = memref.load %arg2[%723] : memref<16xf32, #tpu.memory_space<smem>>
      %725 = vector.broadcast %724 : f32 to vector<14x7x8xf32>
      %726 = arith.addf %713, %725 : vector<14x7x8xf32>
      %cst_423 = arith.constant 0.000000e+00 : f32
      %727 = vector.broadcast %cst_423 : f32 to vector<14x7x8xf32>
      %728 = arith.maximumf %726, %727 : vector<14x7x8xf32>
      %729 = vector.broadcast %724 : f32 to vector<14x7x8xf32>
      %730 = arith.addf %722, %729 : vector<14x7x8xf32>
      %cst_424 = arith.constant 0.000000e+00 : f32
      %731 = vector.broadcast %cst_424 : f32 to vector<14x7x8xf32>
      %732 = arith.maximumf %730, %731 : vector<14x7x8xf32>
      %733 = arith.maximumf %728, %732 : vector<14x7x8xf32>
      %734 = vector.extract_strided_slice %733 {offsets = [0, 0, 0], sizes = [1, 7, 8], strides = [1, 1, 1]} : vector<14x7x8xf32> to vector<1x7x8xf32>
      %735 = vector.shape_cast %734 : vector<1x7x8xf32> to vector<7x8xf32>
      %736 = vector.extract_strided_slice %733 {offsets = [1, 0, 0], sizes = [1, 7, 8], strides = [1, 1, 1]} : vector<14x7x8xf32> to vector<1x7x8xf32>
      %737 = vector.shape_cast %736 : vector<1x7x8xf32> to vector<7x8xf32>
      %738 = arith.maximumf %735, %737 : vector<7x8xf32>
      %739 = arith.index_cast %arg6 : i32 to index
      %c0_425 = arith.constant 0 : index
      %c0_426 = arith.constant 0 : index
      %c0_427 = arith.constant 0 : index
      %740 = vector.load %arg5[%739, %c0_425, %c0_426, %c0_427] : memref<16x7x7x8xf32, #tpu.memory_space<vmem>>, vector<1x1x7x8xf32>
      %741 = vector.shape_cast %740 : vector<1x1x7x8xf32> to vector<7x8xf32>
      %742 = vector.shape_cast %738 : vector<7x8xf32> to vector<1x1x7x8xf32>
      tpu.vector_store %arg5[%739, %c0_425, %c0_426, %c0_427], %742 {strides = array<i32>} : memref<16x7x7x8xf32, #tpu.memory_space<vmem>>, vector<1x1x7x8xf32>,
      %743 = vector.extract_strided_slice %733 {offsets = [2, 0, 0], sizes = [1, 7, 8], strides = [1, 1, 1]} : vector<14x7x8xf32> to vector<1x7x8xf32>
      %744 = vector.shape_cast %743 : vector<1x7x8xf32> to vector<7x8xf32>
      %745 = vector.extract_strided_slice %733 {offsets = [3, 0, 0], sizes = [1, 7, 8], strides = [1, 1, 1]} : vector<14x7x8xf32> to vector<1x7x8xf32>
      %746 = vector.shape_cast %745 : vector<1x7x8xf32> to vector<7x8xf32>
      %747 = arith.maximumf %744, %746 : vector<7x8xf32>
      %748 = arith.index_cast %arg6 : i32 to index
      %c1_428 = arith.constant 1 : index
      %c0_429 = arith.constant 0 : index
      %c0_430 = arith.constant 0 : index
      %749 = vector.load %arg5[%748, %c1_428, %c0_429, %c0_430] : memref<16x7x7x8xf32, #tpu.memory_space<vmem>>, vector<1x1x7x8xf32>
      %750 = vector.shape_cast %749 : vector<1x1x7x8xf32> to vector<7x8xf32>
      %751 = vector.shape_cast %747 : vector<7x8xf32> to vector<1x1x7x8xf32>
      tpu.vector_store %arg5[%748, %c1_428, %c0_429, %c0_430], %751 {strides = array<i32>} : memref<16x7x7x8xf32, #tpu.memory_space<vmem>>, vector<1x1x7x8xf32>,
      %752 = vector.extract_strided_slice %733 {offsets = [4, 0, 0], sizes = [1, 7, 8], strides = [1, 1, 1]} : vector<14x7x8xf32> to vector<1x7x8xf32>
      %753 = vector.shape_cast %752 : vector<1x7x8xf32> to vector<7x8xf32>
      %754 = vector.extract_strided_slice %733 {offsets = [5, 0, 0], sizes = [1, 7, 8], strides = [1, 1, 1]} : vector<14x7x8xf32> to vector<1x7x8xf32>
      %755 = vector.shape_cast %754 : vector<1x7x8xf32> to vector<7x8xf32>
      %756 = arith.maximumf %753, %755 : vector<7x8xf32>
      %757 = arith.index_cast %arg6 : i32 to index
      %c2_431 = arith.constant 2 : index
      %c0_432 = arith.constant 0 : index
      %c0_433 = arith.constant 0 : index
      %758 = vector.load %arg5[%757, %c2_431, %c0_432, %c0_433] : memref<16x7x7x8xf32, #tpu.memory_space<vmem>>, vector<1x1x7x8xf32>
      %759 = vector.shape_cast %758 : vector<1x1x7x8xf32> to vector<7x8xf32>
      %760 = vector.shape_cast %756 : vector<7x8xf32> to vector<1x1x7x8xf32>
      tpu.vector_store %arg5[%757, %c2_431, %c0_432, %c0_433], %760 {strides = array<i32>} : memref<16x7x7x8xf32, #tpu.memory_space<vmem>>, vector<1x1x7x8xf32>,
      %761 = vector.extract_strided_slice %733 {offsets = [6, 0, 0], sizes = [1, 7, 8], strides = [1, 1, 1]} : vector<14x7x8xf32> to vector<1x7x8xf32>
      %762 = vector.shape_cast %761 : vector<1x7x8xf32> to vector<7x8xf32>
      %763 = vector.extract_strided_slice %733 {offsets = [7, 0, 0], sizes = [1, 7, 8], strides = [1, 1, 1]} : vector<14x7x8xf32> to vector<1x7x8xf32>
      %764 = vector.shape_cast %763 : vector<1x7x8xf32> to vector<7x8xf32>
      %765 = arith.maximumf %762, %764 : vector<7x8xf32>
      %766 = arith.index_cast %arg6 : i32 to index
      %c3_434 = arith.constant 3 : index
      %c0_435 = arith.constant 0 : index
      %c0_436 = arith.constant 0 : index
      %767 = vector.load %arg5[%766, %c3_434, %c0_435, %c0_436] : memref<16x7x7x8xf32, #tpu.memory_space<vmem>>, vector<1x1x7x8xf32>
      %768 = vector.shape_cast %767 : vector<1x1x7x8xf32> to vector<7x8xf32>
      %769 = vector.shape_cast %765 : vector<7x8xf32> to vector<1x1x7x8xf32>
      tpu.vector_store %arg5[%766, %c3_434, %c0_435, %c0_436], %769 {strides = array<i32>} : memref<16x7x7x8xf32, #tpu.memory_space<vmem>>, vector<1x1x7x8xf32>,
      %770 = vector.extract_strided_slice %733 {offsets = [8, 0, 0], sizes = [1, 7, 8], strides = [1, 1, 1]} : vector<14x7x8xf32> to vector<1x7x8xf32>
      %771 = vector.shape_cast %770 : vector<1x7x8xf32> to vector<7x8xf32>
      %772 = vector.extract_strided_slice %733 {offsets = [9, 0, 0], sizes = [1, 7, 8], strides = [1, 1, 1]} : vector<14x7x8xf32> to vector<1x7x8xf32>
      %773 = vector.shape_cast %772 : vector<1x7x8xf32> to vector<7x8xf32>
      %774 = arith.maximumf %771, %773 : vector<7x8xf32>
      %775 = arith.index_cast %arg6 : i32 to index
      %c4_437 = arith.constant 4 : index
      %c0_438 = arith.constant 0 : index
      %c0_439 = arith.constant 0 : index
      %776 = vector.load %arg5[%775, %c4_437, %c0_438, %c0_439] : memref<16x7x7x8xf32, #tpu.memory_space<vmem>>, vector<1x1x7x8xf32>
      %777 = vector.shape_cast %776 : vector<1x1x7x8xf32> to vector<7x8xf32>
      %778 = vector.shape_cast %774 : vector<7x8xf32> to vector<1x1x7x8xf32>
      tpu.vector_store %arg5[%775, %c4_437, %c0_438, %c0_439], %778 {strides = array<i32>} : memref<16x7x7x8xf32, #tpu.memory_space<vmem>>, vector<1x1x7x8xf32>,
      %779 = vector.extract_strided_slice %733 {offsets = [10, 0, 0], sizes = [1, 7, 8], strides = [1, 1, 1]} : vector<14x7x8xf32> to vector<1x7x8xf32>
      %780 = vector.shape_cast %779 : vector<1x7x8xf32> to vector<7x8xf32>
      %781 = vector.extract_strided_slice %733 {offsets = [11, 0, 0], sizes = [1, 7, 8], strides = [1, 1, 1]} : vector<14x7x8xf32> to vector<1x7x8xf32>
      %782 = vector.shape_cast %781 : vector<1x7x8xf32> to vector<7x8xf32>
      %783 = arith.maximumf %780, %782 : vector<7x8xf32>
      %784 = arith.index_cast %arg6 : i32 to index
      %c5_440 = arith.constant 5 : index
      %c0_441 = arith.constant 0 : index
      %c0_442 = arith.constant 0 : index
      %785 = vector.load %arg5[%784, %c5_440, %c0_441, %c0_442] : memref<16x7x7x8xf32, #tpu.memory_space<vmem>>, vector<1x1x7x8xf32>
      %786 = vector.shape_cast %785 : vector<1x1x7x8xf32> to vector<7x8xf32>
      %787 = vector.shape_cast %783 : vector<7x8xf32> to vector<1x1x7x8xf32>
      tpu.vector_store %arg5[%784, %c5_440, %c0_441, %c0_442], %787 {strides = array<i32>} : memref<16x7x7x8xf32, #tpu.memory_space<vmem>>, vector<1x1x7x8xf32>,
      %788 = vector.extract_strided_slice %733 {offsets = [12, 0, 0], sizes = [1, 7, 8], strides = [1, 1, 1]} : vector<14x7x8xf32> to vector<1x7x8xf32>
      %789 = vector.shape_cast %788 : vector<1x7x8xf32> to vector<7x8xf32>
      %790 = vector.extract_strided_slice %733 {offsets = [13, 0, 0], sizes = [1, 7, 8], strides = [1, 1, 1]} : vector<14x7x8xf32> to vector<1x7x8xf32>
      %791 = vector.shape_cast %790 : vector<1x7x8xf32> to vector<7x8xf32>
      %792 = arith.maximumf %789, %791 : vector<7x8xf32>
      %793 = arith.index_cast %arg6 : i32 to index
      %c6 = arith.constant 6 : index
      %c0_443 = arith.constant 0 : index
      %c0_444 = arith.constant 0 : index
      %794 = vector.load %arg5[%793, %c6, %c0_443, %c0_444] : memref<16x7x7x8xf32, #tpu.memory_space<vmem>>, vector<1x1x7x8xf32>
      %795 = vector.shape_cast %794 : vector<1x1x7x8xf32> to vector<7x8xf32>
      %796 = vector.shape_cast %792 : vector<7x8xf32> to vector<1x1x7x8xf32>
      tpu.vector_store %arg5[%793, %c6, %c0_443, %c0_444], %796 {strides = array<i32>} : memref<16x7x7x8xf32, #tpu.memory_space<vmem>>, vector<1x1x7x8xf32>,
    }
    %c16_i32_0 = arith.constant 16 : i32
    return
  }
  func.func @transform_0(%arg0: i32) -> i32 {
    %c0_i32 = arith.constant 0 : i32
    %c0_i32_0 = arith.constant 0 : i32
    return %c0_i32 : i32
  }
  func.func @transform_1(%arg0: i32) -> i32 {
    %c0_i32 = arith.constant 0 : i32
    %c0_i32_0 = arith.constant 0 : i32
    return %c0_i32 : i32
  }
  func.func @transform_2(%arg0: i32) -> (i32, i32, i32, i32) {
    %c0_i32 = arith.constant 0 : i32
    %c0_i32_0 = arith.constant 0 : i32
    %c0_i32_1 = arith.constant 0 : i32
    %c0_i32_2 = arith.constant 0 : i32
    return %c0_i32, %c0_i32_0, %c0_i32_1, %arg0 : i32, i32, i32, i32
  }
  func.func @transform_3(%arg0: i32) -> (i32, i32, i32, i32) {
    %c0_i32 = arith.constant 0 : i32
    %c0_i32_0 = arith.constant 0 : i32
    %c0_i32_1 = arith.constant 0 : i32
    %c0_i32_2 = arith.constant 0 : i32
    return %c0_i32, %c0_i32_0, %c0_i32_1, %arg0 : i32, i32, i32, i32
  }
  func.func @transform_4(%arg0: i32) -> (i32, i32, i32, i32) {
    %c0_i32 = arith.constant 0 : i32
    %c0_i32_0 = arith.constant 0 : i32
    %c0_i32_1 = arith.constant 0 : i32
    %c0_i32_2 = arith.constant 0 : i32
    return %c0_i32, %c0_i32_0, %c0_i32_1, %arg0 : i32, i32, i32, i32
  }
}

module attributes {stable_mosaic.version = 11 : i64} {
  func.func @_fc_kernel(%arg0: i32, %arg1: memref<10x784xf32, #tpu.memory_space<vmem>>, %arg2: memref<10x1xf32, #tpu.memory_space<vmem>>, %arg3: memref<784x8xf32, #tpu.memory_space<vmem>>, %arg4: memref<10x8xf32, #tpu.memory_space<vmem>>) attributes {dimension_semantics = [#tpu.dimension_semantics<parallel>], iteration_bounds = array<i64: 1>, scalar_prefetch = 0 : i64, scratch_operands = 0 : i64, tpu.core_type = #tpu.core_type<tc>, window_params = [{pipeline_mode = #tpu.pipeline_mode<synchronous>, transform_indices = @transform_0, window_bounds = array<i64: 10, 784>}, {pipeline_mode = #tpu.pipeline_mode<synchronous>, transform_indices = @transform_1, window_bounds = array<i64: 10, 1>}, {transform_indices = @transform_2, window_bounds = array<i64: 784, 8>}, {transform_indices = @transform_3, window_bounds = array<i64: 10, 8>}]} {
    %c0 = arith.constant 0 : index
    %c0_0 = arith.constant 0 : index
    %0 = vector.load %arg1[%c0, %c0_0] : memref<10x784xf32, #tpu.memory_space<vmem>>, vector<10x784xf32>
    %c0_1 = arith.constant 0 : index
    %c0_2 = arith.constant 0 : index
    %1 = vector.load %arg3[%c0_1, %c0_2] : memref<784x8xf32, #tpu.memory_space<vmem>>, vector<784x8xf32>
    %cst = arith.constant dense<0.000000e+00> : vector<10x8xf32>
    %2 = tpu.matmul %0, %1, %cst {dimension_numbers = #tpu.dot_dimension_numbers<[1], [0], [0], [1], [0, 0, 1, 1], [], []>} : vector<10x784xf32>, vector<784x8xf32>, vector<10x8xf32> -> vector<10x8xf32>
    %c0_3 = arith.constant 0 : index
    %c0_4 = arith.constant 0 : index
    %3 = vector.load %arg2[%c0_3, %c0_4] : memref<10x1xf32, #tpu.memory_space<vmem>>, vector<10x1xf32>
    %4 = vector.broadcast %3 : vector<10x1xf32> to vector<10x8xf32>
    %5 = arith.addf %2, %4 : vector<10x8xf32>
    %c0_5 = arith.constant 0 : index
    %c0_6 = arith.constant 0 : index
    %6 = vector.load %arg4[%c0_5, %c0_6] : memref<10x8xf32, #tpu.memory_space<vmem>>, vector<10x8xf32>
    tpu.vector_store %arg4[%c0_5, %c0_6], %5 {strides = array<i32>} : memref<10x8xf32, #tpu.memory_space<vmem>>, vector<10x8xf32>,
    return
  }
  func.func @transform_0(%arg0: i32) -> (i32, i32) {
    %c0_i32 = arith.constant 0 : i32
    %c0_i32_0 = arith.constant 0 : i32
    %c0_i32_1 = arith.constant 0 : i32
    return %c0_i32, %c0_i32_0 : i32, i32
  }
  func.func @transform_1(%arg0: i32) -> (i32, i32) {
    %c0_i32 = arith.constant 0 : i32
    %c0_i32_0 = arith.constant 0 : i32
    %c0_i32_1 = arith.constant 0 : i32
    return %c0_i32, %c0_i32_0 : i32, i32
  }
  func.func @transform_2(%arg0: i32) -> (i32, i32) {
    %c0_i32 = arith.constant 0 : i32
    %c0_i32_0 = arith.constant 0 : i32
    return %c0_i32, %arg0 : i32, i32
  }
  func.func @transform_3(%arg0: i32) -> (i32, i32) {
    %c0_i32 = arith.constant 0 : i32
    %c0_i32_0 = arith.constant 0 : i32
    return %c0_i32, %arg0 : i32, i32
  }
}

</mosaic_0001>

<llo_original>
// kernel: mnist_cnn_forward.5
$region0: #{mnist_cnn_forward.5}
  #allocation0 [shape = 'u32[]', space=smem, size = 0x4, offset = 0x4, fixed_abs, tag = 'smem constant byte address 0x4 - core index']
  #allocation1 [shape = 'u32[144,128]{1,0:T(1,128)}', space=vmem, size = 0x12000, scoped, tag = 'internal scratch']
  %s0 = inlined_call_operand.vmem [shape: f32[10,784], index: 0, kind: input, shape index: {}]
  %s1 = inlined_call_operand.vmem [shape: f32[10,1], index: 1, kind: input, shape index: {}]
  %s2 = inlined_call_operand.vmem [shape: f32[784,8], index: 2, kind: input, shape index: {}]
  %s3 = inlined_call_operand.vmem [shape: f32[10,8], index: 3, kind: output, shape index: {}]
  %s4 = sld [smem:[#allocation0]]
  $region22: #{mnist_cnn_forward.5} parent=0
    _
  %s6 = ssub.s32 1, %s4
  %s7 = scalar_select 0, %s6, %s4
  // Predicated region
  $region2: #{mnist_cnn_forward.5} parent=0 // pred_check
    _
  $region3: #{mnist_cnn_forward.5} parent=0 // pred_check_branch
    %9 = sbr.rel (0) target = $region5
  $region4: #{mnist_cnn_forward.5} parent=0 // pred_region
    _
  $region5: #{mnist_cnn_forward.5} parent=0 // pred_fallthru
    _
  // Predicated region
  $region6: #{mnist_cnn_forward.5} parent=0 // pred_check
    _
  $region7: #{mnist_cnn_forward.5} parent=0 // pred_check_branch
    %11 = sbr.rel (0) target = $region9
  $region8: #{mnist_cnn_forward.5} parent=0 // pred_region
    _
  $region9: #{mnist_cnn_forward.5} parent=0 // pred_fallthru
    _
  // Predicated region
  $region10: #{mnist_cnn_forward.5} parent=0 // pred_check
    _
  $region11: #{mnist_cnn_forward.5} parent=0 // pred_check_branch
    %13 = sbr.rel (0) target = $region13
  $region12: #{mnist_cnn_forward.5} parent=0 // pred_region
    _
  $region13: #{mnist_cnn_forward.5} parent=0 // pred_fallthru
    _
  %v14 = vld [vmem:[%s0] sm:$0xff]
  %v15 = vld [vmem:[%s0 + $0x8] sm:$0xff]
  %v16 = vld [vmem:[%s0 + $0x10] sm:$0xff]
  %v17 = vld [vmem:[%s0 + $0x18] sm:$0xff]
  %v18 = vld [vmem:[%s0 + $0x20] sm:$0xff]
  %v19 = vld [vmem:[%s0 + $0x28] sm:$0xff]
  %v20 = vld [vmem:[%s0 + $0x30] sm:$0xff]
  %v21 = vld [vmem:[%s0 + $0x38] sm:$0x3]
  %v22 = vld [vmem:[%s0 + $0x40] sm:$0x3]
  %v23 = vld [vmem:[%s0 + $0x48] sm:$0x3]
  %v24 = vld [vmem:[%s0 + $0x50] sm:$0x3]
  %v25 = vld [vmem:[%s0 + $0x58] sm:$0x3]
  %v26 = vld [vmem:[%s0 + $0x60] sm:$0x3]
  %v27 = vld [vmem:[%s0 + $0x68] sm:$0x3]
  %v28 = vld [vmem:[%s2] sm:$0xff]
  %v29 = vld [vmem:[%s2 + $0x8] sm:$0xff]
  %v30 = vld [vmem:[%s2 + $0x10] sm:$0xff]
  %v31 = vld [vmem:[%s2 + $0x18] sm:$0xff]
  %v32 = vld [vmem:[%s2 + $0x20] sm:$0xff]
  %v33 = vld [vmem:[%s2 + $0x28] sm:$0xff]
  %v34 = vld [vmem:[%s2 + $0x30] sm:$0xff]
  %v35 = vld [vmem:[%s2 + $0x38] sm:$0xff]
  %v36 = vld [vmem:[%s2 + $0x40] sm:$0xff]
  %v37 = vld [vmem:[%s2 + $0x48] sm:$0xff]
  %v38 = vld [vmem:[%s2 + $0x50] sm:$0xff]
  %v39 = vld [vmem:[%s2 + $0x58] sm:$0xff]
  %v40 = vld [vmem:[%s2 + $0x60] sm:$0xff]
  %v41 = vld [vmem:[%s2 + $0x68] sm:$0xff]
  %v42 = vld [vmem:[%s2 + $0x70] sm:$0xff]
  %v43 = vld [vmem:[%s2 + $0x78] sm:$0xff]
  %v44 = vld [vmem:[%s2 + $0x80] sm:$0xff]
  %v45 = vld [vmem:[%s2 + $0x88] sm:$0xff]
  %v46 = vld [vmem:[%s2 + $0x90] sm:$0xff]
  %v47 = vld [vmem:[%s2 + $0x98] sm:$0xff]
  %v48 = vld [vmem:[%s2 + $0xa0] sm:$0xff]
  %v49 = vld [vmem:[%s2 + $0xa8] sm:$0xff]
  %v50 = vld [vmem:[%s2 + $0xb0] sm:$0xff]
  %v51 = vld [vmem:[%s2 + $0xb8] sm:$0xff]
  %v52 = vld [vmem:[%s2 + $0xc0] sm:$0xff]
  %v53 = vld [vmem:[%s2 + $0xc8] sm:$0xff]
  %v54 = vld [vmem:[%s2 + $0xd0] sm:$0xff]
  %v55 = vld [vmem:[%s2 + $0xd8] sm:$0xff]
  %v56 = vld [vmem:[%s2 + $0xe0] sm:$0xff]
  %v57 = vld [vmem:[%s2 + $0xe8] sm:$0xff]
  %v58 = vld [vmem:[%s2 + $0xf0] sm:$0xff]
  %v59 = vld [vmem:[%s2 + $0xf8] sm:$0xff]
  %v60 = vld [vmem:[%s2 + $0x100] sm:$0xff]
  %v61 = vld [vmem:[%s2 + $0x108] sm:$0xff]
  %v62 = vld [vmem:[%s2 + $0x110] sm:$0xff]
  %v63 = vld [vmem:[%s2 + $0x118] sm:$0xff]
  %v64 = vld [vmem:[%s2 + $0x120] sm:$0xff]
  %v65 = vld [vmem:[%s2 + $0x128] sm:$0xff]
  %v66 = vld [vmem:[%s2 + $0x130] sm:$0xff]
  %v67 = vld [vmem:[%s2 + $0x138] sm:$0xff]
  %v68 = vld [vmem:[%s2 + $0x140] sm:$0xff]
  %v69 = vld [vmem:[%s2 + $0x148] sm:$0xff]
  %v70 = vld [vmem:[%s2 + $0x150] sm:$0xff]
  %v71 = vld [vmem:[%s2 + $0x158] sm:$0xff]
  %v72 = vld [vmem:[%s2 + $0x160] sm:$0xff]
  %v73 = vld [vmem:[%s2 + $0x168] sm:$0xff]
  %v74 = vld [vmem:[%s2 + $0x170] sm:$0xff]
  %v75 = vld [vmem:[%s2 + $0x178] sm:$0xff]
  %v76 = vld [vmem:[%s2 + $0x180] sm:$0xff]
  %v77 = vld [vmem:[%s2 + $0x188] sm:$0xff]
  %v78 = vld [vmem:[%s2 + $0x190] sm:$0xff]
  %v79 = vld [vmem:[%s2 + $0x198] sm:$0xff]
  %v80 = vld [vmem:[%s2 + $0x1a0] sm:$0xff]
  %v81 = vld [vmem:[%s2 + $0x1a8] sm:$0xff]
  %v82 = vld [vmem:[%s2 + $0x1b0] sm:$0xff]
  %v83 = vld [vmem:[%s2 + $0x1b8] sm:$0xff]
  %v84 = vld [vmem:[%s2 + $0x1c0] sm:$0xff]
  %v85 = vld [vmem:[%s2 + $0x1c8] sm:$0xff]
  %v86 = vld [vmem:[%s2 + $0x1d0] sm:$0xff]
  %v87 = vld [vmem:[%s2 + $0x1d8] sm:$0xff]
  %v88 = vld [vmem:[%s2 + $0x1e0] sm:$0xff]
  %v89 = vld [vmem:[%s2 + $0x1e8] sm:$0xff]
  %v90 = vld [vmem:[%s2 + $0x1f0] sm:$0xff]
  %v91 = vld [vmem:[%s2 + $0x1f8] sm:$0xff]
  %v92 = vld [vmem:[%s2 + $0x200] sm:$0xff]
  %v93 = vld [vmem:[%s2 + $0x208] sm:$0xff]
  %v94 = vld [vmem:[%s2 + $0x210] sm:$0xff]
  %v95 = vld [vmem:[%s2 + $0x218] sm:$0xff]
  %v96 = vld [vmem:[%s2 + $0x220] sm:$0xff]
  %v97 = vld [vmem:[%s2 + $0x228] sm:$0xff]
  %v98 = vld [vmem:[%s2 + $0x230] sm:$0xff]
  %v99 = vld [vmem:[%s2 + $0x238] sm:$0xff]
  %v100 = vld [vmem:[%s2 + $0x240] sm:$0xff]
  %v101 = vld [vmem:[%s2 + $0x248] sm:$0xff]
  %v102 = vld [vmem:[%s2 + $0x250] sm:$0xff]
  %v103 = vld [vmem:[%s2 + $0x258] sm:$0xff]
  %v104 = vld [vmem:[%s2 + $0x260] sm:$0xff]
  %v105 = vld [vmem:[%s2 + $0x268] sm:$0xff]
  %v106 = vld [vmem:[%s2 + $0x270] sm:$0xff]
  %v107 = vld [vmem:[%s2 + $0x278] sm:$0xff]
  %v108 = vld [vmem:[%s2 + $0x280] sm:$0xff]
  %v109 = vld [vmem:[%s2 + $0x288] sm:$0xff]
  %v110 = vld [vmem:[%s2 + $0x290] sm:$0xff]
  %v111 = vld [vmem:[%s2 + $0x298] sm:$0xff]
  %v112 = vld [vmem:[%s2 + $0x2a0] sm:$0xff]
  %v113 = vld [vmem:[%s2 + $0x2a8] sm:$0xff]
  %v114 = vld [vmem:[%s2 + $0x2b0] sm:$0xff]
  %v115 = vld [vmem:[%s2 + $0x2b8] sm:$0xff]
  %v116 = vld [vmem:[%s2 + $0x2c0] sm:$0xff]
  %v117 = vld [vmem:[%s2 + $0x2c8] sm:$0xff]
  %v118 = vld [vmem:[%s2 + $0x2d0] sm:$0xff]
  %v119 = vld [vmem:[%s2 + $0x2d8] sm:$0xff]
  %v120 = vld [vmem:[%s2 + $0x2e0] sm:$0xff]
  %v121 = vld [vmem:[%s2 + $0x2e8] sm:$0xff]
  %v122 = vld [vmem:[%s2 + $0x2f0] sm:$0xff]
  %v123 = vld [vmem:[%s2 + $0x2f8] sm:$0xff]
  %v124 = vld [vmem:[%s2 + $0x300] sm:$0xff]
  %v125 = vld [vmem:[%s2 + $0x308] sm:$0xff]
  %v126 = vld [vmem:[%s1] sm:$0xff]
  %v127 = vld [vmem:[%s1 + $0x8] sm:$0x3]
  %129 = vset.pattern.permute.xlu0 0
  %130 = vperm.xlu0 %129, %v126
  %v131 = vpop.permute.xlu0 %130
  %134 = vset.pattern.permute.xlu0 0
  %135 = vperm.xlu0 %134, %v127
  %v136 = vpop.permute.xlu0 %135
  %vm138 = vcmask 130048
  %v140 = vsel %vm138, %v20, 0
  %v143 = vsel %vm138, %v27, 0
  %145 = vmatprep.subr.mxu0 0.0
  %146 = vmatpush1.msra.mxu0 %v28
  %147 = vmatprep.subr.mxu0 0.0
  %148 = vmatpush1.msra.mxu0 %v29
  %149 = vmatprep.subr.mxu0 0.0
  %150 = vmatpush1.msra.mxu0 %v30
  %151 = vmatprep.subr.mxu0 0.0
  %152 = vmatpush1.msra.mxu0 %v31
  %153 = vmatprep.subr.mxu0 0.0
  %154 = vmatpush1.msra.mxu0 %v32
  %155 = vmatprep.subr.mxu0 0.0
  %156 = vmatpush1.msra.mxu0 %v33
  %157 = vmatprep.subr.mxu0 0.0
  %158 = vmatpush1.msra.mxu0 %v34
  %159 = vmatprep.subr.mxu0 0.0
  %160 = vmatpush1.msra.mxu0 %v35
  %161 = vmatprep.subr.mxu0 0.0
  %162 = vmatpush1.msra.mxu0 %v36
  %163 = vmatprep.subr.mxu0 0.0
  %164 = vmatpush1.msra.mxu0 %v37
  %165 = vmatprep.subr.mxu0 0.0
  %166 = vmatpush1.msra.mxu0 %v38
  %167 = vmatprep.subr.mxu0 0.0
  %168 = vmatpush1.msra.mxu0 %v39
  %169 = vmatprep.subr.mxu0 0.0
  %170 = vmatpush1.msra.mxu0 %v40
  %171 = vmatprep.subr.mxu0 0.0
  %172 = vmatpush1.msra.mxu0 %v41
  %173 = vmatprep.subr.mxu0 0.0
  %174 = vmatpush1.msra.mxu0 %v42
  %175 = vmatprep.subr.mxu0 0.0
  %176 = vmatpush1.msra.mxu0 %v43
  %177 = vmatprep.subr.mxu0 0.0
  %178 = vmatpush1.msra.mxu0 %v44
  %179 = vmatprep.subr.mxu0 0.0
  %180 = vmatpush1.msra.mxu0 %v45
  %181 = vmatprep.subr.mxu0 0.0
  %182 = vmatpush1.msra.mxu0 %v46
  %183 = vmatprep.subr.mxu0 0.0
  %184 = vmatpush1.msra.mxu0 %v47
  %185 = vmatprep.subr.mxu0 0.0
  %186 = vmatpush1.msra.mxu0 %v48
  %187 = vmatprep.subr.mxu0 0.0
  %188 = vmatpush1.msra.mxu0 %v49
  %189 = vmatprep.subr.mxu0 0.0
  %190 = vmatpush1.msra.mxu0 %v50
  %191 = vmatprep.subr.mxu0 0.0
  %192 = vmatpush1.msra.mxu0 %v51
  %193 = vmatprep.subr.mxu0 0.0
  %194 = vmatpush1.msra.mxu0 %v52
  %195 = vmatprep.subr.mxu0 0.0
  %196 = vmatpush1.msra.mxu0 %v53
  %197 = vmatprep.subr.mxu0 0.0
  %198 = vmatpush1.msra.mxu0 %v54
  %199 = vmatprep.subr.mxu0 0.0
  %200 = vmatpush1.msra.mxu0 %v55
  %201 = vmatprep.subr.mxu0 0.0
  %202 = vmatpush1.msra.mxu0 %v56
  %203 = vmatprep.subr.mxu0 0.0
  %204 = vmatpush1.msra.mxu0 %v57
  %205 = vmatprep.subr.mxu0 0.0
  %206 = vmatpush1.msra.mxu0 %v58
  %207 = vmatprep.subr.mxu0 0.0
  %208 = vmatpush1.msra.mxu0 %v59
  %209 = vmatprep.mubr.f32.mxu0 %v15
  %210 = vmatmul.mubr.f32.gmra.mrb[0].mxu0 %v14
  %v211 = vpop.f32.mrb[0].mxu0
  %v212 = vadd.f32 %v131, %v211
  %v213 = vpop.f32.mrb[0].mxu0
  %214 = vmatprep.mubr.f32.mxu0 %v22
  %215 = vmatmul.mubr.f32.gmra.mrb[0].mxu0 %v21
  %v216 = vpop.f32.mrb[0].mxu0
  %v217 = vadd.f32 %v136, %v216
  %v218 = vpop.f32.mrb[0].mxu0
  %219 = vdwg.mxu0
  %220 = vmatprep.subr.mxu0 0.0
  %221 = vmatpush1.msra.mxu0 %v60
  %222 = vmatprep.subr.mxu0 0.0
  %223 = vmatpush1.msra.mxu0 %v61
  %224 = vmatprep.subr.mxu0 0.0
  %225 = vmatpush1.msra.mxu0 %v62
  %226 = vmatprep.subr.mxu0 0.0
  %227 = vmatpush1.msra.mxu0 %v63
  %228 = vmatprep.subr.mxu0 0.0
  %229 = vmatpush1.msra.mxu0 %v64
  %230 = vmatprep.subr.mxu0 0.0
  %231 = vmatpush1.msra.mxu0 %v65
  %232 = vmatprep.subr.mxu0 0.0
  %233 = vmatpush1.msra.mxu0 %v66
  %234 = vmatprep.subr.mxu0 0.0
  %235 = vmatpush1.msra.mxu0 %v67
  %236 = vmatprep.subr.mxu0 0.0
  %237 = vmatpush1.msra.mxu0 %v68
  %238 = vmatprep.subr.mxu0 0.0
  %239 = vmatpush1.msra.mxu0 %v69
  %240 = vmatprep.subr.mxu0 0.0
  %241 = vmatpush1.msra.mxu0 %v70
  %242 = vmatprep.subr.mxu0 0.0
  %243 = vmatpush1.msra.mxu0 %v71
  %244 = vmatprep.subr.mxu0 0.0
  %245 = vmatpush1.msra.mxu0 %v72
  %246 = vmatprep.subr.mxu0 0.0
  %247 = vmatpush1.msra.mxu0 %v73
  %248 = vmatprep.subr.mxu0 0.0
  %249 = vmatpush1.msra.mxu0 %v74
  %250 = vmatprep.subr.mxu0 0.0
  %251 = vmatpush1.msra.mxu0 %v75
  %252 = vmatprep.subr.mxu0 0.0
  %253 = vmatpush1.msra.mxu0 %v76
  %254 = vmatprep.subr.mxu0 0.0
  %255 = vmatpush1.msra.mxu0 %v77
  %256 = vmatprep.subr.mxu0 0.0
  %257 = vmatpush1.msra.mxu0 %v78
  %258 = vmatprep.subr.mxu0 0.0
  %259 = vmatpush1.msra.mxu0 %v79
  %260 = vmatprep.subr.mxu0 0.0
  %261 = vmatpush1.msra.mxu0 %v80
  %262 = vmatprep.subr.mxu0 0.0
  %263 = vmatpush1.msra.mxu0 %v81
  %264 = vmatprep.subr.mxu0 0.0
  %265 = vmatpush1.msra.mxu0 %v82
  %266 = vmatprep.subr.mxu0 0.0
  %267 = vmatpush1.msra.mxu0 %v83
  %268 = vmatprep.subr.mxu0 0.0
  %269 = vmatpush1.msra.mxu0 %v84
  %270 = vmatprep.subr.mxu0 0.0
  %271 = vmatpush1.msra.mxu0 %v85
  %272 = vmatprep.subr.mxu0 0.0
  %273 = vmatpush1.msra.mxu0 %v86
  %274 = vmatprep.subr.mxu0 0.0
  %275 = vmatpush1.msra.mxu0 %v87
  %276 = vmatprep.subr.mxu0 0.0
  %277 = vmatpush1.msra.mxu0 %v88
  %278 = vmatprep.subr.mxu0 0.0
  %279 = vmatpush1.msra.mxu0 %v89
  %280 = vmatprep.subr.mxu0 0.0
  %281 = vmatpush1.msra.mxu0 %v90
  %282 = vmatprep.subr.mxu0 0.0
  %283 = vmatpush1.msra.mxu0 %v91
  %284 = vmatprep.mubr.f32.mxu0 %v17
  %285 = vmatmul.mubr.f32.gmra.mrb[0].mxu0 %v16
  %v286 = vpop.f32.mrb[0].mxu0
  %v287 = vadd.f32 %v212, %v286
  %v288 = vpop.f32.mrb[0].mxu0
  %289 = vmatprep.mubr.f32.mxu0 %v24
  %290 = vmatmul.mubr.f32.gmra.mrb[0].mxu0 %v23
  %v291 = vpop.f32.mrb[0].mxu0
  %v292 = vadd.f32 %v217, %v291
  %v293 = vpop.f32.mrb[0].mxu0
  %294 = vdwg.mxu0
  %295 = vmatprep.subr.mxu0 0.0
  %296 = vmatpush1.msra.mxu0 %v92
  %297 = vmatprep.subr.mxu0 0.0
  %298 = vmatpush1.msra.mxu0 %v93
  %299 = vmatprep.subr.mxu0 0.0
  %300 = vmatpush1.msra.mxu0 %v94
  %301 = vmatprep.subr.mxu0 0.0
  %302 = vmatpush1.msra.mxu0 %v95
  %303 = vmatprep.subr.mxu0 0.0
  %304 = vmatpush1.msra.mxu0 %v96
  %305 = vmatprep.subr.mxu0 0.0
  %306 = vmatpush1.msra.mxu0 %v97
  %307 = vmatprep.subr.mxu0 0.0
  %308 = vmatpush1.msra.mxu0 %v98
  %309 = vmatprep.subr.mxu0 0.0
  %310 = vmatpush1.msra.mxu0 %v99
  %311 = vmatprep.subr.mxu0 0.0
  %312 = vmatpush1.msra.mxu0 %v100
  %313 = vmatprep.subr.mxu0 0.0
  %314 = vmatpush1.msra.mxu0 %v101
  %315 = vmatprep.subr.mxu0 0.0
  %316 = vmatpush1.msra.mxu0 %v102
  %317 = vmatprep.subr.mxu0 0.0
  %318 = vmatpush1.msra.mxu0 %v103
  %319 = vmatprep.subr.mxu0 0.0
  %320 = vmatpush1.msra.mxu0 %v104
  %321 = vmatprep.subr.mxu0 0.0
  %322 = vmatpush1.msra.mxu0 %v105
  %323 = vmatprep.subr.mxu0 0.0
  %324 = vmatpush1.msra.mxu0 %v106
  %325 = vmatprep.subr.mxu0 0.0
  %326 = vmatpush1.msra.mxu0 %v107
  %327 = vmatprep.subr.mxu0 0.0
  %328 = vmatpush1.msra.mxu0 %v108
  %329 = vmatprep.subr.mxu0 0.0
  %330 = vmatpush1.msra.mxu0 %v109
  %331 = vmatprep.subr.mxu0 0.0
  %332 = vmatpush1.msra.mxu0 %v110
  %333 = vmatprep.subr.mxu0 0.0
  %334 = vmatpush1.msra.mxu0 %v111
  %335 = vmatprep.subr.mxu0 0.0
  %336 = vmatpush1.msra.mxu0 %v112
  %337 = vmatprep.subr.mxu0 0.0
  %338 = vmatpush1.msra.mxu0 %v113
  %339 = vmatprep.subr.mxu0 0.0
  %340 = vmatpush1.msra.mxu0 %v114
  %341 = vmatprep.subr.mxu0 0.0
  %342 = vmatpush1.msra.mxu0 %v115
  %343 = vmatprep.subr.mxu0 0.0
  %344 = vmatpush1.msra.mxu0 %v116
  %345 = vmatprep.subr.mxu0 0.0
  %346 = vmatpush1.msra.mxu0 %v117
  %347 = vmatprep.subr.mxu0 0.0
  %348 = vmatpush1.msra.mxu0 %v118
  %349 = vmatprep.subr.mxu0 0.0
  %350 = vmatpush1.msra.mxu0 %v119
  %351 = vmatprep.subr.mxu0 0.0
  %352 = vmatpush1.msra.mxu0 %v120
  %353 = vmatprep.subr.mxu0 0.0
  %354 = vmatpush1.msra.mxu0 %v121
  %355 = vmatprep.subr.mxu0 0.0
  %356 = vmatpush1.msra.mxu0 %v122
  %357 = vmatprep.subr.mxu0 0.0
  %358 = vmatpush1.msra.mxu0 %v123
  %359 = vmatprep.mubr.f32.mxu0 %v19
  %360 = vmatmul.mubr.f32.gmra.mrb[0].mxu0 %v18
  %v361 = vpop.f32.mrb[0].mxu0
  %v362 = vadd.f32 %v287, %v361
  %v363 = vpop.f32.mrb[0].mxu0
  %364 = vmatprep.mubr.f32.mxu0 %v26
  %365 = vmatmul.mubr.f32.gmra.mrb[0].mxu0 %v25
  %v366 = vpop.f32.mrb[0].mxu0
  %v367 = vadd.f32 %v292, %v366
  %v368 = vpop.f32.mrb[0].mxu0
  %369 = vdwg.mxu0
  %370 = vmatprep.subr.mxu0 0.0
  %371 = vmatpush1.msra.mxu0 %v124
  %372 = vmatprep.subr.mxu0 0.0
  %373 = vmatpush1.msra.mxu0 %v125
  %374 = vmatprep.subr.mxu0 0.0
  %375 = vmatpush1.msra.mxu0 0.0
  %376 = vmatprep.subr.mxu0 0.0
  %377 = vmatpush1.msra.mxu0 0.0
  %378 = vmatprep.subr.mxu0 0.0
  %379 = vmatpush1.msra.mxu0 0.0
  %380 = vmatprep.subr.mxu0 0.0
  %381 = vmatpush1.msra.mxu0 0.0
  %382 = vmatprep.subr.mxu0 0.0
  %383 = vmatpush1.msra.mxu0 0.0
  %384 = vmatprep.subr.mxu0 0.0
  %385 = vmatpush1.msra.mxu0 0.0
  %386 = vmatprep.subr.mxu0 0.0
  %387 = vmatpush1.msra.mxu0 0.0
  %388 = vmatprep.subr.mxu0 0.0
  %389 = vmatpush1.msra.mxu0 0.0
  %390 = vmatprep.subr.mxu0 0.0
  %391 = vmatpush1.msra.mxu0 0.0
  %392 = vmatprep.subr.mxu0 0.0
  %393 = vmatpush1.msra.mxu0 0.0
  %394 = vmatprep.subr.mxu0 0.0
  %395 = vmatpush1.msra.mxu0 0.0
  %396 = vmatprep.subr.mxu0 0.0
  %397 = vmatpush1.msra.mxu0 0.0
  %398 = vmatprep.subr.mxu0 0.0
  %399 = vmatpush1.msra.mxu0 0.0
  %400 = vmatprep.subr.mxu0 0.0
  %401 = vmatpush1.msra.mxu0 0.0
  %402 = vmatprep.subr.mxu0 0.0
  %403 = vmatpush1.msra.mxu0 0.0
  %404 = vmatprep.subr.mxu0 0.0
  %405 = vmatpush1.msra.mxu0 0.0
  %406 = vmatprep.subr.mxu0 0.0
  %407 = vmatpush1.msra.mxu0 0.0
  %408 = vmatprep.subr.mxu0 0.0
  %409 = vmatpush1.msra.mxu0 0.0
  %410 = vmatprep.subr.mxu0 0.0
  %411 = vmatpush1.msra.mxu0 0.0
  %412 = vmatprep.subr.mxu0 0.0
  %413 = vmatpush1.msra.mxu0 0.0
  %414 = vmatprep.subr.mxu0 0.0
  %415 = vmatpush1.msra.mxu0 0.0
  %416 = vmatprep.subr.mxu0 0.0
  %417 = vmatpush1.msra.mxu0 0.0
  %418 = vmatprep.subr.mxu0 0.0
  %419 = vmatpush1.msra.mxu0 0.0
  %420 = vmatprep.subr.mxu0 0.0
  %421 = vmatpush1.msra.mxu0 0.0
  %422 = vmatprep.subr.mxu0 0.0
  %423 = vmatpush1.msra.mxu0 0.0
  %424 = vmatprep.subr.mxu0 0.0
  %425 = vmatpush1.msra.mxu0 0.0
  %426 = vmatprep.subr.mxu0 0.0
  %427 = vmatpush1.msra.mxu0 0.0
  %428 = vmatprep.subr.mxu0 0.0
  %429 = vmatpush1.msra.mxu0 0.0
  %430 = vmatprep.subr.mxu0 0.0
  %431 = vmatpush1.msra.mxu0 0.0
  %432 = vmatprep.subr.mxu0 0.0
  %433 = vmatpush1.msra.mxu0 0.0
  %434 = vmatprep.mubr.f32.mxu0 0.0
  %435 = vmatmul.mubr.f32.gmra.mrb[0].mxu0 %v140
  %v436 = vpop.f32.mrb[0].mxu0
  %v437 = vadd.f32 %v362, %v436
  %v438 = vpop.f32.mrb[0].mxu0
  %439 = vmatprep.mubr.f32.mxu0 0.0
  %440 = vmatmul.mubr.f32.gmra.mrb[0].mxu0 %v143
  %v441 = vpop.f32.mrb[0].mxu0
  %v442 = vadd.f32 %v367, %v441
  %v443 = vpop.f32.mrb[0].mxu0
  %444 = vdwg.mxu0
  %vm445 = vcmask 64512
  %446 = vst.msk [vmem:[%s3] sm:$0xff] %vm445, %v437
  %vm447 = vcmask 58368
  %448 = vst.msk [vmem:[%s3 + $0x8] sm:$0x3] %vm447, %v442
  // Predicated region
  $region14: #{mnist_cnn_forward.5} parent=0 // pred_check
    _
  $region15: #{mnist_cnn_forward.5} parent=0 // pred_check_branch
    %450 = sbr.rel (0) target = $region17
  $region16: #{mnist_cnn_forward.5} parent=0 // pred_region
    _
  $region17: #{mnist_cnn_forward.5} parent=0 // pred_fallthru
    _
  // Predicated region
  $region18: #{mnist_cnn_forward.5} parent=0 // pred_check
    _
  $region19: #{mnist_cnn_forward.5} parent=0 // pred_check_branch
    %452 = sbr.rel (0) target = $region21
  $region20: #{mnist_cnn_forward.5} parent=0 // pred_region
    _
  $region21: #{mnist_cnn_forward.5} parent=0 // pred_fallthru
    _

// kernel: mnist_cnn_forward.3
$region0: #{mnist_cnn_forward.3}
  #allocation0 [shape = 'u32[]', space=smem, size = 0x4, offset = 0x4, fixed_abs, tag = 'smem constant byte address 0x4 - core index']
  #allocation1 [shape = 'u32[144,128]{1,0:T(1,128)}', space=vmem, size = 0x12000, scoped, tag = 'internal scratch']
  %s0 = inlined_call_operand.vmem [shape: f32[54], index: 0, kind: input, shape index: {}]
  %s1 = inlined_call_operand.vmem [shape: f32[6], index: 1, kind: input, shape index: {}]
  %s2 = inlined_call_operand.vmem [shape: f32[1,30,15,8], index: 2, kind: input, shape index: {}]
  %s3 = inlined_call_operand.vmem [shape: f32[1,30,15,8], index: 3, kind: input, shape index: {}]
  %s4 = inlined_call_operand.vmem [shape: f32[6,14,14,8], index: 4, kind: output, shape index: {}]
  %s5 = sld [smem:[#allocation0]]
  $region41: #{mnist_cnn_forward.3} parent=0
    _
  %s7 = ssub.s32 1, %s5
  %s8 = scalar_select 0, %s7, %s5
  $region1: #{mnist_cnn_forward.3} parent=0
    #allocation2 [shape = 'u8[512]{0}', space=smem, size = 0x200, scoped, tag = 'input window, operand 0, single buffered']
    #allocation3 [shape = 's32[1]{0}', space=sflag, size = 0x4, scoped, tag = 'scoped memory for mnist_cnn_forward.3']
    #allocation4 [shape = 'u8[512]{0}', space=smem, size = 0x200, scoped, tag = 'input window, operand 1, single buffered']
    #allocation5 [shape = 's32[1]{0}', space=sflag, size = 0x4, scoped, tag = 'scoped memory for mnist_cnn_forward.3']
    %9 = vsyncpa [#allocation3], 0
    %10 = vsyncpa [#allocation5], 0
    // Predicated region
    $region2: #{mnist_cnn_forward.3} parent=1 // pred_check
      _
    $region3: #{mnist_cnn_forward.3} parent=1 // pred_check_branch
      %12 = sbr.rel (0) target = $region5
    $region4: #{mnist_cnn_forward.3} parent=1 // pred_region
      %s14 = ssub.s32 16, 16
      %15 = vsyncadd [#allocation3], %s14
      %s17 = sshll.u32 %s0, 4
      %s18 = int_to_ptr.vmem [resolvable:$true] %s17
      %20 = dma.vmem_to_smem %s18, 16, [#allocation2], [#allocation3]
    $region5: #{mnist_cnn_forward.3} parent=1 // pred_fallthru
      _
    // Predicated region
    $region6: #{mnist_cnn_forward.3} parent=1 // pred_check
      _
    $region7: #{mnist_cnn_forward.3} parent=1 // pred_check_branch
      %22 = sbr.rel (0) target = $region9
    $region8: #{mnist_cnn_forward.3} parent=1 // pred_region
      %s24 = ssub.s32 16, 16
      %25 = vsyncadd [#allocation5], %s24
      %s27 = sshll.u32 %s1, 4
      %s28 = int_to_ptr.vmem [resolvable:$true] %s27
      %30 = dma.vmem_to_smem %s28, 16, [#allocation4], [#allocation5]
    $region9: #{mnist_cnn_forward.3} parent=1 // pred_fallthru
      _
    // Predicated region
    $region10: #{mnist_cnn_forward.3} parent=1 // pred_check
      _
    $region11: #{mnist_cnn_forward.3} parent=1 // pred_check_branch
      %32 = sbr.rel (0) target = $region13
    $region12: #{mnist_cnn_forward.3} parent=1 // pred_region
      _
    $region13: #{mnist_cnn_forward.3} parent=1 // pred_fallthru
      _
    // Predicated region
    $region14: #{mnist_cnn_forward.3} parent=1 // pred_check
      _
    $region15: #{mnist_cnn_forward.3} parent=1 // pred_check_branch
      %34 = sbr.rel (0) target = $region17
    $region16: #{mnist_cnn_forward.3} parent=1 // pred_region
      _
    $region17: #{mnist_cnn_forward.3} parent=1 // pred_fallthru
      _
    // Predicated region
    $region18: #{mnist_cnn_forward.3} parent=1 // pred_check
      _
    $region19: #{mnist_cnn_forward.3} parent=1 // pred_check_branch
      %36 = sbr.rel (0) target = $region21
    $region20: #{mnist_cnn_forward.3} parent=1 // pred_region
      %37 = dma.done [#allocation3], 16
    $region21: #{mnist_cnn_forward.3} parent=1 // pred_fallthru
      _
    // Predicated region
    $region22: #{mnist_cnn_forward.3} parent=1 // pred_check
      _
    $region23: #{mnist_cnn_forward.3} parent=1 // pred_check_branch
      %39 = sbr.rel (0) target = $region25
    $region24: #{mnist_cnn_forward.3} parent=1 // pred_region
      %40 = dma.done [#allocation5], 16
    $region25: #{mnist_cnn_forward.3} parent=1 // pred_fallthru
      _
    %41 = sfence
    loop: start=0, step=1, limit=6
    $region26: #{mnist_cnn_forward.3} parent=1 // loop_pre_header
      _
    $region27: #{mnist_cnn_forward.3} parent=1 // loop_header
      %s43 = sphi 0, %s47
      %p44 = scmp.ge.s32.totalorder %s43, 6
    $region28: #{mnist_cnn_forward.3} parent=1 // loop_header_branch
      %46 = sbr.rel (%p44) target = $region32
    $region29: #{mnist_cnn_forward.3} parent=1 // loop_body
      %v48 = vld [vmem:[%s2] sm:$0xff]
      %v49 = vld [vmem:[%s2 + $0x8] sm:$0x3f]
      %v50 = vld [vmem:[%s2 + $0x10] sm:$0xff]
      %v51 = vld [vmem:[%s2 + $0x18] sm:$0x3f]
      %v52 = vld [vmem:[%s2 + $0x20] sm:$0xff]
      %v53 = vld [vmem:[%s2 + $0x28] sm:$0x3f]
      %v54 = vld [vmem:[%s2 + $0x30] sm:$0xff]
      %v55 = vld [vmem:[%s2 + $0x38] sm:$0x3f]
      %v56 = vld [vmem:[%s2 + $0x40] sm:$0xff]
      %v57 = vld [vmem:[%s2 + $0x48] sm:$0x3f]
      %v58 = vld [vmem:[%s2 + $0x50] sm:$0xff]
      %v59 = vld [vmem:[%s2 + $0x58] sm:$0x3f]
      %v60 = vld [vmem:[%s2 + $0x60] sm:$0xff]
      %v61 = vld [vmem:[%s2 + $0x68] sm:$0x3f]
      %v62 = vld [vmem:[%s2 + $0x70] sm:$0xff]
      %v63 = vld [vmem:[%s2 + $0x78] sm:$0x3f]
      %v64 = vld [vmem:[%s2 + $0x80] sm:$0xff]
      %v65 = vld [vmem:[%s2 + $0x88] sm:$0x3f]
      %v66 = vld [vmem:[%s2 + $0x90] sm:$0xff]
      %v67 = vld [vmem:[%s2 + $0x98] sm:$0x3f]
      %v68 = vld [vmem:[%s2 + $0xa0] sm:$0xff]
      %v69 = vld [vmem:[%s2 + $0xa8] sm:$0x3f]
      %v70 = vld [vmem:[%s2 + $0xb0] sm:$0xff]
      %v71 = vld [vmem:[%s2 + $0xb8] sm:$0x3f]
      %v72 = vld [vmem:[%s2 + $0xc0] sm:$0xff]
      %v73 = vld [vmem:[%s2 + $0xc8] sm:$0x3f]
      %v74 = vld [vmem:[%s2 + $0xd0] sm:$0xff]
      %v75 = vld [vmem:[%s2 + $0xd8] sm:$0x3f]
      %v76 = vld [vmem:[%s2 + $0xe0] sm:$0xff]
      %v77 = vld [vmem:[%s2 + $0xe8] sm:$0x3f]
      %v78 = vld [vmem:[%s2 + $0xf0] sm:$0xff]
      %v79 = vld [vmem:[%s2 + $0xf8] sm:$0x3f]
      %v80 = vld [vmem:[%s2 + $0x100] sm:$0xff]
      %v81 = vld [vmem:[%s2 + $0x108] sm:$0x3f]
      %v82 = vld [vmem:[%s2 + $0x110] sm:$0xff]
      %v83 = vld [vmem:[%s2 + $0x118] sm:$0x3f]
      %v84 = vld [vmem:[%s2 + $0x120] sm:$0xff]
      %v85 = vld [vmem:[%s2 + $0x128] sm:$0x3f]
      %v86 = vld [vmem:[%s2 + $0x130] sm:$0xff]
      %v87 = vld [vmem:[%s2 + $0x138] sm:$0x3f]
      %v88 = vld [vmem:[%s2 + $0x140] sm:$0xff]
      %v89 = vld [vmem:[%s2 + $0x148] sm:$0x3f]
      %v90 = vld [vmem:[%s2 + $0x150] sm:$0xff]
      %v91 = vld [vmem:[%s2 + $0x158] sm:$0x3f]
      %v92 = vld [vmem:[%s2 + $0x160] sm:$0xff]
      %v93 = vld [vmem:[%s2 + $0x168] sm:$0x3f]
      %v94 = vld [vmem:[%s2 + $0x170] sm:$0xff]
      %v95 = vld [vmem:[%s2 + $0x178] sm:$0x3f]
      %v96 = vld [vmem:[%s2 + $0x180] sm:$0xff]
      %v97 = vld [vmem:[%s2 + $0x188] sm:$0x3f]
      %v98 = vld [vmem:[%s2 + $0x190] sm:$0xff]
      %v99 = vld [vmem:[%s2 + $0x198] sm:$0x3f]
      %v100 = vld [vmem:[%s2 + $0x1a0] sm:$0xff]
      %v101 = vld [vmem:[%s2 + $0x1a8] sm:$0x3f]
      %v102 = vld [vmem:[%s2 + $0x1b0] sm:$0xff]
      %v103 = vld [vmem:[%s2 + $0x1b8] sm:$0x3f]
      %v104 = vld [vmem:[%s3] sm:$0xff]
      %v105 = vld [vmem:[%s3 + $0x8] sm:$0x3f]
      %v106 = vld [vmem:[%s3 + $0x10] sm:$0xff]
      %v107 = vld [vmem:[%s3 + $0x18] sm:$0x3f]
      %v108 = vld [vmem:[%s3 + $0x20] sm:$0xff]
      %v109 = vld [vmem:[%s3 + $0x28] sm:$0x3f]
      %v110 = vld [vmem:[%s3 + $0x30] sm:$0xff]
      %v111 = vld [vmem:[%s3 + $0x38] sm:$0x3f]
      %v112 = vld [vmem:[%s3 + $0x40] sm:$0xff]
      %v113 = vld [vmem:[%s3 + $0x48] sm:$0x3f]
      %v114 = vld [vmem:[%s3 + $0x50] sm:$0xff]
      %v115 = vld [vmem:[%s3 + $0x58] sm:$0x3f]
      %v116 = vld [vmem:[%s3 + $0x60] sm:$0xff]
      %v117 = vld [vmem:[%s3 + $0x68] sm:$0x3f]
      %v118 = vld [vmem:[%s3 + $0x70] sm:$0xff]
      %v119 = vld [vmem:[%s3 + $0x78] sm:$0x3f]
      %v120 = vld [vmem:[%s3 + $0x80] sm:$0xff]
      %v121 = vld [vmem:[%s3 + $0x88] sm:$0x3f]
      %v122 = vld [vmem:[%s3 + $0x90] sm:$0xff]
      %v123 = vld [vmem:[%s3 + $0x98] sm:$0x3f]
      %v124 = vld [vmem:[%s3 + $0xa0] sm:$0xff]
      %v125 = vld [vmem:[%s3 + $0xa8] sm:$0x3f]
      %v126 = vld [vmem:[%s3 + $0xb0] sm:$0xff]
      %v127 = vld [vmem:[%s3 + $0xb8] sm:$0x3f]
      %v128 = vld [vmem:[%s3 + $0xc0] sm:$0xff]
      %v129 = vld [vmem:[%s3 + $0xc8] sm:$0x3f]
      %v130 = vld [vmem:[%s3 + $0xd0] sm:$0xff]
      %v131 = vld [vmem:[%s3 + $0xd8] sm:$0x3f]
      %v132 = vld [vmem:[%s3 + $0xe0] sm:$0xff]
      %v133 = vld [vmem:[%s3 + $0xe8] sm:$0x3f]
      %v134 = vld [vmem:[%s3 + $0xf0] sm:$0xff]
      %v135 = vld [vmem:[%s3 + $0xf8] sm:$0x3f]
      %v136 = vld [vmem:[%s3 + $0x100] sm:$0xff]
      %v137 = vld [vmem:[%s3 + $0x108] sm:$0x3f]
      %v138 = vld [vmem:[%s3 + $0x110] sm:$0xff]
      %v139 = vld [vmem:[%s3 + $0x118] sm:$0x3f]
      %v140 = vld [vmem:[%s3 + $0x120] sm:$0xff]
      %v141 = vld [vmem:[%s3 + $0x128] sm:$0x3f]
      %v142 = vld [vmem:[%s3 + $0x130] sm:$0xff]
      %v143 = vld [vmem:[%s3 + $0x138] sm:$0x3f]
      %v144 = vld [vmem:[%s3 + $0x140] sm:$0xff]
      %v145 = vld [vmem:[%s3 + $0x148] sm:$0x3f]
      %v146 = vld [vmem:[%s3 + $0x150] sm:$0xff]
      %v147 = vld [vmem:[%s3 + $0x158] sm:$0x3f]
      %v148 = vld [vmem:[%s3 + $0x160] sm:$0xff]
      %v149 = vld [vmem:[%s3 + $0x168] sm:$0x3f]
      %v150 = vld [vmem:[%s3 + $0x170] sm:$0xff]
      %v151 = vld [vmem:[%s3 + $0x178] sm:$0x3f]
      %v152 = vld [vmem:[%s3 + $0x180] sm:$0xff]
      %v153 = vld [vmem:[%s3 + $0x188] sm:$0x3f]
      %v154 = vld [vmem:[%s3 + $0x190] sm:$0xff]
      %v155 = vld [vmem:[%s3 + $0x198] sm:$0x3f]
      %v156 = vld [vmem:[%s3 + $0x1a0] sm:$0xff]
      %v157 = vld [vmem:[%s3 + $0x1a8] sm:$0x3f]
      %v158 = vld [vmem:[%s3 + $0x1b0] sm:$0xff]
      %v159 = vld [vmem:[%s3 + $0x1b8] sm:$0x3f]
      %v160 = vld [vmem:[%s2 + $0x1] sm:$0xff]
      %v161 = vld [vmem:[%s2 + $0x9] sm:$0x3f]
      %v162 = vld [vmem:[%s2 + $0x11] sm:$0xff]
      %v163 = vld [vmem:[%s2 + $0x19] sm:$0x3f]
      %v164 = vld [vmem:[%s2 + $0x21] sm:$0xff]
      %v165 = vld [vmem:[%s2 + $0x29] sm:$0x3f]
      %v166 = vld [vmem:[%s2 + $0x31] sm:$0xff]
      %v167 = vld [vmem:[%s2 + $0x39] sm:$0x3f]
      %v168 = vld [vmem:[%s2 + $0x41] sm:$0xff]
      %v169 = vld [vmem:[%s2 + $0x49] sm:$0x3f]
      %v170 = vld [vmem:[%s2 + $0x51] sm:$0xff]
      %v171 = vld [vmem:[%s2 + $0x59] sm:$0x3f]
      %v172 = vld [vmem:[%s2 + $0x61] sm:$0xff]
      %v173 = vld [vmem:[%s2 + $0x69] sm:$0x3f]
      %v174 = vld [vmem:[%s2 + $0x71] sm:$0xff]
      %v175 = vld [vmem:[%s2 + $0x79] sm:$0x3f]
      %v176 = vld [vmem:[%s2 + $0x81] sm:$0xff]
      %v177 = vld [vmem:[%s2 + $0x89] sm:$0x3f]
      %v178 = vld [vmem:[%s2 + $0x91] sm:$0xff]
      %v179 = vld [vmem:[%s2 + $0x99] sm:$0x3f]
      %v180 = vld [vmem:[%s2 + $0xa1] sm:$0xff]
      %v181 = vld [vmem:[%s2 + $0xa9] sm:$0x3f]
      %v182 = vld [vmem:[%s2 + $0xb1] sm:$0xff]
      %v183 = vld [vmem:[%s2 + $0xb9] sm:$0x3f]
      %v184 = vld [vmem:[%s2 + $0xc1] sm:$0xff]
      %v185 = vld [vmem:[%s2 + $0xc9] sm:$0x3f]
      %v186 = vld [vmem:[%s2 + $0xd1] sm:$0xff]
      %v187 = vld [vmem:[%s2 + $0xd9] sm:$0x3f]
      %v188 = vld [vmem:[%s2 + $0xe1] sm:$0xff]
      %v189 = vld [vmem:[%s2 + $0xe9] sm:$0x3f]
      %v190 = vld [vmem:[%s2 + $0xf1] sm:$0xff]
      %v191 = vld [vmem:[%s2 + $0xf9] sm:$0x3f]
      %v192 = vld [vmem:[%s2 + $0x101] sm:$0xff]
      %v193 = vld [vmem:[%s2 + $0x109] sm:$0x3f]
      %v194 = vld [vmem:[%s2 + $0x111] sm:$0xff]
      %v195 = vld [vmem:[%s2 + $0x119] sm:$0x3f]
      %v196 = vld [vmem:[%s2 + $0x121] sm:$0xff]
      %v197 = vld [vmem:[%s2 + $0x129] sm:$0x3f]
      %v198 = vld [vmem:[%s2 + $0x131] sm:$0xff]
      %v199 = vld [vmem:[%s2 + $0x139] sm:$0x3f]
      %v200 = vld [vmem:[%s2 + $0x141] sm:$0xff]
      %v201 = vld [vmem:[%s2 + $0x149] sm:$0x3f]
      %v202 = vld [vmem:[%s2 + $0x151] sm:$0xff]
      %v203 = vld [vmem:[%s2 + $0x159] sm:$0x3f]
      %v204 = vld [vmem:[%s2 + $0x161] sm:$0xff]
      %v205 = vld [vmem:[%s2 + $0x169] sm:$0x3f]
      %v206 = vld [vmem:[%s2 + $0x171] sm:$0xff]
      %v207 = vld [vmem:[%s2 + $0x179] sm:$0x3f]
      %v208 = vld [vmem:[%s2 + $0x181] sm:$0xff]
      %v209 = vld [vmem:[%s2 + $0x189] sm:$0x3f]
      %v210 = vld [vmem:[%s2 + $0x191] sm:$0xff]
      %v211 = vld [vmem:[%s2 + $0x199] sm:$0x3f]
      %v212 = vld [vmem:[%s2 + $0x1a1] sm:$0xff]
      %v213 = vld [vmem:[%s2 + $0x1a9] sm:$0x3f]
      %v214 = vld [vmem:[%s2 + $0x1b1] sm:$0xff]
      %v215 = vld [vmem:[%s2 + $0x1b9] sm:$0x3f]
      %v216 = vld [vmem:[%s3 + $0x1] sm:$0xff]
      %v217 = vld [vmem:[%s3 + $0x9] sm:$0x3f]
      %v218 = vld [vmem:[%s3 + $0x11] sm:$0xff]
      %v219 = vld [vmem:[%s3 + $0x19] sm:$0x3f]
      %v220 = vld [vmem:[%s3 + $0x21] sm:$0xff]
      %v221 = vld [vmem:[%s3 + $0x29] sm:$0x3f]
      %v222 = vld [vmem:[%s3 + $0x31] sm:$0xff]
      %v223 = vld [vmem:[%s3 + $0x39] sm:$0x3f]
      %v224 = vld [vmem:[%s3 + $0x41] sm:$0xff]
      %v225 = vld [vmem:[%s3 + $0x49] sm:$0x3f]
      %v226 = vld [vmem:[%s3 + $0x51] sm:$0xff]
      %v227 = vld [vmem:[%s3 + $0x59] sm:$0x3f]
      %v228 = vld [vmem:[%s3 + $0x61] sm:$0xff]
      %v229 = vld [vmem:[%s3 + $0x69] sm:$0x3f]
      %v230 = vld [vmem:[%s3 + $0x71] sm:$0xff]
      %v231 = vld [vmem:[%s3 + $0x79] sm:$0x3f]
      %v232 = vld [vmem:[%s3 + $0x81] sm:$0xff]
      %v233 = vld [vmem:[%s3 + $0x89] sm:$0x3f]
      %v234 = vld [vmem:[%s3 + $0x91] sm:$0xff]
      %v235 = vld [vmem:[%s3 + $0x99] sm:$0x3f]
      %v236 = vld [vmem:[%s3 + $0xa1] sm:$0xff]
      %v237 = vld [vmem:[%s3 + $0xa9] sm:$0x3f]
      %v238 = vld [vmem:[%s3 + $0xb1] sm:$0xff]
      %v239 = vld [vmem:[%s3 + $0xb9] sm:$0x3f]
      %v240 = vld [vmem:[%s3 + $0xc1] sm:$0xff]
      %v241 = vld [vmem:[%s3 + $0xc9] sm:$0x3f]
      %v242 = vld [vmem:[%s3 + $0xd1] sm:$0xff]
      %v243 = vld [vmem:[%s3 + $0xd9] sm:$0x3f]
      %v244 = vld [vmem:[%s3 + $0xe1] sm:$0xff]
      %v245 = vld [vmem:[%s3 + $0xe9] sm:$0x3f]
      %v246 = vld [vmem:[%s3 + $0xf1] sm:$0xff]
      %v247 = vld [vmem:[%s3 + $0xf9] sm:$0x3f]
      %v248 = vld [vmem:[%s3 + $0x101] sm:$0xff]
      %v249 = vld [vmem:[%s3 + $0x109] sm:$0x3f]
      %v250 = vld [vmem:[%s3 + $0x111] sm:$0xff]
      %v251 = vld [vmem:[%s3 + $0x119] sm:$0x3f]
      %v252 = vld [vmem:[%s3 + $0x121] sm:$0xff]
      %v253 = vld [vmem:[%s3 + $0x129] sm:$0x3f]
      %v254 = vld [vmem:[%s3 + $0x131] sm:$0xff]
      %v255 = vld [vmem:[%s3 + $0x139] sm:$0x3f]
      %v256 = vld [vmem:[%s3 + $0x141] sm:$0xff]
      %v257 = vld [vmem:[%s3 + $0x149] sm:$0x3f]
      %v258 = vld [vmem:[%s3 + $0x151] sm:$0xff]
      %v259 = vld [vmem:[%s3 + $0x159] sm:$0x3f]
      %v260 = vld [vmem:[%s3 + $0x161] sm:$0xff]
      %v261 = vld [vmem:[%s3 + $0x169] sm:$0x3f]
      %v262 = vld [vmem:[%s3 + $0x171] sm:$0xff]
      %v263 = vld [vmem:[%s3 + $0x179] sm:$0x3f]
      %v264 = vld [vmem:[%s3 + $0x181] sm:$0xff]
      %v265 = vld [vmem:[%s3 + $0x189] sm:$0x3f]
      %v266 = vld [vmem:[%s3 + $0x191] sm:$0xff]
      %v267 = vld [vmem:[%s3 + $0x199] sm:$0x3f]
      %v268 = vld [vmem:[%s3 + $0x1a1] sm:$0xff]
      %v269 = vld [vmem:[%s3 + $0x1a9] sm:$0x3f]
      %v270 = vld [vmem:[%s3 + $0x1b1] sm:$0xff]
      %v271 = vld [vmem:[%s3 + $0x1b9] sm:$0x3f]
      %s272 = smul.u32 %s43, 9
      %s273 = sld [smem:[#allocation2 + %s272]]
      %s274 = sadd.s32 %s272, 1
      %s275 = sld [smem:[#allocation2 + %s274]]
      %s276 = sadd.s32 %s272, 2
      %s277 = sld [smem:[#allocation2 + %s276]]
      %v278 = vstv %s273
      %v279 = vmul.f32 %v278, %v48
      %v280 = vmul.f32 %v278, %v49
      %v281 = vmul.f32 %v278, %v50
      %v282 = vmul.f32 %v278, %v51
      %v283 = vmul.f32 %v278, %v52
      %v284 = vmul.f32 %v278, %v53
      %v285 = vmul.f32 %v278, %v54
      %v286 = vmul.f32 %v278, %v55
      %v287 = vmul.f32 %v278, %v56
      %v288 = vmul.f32 %v278, %v57
      %v289 = vmul.f32 %v278, %v58
      %v290 = vmul.f32 %v278, %v59
      %v291 = vmul.f32 %v278, %v60
      %v292 = vmul.f32 %v278, %v61
      %v293 = vmul.f32 %v278, %v62
      %v294 = vmul.f32 %v278, %v63
      %v295 = vmul.f32 %v278, %v64
      %v296 = vmul.f32 %v278, %v65
      %v297 = vmul.f32 %v278, %v66
      %v298 = vmul.f32 %v278, %v67
      %v299 = vmul.f32 %v278, %v68
      %v300 = vmul.f32 %v278, %v69
      %v301 = vmul.f32 %v278, %v70
      %v302 = vmul.f32 %v278, %v71
      %v303 = vmul.f32 %v278, %v72
      %v304 = vmul.f32 %v278, %v73
      %v305 = vmul.f32 %v278, %v74
      %v306 = vmul.f32 %v278, %v75
      %v307 = vmul.f32 %v278, %v76
      %v308 = vmul.f32 %v278, %v77
      %v309 = vmul.f32 %v278, %v78
      %v310 = vmul.f32 %v278, %v79
      %v311 = vmul.f32 %v278, %v80
      %v312 = vmul.f32 %v278, %v81
      %v313 = vmul.f32 %v278, %v82
      %v314 = vmul.f32 %v278, %v83
      %v315 = vmul.f32 %v278, %v84
      %v316 = vmul.f32 %v278, %v85
      %v317 = vmul.f32 %v278, %v86
      %v318 = vmul.f32 %v278, %v87
      %v319 = vmul.f32 %v278, %v88
      %v320 = vmul.f32 %v278, %v89
      %v321 = vmul.f32 %v278, %v90
      %v322 = vmul.f32 %v278, %v91
      %v323 = vmul.f32 %v278, %v92
      %v324 = vmul.f32 %v278, %v93
      %v325 = vmul.f32 %v278, %v94
      %v326 = vmul.f32 %v278, %v95
      %v327 = vmul.f32 %v278, %v96
      %v328 = vmul.f32 %v278, %v97
      %v329 = vmul.f32 %v278, %v98
      %v330 = vmul.f32 %v278, %v99
      %v331 = vmul.f32 %v278, %v100
      %v332 = vmul.f32 %v278, %v101
      %v333 = vmul.f32 %v278, %v102
      %v334 = vmul.f32 %v278, %v103
      %v335 = vadd.f32 %v279, 0.0
      %v336 = vadd.f32 %v280, 0.0
      %v337 = vadd.f32 %v281, 0.0
      %v338 = vadd.f32 %v282, 0.0
      %v339 = vadd.f32 %v283, 0.0
      %v340 = vadd.f32 %v284, 0.0
      %v341 = vadd.f32 %v285, 0.0
      %v342 = vadd.f32 %v286, 0.0
      %v343 = vadd.f32 %v287, 0.0
      %v344 = vadd.f32 %v288, 0.0
      %v345 = vadd.f32 %v289, 0.0
      %v346 = vadd.f32 %v290, 0.0
      %v347 = vadd.f32 %v291, 0.0
      %v348 = vadd.f32 %v292, 0.0
      %v349 = vadd.f32 %v293, 0.0
      %v350 = vadd.f32 %v294, 0.0
      %v351 = vadd.f32 %v295, 0.0
      %v352 = vadd.f32 %v296, 0.0
      %v353 = vadd.f32 %v297, 0.0
      %v354 = vadd.f32 %v298, 0.0
      %v355 = vadd.f32 %v299, 0.0
      %v356 = vadd.f32 %v300, 0.0
      %v357 = vadd.f32 %v301, 0.0
      %v358 = vadd.f32 %v302, 0.0
      %v359 = vadd.f32 %v303, 0.0
      %v360 = vadd.f32 %v304, 0.0
      %v361 = vadd.f32 %v305, 0.0
      %v362 = vadd.f32 %v306, 0.0
      %v363 = vadd.f32 %v307, 0.0
      %v364 = vadd.f32 %v308, 0.0
      %v365 = vadd.f32 %v309, 0.0
      %v366 = vadd.f32 %v310, 0.0
      %v367 = vadd.f32 %v311, 0.0
      %v368 = vadd.f32 %v312, 0.0
      %v369 = vadd.f32 %v313, 0.0
      %v370 = vadd.f32 %v314, 0.0
      %v371 = vadd.f32 %v315, 0.0
      %v372 = vadd.f32 %v316, 0.0
      %v373 = vadd.f32 %v317, 0.0
      %v374 = vadd.f32 %v318, 0.0
      %v375 = vadd.f32 %v319, 0.0
      %v376 = vadd.f32 %v320, 0.0
      %v377 = vadd.f32 %v321, 0.0
      %v378 = vadd.f32 %v322, 0.0
      %v379 = vadd.f32 %v323, 0.0
      %v380 = vadd.f32 %v324, 0.0
      %v381 = vadd.f32 %v325, 0.0
      %v382 = vadd.f32 %v326, 0.0
      %v383 = vadd.f32 %v327, 0.0
      %v384 = vadd.f32 %v328, 0.0
      %v385 = vadd.f32 %v329, 0.0
      %v386 = vadd.f32 %v330, 0.0
      %v387 = vadd.f32 %v331, 0.0
      %v388 = vadd.f32 %v332, 0.0
      %v389 = vadd.f32 %v333, 0.0
      %v390 = vadd.f32 %v334, 0.0
      %v391 = vstv %s275
      %v392 = vmul.f32 %v391, %v104
      %v393 = vmul.f32 %v391, %v105
      %v394 = vmul.f32 %v391, %v106
      %v395 = vmul.f32 %v391, %v107
      %v396 = vmul.f32 %v391, %v108
      %v397 = vmul.f32 %v391, %v109
      %v398 = vmul.f32 %v391, %v110
      %v399 = vmul.f32 %v391, %v111
      %v400 = vmul.f32 %v391, %v112
      %v401 = vmul.f32 %v391, %v113
      %v402 = vmul.f32 %v391, %v114
      %v403 = vmul.f32 %v391, %v115
      %v404 = vmul.f32 %v391, %v116
      %v405 = vmul.f32 %v391, %v117
      %v406 = vmul.f32 %v391, %v118
      %v407 = vmul.f32 %v391, %v119
      %v408 = vmul.f32 %v391, %v120
      %v409 = vmul.f32 %v391, %v121
      %v410 = vmul.f32 %v391, %v122
      %v411 = vmul.f32 %v391, %v123
      %v412 = vmul.f32 %v391, %v124
      %v413 = vmul.f32 %v391, %v125
      %v414 = vmul.f32 %v391, %v126
      %v415 = vmul.f32 %v391, %v127
      %v416 = vmul.f32 %v391, %v128
      %v417 = vmul.f32 %v391, %v129
      %v418 = vmul.f32 %v391, %v130
      %v419 = vmul.f32 %v391, %v131
      %v420 = vmul.f32 %v391, %v132
      %v421 = vmul.f32 %v391, %v133
      %v422 = vmul.f32 %v391, %v134
      %v423 = vmul.f32 %v391, %v135
      %v424 = vmul.f32 %v391, %v136
      %v425 = vmul.f32 %v391, %v137
      %v426 = vmul.f32 %v391, %v138
      %v427 = vmul.f32 %v391, %v139
      %v428 = vmul.f32 %v391, %v140
      %v429 = vmul.f32 %v391, %v141
      %v430 = vmul.f32 %v391, %v142
      %v431 = vmul.f32 %v391, %v143
      %v432 = vmul.f32 %v391, %v144
      %v433 = vmul.f32 %v391, %v145
      %v434 = vmul.f32 %v391, %v146
      %v435 = vmul.f32 %v391, %v147
      %v436 = vmul.f32 %v391, %v148
      %v437 = vmul.f32 %v391, %v149
      %v438 = vmul.f32 %v391, %v150
      %v439 = vmul.f32 %v391, %v151
      %v440 = vmul.f32 %v391, %v152
      %v441 = vmul.f32 %v391, %v153
      %v442 = vmul.f32 %v391, %v154
      %v443 = vmul.f32 %v391, %v155
      %v444 = vmul.f32 %v391, %v156
      %v445 = vmul.f32 %v391, %v157
      %v446 = vmul.f32 %v391, %v158
      %v447 = vmul.f32 %v391, %v159
      %v448 = vadd.f32 %v335, %v392
      %v449 = vadd.f32 %v336, %v393
      %v450 = vadd.f32 %v337, %v394
      %v451 = vadd.f32 %v338, %v395
      %v452 = vadd.f32 %v339, %v396
      %v453 = vadd.f32 %v340, %v397
      %v454 = vadd.f32 %v341, %v398
      %v455 = vadd.f32 %v342, %v399
      %v456 = vadd.f32 %v343, %v400
      %v457 = vadd.f32 %v344, %v401
      %v458 = vadd.f32 %v345, %v402
      %v459 = vadd.f32 %v346, %v403
      %v460 = vadd.f32 %v347, %v404
      %v461 = vadd.f32 %v348, %v405
      %v462 = vadd.f32 %v349, %v406
      %v463 = vadd.f32 %v350, %v407
      %v464 = vadd.f32 %v351, %v408
      %v465 = vadd.f32 %v352, %v409
      %v466 = vadd.f32 %v353, %v410
      %v467 = vadd.f32 %v354, %v411
      %v468 = vadd.f32 %v355, %v412
      %v469 = vadd.f32 %v356, %v413
      %v470 = vadd.f32 %v357, %v414
      %v471 = vadd.f32 %v358, %v415
      %v472 = vadd.f32 %v359, %v416
      %v473 = vadd.f32 %v360, %v417
      %v474 = vadd.f32 %v361, %v418
      %v475 = vadd.f32 %v362, %v419
      %v476 = vadd.f32 %v363, %v420
      %v477 = vadd.f32 %v364, %v421
      %v478 = vadd.f32 %v365, %v422
      %v479 = vadd.f32 %v366, %v423
      %v480 = vadd.f32 %v367, %v424
      %v481 = vadd.f32 %v368, %v425
      %v482 = vadd.f32 %v369, %v426
      %v483 = vadd.f32 %v370, %v427
      %v484 = vadd.f32 %v371, %v428
      %v485 = vadd.f32 %v372, %v429
      %v486 = vadd.f32 %v373, %v430
      %v487 = vadd.f32 %v374, %v431
      %v488 = vadd.f32 %v375, %v432
      %v489 = vadd.f32 %v376, %v433
      %v490 = vadd.f32 %v377, %v434
      %v491 = vadd.f32 %v378, %v435
      %v492 = vadd.f32 %v379, %v436
      %v493 = vadd.f32 %v380, %v437
      %v494 = vadd.f32 %v381, %v438
      %v495 = vadd.f32 %v382, %v439
      %v496 = vadd.f32 %v383, %v440
      %v497 = vadd.f32 %v384, %v441
      %v498 = vadd.f32 %v385, %v442
      %v499 = vadd.f32 %v386, %v443
      %v500 = vadd.f32 %v387, %v444
      %v501 = vadd.f32 %v388, %v445
      %v502 = vadd.f32 %v389, %v446
      %v503 = vadd.f32 %v390, %v447
      %v504 = vstv %s277
      %v505 = vmul.f32 %v504, %v160
      %v506 = vmul.f32 %v504, %v161
      %v507 = vmul.f32 %v504, %v162
      %v508 = vmul.f32 %v504, %v163
      %v509 = vmul.f32 %v504, %v164
      %v510 = vmul.f32 %v504, %v165
      %v511 = vmul.f32 %v504, %v166
      %v512 = vmul.f32 %v504, %v167
      %v513 = vmul.f32 %v504, %v168
      %v514 = vmul.f32 %v504, %v169
      %v515 = vmul.f32 %v504, %v170
      %v516 = vmul.f32 %v504, %v171
      %v517 = vmul.f32 %v504, %v172
      %v518 = vmul.f32 %v504, %v173
      %v519 = vmul.f32 %v504, %v174
      %v520 = vmul.f32 %v504, %v175
      %v521 = vmul.f32 %v504, %v176
      %v522 = vmul.f32 %v504, %v177
      %v523 = vmul.f32 %v504, %v178
      %v524 = vmul.f32 %v504, %v179
      %v525 = vmul.f32 %v504, %v180
      %v526 = vmul.f32 %v504, %v181
      %v527 = vmul.f32 %v504, %v182
      %v528 = vmul.f32 %v504, %v183
      %v529 = vmul.f32 %v504, %v184
      %v530 = vmul.f32 %v504, %v185
      %v531 = vmul.f32 %v504, %v186
      %v532 = vmul.f32 %v504, %v187
      %v533 = vmul.f32 %v504, %v188
      %v534 = vmul.f32 %v504, %v189
      %v535 = vmul.f32 %v504, %v190
      %v536 = vmul.f32 %v504, %v191
      %v537 = vmul.f32 %v504, %v192
      %v538 = vmul.f32 %v504, %v193
      %v539 = vmul.f32 %v504, %v194
      %v540 = vmul.f32 %v504, %v195
      %v541 = vmul.f32 %v504, %v196
      %v542 = vmul.f32 %v504, %v197
      %v543 = vmul.f32 %v504, %v198
      %v544 = vmul.f32 %v504, %v199
      %v545 = vmul.f32 %v504, %v200
      %v546 = vmul.f32 %v504, %v201
      %v547 = vmul.f32 %v504, %v202
      %v548 = vmul.f32 %v504, %v203
      %v549 = vmul.f32 %v504, %v204
      %v550 = vmul.f32 %v504, %v205
      %v551 = vmul.f32 %v504, %v206
      %v552 = vmul.f32 %v504, %v207
      %v553 = vmul.f32 %v504, %v208
      %v554 = vmul.f32 %v504, %v209
      %v555 = vmul.f32 %v504, %v210
      %v556 = vmul.f32 %v504, %v211
      %v557 = vmul.f32 %v504, %v212
      %v558 = vmul.f32 %v504, %v213
      %v559 = vmul.f32 %v504, %v214
      %v560 = vmul.f32 %v504, %v215
      %v561 = vadd.f32 %v448, %v505
      %v562 = vadd.f32 %v449, %v506
      %v563 = vadd.f32 %v450, %v507
      %v564 = vadd.f32 %v451, %v508
      %v565 = vadd.f32 %v452, %v509
      %v566 = vadd.f32 %v453, %v510
      %v567 = vadd.f32 %v454, %v511
      %v568 = vadd.f32 %v455, %v512
      %v569 = vadd.f32 %v456, %v513
      %v570 = vadd.f32 %v457, %v514
      %v571 = vadd.f32 %v458, %v515
      %v572 = vadd.f32 %v459, %v516
      %v573 = vadd.f32 %v460, %v517
      %v574 = vadd.f32 %v461, %v518
      %v575 = vadd.f32 %v462, %v519
      %v576 = vadd.f32 %v463, %v520
      %v577 = vadd.f32 %v464, %v521
      %v578 = vadd.f32 %v465, %v522
      %v579 = vadd.f32 %v466, %v523
      %v580 = vadd.f32 %v467, %v524
      %v581 = vadd.f32 %v468, %v525
      %v582 = vadd.f32 %v469, %v526
      %v583 = vadd.f32 %v470, %v527
      %v584 = vadd.f32 %v471, %v528
      %v585 = vadd.f32 %v472, %v529
      %v586 = vadd.f32 %v473, %v530
      %v587 = vadd.f32 %v474, %v531
      %v588 = vadd.f32 %v475, %v532
      %v589 = vadd.f32 %v476, %v533
      %v590 = vadd.f32 %v477, %v534
      %v591 = vadd.f32 %v478, %v535
      %v592 = vadd.f32 %v479, %v536
      %v593 = vadd.f32 %v480, %v537
      %v594 = vadd.f32 %v481, %v538
      %v595 = vadd.f32 %v482, %v539
      %v596 = vadd.f32 %v483, %v540
      %v597 = vadd.f32 %v484, %v541
      %v598 = vadd.f32 %v485, %v542
      %v599 = vadd.f32 %v486, %v543
      %v600 = vadd.f32 %v487, %v544
      %v601 = vadd.f32 %v488, %v545
      %v602 = vadd.f32 %v489, %v546
      %v603 = vadd.f32 %v490, %v547
      %v604 = vadd.f32 %v491, %v548
      %v605 = vadd.f32 %v492, %v549
      %v606 = vadd.f32 %v493, %v550
      %v607 = vadd.f32 %v494, %v551
      %v608 = vadd.f32 %v495, %v552
      %v609 = vadd.f32 %v496, %v553
      %v610 = vadd.f32 %v497, %v554
      %v611 = vadd.f32 %v498, %v555
      %v612 = vadd.f32 %v499, %v556
      %v613 = vadd.f32 %v500, %v557
      %v614 = vadd.f32 %v501, %v558
      %v615 = vadd.f32 %v502, %v559
      %v616 = vadd.f32 %v503, %v560
      %v617 = vmul.f32 %v278, %v104
      %v618 = vmul.f32 %v278, %v105
      %v619 = vmul.f32 %v278, %v106
      %v620 = vmul.f32 %v278, %v107
      %v621 = vmul.f32 %v278, %v108
      %v622 = vmul.f32 %v278, %v109
      %v623 = vmul.f32 %v278, %v110
      %v624 = vmul.f32 %v278, %v111
      %v625 = vmul.f32 %v278, %v112
      %v626 = vmul.f32 %v278, %v113
      %v627 = vmul.f32 %v278, %v114
      %v628 = vmul.f32 %v278, %v115
      %v629 = vmul.f32 %v278, %v116
      %v630 = vmul.f32 %v278, %v117
      %v631 = vmul.f32 %v278, %v118
      %v632 = vmul.f32 %v278, %v119
      %v633 = vmul.f32 %v278, %v120
      %v634 = vmul.f32 %v278, %v121
      %v635 = vmul.f32 %v278, %v122
      %v636 = vmul.f32 %v278, %v123
      %v637 = vmul.f32 %v278, %v124
      %v638 = vmul.f32 %v278, %v125
      %v639 = vmul.f32 %v278, %v126
      %v640 = vmul.f32 %v278, %v127
      %v641 = vmul.f32 %v278, %v128
      %v642 = vmul.f32 %v278, %v129
      %v643 = vmul.f32 %v278, %v130
      %v644 = vmul.f32 %v278, %v131
      %v645 = vmul.f32 %v278, %v132
      %v646 = vmul.f32 %v278, %v133
      %v647 = vmul.f32 %v278, %v134
      %v648 = vmul.f32 %v278, %v135
      %v649 = vmul.f32 %v278, %v136
      %v650 = vmul.f32 %v278, %v137
      %v651 = vmul.f32 %v278, %v138
      %v652 = vmul.f32 %v278, %v139
      %v653 = vmul.f32 %v278, %v140
      %v654 = vmul.f32 %v278, %v141
      %v655 = vmul.f32 %v278, %v142
      %v656 = vmul.f32 %v278, %v143
      %v657 = vmul.f32 %v278, %v144
      %v658 = vmul.f32 %v278, %v145
      %v659 = vmul.f32 %v278, %v146
      %v660 = vmul.f32 %v278, %v147
      %v661 = vmul.f32 %v278, %v148
      %v662 = vmul.f32 %v278, %v149
      %v663 = vmul.f32 %v278, %v150
      %v664 = vmul.f32 %v278, %v151
      %v665 = vmul.f32 %v278, %v152
      %v666 = vmul.f32 %v278, %v153
      %v667 = vmul.f32 %v278, %v154
      %v668 = vmul.f32 %v278, %v155
      %v669 = vmul.f32 %v278, %v156
      %v670 = vmul.f32 %v278, %v157
      %v671 = vmul.f32 %v278, %v158
      %v672 = vmul.f32 %v278, %v159
      %v673 = vadd.f32 %v617, 0.0
      %v674 = vadd.f32 %v618, 0.0
      %v675 = vadd.f32 %v619, 0.0
      %v676 = vadd.f32 %v620, 0.0
      %v677 = vadd.f32 %v621, 0.0
      %v678 = vadd.f32 %v622, 0.0
      %v679 = vadd.f32 %v623, 0.0
      %v680 = vadd.f32 %v624, 0.0
      %v681 = vadd.f32 %v625, 0.0
      %v682 = vadd.f32 %v626, 0.0
      %v683 = vadd.f32 %v627, 0.0
      %v684 = vadd.f32 %v628, 0.0
      %v685 = vadd.f32 %v629, 0.0
      %v686 = vadd.f32 %v630, 0.0
      %v687 = vadd.f32 %v631, 0.0
      %v688 = vadd.f32 %v632, 0.0
      %v689 = vadd.f32 %v633, 0.0
      %v690 = vadd.f32 %v634, 0.0
      %v691 = vadd.f32 %v635, 0.0
      %v692 = vadd.f32 %v636, 0.0
      %v693 = vadd.f32 %v637, 0.0
      %v694 = vadd.f32 %v638, 0.0
      %v695 = vadd.f32 %v639, 0.0
      %v696 = vadd.f32 %v640, 0.0
      %v697 = vadd.f32 %v641, 0.0
      %v698 = vadd.f32 %v642, 0.0
      %v699 = vadd.f32 %v643, 0.0
      %v700 = vadd.f32 %v644, 0.0
      %v701 = vadd.f32 %v645, 0.0
      %v702 = vadd.f32 %v646, 0.0
      %v703 = vadd.f32 %v647, 0.0
      %v704 = vadd.f32 %v648, 0.0
      %v705 = vadd.f32 %v649, 0.0
      %v706 = vadd.f32 %v650, 0.0
      %v707 = vadd.f32 %v651, 0.0
      %v708 = vadd.f32 %v652, 0.0
      %v709 = vadd.f32 %v653, 0.0
      %v710 = vadd.f32 %v654, 0.0
      %v711 = vadd.f32 %v655, 0.0
      %v712 = vadd.f32 %v656, 0.0
      %v713 = vadd.f32 %v657, 0.0
      %v714 = vadd.f32 %v658, 0.0
      %v715 = vadd.f32 %v659, 0.0
      %v716 = vadd.f32 %v660, 0.0
      %v717 = vadd.f32 %v661, 0.0
      %v718 = vadd.f32 %v662, 0.0
      %v719 = vadd.f32 %v663, 0.0
      %v720 = vadd.f32 %v664, 0.0
      %v721 = vadd.f32 %v665, 0.0
      %v722 = vadd.f32 %v666, 0.0
      %v723 = vadd.f32 %v667, 0.0
      %v724 = vadd.f32 %v668, 0.0
      %v725 = vadd.f32 %v669, 0.0
      %v726 = vadd.f32 %v670, 0.0
      %v727 = vadd.f32 %v671, 0.0
      %v728 = vadd.f32 %v672, 0.0
      %v729 = vmul.f32 %v391, %v160
      %v730 = vmul.f32 %v391, %v161
      %v731 = vmul.f32 %v391, %v162
      %v732 = vmul.f32 %v391, %v163
      %v733 = vmul.f32 %v391, %v164
      %v734 = vmul.f32 %v391, %v165
      %v735 = vmul.f32 %v391, %v166
      %v736 = vmul.f32 %v391, %v167
      %v737 = vmul.f32 %v391, %v168
      %v738 = vmul.f32 %v391, %v169
      %v739 = vmul.f32 %v391, %v170
      %v740 = vmul.f32 %v391, %v171
      %v741 = vmul.f32 %v391, %v172
      %v742 = vmul.f32 %v391, %v173
      %v743 = vmul.f32 %v391, %v174
      %v744 = vmul.f32 %v391, %v175
      %v745 = vmul.f32 %v391, %v176
      %v746 = vmul.f32 %v391, %v177
      %v747 = vmul.f32 %v391, %v178
      %v748 = vmul.f32 %v391, %v179
      %v749 = vmul.f32 %v391, %v180
      %v750 = vmul.f32 %v391, %v181
      %v751 = vmul.f32 %v391, %v182
      %v752 = vmul.f32 %v391, %v183
      %v753 = vmul.f32 %v391, %v184
      %v754 = vmul.f32 %v391, %v185
      %v755 = vmul.f32 %v391, %v186
      %v756 = vmul.f32 %v391, %v187
      %v757 = vmul.f32 %v391, %v188
      %v758 = vmul.f32 %v391, %v189
      %v759 = vmul.f32 %v391, %v190
      %v760 = vmul.f32 %v391, %v191
      %v761 = vmul.f32 %v391, %v192
      %v762 = vmul.f32 %v391, %v193
      %v763 = vmul.f32 %v391, %v194
      %v764 = vmul.f32 %v391, %v195
      %v765 = vmul.f32 %v391, %v196
      %v766 = vmul.f32 %v391, %v197
      %v767 = vmul.f32 %v391, %v198
      %v768 = vmul.f32 %v391, %v199
      %v769 = vmul.f32 %v391, %v200
      %v770 = vmul.f32 %v391, %v201
      %v771 = vmul.f32 %v391, %v202
      %v772 = vmul.f32 %v391, %v203
      %v773 = vmul.f32 %v391, %v204
      %v774 = vmul.f32 %v391, %v205
      %v775 = vmul.f32 %v391, %v206
      %v776 = vmul.f32 %v391, %v207
      %v777 = vmul.f32 %v391, %v208
      %v778 = vmul.f32 %v391, %v209
      %v779 = vmul.f32 %v391, %v210
      %v780 = vmul.f32 %v391, %v211
      %v781 = vmul.f32 %v391, %v212
      %v782 = vmul.f32 %v391, %v213
      %v783 = vmul.f32 %v391, %v214
      %v784 = vmul.f32 %v391, %v215
      %v785 = vadd.f32 %v673, %v729
      %v786 = vadd.f32 %v674, %v730
      %v787 = vadd.f32 %v675, %v731
      %v788 = vadd.f32 %v676, %v732
      %v789 = vadd.f32 %v677, %v733
      %v790 = vadd.f32 %v678, %v734
      %v791 = vadd.f32 %v679, %v735
      %v792 = vadd.f32 %v680, %v736
      %v793 = vadd.f32 %v681, %v737
      %v794 = vadd.f32 %v682, %v738
      %v795 = vadd.f32 %v683, %v739
      %v796 = vadd.f32 %v684, %v740
      %v797 = vadd.f32 %v685, %v741
      %v798 = vadd.f32 %v686, %v742
      %v799 = vadd.f32 %v687, %v743
      %v800 = vadd.f32 %v688, %v744
      %v801 = vadd.f32 %v689, %v745
      %v802 = vadd.f32 %v690, %v746
      %v803 = vadd.f32 %v691, %v747
      %v804 = vadd.f32 %v692, %v748
      %v805 = vadd.f32 %v693, %v749
      %v806 = vadd.f32 %v694, %v750
      %v807 = vadd.f32 %v695, %v751
      %v808 = vadd.f32 %v696, %v752
      %v809 = vadd.f32 %v697, %v753
      %v810 = vadd.f32 %v698, %v754
      %v811 = vadd.f32 %v699, %v755
      %v812 = vadd.f32 %v700, %v756
      %v813 = vadd.f32 %v701, %v757
      %v814 = vadd.f32 %v702, %v758
      %v815 = vadd.f32 %v703, %v759
      %v816 = vadd.f32 %v704, %v760
      %v817 = vadd.f32 %v705, %v761
      %v818 = vadd.f32 %v706, %v762
      %v819 = vadd.f32 %v707, %v763
      %v820 = vadd.f32 %v708, %v764
      %v821 = vadd.f32 %v709, %v765
      %v822 = vadd.f32 %v710, %v766
      %v823 = vadd.f32 %v711, %v767
      %v824 = vadd.f32 %v712, %v768
      %v825 = vadd.f32 %v713, %v769
      %v826 = vadd.f32 %v714, %v770
      %v827 = vadd.f32 %v715, %v771
      %v828 = vadd.f32 %v716, %v772
      %v829 = vadd.f32 %v717, %v773
      %v830 = vadd.f32 %v718, %v774
      %v831 = vadd.f32 %v719, %v775
      %v832 = vadd.f32 %v720, %v776
      %v833 = vadd.f32 %v721, %v777
      %v834 = vadd.f32 %v722, %v778
      %v835 = vadd.f32 %v723, %v779
      %v836 = vadd.f32 %v724, %v780
      %v837 = vadd.f32 %v725, %v781
      %v838 = vadd.f32 %v726, %v782
      %v839 = vadd.f32 %v727, %v783
      %v840 = vadd.f32 %v728, %v784
      %v841 = vmul.f32 %v504, %v216
      %v842 = vmul.f32 %v504, %v217
      %v843 = vmul.f32 %v504, %v218
      %v844 = vmul.f32 %v504, %v219
      %v845 = vmul.f32 %v504, %v220
      %v846 = vmul.f32 %v504, %v221
      %v847 = vmul.f32 %v504, %v222
      %v848 = vmul.f32 %v504, %v223
      %v849 = vmul.f32 %v504, %v224
      %v850 = vmul.f32 %v504, %v225
      %v851 = vmul.f32 %v504, %v226
      %v852 = vmul.f32 %v504, %v227
      %v853 = vmul.f32 %v504, %v228
      %v854 = vmul.f32 %v504, %v229
      %v855 = vmul.f32 %v504, %v230
      %v856 = vmul.f32 %v504, %v231
      %v857 = vmul.f32 %v504, %v232
      %v858 = vmul.f32 %v504, %v233
      %v859 = vmul.f32 %v504, %v234
      %v860 = vmul.f32 %v504, %v235
      %v861 = vmul.f32 %v504, %v236
      %v862 = vmul.f32 %v504, %v237
      %v863 = vmul.f32 %v504, %v238
      %v864 = vmul.f32 %v504, %v239
      %v865 = vmul.f32 %v504, %v240
      %v866 = vmul.f32 %v504, %v241
      %v867 = vmul.f32 %v504, %v242
      %v868 = vmul.f32 %v504, %v243
      %v869 = vmul.f32 %v504, %v244
      %v870 = vmul.f32 %v504, %v245
      %v871 = vmul.f32 %v504, %v246
      %v872 = vmul.f32 %v504, %v247
      %v873 = vmul.f32 %v504, %v248
      %v874 = vmul.f32 %v504, %v249
      %v875 = vmul.f32 %v504, %v250
      %v876 = vmul.f32 %v504, %v251
      %v877 = vmul.f32 %v504, %v252
      %v878 = vmul.f32 %v504, %v253
      %v879 = vmul.f32 %v504, %v254
      %v880 = vmul.f32 %v504, %v255
      %v881 = vmul.f32 %v504, %v256
      %v882 = vmul.f32 %v504, %v257
      %v883 = vmul.f32 %v504, %v258
      %v884 = vmul.f32 %v504, %v259
      %v885 = vmul.f32 %v504, %v260
      %v886 = vmul.f32 %v504, %v261
      %v887 = vmul.f32 %v504, %v262
      %v888 = vmul.f32 %v504, %v263
      %v889 = vmul.f32 %v504, %v264
      %v890 = vmul.f32 %v504, %v265
      %v891 = vmul.f32 %v504, %v266
      %v892 = vmul.f32 %v504, %v267
      %v893 = vmul.f32 %v504, %v268
      %v894 = vmul.f32 %v504, %v269
      %v895 = vmul.f32 %v504, %v270
      %v896 = vmul.f32 %v504, %v271
      %v897 = vadd.f32 %v785, %v841
      %v898 = vadd.f32 %v786, %v842
      %v899 = vadd.f32 %v787, %v843
      %v900 = vadd.f32 %v788, %v844
      %v901 = vadd.f32 %v789, %v845
      %v902 = vadd.f32 %v790, %v846
      %v903 = vadd.f32 %v791, %v847
      %v904 = vadd.f32 %v792, %v848
      %v905 = vadd.f32 %v793, %v849
      %v906 = vadd.f32 %v794, %v850
      %v907 = vadd.f32 %v795, %v851
      %v908 = vadd.f32 %v796, %v852
      %v909 = vadd.f32 %v797, %v853
      %v910 = vadd.f32 %v798, %v854
      %v911 = vadd.f32 %v799, %v855
      %v912 = vadd.f32 %v800, %v856
      %v913 = vadd.f32 %v801, %v857
      %v914 = vadd.f32 %v802, %v858
      %v915 = vadd.f32 %v803, %v859
      %v916 = vadd.f32 %v804, %v860
      %v917 = vadd.f32 %v805, %v861
      %v918 = vadd.f32 %v806, %v862
      %v919 = vadd.f32 %v807, %v863
      %v920 = vadd.f32 %v808, %v864
      %v921 = vadd.f32 %v809, %v865
      %v922 = vadd.f32 %v810, %v866
      %v923 = vadd.f32 %v811, %v867
      %v924 = vadd.f32 %v812, %v868
      %v925 = vadd.f32 %v813, %v869
      %v926 = vadd.f32 %v814, %v870
      %v927 = vadd.f32 %v815, %v871
      %v928 = vadd.f32 %v816, %v872
      %v929 = vadd.f32 %v817, %v873
      %v930 = vadd.f32 %v818, %v874
      %v931 = vadd.f32 %v819, %v875
      %v932 = vadd.f32 %v820, %v876
      %v933 = vadd.f32 %v821, %v877
      %v934 = vadd.f32 %v822, %v878
      %v935 = vadd.f32 %v823, %v879
      %v936 = vadd.f32 %v824, %v880
      %v937 = vadd.f32 %v825, %v881
      %v938 = vadd.f32 %v826, %v882
      %v939 = vadd.f32 %v827, %v883
      %v940 = vadd.f32 %v828, %v884
      %v941 = vadd.f32 %v829, %v885
      %v942 = vadd.f32 %v830, %v886
      %v943 = vadd.f32 %v831, %v887
      %v944 = vadd.f32 %v832, %v888
      %v945 = vadd.f32 %v833, %v889
      %v946 = vadd.f32 %v834, %v890
      %v947 = vadd.f32 %v835, %v891
      %v948 = vadd.f32 %v836, %v892
      %v949 = vadd.f32 %v837, %v893
      %v950 = vadd.f32 %v838, %v894
      %v951 = vadd.f32 %v839, %v895
      %v952 = vadd.f32 %v840, %v896
      %s953 = scalar_lea.vmem %s2, 16
      %v954 = vld [vmem:[%s953] sm:$0xff]
      %v955 = vld [vmem:[%s953 + $0x8] sm:$0x3f]
      %v956 = vld [vmem:[%s953 + $0x10] sm:$0xff]
      %v957 = vld [vmem:[%s953 + $0x18] sm:$0x3f]
      %v958 = vld [vmem:[%s953 + $0x20] sm:$0xff]
      %v959 = vld [vmem:[%s953 + $0x28] sm:$0x3f]
      %v960 = vld [vmem:[%s953 + $0x30] sm:$0xff]
      %v961 = vld [vmem:[%s953 + $0x38] sm:$0x3f]
      %v962 = vld [vmem:[%s953 + $0x40] sm:$0xff]
      %v963 = vld [vmem:[%s953 + $0x48] sm:$0x3f]
      %v964 = vld [vmem:[%s953 + $0x50] sm:$0xff]
      %v965 = vld [vmem:[%s953 + $0x58] sm:$0x3f]
      %v966 = vld [vmem:[%s953 + $0x60] sm:$0xff]
      %v967 = vld [vmem:[%s953 + $0x68] sm:$0x3f]
      %v968 = vld [vmem:[%s953 + $0x70] sm:$0xff]
      %v969 = vld [vmem:[%s953 + $0x78] sm:$0x3f]
      %v970 = vld [vmem:[%s953 + $0x80] sm:$0xff]
      %v971 = vld [vmem:[%s953 + $0x88] sm:$0x3f]
      %v972 = vld [vmem:[%s953 + $0x90] sm:$0xff]
      %v973 = vld [vmem:[%s953 + $0x98] sm:$0x3f]
      %v974 = vld [vmem:[%s953 + $0xa0] sm:$0xff]
      %v975 = vld [vmem:[%s953 + $0xa8] sm:$0x3f]
      %v976 = vld [vmem:[%s953 + $0xb0] sm:$0xff]
      %v977 = vld [vmem:[%s953 + $0xb8] sm:$0x3f]
      %v978 = vld [vmem:[%s953 + $0xc0] sm:$0xff]
      %v979 = vld [vmem:[%s953 + $0xc8] sm:$0x3f]
      %v980 = vld [vmem:[%s953 + $0xd0] sm:$0xff]
      %v981 = vld [vmem:[%s953 + $0xd8] sm:$0x3f]
      %v982 = vld [vmem:[%s953 + $0xe0] sm:$0xff]
      %v983 = vld [vmem:[%s953 + $0xe8] sm:$0x3f]
      %v984 = vld [vmem:[%s953 + $0xf0] sm:$0xff]
      %v985 = vld [vmem:[%s953 + $0xf8] sm:$0x3f]
      %v986 = vld [vmem:[%s953 + $0x100] sm:$0xff]
      %v987 = vld [vmem:[%s953 + $0x108] sm:$0x3f]
      %v988 = vld [vmem:[%s953 + $0x110] sm:$0xff]
      %v989 = vld [vmem:[%s953 + $0x118] sm:$0x3f]
      %v990 = vld [vmem:[%s953 + $0x120] sm:$0xff]
      %v991 = vld [vmem:[%s953 + $0x128] sm:$0x3f]
      %v992 = vld [vmem:[%s953 + $0x130] sm:$0xff]
      %v993 = vld [vmem:[%s953 + $0x138] sm:$0x3f]
      %v994 = vld [vmem:[%s953 + $0x140] sm:$0xff]
      %v995 = vld [vmem:[%s953 + $0x148] sm:$0x3f]
      %v996 = vld [vmem:[%s953 + $0x150] sm:$0xff]
      %v997 = vld [vmem:[%s953 + $0x158] sm:$0x3f]
      %v998 = vld [vmem:[%s953 + $0x160] sm:$0xff]
      %v999 = vld [vmem:[%s953 + $0x168] sm:$0x3f]
      %v1000 = vld [vmem:[%s953 + $0x170] sm:$0xff]
      %v1001 = vld [vmem:[%s953 + $0x178] sm:$0x3f]
      %v1002 = vld [vmem:[%s953 + $0x180] sm:$0xff]
      %v1003 = vld [vmem:[%s953 + $0x188] sm:$0x3f]
      %v1004 = vld [vmem:[%s953 + $0x190] sm:$0xff]
      %v1005 = vld [vmem:[%s953 + $0x198] sm:$0x3f]
      %v1006 = vld [vmem:[%s953 + $0x1a0] sm:$0xff]
      %v1007 = vld [vmem:[%s953 + $0x1a8] sm:$0x3f]
      %v1008 = vld [vmem:[%s953 + $0x1b0] sm:$0xff]
      %v1009 = vld [vmem:[%s953 + $0x1b8] sm:$0x3f]
      %s1010 = scalar_lea.vmem %s3, 16
      %v1011 = vld [vmem:[%s1010] sm:$0xff]
      %v1012 = vld [vmem:[%s1010 + $0x8] sm:$0x3f]
      %v1013 = vld [vmem:[%s1010 + $0x10] sm:$0xff]
      %v1014 = vld [vmem:[%s1010 + $0x18] sm:$0x3f]
      %v1015 = vld [vmem:[%s1010 + $0x20] sm:$0xff]
      %v1016 = vld [vmem:[%s1010 + $0x28] sm:$0x3f]
      %v1017 = vld [vmem:[%s1010 + $0x30] sm:$0xff]
      %v1018 = vld [vmem:[%s1010 + $0x38] sm:$0x3f]
      %v1019 = vld [vmem:[%s1010 + $0x40] sm:$0xff]
      %v1020 = vld [vmem:[%s1010 + $0x48] sm:$0x3f]
      %v1021 = vld [vmem:[%s1010 + $0x50] sm:$0xff]
      %v1022 = vld [vmem:[%s1010 + $0x58] sm:$0x3f]
      %v1023 = vld [vmem:[%s1010 + $0x60] sm:$0xff]
      %v1024 = vld [vmem:[%s1010 + $0x68] sm:$0x3f]
      %v1025 = vld [vmem:[%s1010 + $0x70] sm:$0xff]
      %v1026 = vld [vmem:[%s1010 + $0x78] sm:$0x3f]
      %v1027 = vld [vmem:[%s1010 + $0x80] sm:$0xff]
      %v1028 = vld [vmem:[%s1010 + $0x88] sm:$0x3f]
      %v1029 = vld [vmem:[%s1010 + $0x90] sm:$0xff]
      %v1030 = vld [vmem:[%s1010 + $0x98] sm:$0x3f]
      %v1031 = vld [vmem:[%s1010 + $0xa0] sm:$0xff]
      %v1032 = vld [vmem:[%s1010 + $0xa8] sm:$0x3f]
      %v1033 = vld [vmem:[%s1010 + $0xb0] sm:$0xff]
      %v1034 = vld [vmem:[%s1010 + $0xb8] sm:$0x3f]
      %v1035 = vld [vmem:[%s1010 + $0xc0] sm:$0xff]
      %v1036 = vld [vmem:[%s1010 + $0xc8] sm:$0x3f]
      %v1037 = vld [vmem:[%s1010 + $0xd0] sm:$0xff]
      %v1038 = vld [vmem:[%s1010 + $0xd8] sm:$0x3f]
      %v1039 = vld [vmem:[%s1010 + $0xe0] sm:$0xff]
      %v1040 = vld [vmem:[%s1010 + $0xe8] sm:$0x3f]
      %v1041 = vld [vmem:[%s1010 + $0xf0] sm:$0xff]
      %v1042 = vld [vmem:[%s1010 + $0xf8] sm:$0x3f]
      %v1043 = vld [vmem:[%s1010 + $0x100] sm:$0xff]
      %v1044 = vld [vmem:[%s1010 + $0x108] sm:$0x3f]
      %v1045 = vld [vmem:[%s1010 + $0x110] sm:$0xff]
      %v1046 = vld [vmem:[%s1010 + $0x118] sm:$0x3f]
      %v1047 = vld [vmem:[%s1010 + $0x120] sm:$0xff]
      %v1048 = vld [vmem:[%s1010 + $0x128] sm:$0x3f]
      %v1049 = vld [vmem:[%s1010 + $0x130] sm:$0xff]
      %v1050 = vld [vmem:[%s1010 + $0x138] sm:$0x3f]
      %v1051 = vld [vmem:[%s1010 + $0x140] sm:$0xff]
      %v1052 = vld [vmem:[%s1010 + $0x148] sm:$0x3f]
      %v1053 = vld [vmem:[%s1010 + $0x150] sm:$0xff]
      %v1054 = vld [vmem:[%s1010 + $0x158] sm:$0x3f]
      %v1055 = vld [vmem:[%s1010 + $0x160] sm:$0xff]
      %v1056 = vld [vmem:[%s1010 + $0x168] sm:$0x3f]
      %v1057 = vld [vmem:[%s1010 + $0x170] sm:$0xff]
      %v1058 = vld [vmem:[%s1010 + $0x178] sm:$0x3f]
      %v1059 = vld [vmem:[%s1010 + $0x180] sm:$0xff]
      %v1060 = vld [vmem:[%s1010 + $0x188] sm:$0x3f]
      %v1061 = vld [vmem:[%s1010 + $0x190] sm:$0xff]
      %v1062 = vld [vmem:[%s1010 + $0x198] sm:$0x3f]
      %v1063 = vld [vmem:[%s1010 + $0x1a0] sm:$0xff]
      %v1064 = vld [vmem:[%s1010 + $0x1a8] sm:$0x3f]
      %v1065 = vld [vmem:[%s1010 + $0x1b0] sm:$0xff]
      %v1066 = vld [vmem:[%s1010 + $0x1b8] sm:$0x3f]
      %v1067 = vld [vmem:[%s953 + $0x1] sm:$0xff]
      %v1068 = vld [vmem:[%s953 + $0x9] sm:$0x3f]
      %v1069 = vld [vmem:[%s953 + $0x11] sm:$0xff]
      %v1070 = vld [vmem:[%s953 + $0x19] sm:$0x3f]
      %v1071 = vld [vmem:[%s953 + $0x21] sm:$0xff]
      %v1072 = vld [vmem:[%s953 + $0x29] sm:$0x3f]
      %v1073 = vld [vmem:[%s953 + $0x31] sm:$0xff]
      %v1074 = vld [vmem:[%s953 + $0x39] sm:$0x3f]
      %v1075 = vld [vmem:[%s953 + $0x41] sm:$0xff]
      %v1076 = vld [vmem:[%s953 + $0x49] sm:$0x3f]
      %v1077 = vld [vmem:[%s953 + $0x51] sm:$0xff]
      %v1078 = vld [vmem:[%s953 + $0x59] sm:$0x3f]
      %v1079 = vld [vmem:[%s953 + $0x61] sm:$0xff]
      %v1080 = vld [vmem:[%s953 + $0x69] sm:$0x3f]
      %v1081 = vld [vmem:[%s953 + $0x71] sm:$0xff]
      %v1082 = vld [vmem:[%s953 + $0x79] sm:$0x3f]
      %v1083 = vld [vmem:[%s953 + $0x81] sm:$0xff]
      %v1084 = vld [vmem:[%s953 + $0x89] sm:$0x3f]
      %v1085 = vld [vmem:[%s953 + $0x91] sm:$0xff]
      %v1086 = vld [vmem:[%s953 + $0x99] sm:$0x3f]
      %v1087 = vld [vmem:[%s953 + $0xa1] sm:$0xff]
      %v1088 = vld [vmem:[%s953 + $0xa9] sm:$0x3f]
      %v1089 = vld [vmem:[%s953 + $0xb1] sm:$0xff]
      %v1090 = vld [vmem:[%s953 + $0xb9] sm:$0x3f]
      %v1091 = vld [vmem:[%s953 + $0xc1] sm:$0xff]
      %v1092 = vld [vmem:[%s953 + $0xc9] sm:$0x3f]
      %v1093 = vld [vmem:[%s953 + $0xd1] sm:$0xff]
      %v1094 = vld [vmem:[%s953 + $0xd9] sm:$0x3f]
      %v1095 = vld [vmem:[%s953 + $0xe1] sm:$0xff]
      %v1096 = vld [vmem:[%s953 + $0xe9] sm:$0x3f]
      %v1097 = vld [vmem:[%s953 + $0xf1] sm:$0xff]
      %v1098 = vld [vmem:[%s953 + $0xf9] sm:$0x3f]
      %v1099 = vld [vmem:[%s953 + $0x101] sm:$0xff]
      %v1100 = vld [vmem:[%s953 + $0x109] sm:$0x3f]
      %v1101 = vld [vmem:[%s953 + $0x111] sm:$0xff]
      %v1102 = vld [vmem:[%s953 + $0x119] sm:$0x3f]
      %v1103 = vld [vmem:[%s953 + $0x121] sm:$0xff]
      %v1104 = vld [vmem:[%s953 + $0x129] sm:$0x3f]
      %v1105 = vld [vmem:[%s953 + $0x131] sm:$0xff]
      %v1106 = vld [vmem:[%s953 + $0x139] sm:$0x3f]
      %v1107 = vld [vmem:[%s953 + $0x141] sm:$0xff]
      %v1108 = vld [vmem:[%s953 + $0x149] sm:$0x3f]
      %v1109 = vld [vmem:[%s953 + $0x151] sm:$0xff]
      %v1110 = vld [vmem:[%s953 + $0x159] sm:$0x3f]
      %v1111 = vld [vmem:[%s953 + $0x161] sm:$0xff]
      %v1112 = vld [vmem:[%s953 + $0x169] sm:$0x3f]
      %v1113 = vld [vmem:[%s953 + $0x171] sm:$0xff]
      %v1114 = vld [vmem:[%s953 + $0x179] sm:$0x3f]
      %v1115 = vld [vmem:[%s953 + $0x181] sm:$0xff]
      %v1116 = vld [vmem:[%s953 + $0x189] sm:$0x3f]
      %v1117 = vld [vmem:[%s953 + $0x191] sm:$0xff]
      %v1118 = vld [vmem:[%s953 + $0x199] sm:$0x3f]
      %v1119 = vld [vmem:[%s953 + $0x1a1] sm:$0xff]
      %v1120 = vld [vmem:[%s953 + $0x1a9] sm:$0x3f]
      %v1121 = vld [vmem:[%s953 + $0x1b1] sm:$0xff]
      %v1122 = vld [vmem:[%s953 + $0x1b9] sm:$0x3f]
      %v1123 = vld [vmem:[%s1010 + $0x1] sm:$0xff]
      %v1124 = vld [vmem:[%s1010 + $0x9] sm:$0x3f]
      %v1125 = vld [vmem:[%s1010 + $0x11] sm:$0xff]
      %v1126 = vld [vmem:[%s1010 + $0x19] sm:$0x3f]
      %v1127 = vld [vmem:[%s1010 + $0x21] sm:$0xff]
      %v1128 = vld [vmem:[%s1010 + $0x29] sm:$0x3f]
      %v1129 = vld [vmem:[%s1010 + $0x31] sm:$0xff]
      %v1130 = vld [vmem:[%s1010 + $0x39] sm:$0x3f]
      %v1131 = vld [vmem:[%s1010 + $0x41] sm:$0xff]
      %v1132 = vld [vmem:[%s1010 + $0x49] sm:$0x3f]
      %v1133 = vld [vmem:[%s1010 + $0x51] sm:$0xff]
      %v1134 = vld [vmem:[%s1010 + $0x59] sm:$0x3f]
      %v1135 = vld [vmem:[%s1010 + $0x61] sm:$0xff]
      %v1136 = vld [vmem:[%s1010 + $0x69] sm:$0x3f]
      %v1137 = vld [vmem:[%s1010 + $0x71] sm:$0xff]
      %v1138 = vld [vmem:[%s1010 + $0x79] sm:$0x3f]
      %v1139 = vld [vmem:[%s1010 + $0x81] sm:$0xff]
      %v1140 = vld [vmem:[%s1010 + $0x89] sm:$0x3f]
      %v1141 = vld [vmem:[%s1010 + $0x91] sm:$0xff]
      %v1142 = vld [vmem:[%s1010 + $0x99] sm:$0x3f]
      %v1143 = vld [vmem:[%s1010 + $0xa1] sm:$0xff]
      %v1144 = vld [vmem:[%s1010 + $0xa9] sm:$0x3f]
      %v1145 = vld [vmem:[%s1010 + $0xb1] sm:$0xff]
      %v1146 = vld [vmem:[%s1010 + $0xb9] sm:$0x3f]
      %v1147 = vld [vmem:[%s1010 + $0xc1] sm:$0xff]
      %v1148 = vld [vmem:[%s1010 + $0xc9] sm:$0x3f]
      %v1149 = vld [vmem:[%s1010 + $0xd1] sm:$0xff]
      %v1150 = vld [vmem:[%s1010 + $0xd9] sm:$0x3f]
      %v1151 = vld [vmem:[%s1010 + $0xe1] sm:$0xff]
      %v1152 = vld [vmem:[%s1010 + $0xe9] sm:$0x3f]
      %v1153 = vld [vmem:[%s1010 + $0xf1] sm:$0xff]
      %v1154 = vld [vmem:[%s1010 + $0xf9] sm:$0x3f]
      %v1155 = vld [vmem:[%s1010 + $0x101] sm:$0xff]
      %v1156 = vld [vmem:[%s1010 + $0x109] sm:$0x3f]
      %v1157 = vld [vmem:[%s1010 + $0x111] sm:$0xff]
      %v1158 = vld [vmem:[%s1010 + $0x119] sm:$0x3f]
      %v1159 = vld [vmem:[%s1010 + $0x121] sm:$0xff]
      %v1160 = vld [vmem:[%s1010 + $0x129] sm:$0x3f]
      %v1161 = vld [vmem:[%s1010 + $0x131] sm:$0xff]
      %v1162 = vld [vmem:[%s1010 + $0x139] sm:$0x3f]
      %v1163 = vld [vmem:[%s1010 + $0x141] sm:$0xff]
      %v1164 = vld [vmem:[%s1010 + $0x149] sm:$0x3f]
      %v1165 = vld [vmem:[%s1010 + $0x151] sm:$0xff]
      %v1166 = vld [vmem:[%s1010 + $0x159] sm:$0x3f]
      %v1167 = vld [vmem:[%s1010 + $0x161] sm:$0xff]
      %v1168 = vld [vmem:[%s1010 + $0x169] sm:$0x3f]
      %v1169 = vld [vmem:[%s1010 + $0x171] sm:$0xff]
      %v1170 = vld [vmem:[%s1010 + $0x179] sm:$0x3f]
      %v1171 = vld [vmem:[%s1010 + $0x181] sm:$0xff]
      %v1172 = vld [vmem:[%s1010 + $0x189] sm:$0x3f]
      %v1173 = vld [vmem:[%s1010 + $0x191] sm:$0xff]
      %v1174 = vld [vmem:[%s1010 + $0x199] sm:$0x3f]
      %v1175 = vld [vmem:[%s1010 + $0x1a1] sm:$0xff]
      %v1176 = vld [vmem:[%s1010 + $0x1a9] sm:$0x3f]
      %v1177 = vld [vmem:[%s1010 + $0x1b1] sm:$0xff]
      %v1178 = vld [vmem:[%s1010 + $0x1b9] sm:$0x3f]
      %s1179 = smul.u32 %s43, 3
      %s1180 = sadd.s32 %s1179, 1
      %s1181 = smul.u32 %s1180, 3
      %s1182 = sld [smem:[#allocation2 + %s1181]]
      %s1183 = sadd.s32 %s1181, 1
      %s1184 = sld [smem:[#allocation2 + %s1183]]
      %s1185 = sadd.s32 %s1181, 2
      %s1186 = sld [smem:[#allocation2 + %s1185]]
      %v1187 = vstv %s1182
      %v1188 = vmul.f32 %v1187, %v954
      %v1189 = vmul.f32 %v1187, %v955
      %v1190 = vmul.f32 %v1187, %v956
      %v1191 = vmul.f32 %v1187, %v957
      %v1192 = vmul.f32 %v1187, %v958
      %v1193 = vmul.f32 %v1187, %v959
      %v1194 = vmul.f32 %v1187, %v960
      %v1195 = vmul.f32 %v1187, %v961
      %v1196 = vmul.f32 %v1187, %v962
      %v1197 = vmul.f32 %v1187, %v963
      %v1198 = vmul.f32 %v1187, %v964
      %v1199 = vmul.f32 %v1187, %v965
      %v1200 = vmul.f32 %v1187, %v966
      %v1201 = vmul.f32 %v1187, %v967
      %v1202 = vmul.f32 %v1187, %v968
      %v1203 = vmul.f32 %v1187, %v969
      %v1204 = vmul.f32 %v1187, %v970
      %v1205 = vmul.f32 %v1187, %v971
      %v1206 = vmul.f32 %v1187, %v972
      %v1207 = vmul.f32 %v1187, %v973
      %v1208 = vmul.f32 %v1187, %v974
      %v1209 = vmul.f32 %v1187, %v975
      %v1210 = vmul.f32 %v1187, %v976
      %v1211 = vmul.f32 %v1187, %v977
      %v1212 = vmul.f32 %v1187, %v978
      %v1213 = vmul.f32 %v1187, %v979
      %v1214 = vmul.f32 %v1187, %v980
      %v1215 = vmul.f32 %v1187, %v981
      %v1216 = vmul.f32 %v1187, %v982
      %v1217 = vmul.f32 %v1187, %v983
      %v1218 = vmul.f32 %v1187, %v984
      %v1219 = vmul.f32 %v1187, %v985
      %v1220 = vmul.f32 %v1187, %v986
      %v1221 = vmul.f32 %v1187, %v987
      %v1222 = vmul.f32 %v1187, %v988
      %v1223 = vmul.f32 %v1187, %v989
      %v1224 = vmul.f32 %v1187, %v990
      %v1225 = vmul.f32 %v1187, %v991
      %v1226 = vmul.f32 %v1187, %v992
      %v1227 = vmul.f32 %v1187, %v993
      %v1228 = vmul.f32 %v1187, %v994
      %v1229 = vmul.f32 %v1187, %v995
      %v1230 = vmul.f32 %v1187, %v996
      %v1231 = vmul.f32 %v1187, %v997
      %v1232 = vmul.f32 %v1187, %v998
      %v1233 = vmul.f32 %v1187, %v999
      %v1234 = vmul.f32 %v1187, %v1000
      %v1235 = vmul.f32 %v1187, %v1001
      %v1236 = vmul.f32 %v1187, %v1002
      %v1237 = vmul.f32 %v1187, %v1003
      %v1238 = vmul.f32 %v1187, %v1004
      %v1239 = vmul.f32 %v1187, %v1005
      %v1240 = vmul.f32 %v1187, %v1006
      %v1241 = vmul.f32 %v1187, %v1007
      %v1242 = vmul.f32 %v1187, %v1008
      %v1243 = vmul.f32 %v1187, %v1009
      %v1244 = vadd.f32 %v561, %v1188
      %v1245 = vadd.f32 %v562, %v1189
      %v1246 = vadd.f32 %v563, %v1190
      %v1247 = vadd.f32 %v564, %v1191
      %v1248 = vadd.f32 %v565, %v1192
      %v1249 = vadd.f32 %v566, %v1193
      %v1250 = vadd.f32 %v567, %v1194
      %v1251 = vadd.f32 %v568, %v1195
      %v1252 = vadd.f32 %v569, %v1196
      %v1253 = vadd.f32 %v570, %v1197
      %v1254 = vadd.f32 %v571, %v1198
      %v1255 = vadd.f32 %v572, %v1199
      %v1256 = vadd.f32 %v573, %v1200
      %v1257 = vadd.f32 %v574, %v1201
      %v1258 = vadd.f32 %v575, %v1202
      %v1259 = vadd.f32 %v576, %v1203
      %v1260 = vadd.f32 %v577, %v1204
      %v1261 = vadd.f32 %v578, %v1205
      %v1262 = vadd.f32 %v579, %v1206
      %v1263 = vadd.f32 %v580, %v1207
      %v1264 = vadd.f32 %v581, %v1208
      %v1265 = vadd.f32 %v582, %v1209
      %v1266 = vadd.f32 %v583, %v1210
      %v1267 = vadd.f32 %v584, %v1211
      %v1268 = vadd.f32 %v585, %v1212
      %v1269 = vadd.f32 %v586, %v1213
      %v1270 = vadd.f32 %v587, %v1214
      %v1271 = vadd.f32 %v588, %v1215
      %v1272 = vadd.f32 %v589, %v1216
      %v1273 = vadd.f32 %v590, %v1217
      %v1274 = vadd.f32 %v591, %v1218
      %v1275 = vadd.f32 %v592, %v1219
      %v1276 = vadd.f32 %v593, %v1220
      %v1277 = vadd.f32 %v594, %v1221
      %v1278 = vadd.f32 %v595, %v1222
      %v1279 = vadd.f32 %v596, %v1223
      %v1280 = vadd.f32 %v597, %v1224
      %v1281 = vadd.f32 %v598, %v1225
      %v1282 = vadd.f32 %v599, %v1226
      %v1283 = vadd.f32 %v600, %v1227
      %v1284 = vadd.f32 %v601, %v1228
      %v1285 = vadd.f32 %v602, %v1229
      %v1286 = vadd.f32 %v603, %v1230
      %v1287 = vadd.f32 %v604, %v1231
      %v1288 = vadd.f32 %v605, %v1232
      %v1289 = vadd.f32 %v606, %v1233
      %v1290 = vadd.f32 %v607, %v1234
      %v1291 = vadd.f32 %v608, %v1235
      %v1292 = vadd.f32 %v609, %v1236
      %v1293 = vadd.f32 %v610, %v1237
      %v1294 = vadd.f32 %v611, %v1238
      %v1295 = vadd.f32 %v612, %v1239
      %v1296 = vadd.f32 %v613, %v1240
      %v1297 = vadd.f32 %v614, %v1241
      %v1298 = vadd.f32 %v615, %v1242
      %v1299 = vadd.f32 %v616, %v1243
      %v1300 = vstv %s1184
      %v1301 = vmul.f32 %v1300, %v1011
      %v1302 = vmul.f32 %v1300, %v1012
      %v1303 = vmul.f32 %v1300, %v1013
      %v1304 = vmul.f32 %v1300, %v1014
      %v1305 = vmul.f32 %v1300, %v1015
      %v1306 = vmul.f32 %v1300, %v1016
      %v1307 = vmul.f32 %v1300, %v1017
      %v1308 = vmul.f32 %v1300, %v1018
      %v1309 = vmul.f32 %v1300, %v1019
      %v1310 = vmul.f32 %v1300, %v1020
      %v1311 = vmul.f32 %v1300, %v1021
      %v1312 = vmul.f32 %v1300, %v1022
      %v1313 = vmul.f32 %v1300, %v1023
      %v1314 = vmul.f32 %v1300, %v1024
      %v1315 = vmul.f32 %v1300, %v1025
      %v1316 = vmul.f32 %v1300, %v1026
      %v1317 = vmul.f32 %v1300, %v1027
      %v1318 = vmul.f32 %v1300, %v1028
      %v1319 = vmul.f32 %v1300, %v1029
      %v1320 = vmul.f32 %v1300, %v1030
      %v1321 = vmul.f32 %v1300, %v1031
      %v1322 = vmul.f32 %v1300, %v1032
      %v1323 = vmul.f32 %v1300, %v1033
      %v1324 = vmul.f32 %v1300, %v1034
      %v1325 = vmul.f32 %v1300, %v1035
      %v1326 = vmul.f32 %v1300, %v1036
      %v1327 = vmul.f32 %v1300, %v1037
      %v1328 = vmul.f32 %v1300, %v1038
      %v1329 = vmul.f32 %v1300, %v1039
      %v1330 = vmul.f32 %v1300, %v1040
      %v1331 = vmul.f32 %v1300, %v1041
      %v1332 = vmul.f32 %v1300, %v1042
      %v1333 = vmul.f32 %v1300, %v1043
      %v1334 = vmul.f32 %v1300, %v1044
      %v1335 = vmul.f32 %v1300, %v1045
      %v1336 = vmul.f32 %v1300, %v1046
      %v1337 = vmul.f32 %v1300, %v1047
      %v1338 = vmul.f32 %v1300, %v1048
      %v1339 = vmul.f32 %v1300, %v1049
      %v1340 = vmul.f32 %v1300, %v1050
      %v1341 = vmul.f32 %v1300, %v1051
      %v1342 = vmul.f32 %v1300, %v1052
      %v1343 = vmul.f32 %v1300, %v1053
      %v1344 = vmul.f32 %v1300, %v1054
      %v1345 = vmul.f32 %v1300, %v1055
      %v1346 = vmul.f32 %v1300, %v1056
      %v1347 = vmul.f32 %v1300, %v1057
      %v1348 = vmul.f32 %v1300, %v1058
      %v1349 = vmul.f32 %v1300, %v1059
      %v1350 = vmul.f32 %v1300, %v1060
      %v1351 = vmul.f32 %v1300, %v1061
      %v1352 = vmul.f32 %v1300, %v1062
      %v1353 = vmul.f32 %v1300, %v1063
      %v1354 = vmul.f32 %v1300, %v1064
      %v1355 = vmul.f32 %v1300, %v1065
      %v1356 = vmul.f32 %v1300, %v1066
      %v1357 = vadd.f32 %v1244, %v1301
      %v1358 = vadd.f32 %v1245, %v1302
      %v1359 = vadd.f32 %v1246, %v1303
      %v1360 = vadd.f32 %v1247, %v1304
      %v1361 = vadd.f32 %v1248, %v1305
      %v1362 = vadd.f32 %v1249, %v1306
      %v1363 = vadd.f32 %v1250, %v1307
      %v1364 = vadd.f32 %v1251, %v1308
      %v1365 = vadd.f32 %v1252, %v1309
      %v1366 = vadd.f32 %v1253, %v1310
      %v1367 = vadd.f32 %v1254, %v1311
      %v1368 = vadd.f32 %v1255, %v1312
      %v1369 = vadd.f32 %v1256, %v1313
      %v1370 = vadd.f32 %v1257, %v1314
      %v1371 = vadd.f32 %v1258, %v1315
      %v1372 = vadd.f32 %v1259, %v1316
      %v1373 = vadd.f32 %v1260, %v1317
      %v1374 = vadd.f32 %v1261, %v1318
      %v1375 = vadd.f32 %v1262, %v1319
      %v1376 = vadd.f32 %v1263, %v1320
      %v1377 = vadd.f32 %v1264, %v1321
      %v1378 = vadd.f32 %v1265, %v1322
      %v1379 = vadd.f32 %v1266, %v1323
      %v1380 = vadd.f32 %v1267, %v1324
      %v1381 = vadd.f32 %v1268, %v1325
      %v1382 = vadd.f32 %v1269, %v1326
      %v1383 = vadd.f32 %v1270, %v1327
      %v1384 = vadd.f32 %v1271, %v1328
      %v1385 = vadd.f32 %v1272, %v1329
      %v1386 = vadd.f32 %v1273, %v1330
      %v1387 = vadd.f32 %v1274, %v1331
      %v1388 = vadd.f32 %v1275, %v1332
      %v1389 = vadd.f32 %v1276, %v1333
      %v1390 = vadd.f32 %v1277, %v1334
      %v1391 = vadd.f32 %v1278, %v1335
      %v1392 = vadd.f32 %v1279, %v1336
      %v1393 = vadd.f32 %v1280, %v1337
      %v1394 = vadd.f32 %v1281, %v1338
      %v1395 = vadd.f32 %v1282, %v1339
      %v1396 = vadd.f32 %v1283, %v1340
      %v1397 = vadd.f32 %v1284, %v1341
      %v1398 = vadd.f32 %v1285, %v1342
      %v1399 = vadd.f32 %v1286, %v1343
      %v1400 = vadd.f32 %v1287, %v1344
      %v1401 = vadd.f32 %v1288, %v1345
      %v1402 = vadd.f32 %v1289, %v1346
      %v1403 = vadd.f32 %v1290, %v1347
      %v1404 = vadd.f32 %v1291, %v1348
      %v1405 = vadd.f32 %v1292, %v1349
      %v1406 = vadd.f32 %v1293, %v1350
      %v1407 = vadd.f32 %v1294, %v1351
      %v1408 = vadd.f32 %v1295, %v1352
      %v1409 = vadd.f32 %v1296, %v1353
      %v1410 = vadd.f32 %v1297, %v1354
      %v1411 = vadd.f32 %v1298, %v1355
      %v1412 = vadd.f32 %v1299, %v1356
      %v1413 = vstv %s1186
      %v1414 = vmul.f32 %v1413, %v1067
      %v1415 = vmul.f32 %v1413, %v1068
      %v1416 = vmul.f32 %v1413, %v1069
      %v1417 = vmul.f32 %v1413, %v1070
      %v1418 = vmul.f32 %v1413, %v1071
      %v1419 = vmul.f32 %v1413, %v1072
      %v1420 = vmul.f32 %v1413, %v1073
      %v1421 = vmul.f32 %v1413, %v1074
      %v1422 = vmul.f32 %v1413, %v1075
      %v1423 = vmul.f32 %v1413, %v1076
      %v1424 = vmul.f32 %v1413, %v1077
      %v1425 = vmul.f32 %v1413, %v1078
      %v1426 = vmul.f32 %v1413, %v1079
      %v1427 = vmul.f32 %v1413, %v1080
      %v1428 = vmul.f32 %v1413, %v1081
      %v1429 = vmul.f32 %v1413, %v1082
      %v1430 = vmul.f32 %v1413, %v1083
      %v1431 = vmul.f32 %v1413, %v1084
      %v1432 = vmul.f32 %v1413, %v1085
      %v1433 = vmul.f32 %v1413, %v1086
      %v1434 = vmul.f32 %v1413, %v1087
      %v1435 = vmul.f32 %v1413, %v1088
      %v1436 = vmul.f32 %v1413, %v1089
      %v1437 = vmul.f32 %v1413, %v1090
      %v1438 = vmul.f32 %v1413, %v1091
      %v1439 = vmul.f32 %v1413, %v1092
      %v1440 = vmul.f32 %v1413, %v1093
      %v1441 = vmul.f32 %v1413, %v1094
      %v1442 = vmul.f32 %v1413, %v1095
      %v1443 = vmul.f32 %v1413, %v1096
      %v1444 = vmul.f32 %v1413, %v1097
      %v1445 = vmul.f32 %v1413, %v1098
      %v1446 = vmul.f32 %v1413, %v1099
      %v1447 = vmul.f32 %v1413, %v1100
      %v1448 = vmul.f32 %v1413, %v1101
      %v1449 = vmul.f32 %v1413, %v1102
      %v1450 = vmul.f32 %v1413, %v1103
      %v1451 = vmul.f32 %v1413, %v1104
      %v1452 = vmul.f32 %v1413, %v1105
      %v1453 = vmul.f32 %v1413, %v1106
      %v1454 = vmul.f32 %v1413, %v1107
      %v1455 = vmul.f32 %v1413, %v1108
      %v1456 = vmul.f32 %v1413, %v1109
      %v1457 = vmul.f32 %v1413, %v1110
      %v1458 = vmul.f32 %v1413, %v1111
      %v1459 = vmul.f32 %v1413, %v1112
      %v1460 = vmul.f32 %v1413, %v1113
      %v1461 = vmul.f32 %v1413, %v1114
      %v1462 = vmul.f32 %v1413, %v1115
      %v1463 = vmul.f32 %v1413, %v1116
      %v1464 = vmul.f32 %v1413, %v1117
      %v1465 = vmul.f32 %v1413, %v1118
      %v1466 = vmul.f32 %v1413, %v1119
      %v1467 = vmul.f32 %v1413, %v1120
      %v1468 = vmul.f32 %v1413, %v1121
      %v1469 = vmul.f32 %v1413, %v1122
      %v1470 = vadd.f32 %v1357, %v1414
      %v1471 = vadd.f32 %v1358, %v1415
      %v1472 = vadd.f32 %v1359, %v1416
      %v1473 = vadd.f32 %v1360, %v1417
      %v1474 = vadd.f32 %v1361, %v1418
      %v1475 = vadd.f32 %v1362, %v1419
      %v1476 = vadd.f32 %v1363, %v1420
      %v1477 = vadd.f32 %v1364, %v1421
      %v1478 = vadd.f32 %v1365, %v1422
      %v1479 = vadd.f32 %v1366, %v1423
      %v1480 = vadd.f32 %v1367, %v1424
      %v1481 = vadd.f32 %v1368, %v1425
      %v1482 = vadd.f32 %v1369, %v1426
      %v1483 = vadd.f32 %v1370, %v1427
      %v1484 = vadd.f32 %v1371, %v1428
      %v1485 = vadd.f32 %v1372, %v1429
      %v1486 = vadd.f32 %v1373, %v1430
      %v1487 = vadd.f32 %v1374, %v1431
      %v1488 = vadd.f32 %v1375, %v1432
      %v1489 = vadd.f32 %v1376, %v1433
      %v1490 = vadd.f32 %v1377, %v1434
      %v1491 = vadd.f32 %v1378, %v1435
      %v1492 = vadd.f32 %v1379, %v1436
      %v1493 = vadd.f32 %v1380, %v1437
      %v1494 = vadd.f32 %v1381, %v1438
      %v1495 = vadd.f32 %v1382, %v1439
      %v1496 = vadd.f32 %v1383, %v1440
      %v1497 = vadd.f32 %v1384, %v1441
      %v1498 = vadd.f32 %v1385, %v1442
      %v1499 = vadd.f32 %v1386, %v1443
      %v1500 = vadd.f32 %v1387, %v1444
      %v1501 = vadd.f32 %v1388, %v1445
      %v1502 = vadd.f32 %v1389, %v1446
      %v1503 = vadd.f32 %v1390, %v1447
      %v1504 = vadd.f32 %v1391, %v1448
      %v1505 = vadd.f32 %v1392, %v1449
      %v1506 = vadd.f32 %v1393, %v1450
      %v1507 = vadd.f32 %v1394, %v1451
      %v1508 = vadd.f32 %v1395, %v1452
      %v1509 = vadd.f32 %v1396, %v1453
      %v1510 = vadd.f32 %v1397, %v1454
      %v1511 = vadd.f32 %v1398, %v1455
      %v1512 = vadd.f32 %v1399, %v1456
      %v1513 = vadd.f32 %v1400, %v1457
      %v1514 = vadd.f32 %v1401, %v1458
      %v1515 = vadd.f32 %v1402, %v1459
      %v1516 = vadd.f32 %v1403, %v1460
      %v1517 = vadd.f32 %v1404, %v1461
      %v1518 = vadd.f32 %v1405, %v1462
      %v1519 = vadd.f32 %v1406, %v1463
      %v1520 = vadd.f32 %v1407, %v1464
      %v1521 = vadd.f32 %v1408, %v1465
      %v1522 = vadd.f32 %v1409, %v1466
      %v1523 = vadd.f32 %v1410, %v1467
      %v1524 = vadd.f32 %v1411, %v1468
      %v1525 = vadd.f32 %v1412, %v1469
      %v1526 = vmul.f32 %v1187, %v1011
      %v1527 = vmul.f32 %v1187, %v1012
      %v1528 = vmul.f32 %v1187, %v1013
      %v1529 = vmul.f32 %v1187, %v1014
      %v1530 = vmul.f32 %v1187, %v1015
      %v1531 = vmul.f32 %v1187, %v1016
      %v1532 = vmul.f32 %v1187, %v1017
      %v1533 = vmul.f32 %v1187, %v1018
      %v1534 = vmul.f32 %v1187, %v1019
      %v1535 = vmul.f32 %v1187, %v1020
      %v1536 = vmul.f32 %v1187, %v1021
      %v1537 = vmul.f32 %v1187, %v1022
      %v1538 = vmul.f32 %v1187, %v1023
      %v1539 = vmul.f32 %v1187, %v1024
      %v1540 = vmul.f32 %v1187, %v1025
      %v1541 = vmul.f32 %v1187, %v1026
      %v1542 = vmul.f32 %v1187, %v1027
      %v1543 = vmul.f32 %v1187, %v1028
      %v1544 = vmul.f32 %v1187, %v1029
      %v1545 = vmul.f32 %v1187, %v1030
      %v1546 = vmul.f32 %v1187, %v1031
      %v1547 = vmul.f32 %v1187, %v1032
      %v1548 = vmul.f32 %v1187, %v1033
      %v1549 = vmul.f32 %v1187, %v1034
      %v1550 = vmul.f32 %v1187, %v1035
      %v1551 = vmul.f32 %v1187, %v1036
      %v1552 = vmul.f32 %v1187, %v1037
      %v1553 = vmul.f32 %v1187, %v1038
      %v1554 = vmul.f32 %v1187, %v1039
      %v1555 = vmul.f32 %v1187, %v1040
      %v1556 = vmul.f32 %v1187, %v1041
      %v1557 = vmul.f32 %v1187, %v1042
      %v1558 = vmul.f32 %v1187, %v1043
      %v1559 = vmul.f32 %v1187, %v1044
      %v1560 = vmul.f32 %v1187, %v1045
      %v1561 = vmul.f32 %v1187, %v1046
      %v1562 = vmul.f32 %v1187, %v1047
      %v1563 = vmul.f32 %v1187, %v1048
      %v1564 = vmul.f32 %v1187, %v1049
      %v1565 = vmul.f32 %v1187, %v1050
      %v1566 = vmul.f32 %v1187, %v1051
      %v1567 = vmul.f32 %v1187, %v1052
      %v1568 = vmul.f32 %v1187, %v1053
      %v1569 = vmul.f32 %v1187, %v1054
      %v1570 = vmul.f32 %v1187, %v1055
      %v1571 = vmul.f32 %v1187, %v1056
      %v1572 = vmul.f32 %v1187, %v1057
      %v1573 = vmul.f32 %v1187, %v1058
      %v1574 = vmul.f32 %v1187, %v1059
      %v1575 = vmul.f32 %v1187, %v1060
      %v1576 = vmul.f32 %v1187, %v1061
      %v1577 = vmul.f32 %v1187, %v1062
      %v1578 = vmul.f32 %v1187, %v1063
      %v1579 = vmul.f32 %v1187, %v1064
      %v1580 = vmul.f32 %v1187, %v1065
      %v1581 = vmul.f32 %v1187, %v1066
      %v1582 = vadd.f32 %v897, %v1526
      %v1583 = vadd.f32 %v898, %v1527
      %v1584 = vadd.f32 %v899, %v1528
      %v1585 = vadd.f32 %v900, %v1529
      %v1586 = vadd.f32 %v901, %v1530
      %v1587 = vadd.f32 %v902, %v1531
      %v1588 = vadd.f32 %v903, %v1532
      %v1589 = vadd.f32 %v904, %v1533
      %v1590 = vadd.f32 %v905, %v1534
      %v1591 = vadd.f32 %v906, %v1535
      %v1592 = vadd.f32 %v907, %v1536
      %v1593 = vadd.f32 %v908, %v1537
      %v1594 = vadd.f32 %v909, %v1538
      %v1595 = vadd.f32 %v910, %v1539
      %v1596 = vadd.f32 %v911, %v1540
      %v1597 = vadd.f32 %v912, %v1541
      %v1598 = vadd.f32 %v913, %v1542
      %v1599 = vadd.f32 %v914, %v1543
      %v1600 = vadd.f32 %v915, %v1544
      %v1601 = vadd.f32 %v916, %v1545
      %v1602 = vadd.f32 %v917, %v1546
      %v1603 = vadd.f32 %v918, %v1547
      %v1604 = vadd.f32 %v919, %v1548
      %v1605 = vadd.f32 %v920, %v1549
      %v1606 = vadd.f32 %v921, %v1550
      %v1607 = vadd.f32 %v922, %v1551
      %v1608 = vadd.f32 %v923, %v1552
      %v1609 = vadd.f32 %v924, %v1553
      %v1610 = vadd.f32 %v925, %v1554
      %v1611 = vadd.f32 %v926, %v1555
      %v1612 = vadd.f32 %v927, %v1556
      %v1613 = vadd.f32 %v928, %v1557
      %v1614 = vadd.f32 %v929, %v1558
      %v1615 = vadd.f32 %v930, %v1559
      %v1616 = vadd.f32 %v931, %v1560
      %v1617 = vadd.f32 %v932, %v1561
      %v1618 = vadd.f32 %v933, %v1562
      %v1619 = vadd.f32 %v934, %v1563
      %v1620 = vadd.f32 %v935, %v1564
      %v1621 = vadd.f32 %v936, %v1565
      %v1622 = vadd.f32 %v937, %v1566
      %v1623 = vadd.f32 %v938, %v1567
      %v1624 = vadd.f32 %v939, %v1568
      %v1625 = vadd.f32 %v940, %v1569
      %v1626 = vadd.f32 %v941, %v1570
      %v1627 = vadd.f32 %v942, %v1571
      %v1628 = vadd.f32 %v943, %v1572
      %v1629 = vadd.f32 %v944, %v1573
      %v1630 = vadd.f32 %v945, %v1574
      %v1631 = vadd.f32 %v946, %v1575
      %v1632 = vadd.f32 %v947, %v1576
      %v1633 = vadd.f32 %v948, %v1577
      %v1634 = vadd.f32 %v949, %v1578
      %v1635 = vadd.f32 %v950, %v1579
      %v1636 = vadd.f32 %v951, %v1580
      %v1637 = vadd.f32 %v952, %v1581
      %v1638 = vmul.f32 %v1300, %v1067
      %v1639 = vmul.f32 %v1300, %v1068
      %v1640 = vmul.f32 %v1300, %v1069
      %v1641 = vmul.f32 %v1300, %v1070
      %v1642 = vmul.f32 %v1300, %v1071
      %v1643 = vmul.f32 %v1300, %v1072
      %v1644 = vmul.f32 %v1300, %v1073
      %v1645 = vmul.f32 %v1300, %v1074
      %v1646 = vmul.f32 %v1300, %v1075
      %v1647 = vmul.f32 %v1300, %v1076
      %v1648 = vmul.f32 %v1300, %v1077
      %v1649 = vmul.f32 %v1300, %v1078
      %v1650 = vmul.f32 %v1300, %v1079
      %v1651 = vmul.f32 %v1300, %v1080
      %v1652 = vmul.f32 %v1300, %v1081
      %v1653 = vmul.f32 %v1300, %v1082
      %v1654 = vmul.f32 %v1300, %v1083
      %v1655 = vmul.f32 %v1300, %v1084
      %v1656 = vmul.f32 %v1300, %v1085
      %v1657 = vmul.f32 %v1300, %v1086
      %v1658 = vmul.f32 %v1300, %v1087
      %v1659 = vmul.f32 %v1300, %v1088
      %v1660 = vmul.f32 %v1300, %v1089
      %v1661 = vmul.f32 %v1300, %v1090
      %v1662 = vmul.f32 %v1300, %v1091
      %v1663 = vmul.f32 %v1300, %v1092
      %v1664 = vmul.f32 %v1300, %v1093
      %v1665 = vmul.f32 %v1300, %v1094
      %v1666 = vmul.f32 %v1300, %v1095
      %v1667 = vmul.f32 %v1300, %v1096
      %v1668 = vmul.f32 %v1300, %v1097
      %v1669 = vmul.f32 %v1300, %v1098
      %v1670 = vmul.f32 %v1300, %v1099
      %v1671 = vmul.f32 %v1300, %v1100
      %v1672 = vmul.f32 %v1300, %v1101
      %v1673 = vmul.f32 %v1300, %v1102
      %v1674 = vmul.f32 %v1300, %v1103
      %v1675 = vmul.f32 %v1300, %v1104
      %v1676 = vmul.f32 %v1300, %v1105
      %v1677 = vmul.f32 %v1300, %v1106
      %v1678 = vmul.f32 %v1300, %v1107
      %v1679 = vmul.f32 %v1300, %v1108
      %v1680 = vmul.f32 %v1300, %v1109
      %v1681 = vmul.f32 %v1300, %v1110
      %v1682 = vmul.f32 %v1300, %v1111
      %v1683 = vmul.f32 %v1300, %v1112
      %v1684 = vmul.f32 %v1300, %v1113
      %v1685 = vmul.f32 %v1300, %v1114
      %v1686 = vmul.f32 %v1300, %v1115
      %v1687 = vmul.f32 %v1300, %v1116
      %v1688 = vmul.f32 %v1300, %v1117
      %v1689 = vmul.f32 %v1300, %v1118
      %v1690 = vmul.f32 %v1300, %v1119
      %v1691 = vmul.f32 %v1300, %v1120
      %v1692 = vmul.f32 %v1300, %v1121
      %v1693 = vmul.f32 %v1300, %v1122
      %v1694 = vadd.f32 %v1582, %v1638
      %v1695 = vadd.f32 %v1583, %v1639
      %v1696 = vadd.f32 %v1584, %v1640
      %v1697 = vadd.f32 %v1585, %v1641
      %v1698 = vadd.f32 %v1586, %v1642
      %v1699 = vadd.f32 %v1587, %v1643
      %v1700 = vadd.f32 %v1588, %v1644
      %v1701 = vadd.f32 %v1589, %v1645
      %v1702 = vadd.f32 %v1590, %v1646
      %v1703 = vadd.f32 %v1591, %v1647
      %v1704 = vadd.f32 %v1592, %v1648
      %v1705 = vadd.f32 %v1593, %v1649
      %v1706 = vadd.f32 %v1594, %v1650
      %v1707 = vadd.f32 %v1595, %v1651
      %v1708 = vadd.f32 %v1596, %v1652
      %v1709 = vadd.f32 %v1597, %v1653
      %v1710 = vadd.f32 %v1598, %v1654
      %v1711 = vadd.f32 %v1599, %v1655
      %v1712 = vadd.f32 %v1600, %v1656
      %v1713 = vadd.f32 %v1601, %v1657
      %v1714 = vadd.f32 %v1602, %v1658
      %v1715 = vadd.f32 %v1603, %v1659
      %v1716 = vadd.f32 %v1604, %v1660
      %v1717 = vadd.f32 %v1605, %v1661
      %v1718 = vadd.f32 %v1606, %v1662
      %v1719 = vadd.f32 %v1607, %v1663
      %v1720 = vadd.f32 %v1608, %v1664
      %v1721 = vadd.f32 %v1609, %v1665
      %v1722 = vadd.f32 %v1610, %v1666
      %v1723 = vadd.f32 %v1611, %v1667
      %v1724 = vadd.f32 %v1612, %v1668
      %v1725 = vadd.f32 %v1613, %v1669
      %v1726 = vadd.f32 %v1614, %v1670
      %v1727 = vadd.f32 %v1615, %v1671
      %v1728 = vadd.f32 %v1616, %v1672
      %v1729 = vadd.f32 %v1617, %v1673
      %v1730 = vadd.f32 %v1618, %v1674
      %v1731 = vadd.f32 %v1619, %v1675
      %v1732 = vadd.f32 %v1620, %v1676
      %v1733 = vadd.f32 %v1621, %v1677
      %v1734 = vadd.f32 %v1622, %v1678
      %v1735 = vadd.f32 %v1623, %v1679
      %v1736 = vadd.f32 %v1624, %v1680
      %v1737 = vadd.f32 %v1625, %v1681
      %v1738 = vadd.f32 %v1626, %v1682
      %v1739 = vadd.f32 %v1627, %v1683
      %v1740 = vadd.f32 %v1628, %v1684
      %v1741 = vadd.f32 %v1629, %v1685
      %v1742 = vadd.f32 %v1630, %v1686
      %v1743 = vadd.f32 %v1631, %v1687
      %v1744 = vadd.f32 %v1632, %v1688
      %v1745 = vadd.f32 %v1633, %v1689
      %v1746 = vadd.f32 %v1634, %v1690
      %v1747 = vadd.f32 %v1635, %v1691
      %v1748 = vadd.f32 %v1636, %v1692
      %v1749 = vadd.f32 %v1637, %v1693
      %v1750 = vmul.f32 %v1413, %v1123
      %v1751 = vmul.f32 %v1413, %v1124
      %v1752 = vmul.f32 %v1413, %v1125
      %v1753 = vmul.f32 %v1413, %v1126
      %v1754 = vmul.f32 %v1413, %v1127
      %v1755 = vmul.f32 %v1413, %v1128
      %v1756 = vmul.f32 %v1413, %v1129
      %v1757 = vmul.f32 %v1413, %v1130
      %v1758 = vmul.f32 %v1413, %v1131
      %v1759 = vmul.f32 %v1413, %v1132
      %v1760 = vmul.f32 %v1413, %v1133
      %v1761 = vmul.f32 %v1413, %v1134
      %v1762 = vmul.f32 %v1413, %v1135
      %v1763 = vmul.f32 %v1413, %v1136
      %v1764 = vmul.f32 %v1413, %v1137
      %v1765 = vmul.f32 %v1413, %v1138
      %v1766 = vmul.f32 %v1413, %v1139
      %v1767 = vmul.f32 %v1413, %v1140
      %v1768 = vmul.f32 %v1413, %v1141
      %v1769 = vmul.f32 %v1413, %v1142
      %v1770 = vmul.f32 %v1413, %v1143
      %v1771 = vmul.f32 %v1413, %v1144
      %v1772 = vmul.f32 %v1413, %v1145
      %v1773 = vmul.f32 %v1413, %v1146
      %v1774 = vmul.f32 %v1413, %v1147
      %v1775 = vmul.f32 %v1413, %v1148
      %v1776 = vmul.f32 %v1413, %v1149
      %v1777 = vmul.f32 %v1413, %v1150
      %v1778 = vmul.f32 %v1413, %v1151
      %v1779 = vmul.f32 %v1413, %v1152
      %v1780 = vmul.f32 %v1413, %v1153
      %v1781 = vmul.f32 %v1413, %v1154
      %v1782 = vmul.f32 %v1413, %v1155
      %v1783 = vmul.f32 %v1413, %v1156
      %v1784 = vmul.f32 %v1413, %v1157
      %v1785 = vmul.f32 %v1413, %v1158
      %v1786 = vmul.f32 %v1413, %v1159
      %v1787 = vmul.f32 %v1413, %v1160
      %v1788 = vmul.f32 %v1413, %v1161
      %v1789 = vmul.f32 %v1413, %v1162
      %v1790 = vmul.f32 %v1413, %v1163
      %v1791 = vmul.f32 %v1413, %v1164
      %v1792 = vmul.f32 %v1413, %v1165
      %v1793 = vmul.f32 %v1413, %v1166
      %v1794 = vmul.f32 %v1413, %v1167
      %v1795 = vmul.f32 %v1413, %v1168
      %v1796 = vmul.f32 %v1413, %v1169
      %v1797 = vmul.f32 %v1413, %v1170
      %v1798 = vmul.f32 %v1413, %v1171
      %v1799 = vmul.f32 %v1413, %v1172
      %v1800 = vmul.f32 %v1413, %v1173
      %v1801 = vmul.f32 %v1413, %v1174
      %v1802 = vmul.f32 %v1413, %v1175
      %v1803 = vmul.f32 %v1413, %v1176
      %v1804 = vmul.f32 %v1413, %v1177
      %v1805 = vmul.f32 %v1413, %v1178
      %v1806 = vadd.f32 %v1694, %v1750
      %v1807 = vadd.f32 %v1695, %v1751
      %v1808 = vadd.f32 %v1696, %v1752
      %v1809 = vadd.f32 %v1697, %v1753
      %v1810 = vadd.f32 %v1698, %v1754
      %v1811 = vadd.f32 %v1699, %v1755
      %v1812 = vadd.f32 %v1700, %v1756
      %v1813 = vadd.f32 %v1701, %v1757
      %v1814 = vadd.f32 %v1702, %v1758
      %v1815 = vadd.f32 %v1703, %v1759
      %v1816 = vadd.f32 %v1704, %v1760
      %v1817 = vadd.f32 %v1705, %v1761
      %v1818 = vadd.f32 %v1706, %v1762
      %v1819 = vadd.f32 %v1707, %v1763
      %v1820 = vadd.f32 %v1708, %v1764
      %v1821 = vadd.f32 %v1709, %v1765
      %v1822 = vadd.f32 %v1710, %v1766
      %v1823 = vadd.f32 %v1711, %v1767
      %v1824 = vadd.f32 %v1712, %v1768
      %v1825 = vadd.f32 %v1713, %v1769
      %v1826 = vadd.f32 %v1714, %v1770
      %v1827 = vadd.f32 %v1715, %v1771
      %v1828 = vadd.f32 %v1716, %v1772
      %v1829 = vadd.f32 %v1717, %v1773
      %v1830 = vadd.f32 %v1718, %v1774
      %v1831 = vadd.f32 %v1719, %v1775
      %v1832 = vadd.f32 %v1720, %v1776
      %v1833 = vadd.f32 %v1721, %v1777
      %v1834 = vadd.f32 %v1722, %v1778
      %v1835 = vadd.f32 %v1723, %v1779
      %v1836 = vadd.f32 %v1724, %v1780
      %v1837 = vadd.f32 %v1725, %v1781
      %v1838 = vadd.f32 %v1726, %v1782
      %v1839 = vadd.f32 %v1727, %v1783
      %v1840 = vadd.f32 %v1728, %v1784
      %v1841 = vadd.f32 %v1729, %v1785
      %v1842 = vadd.f32 %v1730, %v1786
      %v1843 = vadd.f32 %v1731, %v1787
      %v1844 = vadd.f32 %v1732, %v1788
      %v1845 = vadd.f32 %v1733, %v1789
      %v1846 = vadd.f32 %v1734, %v1790
      %v1847 = vadd.f32 %v1735, %v1791
      %v1848 = vadd.f32 %v1736, %v1792
      %v1849 = vadd.f32 %v1737, %v1793
      %v1850 = vadd.f32 %v1738, %v1794
      %v1851 = vadd.f32 %v1739, %v1795
      %v1852 = vadd.f32 %v1740, %v1796
      %v1853 = vadd.f32 %v1741, %v1797
      %v1854 = vadd.f32 %v1742, %v1798
      %v1855 = vadd.f32 %v1743, %v1799
      %v1856 = vadd.f32 %v1744, %v1800
      %v1857 = vadd.f32 %v1745, %v1801
      %v1858 = vadd.f32 %v1746, %v1802
      %v1859 = vadd.f32 %v1747, %v1803
      %v1860 = vadd.f32 %v1748, %v1804
      %v1861 = vadd.f32 %v1749, %v1805
      %s1862 = scalar_lea.vmem %s2, 32
      %v1863 = vld [vmem:[%s1862] sm:$0xff]
      %v1864 = vld [vmem:[%s1862 + $0x8] sm:$0x3f]
      %v1865 = vld [vmem:[%s1862 + $0x10] sm:$0xff]
      %v1866 = vld [vmem:[%s1862 + $0x18] sm:$0x3f]
      %v1867 = vld [vmem:[%s1862 + $0x20] sm:$0xff]
      %v1868 = vld [vmem:[%s1862 + $0x28] sm:$0x3f]
      %v1869 = vld [vmem:[%s1862 + $0x30] sm:$0xff]
      %v1870 = vld [vmem:[%s1862 + $0x38] sm:$0x3f]
      %v1871 = vld [vmem:[%s1862 + $0x40] sm:$0xff]
      %v1872 = vld [vmem:[%s1862 + $0x48] sm:$0x3f]
      %v1873 = vld [vmem:[%s1862 + $0x50] sm:$0xff]
      %v1874 = vld [vmem:[%s1862 + $0x58] sm:$0x3f]
      %v1875 = vld [vmem:[%s1862 + $0x60] sm:$0xff]
      %v1876 = vld [vmem:[%s1862 + $0x68] sm:$0x3f]
      %v1877 = vld [vmem:[%s1862 + $0x70] sm:$0xff]
      %v1878 = vld [vmem:[%s1862 + $0x78] sm:$0x3f]
      %v1879 = vld [vmem:[%s1862 + $0x80] sm:$0xff]
      %v1880 = vld [vmem:[%s1862 + $0x88] sm:$0x3f]
      %v1881 = vld [vmem:[%s1862 + $0x90] sm:$0xff]
      %v1882 = vld [vmem:[%s1862 + $0x98] sm:$0x3f]
      %v1883 = vld [vmem:[%s1862 + $0xa0] sm:$0xff]
      %v1884 = vld [vmem:[%s1862 + $0xa8] sm:$0x3f]
      %v1885 = vld [vmem:[%s1862 + $0xb0] sm:$0xff]
      %v1886 = vld [vmem:[%s1862 + $0xb8] sm:$0x3f]
      %v1887 = vld [vmem:[%s1862 + $0xc0] sm:$0xff]
      %v1888 = vld [vmem:[%s1862 + $0xc8] sm:$0x3f]
      %v1889 = vld [vmem:[%s1862 + $0xd0] sm:$0xff]
      %v1890 = vld [vmem:[%s1862 + $0xd8] sm:$0x3f]
      %v1891 = vld [vmem:[%s1862 + $0xe0] sm:$0xff]
      %v1892 = vld [vmem:[%s1862 + $0xe8] sm:$0x3f]
      %v1893 = vld [vmem:[%s1862 + $0xf0] sm:$0xff]
      %v1894 = vld [vmem:[%s1862 + $0xf8] sm:$0x3f]
      %v1895 = vld [vmem:[%s1862 + $0x100] sm:$0xff]
      %v1896 = vld [vmem:[%s1862 + $0x108] sm:$0x3f]
      %v1897 = vld [vmem:[%s1862 + $0x110] sm:$0xff]
      %v1898 = vld [vmem:[%s1862 + $0x118] sm:$0x3f]
      %v1899 = vld [vmem:[%s1862 + $0x120] sm:$0xff]
      %v1900 = vld [vmem:[%s1862 + $0x128] sm:$0x3f]
      %v1901 = vld [vmem:[%s1862 + $0x130] sm:$0xff]
      %v1902 = vld [vmem:[%s1862 + $0x138] sm:$0x3f]
      %v1903 = vld [vmem:[%s1862 + $0x140] sm:$0xff]
      %v1904 = vld [vmem:[%s1862 + $0x148] sm:$0x3f]
      %v1905 = vld [vmem:[%s1862 + $0x150] sm:$0xff]
      %v1906 = vld [vmem:[%s1862 + $0x158] sm:$0x3f]
      %v1907 = vld [vmem:[%s1862 + $0x160] sm:$0xff]
      %v1908 = vld [vmem:[%s1862 + $0x168] sm:$0x3f]
      %v1909 = vld [vmem:[%s1862 + $0x170] sm:$0xff]
      %v1910 = vld [vmem:[%s1862 + $0x178] sm:$0x3f]
      %v1911 = vld [vmem:[%s1862 + $0x180] sm:$0xff]
      %v1912 = vld [vmem:[%s1862 + $0x188] sm:$0x3f]
      %v1913 = vld [vmem:[%s1862 + $0x190] sm:$0xff]
      %v1914 = vld [vmem:[%s1862 + $0x198] sm:$0x3f]
      %v1915 = vld [vmem:[%s1862 + $0x1a0] sm:$0xff]
      %v1916 = vld [vmem:[%s1862 + $0x1a8] sm:$0x3f]
      %v1917 = vld [vmem:[%s1862 + $0x1b0] sm:$0xff]
      %v1918 = vld [vmem:[%s1862 + $0x1b8] sm:$0x3f]
      %s1919 = scalar_lea.vmem %s3, 32
      %v1920 = vld [vmem:[%s1919] sm:$0xff]
      %v1921 = vld [vmem:[%s1919 + $0x8] sm:$0x3f]
      %v1922 = vld [vmem:[%s1919 + $0x10] sm:$0xff]
      %v1923 = vld [vmem:[%s1919 + $0x18] sm:$0x3f]
      %v1924 = vld [vmem:[%s1919 + $0x20] sm:$0xff]
      %v1925 = vld [vmem:[%s1919 + $0x28] sm:$0x3f]
      %v1926 = vld [vmem:[%s1919 + $0x30] sm:$0xff]
      %v1927 = vld [vmem:[%s1919 + $0x38] sm:$0x3f]
      %v1928 = vld [vmem:[%s1919 + $0x40] sm:$0xff]
      %v1929 = vld [vmem:[%s1919 + $0x48] sm:$0x3f]
      %v1930 = vld [vmem:[%s1919 + $0x50] sm:$0xff]
      %v1931 = vld [vmem:[%s1919 + $0x58] sm:$0x3f]
      %v1932 = vld [vmem:[%s1919 + $0x60] sm:$0xff]
      %v1933 = vld [vmem:[%s1919 + $0x68] sm:$0x3f]
      %v1934 = vld [vmem:[%s1919 + $0x70] sm:$0xff]
      %v1935 = vld [vmem:[%s1919 + $0x78] sm:$0x3f]
      %v1936 = vld [vmem:[%s1919 + $0x80] sm:$0xff]
      %v1937 = vld [vmem:[%s1919 + $0x88] sm:$0x3f]
      %v1938 = vld [vmem:[%s1919 + $0x90] sm:$0xff]
      %v1939 = vld [vmem:[%s1919 + $0x98] sm:$0x3f]
      %v1940 = vld [vmem:[%s1919 + $0xa0] sm:$0xff]
      %v1941 = vld [vmem:[%s1919 + $0xa8] sm:$0x3f]
      %v1942 = vld [vmem:[%s1919 + $0xb0] sm:$0xff]
      %v1943 = vld [vmem:[%s1919 + $0xb8] sm:$0x3f]
      %v1944 = vld [vmem:[%s1919 + $0xc0] sm:$0xff]
      %v1945 = vld [vmem:[%s1919 + $0xc8] sm:$0x3f]
      %v1946 = vld [vmem:[%s1919 + $0xd0] sm:$0xff]
      %v1947 = vld [vmem:[%s1919 + $0xd8] sm:$0x3f]
      %v1948 = vld [vmem:[%s1919 + $0xe0] sm:$0xff]
      %v1949 = vld [vmem:[%s1919 + $0xe8] sm:$0x3f]
      %v1950 = vld [vmem:[%s1919 + $0xf0] sm:$0xff]
      %v1951 = vld [vmem:[%s1919 + $0xf8] sm:$0x3f]
      %v1952 = vld [vmem:[%s1919 + $0x100] sm:$0xff]
      %v1953 = vld [vmem:[%s1919 + $0x108] sm:$0x3f]
      %v1954 = vld [vmem:[%s1919 + $0x110] sm:$0xff]
      %v1955 = vld [vmem:[%s1919 + $0x118] sm:$0x3f]
      %v1956 = vld [vmem:[%s1919 + $0x120] sm:$0xff]
      %v1957 = vld [vmem:[%s1919 + $0x128] sm:$0x3f]
      %v1958 = vld [vmem:[%s1919 + $0x130] sm:$0xff]
      %v1959 = vld [vmem:[%s1919 + $0x138] sm:$0x3f]
      %v1960 = vld [vmem:[%s1919 + $0x140] sm:$0xff]
      %v1961 = vld [vmem:[%s1919 + $0x148] sm:$0x3f]
      %v1962 = vld [vmem:[%s1919 + $0x150] sm:$0xff]
      %v1963 = vld [vmem:[%s1919 + $0x158] sm:$0x3f]
      %v1964 = vld [vmem:[%s1919 + $0x160] sm:$0xff]
      %v1965 = vld [vmem:[%s1919 + $0x168] sm:$0x3f]
      %v1966 = vld [vmem:[%s1919 + $0x170] sm:$0xff]
      %v1967 = vld [vmem:[%s1919 + $0x178] sm:$0x3f]
      %v1968 = vld [vmem:[%s1919 + $0x180] sm:$0xff]
      %v1969 = vld [vmem:[%s1919 + $0x188] sm:$0x3f]
      %v1970 = vld [vmem:[%s1919 + $0x190] sm:$0xff]
      %v1971 = vld [vmem:[%s1919 + $0x198] sm:$0x3f]
      %v1972 = vld [vmem:[%s1919 + $0x1a0] sm:$0xff]
      %v1973 = vld [vmem:[%s1919 + $0x1a8] sm:$0x3f]
      %v1974 = vld [vmem:[%s1919 + $0x1b0] sm:$0xff]
      %v1975 = vld [vmem:[%s1919 + $0x1b8] sm:$0x3f]
      %v1976 = vld [vmem:[%s1862 + $0x1] sm:$0xff]
      %v1977 = vld [vmem:[%s1862 + $0x9] sm:$0x3f]
      %v1978 = vld [vmem:[%s1862 + $0x11] sm:$0xff]
      %v1979 = vld [vmem:[%s1862 + $0x19] sm:$0x3f]
      %v1980 = vld [vmem:[%s1862 + $0x21] sm:$0xff]
      %v1981 = vld [vmem:[%s1862 + $0x29] sm:$0x3f]
      %v1982 = vld [vmem:[%s1862 + $0x31] sm:$0xff]
      %v1983 = vld [vmem:[%s1862 + $0x39] sm:$0x3f]
      %v1984 = vld [vmem:[%s1862 + $0x41] sm:$0xff]
      %v1985 = vld [vmem:[%s1862 + $0x49] sm:$0x3f]
      %v1986 = vld [vmem:[%s1862 + $0x51] sm:$0xff]
      %v1987 = vld [vmem:[%s1862 + $0x59] sm:$0x3f]
      %v1988 = vld [vmem:[%s1862 + $0x61] sm:$0xff]
      %v1989 = vld [vmem:[%s1862 + $0x69] sm:$0x3f]
      %v1990 = vld [vmem:[%s1862 + $0x71] sm:$0xff]
      %v1991 = vld [vmem:[%s1862 + $0x79] sm:$0x3f]
      %v1992 = vld [vmem:[%s1862 + $0x81] sm:$0xff]
      %v1993 = vld [vmem:[%s1862 + $0x89] sm:$0x3f]
      %v1994 = vld [vmem:[%s1862 + $0x91] sm:$0xff]
      %v1995 = vld [vmem:[%s1862 + $0x99] sm:$0x3f]
      %v1996 = vld [vmem:[%s1862 + $0xa1] sm:$0xff]
      %v1997 = vld [vmem:[%s1862 + $0xa9] sm:$0x3f]
      %v1998 = vld [vmem:[%s1862 + $0xb1] sm:$0xff]
      %v1999 = vld [vmem:[%s1862 + $0xb9] sm:$0x3f]
      %v2000 = vld [vmem:[%s1862 + $0xc1] sm:$0xff]
      %v2001 = vld [vmem:[%s1862 + $0xc9] sm:$0x3f]
      %v2002 = vld [vmem:[%s1862 + $0xd1] sm:$0xff]
      %v2003 = vld [vmem:[%s1862 + $0xd9] sm:$0x3f]
      %v2004 = vld [vmem:[%s1862 + $0xe1] sm:$0xff]
      %v2005 = vld [vmem:[%s1862 + $0xe9] sm:$0x3f]
      %v2006 = vld [vmem:[%s1862 + $0xf1] sm:$0xff]
      %v2007 = vld [vmem:[%s1862 + $0xf9] sm:$0x3f]
      %v2008 = vld [vmem:[%s1862 + $0x101] sm:$0xff]
      %v2009 = vld [vmem:[%s1862 + $0x109] sm:$0x3f]
      %v2010 = vld [vmem:[%s1862 + $0x111] sm:$0xff]
      %v2011 = vld [vmem:[%s1862 + $0x119] sm:$0x3f]
      %v2012 = vld [vmem:[%s1862 + $0x121] sm:$0xff]
      %v2013 = vld [vmem:[%s1862 + $0x129] sm:$0x3f]
      %v2014 = vld [vmem:[%s1862 + $0x131] sm:$0xff]
      %v2015 = vld [vmem:[%s1862 + $0x139] sm:$0x3f]
      %v2016 = vld [vmem:[%s1862 + $0x141] sm:$0xff]
      %v2017 = vld [vmem:[%s1862 + $0x149] sm:$0x3f]
      %v2018 = vld [vmem:[%s1862 + $0x151] sm:$0xff]
      %v2019 = vld [vmem:[%s1862 + $0x159] sm:$0x3f]
      %v2020 = vld [vmem:[%s1862 + $0x161] sm:$0xff]
      %v2021 = vld [vmem:[%s1862 + $0x169] sm:$0x3f]
      %v2022 = vld [vmem:[%s1862 + $0x171] sm:$0xff]
      %v2023 = vld [vmem:[%s1862 + $0x179] sm:$0x3f]
      %v2024 = vld [vmem:[%s1862 + $0x181] sm:$0xff]
      %v2025 = vld [vmem:[%s1862 + $0x189] sm:$0x3f]
      %v2026 = vld [vmem:[%s1862 + $0x191] sm:$0xff]
      %v2027 = vld [vmem:[%s1862 + $0x199] sm:$0x3f]
      %v2028 = vld [vmem:[%s1862 + $0x1a1] sm:$0xff]
      %v2029 = vld [vmem:[%s1862 + $0x1a9] sm:$0x3f]
      %v2030 = vld [vmem:[%s1862 + $0x1b1] sm:$0xff]
      %v2031 = vld [vmem:[%s1862 + $0x1b9] sm:$0x3f]
      %v2032 = vld [vmem:[%s1919 + $0x1] sm:$0xff]
      %v2033 = vld [vmem:[%s1919 + $0x9] sm:$0x3f]
      %v2034 = vld [vmem:[%s1919 + $0x11] sm:$0xff]
      %v2035 = vld [vmem:[%s1919 + $0x19] sm:$0x3f]
      %v2036 = vld [vmem:[%s1919 + $0x21] sm:$0xff]
      %v2037 = vld [vmem:[%s1919 + $0x29] sm:$0x3f]
      %v2038 = vld [vmem:[%s1919 + $0x31] sm:$0xff]
      %v2039 = vld [vmem:[%s1919 + $0x39] sm:$0x3f]
      %v2040 = vld [vmem:[%s1919 + $0x41] sm:$0xff]
      %v2041 = vld [vmem:[%s1919 + $0x49] sm:$0x3f]
      %v2042 = vld [vmem:[%s1919 + $0x51] sm:$0xff]
      %v2043 = vld [vmem:[%s1919 + $0x59] sm:$0x3f]
      %v2044 = vld [vmem:[%s1919 + $0x61] sm:$0xff]
      %v2045 = vld [vmem:[%s1919 + $0x69] sm:$0x3f]
      %v2046 = vld [vmem:[%s1919 + $0x71] sm:$0xff]
      %v2047 = vld [vmem:[%s1919 + $0x79] sm:$0x3f]
      %v2048 = vld [vmem:[%s1919 + $0x81] sm:$0xff]
      %v2049 = vld [vmem:[%s1919 + $0x89] sm:$0x3f]
      %v2050 = vld [vmem:[%s1919 + $0x91] sm:$0xff]
      %v2051 = vld [vmem:[%s1919 + $0x99] sm:$0x3f]
      %v2052 = vld [vmem:[%s1919 + $0xa1] sm:$0xff]
      %v2053 = vld [vmem:[%s1919 + $0xa9] sm:$0x3f]
      %v2054 = vld [vmem:[%s1919 + $0xb1] sm:$0xff]
      %v2055 = vld [vmem:[%s1919 + $0xb9] sm:$0x3f]
      %v2056 = vld [vmem:[%s1919 + $0xc1] sm:$0xff]
      %v2057 = vld [vmem:[%s1919 + $0xc9] sm:$0x3f]
      %v2058 = vld [vmem:[%s1919 + $0xd1] sm:$0xff]
      %v2059 = vld [vmem:[%s1919 + $0xd9] sm:$0x3f]
      %v2060 = vld [vmem:[%s1919 + $0xe1] sm:$0xff]
      %v2061 = vld [vmem:[%s1919 + $0xe9] sm:$0x3f]
      %v2062 = vld [vmem:[%s1919 + $0xf1] sm:$0xff]
      %v2063 = vld [vmem:[%s1919 + $0xf9] sm:$0x3f]
      %v2064 = vld [vmem:[%s1919 + $0x101] sm:$0xff]
      %v2065 = vld [vmem:[%s1919 + $0x109] sm:$0x3f]
      %v2066 = vld [vmem:[%s1919 + $0x111] sm:$0xff]
      %v2067 = vld [vmem:[%s1919 + $0x119] sm:$0x3f]
      %v2068 = vld [vmem:[%s1919 + $0x121] sm:$0xff]
      %v2069 = vld [vmem:[%s1919 + $0x129] sm:$0x3f]
      %v2070 = vld [vmem:[%s1919 + $0x131] sm:$0xff]
      %v2071 = vld [vmem:[%s1919 + $0x139] sm:$0x3f]
      %v2072 = vld [vmem:[%s1919 + $0x141] sm:$0xff]
      %v2073 = vld [vmem:[%s1919 + $0x149] sm:$0x3f]
      %v2074 = vld [vmem:[%s1919 + $0x151] sm:$0xff]
      %v2075 = vld [vmem:[%s1919 + $0x159] sm:$0x3f]
      %v2076 = vld [vmem:[%s1919 + $0x161] sm:$0xff]
      %v2077 = vld [vmem:[%s1919 + $0x169] sm:$0x3f]
      %v2078 = vld [vmem:[%s1919 + $0x171] sm:$0xff]
      %v2079 = vld [vmem:[%s1919 + $0x179] sm:$0x3f]
      %v2080 = vld [vmem:[%s1919 + $0x181] sm:$0xff]
      %v2081 = vld [vmem:[%s1919 + $0x189] sm:$0x3f]
      %v2082 = vld [vmem:[%s1919 + $0x191] sm:$0xff]
      %v2083 = vld [vmem:[%s1919 + $0x199] sm:$0x3f]
      %v2084 = vld [vmem:[%s1919 + $0x1a1] sm:$0xff]
      %v2085 = vld [vmem:[%s1919 + $0x1a9] sm:$0x3f]
      %v2086 = vld [vmem:[%s1919 + $0x1b1] sm:$0xff]
      %v2087 = vld [vmem:[%s1919 + $0x1b9] sm:$0x3f]
      %s2088 = sadd.s32 %s1179, 2
      %s2089 = smul.u32 %s2088, 3
      %s2090 = sld [smem:[#allocation2 + %s2089]]
      %s2091 = sadd.s32 %s2089, 1
      %s2092 = sld [smem:[#allocation2 + %s2091]]
      %s2093 = sadd.s32 %s2089, 2
      %s2094 = sld [smem:[#allocation2 + %s2093]]
      %v2095 = vstv %s2090
      %v2096 = vmul.f32 %v2095, %v1863
      %v2097 = vmul.f32 %v2095, %v1864
      %v2098 = vmul.f32 %v2095, %v1865
      %v2099 = vmul.f32 %v2095, %v1866
      %v2100 = vmul.f32 %v2095, %v1867
      %v2101 = vmul.f32 %v2095, %v1868
      %v2102 = vmul.f32 %v2095, %v1869
      %v2103 = vmul.f32 %v2095, %v1870
      %v2104 = vmul.f32 %v2095, %v1871
      %v2105 = vmul.f32 %v2095, %v1872
      %v2106 = vmul.f32 %v2095, %v1873
      %v2107 = vmul.f32 %v2095, %v1874
      %v2108 = vmul.f32 %v2095, %v1875
      %v2109 = vmul.f32 %v2095, %v1876
      %v2110 = vmul.f32 %v2095, %v1877
      %v2111 = vmul.f32 %v2095, %v1878
      %v2112 = vmul.f32 %v2095, %v1879
      %v2113 = vmul.f32 %v2095, %v1880
      %v2114 = vmul.f32 %v2095, %v1881
      %v2115 = vmul.f32 %v2095, %v1882
      %v2116 = vmul.f32 %v2095, %v1883
      %v2117 = vmul.f32 %v2095, %v1884
      %v2118 = vmul.f32 %v2095, %v1885
      %v2119 = vmul.f32 %v2095, %v1886
      %v2120 = vmul.f32 %v2095, %v1887
      %v2121 = vmul.f32 %v2095, %v1888
      %v2122 = vmul.f32 %v2095, %v1889
      %v2123 = vmul.f32 %v2095, %v1890
      %v2124 = vmul.f32 %v2095, %v1891
      %v2125 = vmul.f32 %v2095, %v1892
      %v2126 = vmul.f32 %v2095, %v1893
      %v2127 = vmul.f32 %v2095, %v1894
      %v2128 = vmul.f32 %v2095, %v1895
      %v2129 = vmul.f32 %v2095, %v1896
      %v2130 = vmul.f32 %v2095, %v1897
      %v2131 = vmul.f32 %v2095, %v1898
      %v2132 = vmul.f32 %v2095, %v1899
      %v2133 = vmul.f32 %v2095, %v1900
      %v2134 = vmul.f32 %v2095, %v1901
      %v2135 = vmul.f32 %v2095, %v1902
      %v2136 = vmul.f32 %v2095, %v1903
      %v2137 = vmul.f32 %v2095, %v1904
      %v2138 = vmul.f32 %v2095, %v1905
      %v2139 = vmul.f32 %v2095, %v1906
      %v2140 = vmul.f32 %v2095, %v1907
      %v2141 = vmul.f32 %v2095, %v1908
      %v2142 = vmul.f32 %v2095, %v1909
      %v2143 = vmul.f32 %v2095, %v1910
      %v2144 = vmul.f32 %v2095, %v1911
      %v2145 = vmul.f32 %v2095, %v1912
      %v2146 = vmul.f32 %v2095, %v1913
      %v2147 = vmul.f32 %v2095, %v1914
      %v2148 = vmul.f32 %v2095, %v1915
      %v2149 = vmul.f32 %v2095, %v1916
      %v2150 = vmul.f32 %v2095, %v1917
      %v2151 = vmul.f32 %v2095, %v1918
      %v2152 = vadd.f32 %v1470, %v2096
      %v2153 = vadd.f32 %v1471, %v2097
      %v2154 = vadd.f32 %v1472, %v2098
      %v2155 = vadd.f32 %v1473, %v2099
      %v2156 = vadd.f32 %v1474, %v2100
      %v2157 = vadd.f32 %v1475, %v2101
      %v2158 = vadd.f32 %v1476, %v2102
      %v2159 = vadd.f32 %v1477, %v2103
      %v2160 = vadd.f32 %v1478, %v2104
      %v2161 = vadd.f32 %v1479, %v2105
      %v2162 = vadd.f32 %v1480, %v2106
      %v2163 = vadd.f32 %v1481, %v2107
      %v2164 = vadd.f32 %v1482, %v2108
      %v2165 = vadd.f32 %v1483, %v2109
      %v2166 = vadd.f32 %v1484, %v2110
      %v2167 = vadd.f32 %v1485, %v2111
      %v2168 = vadd.f32 %v1486, %v2112
      %v2169 = vadd.f32 %v1487, %v2113
      %v2170 = vadd.f32 %v1488, %v2114
      %v2171 = vadd.f32 %v1489, %v2115
      %v2172 = vadd.f32 %v1490, %v2116
      %v2173 = vadd.f32 %v1491, %v2117
      %v2174 = vadd.f32 %v1492, %v2118
      %v2175 = vadd.f32 %v1493, %v2119
      %v2176 = vadd.f32 %v1494, %v2120
      %v2177 = vadd.f32 %v1495, %v2121
      %v2178 = vadd.f32 %v1496, %v2122
      %v2179 = vadd.f32 %v1497, %v2123
      %v2180 = vadd.f32 %v1498, %v2124
      %v2181 = vadd.f32 %v1499, %v2125
      %v2182 = vadd.f32 %v1500, %v2126
      %v2183 = vadd.f32 %v1501, %v2127
      %v2184 = vadd.f32 %v1502, %v2128
      %v2185 = vadd.f32 %v1503, %v2129
      %v2186 = vadd.f32 %v1504, %v2130
      %v2187 = vadd.f32 %v1505, %v2131
      %v2188 = vadd.f32 %v1506, %v2132
      %v2189 = vadd.f32 %v1507, %v2133
      %v2190 = vadd.f32 %v1508, %v2134
      %v2191 = vadd.f32 %v1509, %v2135
      %v2192 = vadd.f32 %v1510, %v2136
      %v2193 = vadd.f32 %v1511, %v2137
      %v2194 = vadd.f32 %v1512, %v2138
      %v2195 = vadd.f32 %v1513, %v2139
      %v2196 = vadd.f32 %v1514, %v2140
      %v2197 = vadd.f32 %v1515, %v2141
      %v2198 = vadd.f32 %v1516, %v2142
      %v2199 = vadd.f32 %v1517, %v2143
      %v2200 = vadd.f32 %v1518, %v2144
      %v2201 = vadd.f32 %v1519, %v2145
      %v2202 = vadd.f32 %v1520, %v2146
      %v2203 = vadd.f32 %v1521, %v2147
      %v2204 = vadd.f32 %v1522, %v2148
      %v2205 = vadd.f32 %v1523, %v2149
      %v2206 = vadd.f32 %v1524, %v2150
      %v2207 = vadd.f32 %v1525, %v2151
      %v2208 = vstv %s2092
      %v2209 = vmul.f32 %v2208, %v1920
      %v2210 = vmul.f32 %v2208, %v1921
      %v2211 = vmul.f32 %v2208, %v1922
      %v2212 = vmul.f32 %v2208, %v1923
      %v2213 = vmul.f32 %v2208, %v1924
      %v2214 = vmul.f32 %v2208, %v1925
      %v2215 = vmul.f32 %v2208, %v1926
      %v2216 = vmul.f32 %v2208, %v1927
      %v2217 = vmul.f32 %v2208, %v1928
      %v2218 = vmul.f32 %v2208, %v1929
      %v2219 = vmul.f32 %v2208, %v1930
      %v2220 = vmul.f32 %v2208, %v1931
      %v2221 = vmul.f32 %v2208, %v1932
      %v2222 = vmul.f32 %v2208, %v1933
      %v2223 = vmul.f32 %v2208, %v1934
      %v2224 = vmul.f32 %v2208, %v1935
      %v2225 = vmul.f32 %v2208, %v1936
      %v2226 = vmul.f32 %v2208, %v1937
      %v2227 = vmul.f32 %v2208, %v1938
      %v2228 = vmul.f32 %v2208, %v1939
      %v2229 = vmul.f32 %v2208, %v1940
      %v2230 = vmul.f32 %v2208, %v1941
      %v2231 = vmul.f32 %v2208, %v1942
      %v2232 = vmul.f32 %v2208, %v1943
      %v2233 = vmul.f32 %v2208, %v1944
      %v2234 = vmul.f32 %v2208, %v1945
      %v2235 = vmul.f32 %v2208, %v1946
      %v2236 = vmul.f32 %v2208, %v1947
      %v2237 = vmul.f32 %v2208, %v1948
      %v2238 = vmul.f32 %v2208, %v1949
      %v2239 = vmul.f32 %v2208, %v1950
      %v2240 = vmul.f32 %v2208, %v1951
      %v2241 = vmul.f32 %v2208, %v1952
      %v2242 = vmul.f32 %v2208, %v1953
      %v2243 = vmul.f32 %v2208, %v1954
      %v2244 = vmul.f32 %v2208, %v1955
      %v2245 = vmul.f32 %v2208, %v1956
      %v2246 = vmul.f32 %v2208, %v1957
      %v2247 = vmul.f32 %v2208, %v1958
      %v2248 = vmul.f32 %v2208, %v1959
      %v2249 = vmul.f32 %v2208, %v1960
      %v2250 = vmul.f32 %v2208, %v1961
      %v2251 = vmul.f32 %v2208, %v1962
      %v2252 = vmul.f32 %v2208, %v1963
      %v2253 = vmul.f32 %v2208, %v1964
      %v2254 = vmul.f32 %v2208, %v1965
      %v2255 = vmul.f32 %v2208, %v1966
      %v2256 = vmul.f32 %v2208, %v1967
      %v2257 = vmul.f32 %v2208, %v1968
      %v2258 = vmul.f32 %v2208, %v1969
      %v2259 = vmul.f32 %v2208, %v1970
      %v2260 = vmul.f32 %v2208, %v1971
      %v2261 = vmul.f32 %v2208, %v1972
      %v2262 = vmul.f32 %v2208, %v1973
      %v2263 = vmul.f32 %v2208, %v1974
      %v2264 = vmul.f32 %v2208, %v1975
      %v2265 = vadd.f32 %v2152, %v2209
      %v2266 = vadd.f32 %v2153, %v2210
      %v2267 = vadd.f32 %v2154, %v2211
      %v2268 = vadd.f32 %v2155, %v2212
      %v2269 = vadd.f32 %v2156, %v2213
      %v2270 = vadd.f32 %v2157, %v2214
      %v2271 = vadd.f32 %v2158, %v2215
      %v2272 = vadd.f32 %v2159, %v2216
      %v2273 = vadd.f32 %v2160, %v2217
      %v2274 = vadd.f32 %v2161, %v2218
      %v2275 = vadd.f32 %v2162, %v2219
      %v2276 = vadd.f32 %v2163, %v2220
      %v2277 = vadd.f32 %v2164, %v2221
      %v2278 = vadd.f32 %v2165, %v2222
      %v2279 = vadd.f32 %v2166, %v2223
      %v2280 = vadd.f32 %v2167, %v2224
      %v2281 = vadd.f32 %v2168, %v2225
      %v2282 = vadd.f32 %v2169, %v2226
      %v2283 = vadd.f32 %v2170, %v2227
      %v2284 = vadd.f32 %v2171, %v2228
      %v2285 = vadd.f32 %v2172, %v2229
      %v2286 = vadd.f32 %v2173, %v2230
      %v2287 = vadd.f32 %v2174, %v2231
      %v2288 = vadd.f32 %v2175, %v2232
      %v2289 = vadd.f32 %v2176, %v2233
      %v2290 = vadd.f32 %v2177, %v2234
      %v2291 = vadd.f32 %v2178, %v2235
      %v2292 = vadd.f32 %v2179, %v2236
      %v2293 = vadd.f32 %v2180, %v2237
      %v2294 = vadd.f32 %v2181, %v2238
      %v2295 = vadd.f32 %v2182, %v2239
      %v2296 = vadd.f32 %v2183, %v2240
      %v2297 = vadd.f32 %v2184, %v2241
      %v2298 = vadd.f32 %v2185, %v2242
      %v2299 = vadd.f32 %v2186, %v2243
      %v2300 = vadd.f32 %v2187, %v2244
      %v2301 = vadd.f32 %v2188, %v2245
      %v2302 = vadd.f32 %v2189, %v2246
      %v2303 = vadd.f32 %v2190, %v2247
      %v2304 = vadd.f32 %v2191, %v2248
      %v2305 = vadd.f32 %v2192, %v2249
      %v2306 = vadd.f32 %v2193, %v2250
      %v2307 = vadd.f32 %v2194, %v2251
      %v2308 = vadd.f32 %v2195, %v2252
      %v2309 = vadd.f32 %v2196, %v2253
      %v2310 = vadd.f32 %v2197, %v2254
      %v2311 = vadd.f32 %v2198, %v2255
      %v2312 = vadd.f32 %v2199, %v2256
      %v2313 = vadd.f32 %v2200, %v2257
      %v2314 = vadd.f32 %v2201, %v2258
      %v2315 = vadd.f32 %v2202, %v2259
      %v2316 = vadd.f32 %v2203, %v2260
      %v2317 = vadd.f32 %v2204, %v2261
      %v2318 = vadd.f32 %v2205, %v2262
      %v2319 = vadd.f32 %v2206, %v2263
      %v2320 = vadd.f32 %v2207, %v2264
      %v2321 = vstv %s2094
      %v2322 = vmul.f32 %v2321, %v1976
      %v2323 = vmul.f32 %v2321, %v1977
      %v2324 = vmul.f32 %v2321, %v1978
      %v2325 = vmul.f32 %v2321, %v1979
      %v2326 = vmul.f32 %v2321, %v1980
      %v2327 = vmul.f32 %v2321, %v1981
      %v2328 = vmul.f32 %v2321, %v1982
      %v2329 = vmul.f32 %v2321, %v1983
      %v2330 = vmul.f32 %v2321, %v1984
      %v2331 = vmul.f32 %v2321, %v1985
      %v2332 = vmul.f32 %v2321, %v1986
      %v2333 = vmul.f32 %v2321, %v1987
      %v2334 = vmul.f32 %v2321, %v1988
      %v2335 = vmul.f32 %v2321, %v1989
      %v2336 = vmul.f32 %v2321, %v1990
      %v2337 = vmul.f32 %v2321, %v1991
      %v2338 = vmul.f32 %v2321, %v1992
      %v2339 = vmul.f32 %v2321, %v1993
      %v2340 = vmul.f32 %v2321, %v1994
      %v2341 = vmul.f32 %v2321, %v1995
      %v2342 = vmul.f32 %v2321, %v1996
      %v2343 = vmul.f32 %v2321, %v1997
      %v2344 = vmul.f32 %v2321, %v1998
      %v2345 = vmul.f32 %v2321, %v1999
      %v2346 = vmul.f32 %v2321, %v2000
      %v2347 = vmul.f32 %v2321, %v2001
      %v2348 = vmul.f32 %v2321, %v2002
      %v2349 = vmul.f32 %v2321, %v2003
      %v2350 = vmul.f32 %v2321, %v2004
      %v2351 = vmul.f32 %v2321, %v2005
      %v2352 = vmul.f32 %v2321, %v2006
      %v2353 = vmul.f32 %v2321, %v2007
      %v2354 = vmul.f32 %v2321, %v2008
      %v2355 = vmul.f32 %v2321, %v2009
      %v2356 = vmul.f32 %v2321, %v2010
      %v2357 = vmul.f32 %v2321, %v2011
      %v2358 = vmul.f32 %v2321, %v2012
      %v2359 = vmul.f32 %v2321, %v2013
      %v2360 = vmul.f32 %v2321, %v2014
      %v2361 = vmul.f32 %v2321, %v2015
      %v2362 = vmul.f32 %v2321, %v2016
      %v2363 = vmul.f32 %v2321, %v2017
      %v2364 = vmul.f32 %v2321, %v2018
      %v2365 = vmul.f32 %v2321, %v2019
      %v2366 = vmul.f32 %v2321, %v2020
      %v2367 = vmul.f32 %v2321, %v2021
      %v2368 = vmul.f32 %v2321, %v2022
      %v2369 = vmul.f32 %v2321, %v2023
      %v2370 = vmul.f32 %v2321, %v2024
      %v2371 = vmul.f32 %v2321, %v2025
      %v2372 = vmul.f32 %v2321, %v2026
      %v2373 = vmul.f32 %v2321, %v2027
      %v2374 = vmul.f32 %v2321, %v2028
      %v2375 = vmul.f32 %v2321, %v2029
      %v2376 = vmul.f32 %v2321, %v2030
      %v2377 = vmul.f32 %v2321, %v2031
      %v2378 = vadd.f32 %v2265, %v2322
      %v2379 = vadd.f32 %v2266, %v2323
      %v2380 = vadd.f32 %v2267, %v2324
      %v2381 = vadd.f32 %v2268, %v2325
      %v2382 = vadd.f32 %v2269, %v2326
      %v2383 = vadd.f32 %v2270, %v2327
      %v2384 = vadd.f32 %v2271, %v2328
      %v2385 = vadd.f32 %v2272, %v2329
      %v2386 = vadd.f32 %v2273, %v2330
      %v2387 = vadd.f32 %v2274, %v2331
      %v2388 = vadd.f32 %v2275, %v2332
      %v2389 = vadd.f32 %v2276, %v2333
      %v2390 = vadd.f32 %v2277, %v2334
      %v2391 = vadd.f32 %v2278, %v2335
      %v2392 = vadd.f32 %v2279, %v2336
      %v2393 = vadd.f32 %v2280, %v2337
      %v2394 = vadd.f32 %v2281, %v2338
      %v2395 = vadd.f32 %v2282, %v2339
      %v2396 = vadd.f32 %v2283, %v2340
      %v2397 = vadd.f32 %v2284, %v2341
      %v2398 = vadd.f32 %v2285, %v2342
      %v2399 = vadd.f32 %v2286, %v2343
      %v2400 = vadd.f32 %v2287, %v2344
      %v2401 = vadd.f32 %v2288, %v2345
      %v2402 = vadd.f32 %v2289, %v2346
      %v2403 = vadd.f32 %v2290, %v2347
      %v2404 = vadd.f32 %v2291, %v2348
      %v2405 = vadd.f32 %v2292, %v2349
      %v2406 = vadd.f32 %v2293, %v2350
      %v2407 = vadd.f32 %v2294, %v2351
      %v2408 = vadd.f32 %v2295, %v2352
      %v2409 = vadd.f32 %v2296, %v2353
      %v2410 = vadd.f32 %v2297, %v2354
      %v2411 = vadd.f32 %v2298, %v2355
      %v2412 = vadd.f32 %v2299, %v2356
      %v2413 = vadd.f32 %v2300, %v2357
      %v2414 = vadd.f32 %v2301, %v2358
      %v2415 = vadd.f32 %v2302, %v2359
      %v2416 = vadd.f32 %v2303, %v2360
      %v2417 = vadd.f32 %v2304, %v2361
      %v2418 = vadd.f32 %v2305, %v2362
      %v2419 = vadd.f32 %v2306, %v2363
      %v2420 = vadd.f32 %v2307, %v2364
      %v2421 = vadd.f32 %v2308, %v2365
      %v2422 = vadd.f32 %v2309, %v2366
      %v2423 = vadd.f32 %v2310, %v2367
      %v2424 = vadd.f32 %v2311, %v2368
      %v2425 = vadd.f32 %v2312, %v2369
      %v2426 = vadd.f32 %v2313, %v2370
      %v2427 = vadd.f32 %v2314, %v2371
      %v2428 = vadd.f32 %v2315, %v2372
      %v2429 = vadd.f32 %v2316, %v2373
      %v2430 = vadd.f32 %v2317, %v2374
      %v2431 = vadd.f32 %v2318, %v2375
      %v2432 = vadd.f32 %v2319, %v2376
      %v2433 = vadd.f32 %v2320, %v2377
      %v2434 = vmul.f32 %v2095, %v1920
      %v2435 = vmul.f32 %v2095, %v1921
      %v2436 = vmul.f32 %v2095, %v1922
      %v2437 = vmul.f32 %v2095, %v1923
      %v2438 = vmul.f32 %v2095, %v1924
      %v2439 = vmul.f32 %v2095, %v1925
      %v2440 = vmul.f32 %v2095, %v1926
      %v2441 = vmul.f32 %v2095, %v1927
      %v2442 = vmul.f32 %v2095, %v1928
      %v2443 = vmul.f32 %v2095, %v1929
      %v2444 = vmul.f32 %v2095, %v1930
      %v2445 = vmul.f32 %v2095, %v1931
      %v2446 = vmul.f32 %v2095, %v1932
      %v2447 = vmul.f32 %v2095, %v1933
      %v2448 = vmul.f32 %v2095, %v1934
      %v2449 = vmul.f32 %v2095, %v1935
      %v2450 = vmul.f32 %v2095, %v1936
      %v2451 = vmul.f32 %v2095, %v1937
      %v2452 = vmul.f32 %v2095, %v1938
      %v2453 = vmul.f32 %v2095, %v1939
      %v2454 = vmul.f32 %v2095, %v1940
      %v2455 = vmul.f32 %v2095, %v1941
      %v2456 = vmul.f32 %v2095, %v1942
      %v2457 = vmul.f32 %v2095, %v1943
      %v2458 = vmul.f32 %v2095, %v1944
      %v2459 = vmul.f32 %v2095, %v1945
      %v2460 = vmul.f32 %v2095, %v1946
      %v2461 = vmul.f32 %v2095, %v1947
      %v2462 = vmul.f32 %v2095, %v1948
      %v2463 = vmul.f32 %v2095, %v1949
      %v2464 = vmul.f32 %v2095, %v1950
      %v2465 = vmul.f32 %v2095, %v1951
      %v2466 = vmul.f32 %v2095, %v1952
      %v2467 = vmul.f32 %v2095, %v1953
      %v2468 = vmul.f32 %v2095, %v1954
      %v2469 = vmul.f32 %v2095, %v1955
      %v2470 = vmul.f32 %v2095, %v1956
      %v2471 = vmul.f32 %v2095, %v1957
      %v2472 = vmul.f32 %v2095, %v1958
      %v2473 = vmul.f32 %v2095, %v1959
      %v2474 = vmul.f32 %v2095, %v1960
      %v2475 = vmul.f32 %v2095, %v1961
      %v2476 = vmul.f32 %v2095, %v1962
      %v2477 = vmul.f32 %v2095, %v1963
      %v2478 = vmul.f32 %v2095, %v1964
      %v2479 = vmul.f32 %v2095, %v1965
      %v2480 = vmul.f32 %v2095, %v1966
      %v2481 = vmul.f32 %v2095, %v1967
      %v2482 = vmul.f32 %v2095, %v1968
      %v2483 = vmul.f32 %v2095, %v1969
      %v2484 = vmul.f32 %v2095, %v1970
      %v2485 = vmul.f32 %v2095, %v1971
      %v2486 = vmul.f32 %v2095, %v1972
      %v2487 = vmul.f32 %v2095, %v1973
      %v2488 = vmul.f32 %v2095, %v1974
      %v2489 = vmul.f32 %v2095, %v1975
      %v2490 = vadd.f32 %v1806, %v2434
      %v2491 = vadd.f32 %v1807, %v2435
      %v2492 = vadd.f32 %v1808, %v2436
      %v2493 = vadd.f32 %v1809, %v2437
      %v2494 = vadd.f32 %v1810, %v2438
      %v2495 = vadd.f32 %v1811, %v2439
      %v2496 = vadd.f32 %v1812, %v2440
      %v2497 = vadd.f32 %v1813, %v2441
      %v2498 = vadd.f32 %v1814, %v2442
      %v2499 = vadd.f32 %v1815, %v2443
      %v2500 = vadd.f32 %v1816, %v2444
      %v2501 = vadd.f32 %v1817, %v2445
      %v2502 = vadd.f32 %v1818, %v2446
      %v2503 = vadd.f32 %v1819, %v2447
      %v2504 = vadd.f32 %v1820, %v2448
      %v2505 = vadd.f32 %v1821, %v2449
      %v2506 = vadd.f32 %v1822, %v2450
      %v2507 = vadd.f32 %v1823, %v2451
      %v2508 = vadd.f32 %v1824, %v2452
      %v2509 = vadd.f32 %v1825, %v2453
      %v2510 = vadd.f32 %v1826, %v2454
      %v2511 = vadd.f32 %v1827, %v2455
      %v2512 = vadd.f32 %v1828, %v2456
      %v2513 = vadd.f32 %v1829, %v2457
      %v2514 = vadd.f32 %v1830, %v2458
      %v2515 = vadd.f32 %v1831, %v2459
      %v2516 = vadd.f32 %v1832, %v2460
      %v2517 = vadd.f32 %v1833, %v2461
      %v2518 = vadd.f32 %v1834, %v2462
      %v2519 = vadd.f32 %v1835, %v2463
      %v2520 = vadd.f32 %v1836, %v2464
      %v2521 = vadd.f32 %v1837, %v2465
      %v2522 = vadd.f32 %v1838, %v2466
      %v2523 = vadd.f32 %v1839, %v2467
      %v2524 = vadd.f32 %v1840, %v2468
      %v2525 = vadd.f32 %v1841, %v2469
      %v2526 = vadd.f32 %v1842, %v2470
      %v2527 = vadd.f32 %v1843, %v2471
      %v2528 = vadd.f32 %v1844, %v2472
      %v2529 = vadd.f32 %v1845, %v2473
      %v2530 = vadd.f32 %v1846, %v2474
      %v2531 = vadd.f32 %v1847, %v2475
      %v2532 = vadd.f32 %v1848, %v2476
      %v2533 = vadd.f32 %v1849, %v2477
      %v2534 = vadd.f32 %v1850, %v2478
      %v2535 = vadd.f32 %v1851, %v2479
      %v2536 = vadd.f32 %v1852, %v2480
      %v2537 = vadd.f32 %v1853, %v2481
      %v2538 = vadd.f32 %v1854, %v2482
      %v2539 = vadd.f32 %v1855, %v2483
      %v2540 = vadd.f32 %v1856, %v2484
      %v2541 = vadd.f32 %v1857, %v2485
      %v2542 = vadd.f32 %v1858, %v2486
      %v2543 = vadd.f32 %v1859, %v2487
      %v2544 = vadd.f32 %v1860, %v2488
      %v2545 = vadd.f32 %v1861, %v2489
      %v2546 = vmul.f32 %v2208, %v1976
      %v2547 = vmul.f32 %v2208, %v1977
      %v2548 = vmul.f32 %v2208, %v1978
      %v2549 = vmul.f32 %v2208, %v1979
      %v2550 = vmul.f32 %v2208, %v1980
      %v2551 = vmul.f32 %v2208, %v1981
      %v2552 = vmul.f32 %v2208, %v1982
      %v2553 = vmul.f32 %v2208, %v1983
      %v2554 = vmul.f32 %v2208, %v1984
      %v2555 = vmul.f32 %v2208, %v1985
      %v2556 = vmul.f32 %v2208, %v1986
      %v2557 = vmul.f32 %v2208, %v1987
      %v2558 = vmul.f32 %v2208, %v1988
      %v2559 = vmul.f32 %v2208, %v1989
      %v2560 = vmul.f32 %v2208, %v1990
      %v2561 = vmul.f32 %v2208, %v1991
      %v2562 = vmul.f32 %v2208, %v1992
      %v2563 = vmul.f32 %v2208, %v1993
      %v2564 = vmul.f32 %v2208, %v1994
      %v2565 = vmul.f32 %v2208, %v1995
      %v2566 = vmul.f32 %v2208, %v1996
      %v2567 = vmul.f32 %v2208, %v1997
      %v2568 = vmul.f32 %v2208, %v1998
      %v2569 = vmul.f32 %v2208, %v1999
      %v2570 = vmul.f32 %v2208, %v2000
      %v2571 = vmul.f32 %v2208, %v2001
      %v2572 = vmul.f32 %v2208, %v2002
      %v2573 = vmul.f32 %v2208, %v2003
      %v2574 = vmul.f32 %v2208, %v2004
      %v2575 = vmul.f32 %v2208, %v2005
      %v2576 = vmul.f32 %v2208, %v2006
      %v2577 = vmul.f32 %v2208, %v2007
      %v2578 = vmul.f32 %v2208, %v2008
      %v2579 = vmul.f32 %v2208, %v2009
      %v2580 = vmul.f32 %v2208, %v2010
      %v2581 = vmul.f32 %v2208, %v2011
      %v2582 = vmul.f32 %v2208, %v2012
      %v2583 = vmul.f32 %v2208, %v2013
      %v2584 = vmul.f32 %v2208, %v2014
      %v2585 = vmul.f32 %v2208, %v2015
      %v2586 = vmul.f32 %v2208, %v2016
      %v2587 = vmul.f32 %v2208, %v2017
      %v2588 = vmul.f32 %v2208, %v2018
      %v2589 = vmul.f32 %v2208, %v2019
      %v2590 = vmul.f32 %v2208, %v2020
      %v2591 = vmul.f32 %v2208, %v2021
      %v2592 = vmul.f32 %v2208, %v2022
      %v2593 = vmul.f32 %v2208, %v2023
      %v2594 = vmul.f32 %v2208, %v2024
      %v2595 = vmul.f32 %v2208, %v2025
      %v2596 = vmul.f32 %v2208, %v2026
      %v2597 = vmul.f32 %v2208, %v2027
      %v2598 = vmul.f32 %v2208, %v2028
      %v2599 = vmul.f32 %v2208, %v2029
      %v2600 = vmul.f32 %v2208, %v2030
      %v2601 = vmul.f32 %v2208, %v2031
      %v2602 = vadd.f32 %v2490, %v2546
      %v2603 = vadd.f32 %v2491, %v2547
      %v2604 = vadd.f32 %v2492, %v2548
      %v2605 = vadd.f32 %v2493, %v2549
      %v2606 = vadd.f32 %v2494, %v2550
      %v2607 = vadd.f32 %v2495, %v2551
      %v2608 = vadd.f32 %v2496, %v2552
      %v2609 = vadd.f32 %v2497, %v2553
      %v2610 = vadd.f32 %v2498, %v2554
      %v2611 = vadd.f32 %v2499, %v2555
      %v2612 = vadd.f32 %v2500, %v2556
      %v2613 = vadd.f32 %v2501, %v2557
      %v2614 = vadd.f32 %v2502, %v2558
      %v2615 = vadd.f32 %v2503, %v2559
      %v2616 = vadd.f32 %v2504, %v2560
      %v2617 = vadd.f32 %v2505, %v2561
      %v2618 = vadd.f32 %v2506, %v2562
      %v2619 = vadd.f32 %v2507, %v2563
      %v2620 = vadd.f32 %v2508, %v2564
      %v2621 = vadd.f32 %v2509, %v2565
      %v2622 = vadd.f32 %v2510, %v2566
      %v2623 = vadd.f32 %v2511, %v2567
      %v2624 = vadd.f32 %v2512, %v2568
      %v2625 = vadd.f32 %v2513, %v2569
      %v2626 = vadd.f32 %v2514, %v2570
      %v2627 = vadd.f32 %v2515, %v2571
      %v2628 = vadd.f32 %v2516, %v2572
      %v2629 = vadd.f32 %v2517, %v2573
      %v2630 = vadd.f32 %v2518, %v2574
      %v2631 = vadd.f32 %v2519, %v2575
      %v2632 = vadd.f32 %v2520, %v2576
      %v2633 = vadd.f32 %v2521, %v2577
      %v2634 = vadd.f32 %v2522, %v2578
      %v2635 = vadd.f32 %v2523, %v2579
      %v2636 = vadd.f32 %v2524, %v2580
      %v2637 = vadd.f32 %v2525, %v2581
      %v2638 = vadd.f32 %v2526, %v2582
      %v2639 = vadd.f32 %v2527, %v2583
      %v2640 = vadd.f32 %v2528, %v2584
      %v2641 = vadd.f32 %v2529, %v2585
      %v2642 = vadd.f32 %v2530, %v2586
      %v2643 = vadd.f32 %v2531, %v2587
      %v2644 = vadd.f32 %v2532, %v2588
      %v2645 = vadd.f32 %v2533, %v2589
      %v2646 = vadd.f32 %v2534, %v2590
      %v2647 = vadd.f32 %v2535, %v2591
      %v2648 = vadd.f32 %v2536, %v2592
      %v2649 = vadd.f32 %v2537, %v2593
      %v2650 = vadd.f32 %v2538, %v2594
      %v2651 = vadd.f32 %v2539, %v2595
      %v2652 = vadd.f32 %v2540, %v2596
      %v2653 = vadd.f32 %v2541, %v2597
      %v2654 = vadd.f32 %v2542, %v2598
      %v2655 = vadd.f32 %v2543, %v2599
      %v2656 = vadd.f32 %v2544, %v2600
      %v2657 = vadd.f32 %v2545, %v2601
      %v2658 = vmul.f32 %v2321, %v2032
      %v2659 = vmul.f32 %v2321, %v2033
      %v2660 = vmul.f32 %v2321, %v2034
      %v2661 = vmul.f32 %v2321, %v2035
      %v2662 = vmul.f32 %v2321, %v2036
      %v2663 = vmul.f32 %v2321, %v2037
      %v2664 = vmul.f32 %v2321, %v2038
      %v2665 = vmul.f32 %v2321, %v2039
      %v2666 = vmul.f32 %v2321, %v2040
      %v2667 = vmul.f32 %v2321, %v2041
      %v2668 = vmul.f32 %v2321, %v2042
      %v2669 = vmul.f32 %v2321, %v2043
      %v2670 = vmul.f32 %v2321, %v2044
      %v2671 = vmul.f32 %v2321, %v2045
      %v2672 = vmul.f32 %v2321, %v2046
      %v2673 = vmul.f32 %v2321, %v2047
      %v2674 = vmul.f32 %v2321, %v2048
      %v2675 = vmul.f32 %v2321, %v2049
      %v2676 = vmul.f32 %v2321, %v2050
      %v2677 = vmul.f32 %v2321, %v2051
      %v2678 = vmul.f32 %v2321, %v2052
      %v2679 = vmul.f32 %v2321, %v2053
      %v2680 = vmul.f32 %v2321, %v2054
      %v2681 = vmul.f32 %v2321, %v2055
      %v2682 = vmul.f32 %v2321, %v2056
      %v2683 = vmul.f32 %v2321, %v2057
      %v2684 = vmul.f32 %v2321, %v2058
      %v2685 = vmul.f32 %v2321, %v2059
      %v2686 = vmul.f32 %v2321, %v2060
      %v2687 = vmul.f32 %v2321, %v2061
      %v2688 = vmul.f32 %v2321, %v2062
      %v2689 = vmul.f32 %v2321, %v2063
      %v2690 = vmul.f32 %v2321, %v2064
      %v2691 = vmul.f32 %v2321, %v2065
      %v2692 = vmul.f32 %v2321, %v2066
      %v2693 = vmul.f32 %v2321, %v2067
      %v2694 = vmul.f32 %v2321, %v2068
      %v2695 = vmul.f32 %v2321, %v2069
      %v2696 = vmul.f32 %v2321, %v2070
      %v2697 = vmul.f32 %v2321, %v2071
      %v2698 = vmul.f32 %v2321, %v2072
      %v2699 = vmul.f32 %v2321, %v2073
      %v2700 = vmul.f32 %v2321, %v2074
      %v2701 = vmul.f32 %v2321, %v2075
      %v2702 = vmul.f32 %v2321, %v2076
      %v2703 = vmul.f32 %v2321, %v2077
      %v2704 = vmul.f32 %v2321, %v2078
      %v2705 = vmul.f32 %v2321, %v2079
      %v2706 = vmul.f32 %v2321, %v2080
      %v2707 = vmul.f32 %v2321, %v2081
      %v2708 = vmul.f32 %v2321, %v2082
      %v2709 = vmul.f32 %v2321, %v2083
      %v2710 = vmul.f32 %v2321, %v2084
      %v2711 = vmul.f32 %v2321, %v2085
      %v2712 = vmul.f32 %v2321, %v2086
      %v2713 = vmul.f32 %v2321, %v2087
      %v2714 = vadd.f32 %v2602, %v2658
      %v2715 = vadd.f32 %v2603, %v2659
      %v2716 = vadd.f32 %v2604, %v2660
      %v2717 = vadd.f32 %v2605, %v2661
      %v2718 = vadd.f32 %v2606, %v2662
      %v2719 = vadd.f32 %v2607, %v2663
      %v2720 = vadd.f32 %v2608, %v2664
      %v2721 = vadd.f32 %v2609, %v2665
      %v2722 = vadd.f32 %v2610, %v2666
      %v2723 = vadd.f32 %v2611, %v2667
      %v2724 = vadd.f32 %v2612, %v2668
      %v2725 = vadd.f32 %v2613, %v2669
      %v2726 = vadd.f32 %v2614, %v2670
      %v2727 = vadd.f32 %v2615, %v2671
      %v2728 = vadd.f32 %v2616, %v2672
      %v2729 = vadd.f32 %v2617, %v2673
      %v2730 = vadd.f32 %v2618, %v2674
      %v2731 = vadd.f32 %v2619, %v2675
      %v2732 = vadd.f32 %v2620, %v2676
      %v2733 = vadd.f32 %v2621, %v2677
      %v2734 = vadd.f32 %v2622, %v2678
      %v2735 = vadd.f32 %v2623, %v2679
      %v2736 = vadd.f32 %v2624, %v2680
      %v2737 = vadd.f32 %v2625, %v2681
      %v2738 = vadd.f32 %v2626, %v2682
      %v2739 = vadd.f32 %v2627, %v2683
      %v2740 = vadd.f32 %v2628, %v2684
      %v2741 = vadd.f32 %v2629, %v2685
      %v2742 = vadd.f32 %v2630, %v2686
      %v2743 = vadd.f32 %v2631, %v2687
      %v2744 = vadd.f32 %v2632, %v2688
      %v2745 = vadd.f32 %v2633, %v2689
      %v2746 = vadd.f32 %v2634, %v2690
      %v2747 = vadd.f32 %v2635, %v2691
      %v2748 = vadd.f32 %v2636, %v2692
      %v2749 = vadd.f32 %v2637, %v2693
      %v2750 = vadd.f32 %v2638, %v2694
      %v2751 = vadd.f32 %v2639, %v2695
      %v2752 = vadd.f32 %v2640, %v2696
      %v2753 = vadd.f32 %v2641, %v2697
      %v2754 = vadd.f32 %v2642, %v2698
      %v2755 = vadd.f32 %v2643, %v2699
      %v2756 = vadd.f32 %v2644, %v2700
      %v2757 = vadd.f32 %v2645, %v2701
      %v2758 = vadd.f32 %v2646, %v2702
      %v2759 = vadd.f32 %v2647, %v2703
      %v2760 = vadd.f32 %v2648, %v2704
      %v2761 = vadd.f32 %v2649, %v2705
      %v2762 = vadd.f32 %v2650, %v2706
      %v2763 = vadd.f32 %v2651, %v2707
      %v2764 = vadd.f32 %v2652, %v2708
      %v2765 = vadd.f32 %v2653, %v2709
      %v2766 = vadd.f32 %v2654, %v2710
      %v2767 = vadd.f32 %v2655, %v2711
      %v2768 = vadd.f32 %v2656, %v2712
      %v2769 = vadd.f32 %v2657, %v2713
      %s2770 = sld [smem:[#allocation4 + %s43]]
      %v2771 = vstv %s2770
      %v2772 = vadd.f32 %v2378, %v2771
      %v2773 = vadd.f32 %v2379, %v2771
      %v2774 = vadd.f32 %v2380, %v2771
      %v2775 = vadd.f32 %v2381, %v2771
      %v2776 = vadd.f32 %v2382, %v2771
      %v2777 = vadd.f32 %v2383, %v2771
      %v2778 = vadd.f32 %v2384, %v2771
      %v2779 = vadd.f32 %v2385, %v2771
      %v2780 = vadd.f32 %v2386, %v2771
      %v2781 = vadd.f32 %v2387, %v2771
      %v2782 = vadd.f32 %v2388, %v2771
      %v2783 = vadd.f32 %v2389, %v2771
      %v2784 = vadd.f32 %v2390, %v2771
      %v2785 = vadd.f32 %v2391, %v2771
      %v2786 = vadd.f32 %v2392, %v2771
      %v2787 = vadd.f32 %v2393, %v2771
      %v2788 = vadd.f32 %v2394, %v2771
      %v2789 = vadd.f32 %v2395, %v2771
      %v2790 = vadd.f32 %v2396, %v2771
      %v2791 = vadd.f32 %v2397, %v2771
      %v2792 = vadd.f32 %v2398, %v2771
      %v2793 = vadd.f32 %v2399, %v2771
      %v2794 = vadd.f32 %v2400, %v2771
      %v2795 = vadd.f32 %v2401, %v2771
      %v2796 = vadd.f32 %v2402, %v2771
      %v2797 = vadd.f32 %v2403, %v2771
      %v2798 = vadd.f32 %v2404, %v2771
      %v2799 = vadd.f32 %v2405, %v2771
      %v2800 = vadd.f32 %v2406, %v2771
      %v2801 = vadd.f32 %v2407, %v2771
      %v2802 = vadd.f32 %v2408, %v2771
      %v2803 = vadd.f32 %v2409, %v2771
      %v2804 = vadd.f32 %v2410, %v2771
      %v2805 = vadd.f32 %v2411, %v2771
      %v2806 = vadd.f32 %v2412, %v2771
      %v2807 = vadd.f32 %v2413, %v2771
      %v2808 = vadd.f32 %v2414, %v2771
      %v2809 = vadd.f32 %v2415, %v2771
      %v2810 = vadd.f32 %v2416, %v2771
      %v2811 = vadd.f32 %v2417, %v2771
      %v2812 = vadd.f32 %v2418, %v2771
      %v2813 = vadd.f32 %v2419, %v2771
      %v2814 = vadd.f32 %v2420, %v2771
      %v2815 = vadd.f32 %v2421, %v2771
      %v2816 = vadd.f32 %v2422, %v2771
      %v2817 = vadd.f32 %v2423, %v2771
      %v2818 = vadd.f32 %v2424, %v2771
      %v2819 = vadd.f32 %v2425, %v2771
      %v2820 = vadd.f32 %v2426, %v2771
      %v2821 = vadd.f32 %v2427, %v2771
      %v2822 = vadd.f32 %v2428, %v2771
      %v2823 = vadd.f32 %v2429, %v2771
      %v2824 = vadd.f32 %v2430, %v2771
      %v2825 = vadd.f32 %v2431, %v2771
      %v2826 = vadd.f32 %v2432, %v2771
      %v2827 = vadd.f32 %v2433, %v2771
      %v2828 = vmax.f32 %v2772, 0.0
      %v2829 = vmax.f32 %v2773, 0.0
      %v2830 = vmax.f32 %v2774, 0.0
      %v2831 = vmax.f32 %v2775, 0.0
      %v2832 = vmax.f32 %v2776, 0.0
      %v2833 = vmax.f32 %v2777, 0.0
      %v2834 = vmax.f32 %v2778, 0.0
      %v2835 = vmax.f32 %v2779, 0.0
      %v2836 = vmax.f32 %v2780, 0.0
      %v2837 = vmax.f32 %v2781, 0.0
      %v2838 = vmax.f32 %v2782, 0.0
      %v2839 = vmax.f32 %v2783, 0.0
      %v2840 = vmax.f32 %v2784, 0.0
      %v2841 = vmax.f32 %v2785, 0.0
      %v2842 = vmax.f32 %v2786, 0.0
      %v2843 = vmax.f32 %v2787, 0.0
      %v2844 = vmax.f32 %v2788, 0.0
      %v2845 = vmax.f32 %v2789, 0.0
      %v2846 = vmax.f32 %v2790, 0.0
      %v2847 = vmax.f32 %v2791, 0.0
      %v2848 = vmax.f32 %v2792, 0.0
      %v2849 = vmax.f32 %v2793, 0.0
      %v2850 = vmax.f32 %v2794, 0.0
      %v2851 = vmax.f32 %v2795, 0.0
      %v2852 = vmax.f32 %v2796, 0.0
      %v2853 = vmax.f32 %v2797, 0.0
      %v2854 = vmax.f32 %v2798, 0.0
      %v2855 = vmax.f32 %v2799, 0.0
      %v2856 = vmax.f32 %v2800, 0.0
      %v2857 = vmax.f32 %v2801, 0.0
      %v2858 = vmax.f32 %v2802, 0.0
      %v2859 = vmax.f32 %v2803, 0.0
      %v2860 = vmax.f32 %v2804, 0.0
      %v2861 = vmax.f32 %v2805, 0.0
      %v2862 = vmax.f32 %v2806, 0.0
      %v2863 = vmax.f32 %v2807, 0.0
      %v2864 = vmax.f32 %v2808, 0.0
      %v2865 = vmax.f32 %v2809, 0.0
      %v2866 = vmax.f32 %v2810, 0.0
      %v2867 = vmax.f32 %v2811, 0.0
      %v2868 = vmax.f32 %v2812, 0.0
      %v2869 = vmax.f32 %v2813, 0.0
      %v2870 = vmax.f32 %v2814, 0.0
      %v2871 = vmax.f32 %v2815, 0.0
      %v2872 = vmax.f32 %v2816, 0.0
      %v2873 = vmax.f32 %v2817, 0.0
      %v2874 = vmax.f32 %v2818, 0.0
      %v2875 = vmax.f32 %v2819, 0.0
      %v2876 = vmax.f32 %v2820, 0.0
      %v2877 = vmax.f32 %v2821, 0.0
      %v2878 = vmax.f32 %v2822, 0.0
      %v2879 = vmax.f32 %v2823, 0.0
      %v2880 = vmax.f32 %v2824, 0.0
      %v2881 = vmax.f32 %v2825, 0.0
      %v2882 = vmax.f32 %v2826, 0.0
      %v2883 = vmax.f32 %v2827, 0.0
      %v2884 = vadd.f32 %v2714, %v2771
      %v2885 = vadd.f32 %v2715, %v2771
      %v2886 = vadd.f32 %v2716, %v2771
      %v2887 = vadd.f32 %v2717, %v2771
      %v2888 = vadd.f32 %v2718, %v2771
      %v2889 = vadd.f32 %v2719, %v2771
      %v2890 = vadd.f32 %v2720, %v2771
      %v2891 = vadd.f32 %v2721, %v2771
      %v2892 = vadd.f32 %v2722, %v2771
      %v2893 = vadd.f32 %v2723, %v2771
      %v2894 = vadd.f32 %v2724, %v2771
      %v2895 = vadd.f32 %v2725, %v2771
      %v2896 = vadd.f32 %v2726, %v2771
      %v2897 = vadd.f32 %v2727, %v2771
      %v2898 = vadd.f32 %v2728, %v2771
      %v2899 = vadd.f32 %v2729, %v2771
      %v2900 = vadd.f32 %v2730, %v2771
      %v2901 = vadd.f32 %v2731, %v2771
      %v2902 = vadd.f32 %v2732, %v2771
      %v2903 = vadd.f32 %v2733, %v2771
      %v2904 = vadd.f32 %v2734, %v2771
      %v2905 = vadd.f32 %v2735, %v2771
      %v2906 = vadd.f32 %v2736, %v2771
      %v2907 = vadd.f32 %v2737, %v2771
      %v2908 = vadd.f32 %v2738, %v2771
      %v2909 = vadd.f32 %v2739, %v2771
      %v2910 = vadd.f32 %v2740, %v2771
      %v2911 = vadd.f32 %v2741, %v2771
      %v2912 = vadd.f32 %v2742, %v2771
      %v2913 = vadd.f32 %v2743, %v2771
      %v2914 = vadd.f32 %v2744, %v2771
      %v2915 = vadd.f32 %v2745, %v2771
      %v2916 = vadd.f32 %v2746, %v2771
      %v2917 = vadd.f32 %v2747, %v2771
      %v2918 = vadd.f32 %v2748, %v2771
      %v2919 = vadd.f32 %v2749, %v2771
      %v2920 = vadd.f32 %v2750, %v2771
      %v2921 = vadd.f32 %v2751, %v2771
      %v2922 = vadd.f32 %v2752, %v2771
      %v2923 = vadd.f32 %v2753, %v2771
      %v2924 = vadd.f32 %v2754, %v2771
      %v2925 = vadd.f32 %v2755, %v2771
      %v2926 = vadd.f32 %v2756, %v2771
      %v2927 = vadd.f32 %v2757, %v2771
      %v2928 = vadd.f32 %v2758, %v2771
      %v2929 = vadd.f32 %v2759, %v2771
      %v2930 = vadd.f32 %v2760, %v2771
      %v2931 = vadd.f32 %v2761, %v2771
      %v2932 = vadd.f32 %v2762, %v2771
      %v2933 = vadd.f32 %v2763, %v2771
      %v2934 = vadd.f32 %v2764, %v2771
      %v2935 = vadd.f32 %v2765, %v2771
      %v2936 = vadd.f32 %v2766, %v2771
      %v2937 = vadd.f32 %v2767, %v2771
      %v2938 = vadd.f32 %v2768, %v2771
      %v2939 = vadd.f32 %v2769, %v2771
      %v2940 = vmax.f32 %v2884, 0.0
      %v2941 = vmax.f32 %v2885, 0.0
      %v2942 = vmax.f32 %v2886, 0.0
      %v2943 = vmax.f32 %v2887, 0.0
      %v2944 = vmax.f32 %v2888, 0.0
      %v2945 = vmax.f32 %v2889, 0.0
      %v2946 = vmax.f32 %v2890, 0.0
      %v2947 = vmax.f32 %v2891, 0.0
      %v2948 = vmax.f32 %v2892, 0.0
      %v2949 = vmax.f32 %v2893, 0.0
      %v2950 = vmax.f32 %v2894, 0.0
      %v2951 = vmax.f32 %v2895, 0.0
      %v2952 = vmax.f32 %v2896, 0.0
      %v2953 = vmax.f32 %v2897, 0.0
      %v2954 = vmax.f32 %v2898, 0.0
      %v2955 = vmax.f32 %v2899, 0.0
      %v2956 = vmax.f32 %v2900, 0.0
      %v2957 = vmax.f32 %v2901, 0.0
      %v2958 = vmax.f32 %v2902, 0.0
      %v2959 = vmax.f32 %v2903, 0.0
      %v2960 = vmax.f32 %v2904, 0.0
      %v2961 = vmax.f32 %v2905, 0.0
      %v2962 = vmax.f32 %v2906, 0.0
      %v2963 = vmax.f32 %v2907, 0.0
      %v2964 = vmax.f32 %v2908, 0.0
      %v2965 = vmax.f32 %v2909, 0.0
      %v2966 = vmax.f32 %v2910, 0.0
      %v2967 = vmax.f32 %v2911, 0.0
      %v2968 = vmax.f32 %v2912, 0.0
      %v2969 = vmax.f32 %v2913, 0.0
      %v2970 = vmax.f32 %v2914, 0.0
      %v2971 = vmax.f32 %v2915, 0.0
      %v2972 = vmax.f32 %v2916, 0.0
      %v2973 = vmax.f32 %v2917, 0.0
      %v2974 = vmax.f32 %v2918, 0.0
      %v2975 = vmax.f32 %v2919, 0.0
      %v2976 = vmax.f32 %v2920, 0.0
      %v2977 = vmax.f32 %v2921, 0.0
      %v2978 = vmax.f32 %v2922, 0.0
      %v2979 = vmax.f32 %v2923, 0.0
      %v2980 = vmax.f32 %v2924, 0.0
      %v2981 = vmax.f32 %v2925, 0.0
      %v2982 = vmax.f32 %v2926, 0.0
      %v2983 = vmax.f32 %v2927, 0.0
      %v2984 = vmax.f32 %v2928, 0.0
      %v2985 = vmax.f32 %v2929, 0.0
      %v2986 = vmax.f32 %v2930, 0.0
      %v2987 = vmax.f32 %v2931, 0.0
      %v2988 = vmax.f32 %v2932, 0.0
      %v2989 = vmax.f32 %v2933, 0.0
      %v2990 = vmax.f32 %v2934, 0.0
      %v2991 = vmax.f32 %v2935, 0.0
      %v2992 = vmax.f32 %v2936, 0.0
      %v2993 = vmax.f32 %v2937, 0.0
      %v2994 = vmax.f32 %v2938, 0.0
      %v2995 = vmax.f32 %v2939, 0.0
      %v2996 = vmax.f32 %v2828, %v2940
      %v2997 = vmax.f32 %v2829, %v2941
      %v2998 = vmax.f32 %v2830, %v2942
      %v2999 = vmax.f32 %v2831, %v2943
      %v3000 = vmax.f32 %v2832, %v2944
      %v3001 = vmax.f32 %v2833, %v2945
      %v3002 = vmax.f32 %v2834, %v2946
      %v3003 = vmax.f32 %v2835, %v2947
      %v3004 = vmax.f32 %v2836, %v2948
      %v3005 = vmax.f32 %v2837, %v2949
      %v3006 = vmax.f32 %v2838, %v2950
      %v3007 = vmax.f32 %v2839, %v2951
      %v3008 = vmax.f32 %v2840, %v2952
      %v3009 = vmax.f32 %v2841, %v2953
      %v3010 = vmax.f32 %v2842, %v2954
      %v3011 = vmax.f32 %v2843, %v2955
      %v3012 = vmax.f32 %v2844, %v2956
      %v3013 = vmax.f32 %v2845, %v2957
      %v3014 = vmax.f32 %v2846, %v2958
      %v3015 = vmax.f32 %v2847, %v2959
      %v3016 = vmax.f32 %v2848, %v2960
      %v3017 = vmax.f32 %v2849, %v2961
      %v3018 = vmax.f32 %v2850, %v2962
      %v3019 = vmax.f32 %v2851, %v2963
      %v3020 = vmax.f32 %v2852, %v2964
      %v3021 = vmax.f32 %v2853, %v2965
      %v3022 = vmax.f32 %v2854, %v2966
      %v3023 = vmax.f32 %v2855, %v2967
      %v3024 = vmax.f32 %v2856, %v2968
      %v3025 = vmax.f32 %v2857, %v2969
      %v3026 = vmax.f32 %v2858, %v2970
      %v3027 = vmax.f32 %v2859, %v2971
      %v3028 = vmax.f32 %v2860, %v2972
      %v3029 = vmax.f32 %v2861, %v2973
      %v3030 = vmax.f32 %v2862, %v2974
      %v3031 = vmax.f32 %v2863, %v2975
      %v3032 = vmax.f32 %v2864, %v2976
      %v3033 = vmax.f32 %v2865, %v2977
      %v3034 = vmax.f32 %v2866, %v2978
      %v3035 = vmax.f32 %v2867, %v2979
      %v3036 = vmax.f32 %v2868, %v2980
      %v3037 = vmax.f32 %v2869, %v2981
      %v3038 = vmax.f32 %v2870, %v2982
      %v3039 = vmax.f32 %v2871, %v2983
      %v3040 = vmax.f32 %v2872, %v2984
      %v3041 = vmax.f32 %v2873, %v2985
      %v3042 = vmax.f32 %v2874, %v2986
      %v3043 = vmax.f32 %v2875, %v2987
      %v3044 = vmax.f32 %v2876, %v2988
      %v3045 = vmax.f32 %v2877, %v2989
      %v3046 = vmax.f32 %v2878, %v2990
      %v3047 = vmax.f32 %v2879, %v2991
      %v3048 = vmax.f32 %v2880, %v2992
      %v3049 = vmax.f32 %v2881, %v2993
      %v3050 = vmax.f32 %v2882, %v2994
      %v3051 = vmax.f32 %v2883, %v2995
      %v3052 = vmax.f32 %v2996, %v2998
      %v3053 = vmax.f32 %v2997, %v2999
      %s3054 = smul.u32 %s43, 224
      %s3055 = scalar_lea.vmem %s4, %s3054
      %vm3056 = vcmask 64512
      %3057 = vst.msk [vmem:[%s3055] sm:$0xff] %vm3056, %v3052
      %vm3058 = vcmask 62464
      %3059 = vst.msk [vmem:[%s3055 + $0x8] sm:$0x3f] %vm3058, %v3053
      %v3060 = vmax.f32 %v3000, %v3002
      %v3061 = vmax.f32 %v3001, %v3003
      %s3062 = sadd.s32 16, %s3054
      %s3063 = scalar_lea.vmem %s4, %s3062
      %3064 = vst.msk [vmem:[%s3063] sm:$0xff] %vm3056, %v3060
      %3065 = vst.msk [vmem:[%s3063 + $0x8] sm:$0x3f] %vm3058, %v3061
      %v3066 = vmax.f32 %v3004, %v3006
      %v3067 = vmax.f32 %v3005, %v3007
      %s3068 = sadd.s32 32, %s3054
      %s3069 = scalar_lea.vmem %s4, %s3068
      %3070 = vst.msk [vmem:[%s3069] sm:$0xff] %vm3056, %v3066
      %3071 = vst.msk [vmem:[%s3069 + $0x8] sm:$0x3f] %vm3058, %v3067
      %v3072 = vmax.f32 %v3008, %v3010
      %v3073 = vmax.f32 %v3009, %v3011
      %s3074 = sadd.s32 48, %s3054
      %s3075 = scalar_lea.vmem %s4, %s3074
      %3076 = vst.msk [vmem:[%s3075] sm:$0xff] %vm3056, %v3072
      %3077 = vst.msk [vmem:[%s3075 + $0x8] sm:$0x3f] %vm3058, %v3073
      %v3078 = vmax.f32 %v3012, %v3014
      %v3079 = vmax.f32 %v3013, %v3015
      %s3080 = sadd.s32 64, %s3054
      %s3081 = scalar_lea.vmem %s4, %s3080
      %3082 = vst.msk [vmem:[%s3081] sm:$0xff] %vm3056, %v3078
      %3083 = vst.msk [vmem:[%s3081 + $0x8] sm:$0x3f] %vm3058, %v3079
      %v3084 = vmax.f32 %v3016, %v3018
      %v3085 = vmax.f32 %v3017, %v3019
      %s3086 = sadd.s32 80, %s3054
      %s3087 = scalar_lea.vmem %s4, %s3086
      %3088 = vst.msk [vmem:[%s3087] sm:$0xff] %vm3056, %v3084
      %3089 = vst.msk [vmem:[%s3087 + $0x8] sm:$0x3f] %vm3058, %v3085
      %v3090 = vmax.f32 %v3020, %v3022
      %v3091 = vmax.f32 %v3021, %v3023
      %s3092 = sadd.s32 96, %s3054
      %s3093 = scalar_lea.vmem %s4, %s3092
      %3094 = vst.msk [vmem:[%s3093] sm:$0xff] %vm3056, %v3090
      %3095 = vst.msk [vmem:[%s3093 + $0x8] sm:$0x3f] %vm3058, %v3091
      %v3096 = vmax.f32 %v3024, %v3026
      %v3097 = vmax.f32 %v3025, %v3027
      %s3098 = sadd.s32 112, %s3054
      %s3099 = scalar_lea.vmem %s4, %s3098
      %3100 = vst.msk [vmem:[%s3099] sm:$0xff] %vm3056, %v3096
      %3101 = vst.msk [vmem:[%s3099 + $0x8] sm:$0x3f] %vm3058, %v3097
      %v3102 = vmax.f32 %v3028, %v3030
      %v3103 = vmax.f32 %v3029, %v3031
      %s3104 = sadd.s32 128, %s3054
      %s3105 = scalar_lea.vmem %s4, %s3104
      %3106 = vst.msk [vmem:[%s3105] sm:$0xff] %vm3056, %v3102
      %3107 = vst.msk [vmem:[%s3105 + $0x8] sm:$0x3f] %vm3058, %v3103
      %v3108 = vmax.f32 %v3032, %v3034
      %v3109 = vmax.f32 %v3033, %v3035
      %s3110 = sadd.s32 144, %s3054
      %s3111 = scalar_lea.vmem %s4, %s3110
      %3112 = vst.msk [vmem:[%s3111] sm:$0xff] %vm3056, %v3108
      %3113 = vst.msk [vmem:[%s3111 + $0x8] sm:$0x3f] %vm3058, %v3109
      %v3114 = vmax.f32 %v3036, %v3038
      %v3115 = vmax.f32 %v3037, %v3039
      %s3116 = sadd.s32 160, %s3054
      %s3117 = scalar_lea.vmem %s4, %s3116
      %3118 = vst.msk [vmem:[%s3117] sm:$0xff] %vm3056, %v3114
      %3119 = vst.msk [vmem:[%s3117 + $0x8] sm:$0x3f] %vm3058, %v3115
      %v3120 = vmax.f32 %v3040, %v3042
      %v3121 = vmax.f32 %v3041, %v3043
      %s3122 = sadd.s32 176, %s3054
      %s3123 = scalar_lea.vmem %s4, %s3122
      %3124 = vst.msk [vmem:[%s3123] sm:$0xff] %vm3056, %v3120
      %3125 = vst.msk [vmem:[%s3123 + $0x8] sm:$0x3f] %vm3058, %v3121
      %v3126 = vmax.f32 %v3044, %v3046
      %v3127 = vmax.f32 %v3045, %v3047
      %s3128 = sadd.s32 192, %s3054
      %s3129 = scalar_lea.vmem %s4, %s3128
      %3130 = vst.msk [vmem:[%s3129] sm:$0xff] %vm3056, %v3126
      %3131 = vst.msk [vmem:[%s3129 + $0x8] sm:$0x3f] %vm3058, %v3127
      %v3132 = vmax.f32 %v3048, %v3050
      %v3133 = vmax.f32 %v3049, %v3051
      %s3134 = sadd.s32 208, %s3054
      %s3135 = scalar_lea.vmem %s4, %s3134
      %3136 = vst.msk [vmem:[%s3135] sm:$0xff] %vm3056, %v3132
      %3137 = vst.msk [vmem:[%s3135 + $0x8] sm:$0x3f] %vm3058, %v3133
    $region30: #{mnist_cnn_forward.3} parent=1 // loop_footer
      %s47 = sadd.s32 1, %s43
    $region31: #{mnist_cnn_forward.3} parent=1 // loop_footer_branch
      %42 = sbr.rel target = $region27
    $region32: #{mnist_cnn_forward.3} parent=1 // loop_exit
      _
    // Predicated region
    $region33: #{mnist_cnn_forward.3} parent=1 // pred_check
      _
    $region34: #{mnist_cnn_forward.3} parent=1 // pred_check_branch
      %3139 = sbr.rel (0) target = $region36
    $region35: #{mnist_cnn_forward.3} parent=1 // pred_region
      _
    $region36: #{mnist_cnn_forward.3} parent=1 // pred_fallthru
      _
    // Predicated region
    $region37: #{mnist_cnn_forward.3} parent=1 // pred_check
      _
    $region38: #{mnist_cnn_forward.3} parent=1 // pred_check_branch
      %3141 = sbr.rel (0) target = $region40
    $region39: #{mnist_cnn_forward.3} parent=1 // pred_region
      _
    $region40: #{mnist_cnn_forward.3} parent=1 // pred_fallthru
      _
    %3142 = vsyncpa [#allocation3], 1
    %3143 = vsyncpa [#allocation5], 1

// kernel: mnist_cnn_forward.4
$region0: #{mnist_cnn_forward.4}
  #allocation0 [shape = 'u32[]', space=smem, size = 0x4, offset = 0x4, fixed_abs, tag = 'smem constant byte address 0x4 - core index']
  #allocation1 [shape = 'u32[144,128]{1,0:T(1,128)}', space=vmem, size = 0x12000, scoped, tag = 'internal scratch']
  %s0 = inlined_call_operand.vmem [shape: f32[864], index: 0, kind: input, shape index: {}]
  %s1 = inlined_call_operand.vmem [shape: f32[16], index: 1, kind: input, shape index: {}]
  %s2 = inlined_call_operand.vmem [shape: f32[6,16,8,8], index: 2, kind: input, shape index: {}]
  %s3 = inlined_call_operand.vmem [shape: f32[6,16,8,8], index: 3, kind: input, shape index: {}]
  %s4 = inlined_call_operand.vmem [shape: f32[16,7,7,8], index: 4, kind: output, shape index: {}]
  %s5 = sld [smem:[#allocation0]]
  $region41: #{mnist_cnn_forward.4} parent=0
    _
  %s7 = ssub.s32 1, %s5
  %s8 = scalar_select 0, %s7, %s5
  $region1: #{mnist_cnn_forward.4} parent=0
    #allocation2 [shape = 'u8[3584]{0}', space=smem, size = 0xe00, scoped, tag = 'input window, operand 0, single buffered']
    #allocation3 [shape = 's32[1]{0}', space=sflag, size = 0x4, scoped, tag = 'scoped memory for mnist_cnn_forward.4']
    #allocation4 [shape = 'u8[512]{0}', space=smem, size = 0x200, scoped, tag = 'input window, operand 1, single buffered']
    #allocation5 [shape = 's32[1]{0}', space=sflag, size = 0x4, scoped, tag = 'scoped memory for mnist_cnn_forward.4']
    %9 = vsyncpa [#allocation3], 0
    %10 = vsyncpa [#allocation5], 0
    // Predicated region
    $region2: #{mnist_cnn_forward.4} parent=1 // pred_check
      _
    $region3: #{mnist_cnn_forward.4} parent=1 // pred_check_branch
      %12 = sbr.rel (0) target = $region5
    $region4: #{mnist_cnn_forward.4} parent=1 // pred_region
      %s14 = ssub.s32 112, 112
      %15 = vsyncadd [#allocation3], %s14
      %s17 = sshll.u32 %s0, 4
      %s18 = int_to_ptr.vmem [resolvable:$true] %s17
      %20 = dma.vmem_to_smem %s18, 112, [#allocation2], [#allocation3]
    $region5: #{mnist_cnn_forward.4} parent=1 // pred_fallthru
      _
    // Predicated region
    $region6: #{mnist_cnn_forward.4} parent=1 // pred_check
      _
    $region7: #{mnist_cnn_forward.4} parent=1 // pred_check_branch
      %22 = sbr.rel (0) target = $region9
    $region8: #{mnist_cnn_forward.4} parent=1 // pred_region
      %s24 = ssub.s32 16, 16
      %25 = vsyncadd [#allocation5], %s24
      %s27 = sshll.u32 %s1, 4
      %s28 = int_to_ptr.vmem [resolvable:$true] %s27
      %30 = dma.vmem_to_smem %s28, 16, [#allocation4], [#allocation5]
    $region9: #{mnist_cnn_forward.4} parent=1 // pred_fallthru
      _
    // Predicated region
    $region10: #{mnist_cnn_forward.4} parent=1 // pred_check
      _
    $region11: #{mnist_cnn_forward.4} parent=1 // pred_check_branch
      %32 = sbr.rel (0) target = $region13
    $region12: #{mnist_cnn_forward.4} parent=1 // pred_region
      _
    $region13: #{mnist_cnn_forward.4} parent=1 // pred_fallthru
      _
    // Predicated region
    $region14: #{mnist_cnn_forward.4} parent=1 // pred_check
      _
    $region15: #{mnist_cnn_forward.4} parent=1 // pred_check_branch
      %34 = sbr.rel (0) target = $region17
    $region16: #{mnist_cnn_forward.4} parent=1 // pred_region
      _
    $region17: #{mnist_cnn_forward.4} parent=1 // pred_fallthru
      _
    // Predicated region
    $region18: #{mnist_cnn_forward.4} parent=1 // pred_check
      _
    $region19: #{mnist_cnn_forward.4} parent=1 // pred_check_branch
      %36 = sbr.rel (0) target = $region21
    $region20: #{mnist_cnn_forward.4} parent=1 // pred_region
      %37 = dma.done [#allocation3], 112
    $region21: #{mnist_cnn_forward.4} parent=1 // pred_fallthru
      _
    // Predicated region
    $region22: #{mnist_cnn_forward.4} parent=1 // pred_check
      _
    $region23: #{mnist_cnn_forward.4} parent=1 // pred_check_branch
      %39 = sbr.rel (0) target = $region25
    $region24: #{mnist_cnn_forward.4} parent=1 // pred_region
      %40 = dma.done [#allocation5], 16
    $region25: #{mnist_cnn_forward.4} parent=1 // pred_fallthru
      _
    %41 = sfence
    loop: start=0, step=1, limit=16
    $region26: #{mnist_cnn_forward.4} parent=1 // loop_pre_header
      _
    $region27: #{mnist_cnn_forward.4} parent=1 // loop_header
      %s43 = sphi 0, %s47
      %p44 = scmp.ge.s32.totalorder %s43, 16
    $region28: #{mnist_cnn_forward.4} parent=1 // loop_header_branch
      %46 = sbr.rel (%p44) target = $region32
    $region29: #{mnist_cnn_forward.4} parent=1 // loop_body
      %v48 = vld [vmem:[%s2] sm:$0x7f]
      %v49 = vld [vmem:[%s2 + $0x8] sm:$0x7f]
      %v50 = vld [vmem:[%s2 + $0x10] sm:$0x7f]
      %v51 = vld [vmem:[%s2 + $0x18] sm:$0x7f]
      %v52 = vld [vmem:[%s2 + $0x20] sm:$0x7f]
      %v53 = vld [vmem:[%s2 + $0x28] sm:$0x7f]
      %v54 = vld [vmem:[%s2 + $0x30] sm:$0x7f]
      %v55 = vld [vmem:[%s2 + $0x38] sm:$0x7f]
      %v56 = vld [vmem:[%s2 + $0x40] sm:$0x7f]
      %v57 = vld [vmem:[%s2 + $0x48] sm:$0x7f]
      %v58 = vld [vmem:[%s2 + $0x50] sm:$0x7f]
      %v59 = vld [vmem:[%s2 + $0x58] sm:$0x7f]
      %v60 = vld [vmem:[%s2 + $0x60] sm:$0x7f]
      %v61 = vld [vmem:[%s2 + $0x68] sm:$0x7f]
      %v62 = vld [vmem:[%s3] sm:$0x7f]
      %v63 = vld [vmem:[%s3 + $0x8] sm:$0x7f]
      %v64 = vld [vmem:[%s3 + $0x10] sm:$0x7f]
      %v65 = vld [vmem:[%s3 + $0x18] sm:$0x7f]
      %v66 = vld [vmem:[%s3 + $0x20] sm:$0x7f]
      %v67 = vld [vmem:[%s3 + $0x28] sm:$0x7f]
      %v68 = vld [vmem:[%s3 + $0x30] sm:$0x7f]
      %v69 = vld [vmem:[%s3 + $0x38] sm:$0x7f]
      %v70 = vld [vmem:[%s3 + $0x40] sm:$0x7f]
      %v71 = vld [vmem:[%s3 + $0x48] sm:$0x7f]
      %v72 = vld [vmem:[%s3 + $0x50] sm:$0x7f]
      %v73 = vld [vmem:[%s3 + $0x58] sm:$0x7f]
      %v74 = vld [vmem:[%s3 + $0x60] sm:$0x7f]
      %v75 = vld [vmem:[%s3 + $0x68] sm:$0x7f]
      %v76 = vld [vmem:[%s2 + $0x1] sm:$0x7f]
      %v77 = vld [vmem:[%s2 + $0x9] sm:$0x7f]
      %v78 = vld [vmem:[%s2 + $0x11] sm:$0x7f]
      %v79 = vld [vmem:[%s2 + $0x19] sm:$0x7f]
      %v80 = vld [vmem:[%s2 + $0x21] sm:$0x7f]
      %v81 = vld [vmem:[%s2 + $0x29] sm:$0x7f]
      %v82 = vld [vmem:[%s2 + $0x31] sm:$0x7f]
      %v83 = vld [vmem:[%s2 + $0x39] sm:$0x7f]
      %v84 = vld [vmem:[%s2 + $0x41] sm:$0x7f]
      %v85 = vld [vmem:[%s2 + $0x49] sm:$0x7f]
      %v86 = vld [vmem:[%s2 + $0x51] sm:$0x7f]
      %v87 = vld [vmem:[%s2 + $0x59] sm:$0x7f]
      %v88 = vld [vmem:[%s2 + $0x61] sm:$0x7f]
      %v89 = vld [vmem:[%s2 + $0x69] sm:$0x7f]
      %v90 = vld [vmem:[%s3 + $0x1] sm:$0x7f]
      %v91 = vld [vmem:[%s3 + $0x9] sm:$0x7f]
      %v92 = vld [vmem:[%s3 + $0x11] sm:$0x7f]
      %v93 = vld [vmem:[%s3 + $0x19] sm:$0x7f]
      %v94 = vld [vmem:[%s3 + $0x21] sm:$0x7f]
      %v95 = vld [vmem:[%s3 + $0x29] sm:$0x7f]
      %v96 = vld [vmem:[%s3 + $0x31] sm:$0x7f]
      %v97 = vld [vmem:[%s3 + $0x39] sm:$0x7f]
      %v98 = vld [vmem:[%s3 + $0x41] sm:$0x7f]
      %v99 = vld [vmem:[%s3 + $0x49] sm:$0x7f]
      %v100 = vld [vmem:[%s3 + $0x51] sm:$0x7f]
      %v101 = vld [vmem:[%s3 + $0x59] sm:$0x7f]
      %v102 = vld [vmem:[%s3 + $0x61] sm:$0x7f]
      %v103 = vld [vmem:[%s3 + $0x69] sm:$0x7f]
      %s104 = smul.u32 %s43, 54
      %s105 = sld [smem:[#allocation2 + %s104]]
      %s106 = sadd.s32 %s104, 1
      %s107 = sld [smem:[#allocation2 + %s106]]
      %s108 = sadd.s32 %s104, 2
      %s109 = sld [smem:[#allocation2 + %s108]]
      %v110 = vstv %s105
      %v111 = vmul.f32 %v110, %v48
      %v112 = vmul.f32 %v110, %v49
      %v113 = vmul.f32 %v110, %v50
      %v114 = vmul.f32 %v110, %v51
      %v115 = vmul.f32 %v110, %v52
      %v116 = vmul.f32 %v110, %v53
      %v117 = vmul.f32 %v110, %v54
      %v118 = vmul.f32 %v110, %v55
      %v119 = vmul.f32 %v110, %v56
      %v120 = vmul.f32 %v110, %v57
      %v121 = vmul.f32 %v110, %v58
      %v122 = vmul.f32 %v110, %v59
      %v123 = vmul.f32 %v110, %v60
      %v124 = vmul.f32 %v110, %v61
      %v125 = vadd.f32 %v111, 0.0
      %v126 = vadd.f32 %v112, 0.0
      %v127 = vadd.f32 %v113, 0.0
      %v128 = vadd.f32 %v114, 0.0
      %v129 = vadd.f32 %v115, 0.0
      %v130 = vadd.f32 %v116, 0.0
      %v131 = vadd.f32 %v117, 0.0
      %v132 = vadd.f32 %v118, 0.0
      %v133 = vadd.f32 %v119, 0.0
      %v134 = vadd.f32 %v120, 0.0
      %v135 = vadd.f32 %v121, 0.0
      %v136 = vadd.f32 %v122, 0.0
      %v137 = vadd.f32 %v123, 0.0
      %v138 = vadd.f32 %v124, 0.0
      %v139 = vstv %s107
      %v140 = vmul.f32 %v139, %v62
      %v141 = vmul.f32 %v139, %v63
      %v142 = vmul.f32 %v139, %v64
      %v143 = vmul.f32 %v139, %v65
      %v144 = vmul.f32 %v139, %v66
      %v145 = vmul.f32 %v139, %v67
      %v146 = vmul.f32 %v139, %v68
      %v147 = vmul.f32 %v139, %v69
      %v148 = vmul.f32 %v139, %v70
      %v149 = vmul.f32 %v139, %v71
      %v150 = vmul.f32 %v139, %v72
      %v151 = vmul.f32 %v139, %v73
      %v152 = vmul.f32 %v139, %v74
      %v153 = vmul.f32 %v139, %v75
      %v154 = vadd.f32 %v125, %v140
      %v155 = vadd.f32 %v126, %v141
      %v156 = vadd.f32 %v127, %v142
      %v157 = vadd.f32 %v128, %v143
      %v158 = vadd.f32 %v129, %v144
      %v159 = vadd.f32 %v130, %v145
      %v160 = vadd.f32 %v131, %v146
      %v161 = vadd.f32 %v132, %v147
      %v162 = vadd.f32 %v133, %v148
      %v163 = vadd.f32 %v134, %v149
      %v164 = vadd.f32 %v135, %v150
      %v165 = vadd.f32 %v136, %v151
      %v166 = vadd.f32 %v137, %v152
      %v167 = vadd.f32 %v138, %v153
      %v168 = vstv %s109
      %v169 = vmul.f32 %v168, %v76
      %v170 = vmul.f32 %v168, %v77
      %v171 = vmul.f32 %v168, %v78
      %v172 = vmul.f32 %v168, %v79
      %v173 = vmul.f32 %v168, %v80
      %v174 = vmul.f32 %v168, %v81
      %v175 = vmul.f32 %v168, %v82
      %v176 = vmul.f32 %v168, %v83
      %v177 = vmul.f32 %v168, %v84
      %v178 = vmul.f32 %v168, %v85
      %v179 = vmul.f32 %v168, %v86
      %v180 = vmul.f32 %v168, %v87
      %v181 = vmul.f32 %v168, %v88
      %v182 = vmul.f32 %v168, %v89
      %v183 = vadd.f32 %v154, %v169
      %v184 = vadd.f32 %v155, %v170
      %v185 = vadd.f32 %v156, %v171
      %v186 = vadd.f32 %v157, %v172
      %v187 = vadd.f32 %v158, %v173
      %v188 = vadd.f32 %v159, %v174
      %v189 = vadd.f32 %v160, %v175
      %v190 = vadd.f32 %v161, %v176
      %v191 = vadd.f32 %v162, %v177
      %v192 = vadd.f32 %v163, %v178
      %v193 = vadd.f32 %v164, %v179
      %v194 = vadd.f32 %v165, %v180
      %v195 = vadd.f32 %v166, %v181
      %v196 = vadd.f32 %v167, %v182
      %v197 = vmul.f32 %v110, %v62
      %v198 = vmul.f32 %v110, %v63
      %v199 = vmul.f32 %v110, %v64
      %v200 = vmul.f32 %v110, %v65
      %v201 = vmul.f32 %v110, %v66
      %v202 = vmul.f32 %v110, %v67
      %v203 = vmul.f32 %v110, %v68
      %v204 = vmul.f32 %v110, %v69
      %v205 = vmul.f32 %v110, %v70
      %v206 = vmul.f32 %v110, %v71
      %v207 = vmul.f32 %v110, %v72
      %v208 = vmul.f32 %v110, %v73
      %v209 = vmul.f32 %v110, %v74
      %v210 = vmul.f32 %v110, %v75
      %v211 = vadd.f32 %v197, 0.0
      %v212 = vadd.f32 %v198, 0.0
      %v213 = vadd.f32 %v199, 0.0
      %v214 = vadd.f32 %v200, 0.0
      %v215 = vadd.f32 %v201, 0.0
      %v216 = vadd.f32 %v202, 0.0
      %v217 = vadd.f32 %v203, 0.0
      %v218 = vadd.f32 %v204, 0.0
      %v219 = vadd.f32 %v205, 0.0
      %v220 = vadd.f32 %v206, 0.0
      %v221 = vadd.f32 %v207, 0.0
      %v222 = vadd.f32 %v208, 0.0
      %v223 = vadd.f32 %v209, 0.0
      %v224 = vadd.f32 %v210, 0.0
      %v225 = vmul.f32 %v139, %v76
      %v226 = vmul.f32 %v139, %v77
      %v227 = vmul.f32 %v139, %v78
      %v228 = vmul.f32 %v139, %v79
      %v229 = vmul.f32 %v139, %v80
      %v230 = vmul.f32 %v139, %v81
      %v231 = vmul.f32 %v139, %v82
      %v232 = vmul.f32 %v139, %v83
      %v233 = vmul.f32 %v139, %v84
      %v234 = vmul.f32 %v139, %v85
      %v235 = vmul.f32 %v139, %v86
      %v236 = vmul.f32 %v139, %v87
      %v237 = vmul.f32 %v139, %v88
      %v238 = vmul.f32 %v139, %v89
      %v239 = vadd.f32 %v211, %v225
      %v240 = vadd.f32 %v212, %v226
      %v241 = vadd.f32 %v213, %v227
      %v242 = vadd.f32 %v214, %v228
      %v243 = vadd.f32 %v215, %v229
      %v244 = vadd.f32 %v216, %v230
      %v245 = vadd.f32 %v217, %v231
      %v246 = vadd.f32 %v218, %v232
      %v247 = vadd.f32 %v219, %v233
      %v248 = vadd.f32 %v220, %v234
      %v249 = vadd.f32 %v221, %v235
      %v250 = vadd.f32 %v222, %v236
      %v251 = vadd.f32 %v223, %v237
      %v252 = vadd.f32 %v224, %v238
      %v253 = vmul.f32 %v168, %v90
      %v254 = vmul.f32 %v168, %v91
      %v255 = vmul.f32 %v168, %v92
      %v256 = vmul.f32 %v168, %v93
      %v257 = vmul.f32 %v168, %v94
      %v258 = vmul.f32 %v168, %v95
      %v259 = vmul.f32 %v168, %v96
      %v260 = vmul.f32 %v168, %v97
      %v261 = vmul.f32 %v168, %v98
      %v262 = vmul.f32 %v168, %v99
      %v263 = vmul.f32 %v168, %v100
      %v264 = vmul.f32 %v168, %v101
      %v265 = vmul.f32 %v168, %v102
      %v266 = vmul.f32 %v168, %v103
      %v267 = vadd.f32 %v239, %v253
      %v268 = vadd.f32 %v240, %v254
      %v269 = vadd.f32 %v241, %v255
      %v270 = vadd.f32 %v242, %v256
      %v271 = vadd.f32 %v243, %v257
      %v272 = vadd.f32 %v244, %v258
      %v273 = vadd.f32 %v245, %v259
      %v274 = vadd.f32 %v246, %v260
      %v275 = vadd.f32 %v247, %v261
      %v276 = vadd.f32 %v248, %v262
      %v277 = vadd.f32 %v249, %v263
      %v278 = vadd.f32 %v250, %v264
      %v279 = vadd.f32 %v251, %v265
      %v280 = vadd.f32 %v252, %v266
      %s281 = scalar_lea.vmem %s2, 8
      %v282 = vld [vmem:[%s281] sm:$0x7f]
      %v283 = vld [vmem:[%s281 + $0x8] sm:$0x7f]
      %v284 = vld [vmem:[%s281 + $0x10] sm:$0x7f]
      %v285 = vld [vmem:[%s281 + $0x18] sm:$0x7f]
      %v286 = vld [vmem:[%s281 + $0x20] sm:$0x7f]
      %v287 = vld [vmem:[%s281 + $0x28] sm:$0x7f]
      %v288 = vld [vmem:[%s281 + $0x30] sm:$0x7f]
      %v289 = vld [vmem:[%s281 + $0x38] sm:$0x7f]
      %v290 = vld [vmem:[%s281 + $0x40] sm:$0x7f]
      %v291 = vld [vmem:[%s281 + $0x48] sm:$0x7f]
      %v292 = vld [vmem:[%s281 + $0x50] sm:$0x7f]
      %v293 = vld [vmem:[%s281 + $0x58] sm:$0x7f]
      %v294 = vld [vmem:[%s281 + $0x60] sm:$0x7f]
      %v295 = vld [vmem:[%s281 + $0x68] sm:$0x7f]
      %s296 = scalar_lea.vmem %s3, 8
      %v297 = vld [vmem:[%s296] sm:$0x7f]
      %v298 = vld [vmem:[%s296 + $0x8] sm:$0x7f]
      %v299 = vld [vmem:[%s296 + $0x10] sm:$0x7f]
      %v300 = vld [vmem:[%s296 + $0x18] sm:$0x7f]
      %v301 = vld [vmem:[%s296 + $0x20] sm:$0x7f]
      %v302 = vld [vmem:[%s296 + $0x28] sm:$0x7f]
      %v303 = vld [vmem:[%s296 + $0x30] sm:$0x7f]
      %v304 = vld [vmem:[%s296 + $0x38] sm:$0x7f]
      %v305 = vld [vmem:[%s296 + $0x40] sm:$0x7f]
      %v306 = vld [vmem:[%s296 + $0x48] sm:$0x7f]
      %v307 = vld [vmem:[%s296 + $0x50] sm:$0x7f]
      %v308 = vld [vmem:[%s296 + $0x58] sm:$0x7f]
      %v309 = vld [vmem:[%s296 + $0x60] sm:$0x7f]
      %v310 = vld [vmem:[%s296 + $0x68] sm:$0x7f]
      %v311 = vld [vmem:[%s281 + $0x1] sm:$0x7f]
      %v312 = vld [vmem:[%s281 + $0x9] sm:$0x7f]
      %v313 = vld [vmem:[%s281 + $0x11] sm:$0x7f]
      %v314 = vld [vmem:[%s281 + $0x19] sm:$0x7f]
      %v315 = vld [vmem:[%s281 + $0x21] sm:$0x7f]
      %v316 = vld [vmem:[%s281 + $0x29] sm:$0x7f]
      %v317 = vld [vmem:[%s281 + $0x31] sm:$0x7f]
      %v318 = vld [vmem:[%s281 + $0x39] sm:$0x7f]
      %v319 = vld [vmem:[%s281 + $0x41] sm:$0x7f]
      %v320 = vld [vmem:[%s281 + $0x49] sm:$0x7f]
      %v321 = vld [vmem:[%s281 + $0x51] sm:$0x7f]
      %v322 = vld [vmem:[%s281 + $0x59] sm:$0x7f]
      %v323 = vld [vmem:[%s281 + $0x61] sm:$0x7f]
      %v324 = vld [vmem:[%s281 + $0x69] sm:$0x7f]
      %v325 = vld [vmem:[%s296 + $0x1] sm:$0x7f]
      %v326 = vld [vmem:[%s296 + $0x9] sm:$0x7f]
      %v327 = vld [vmem:[%s296 + $0x11] sm:$0x7f]
      %v328 = vld [vmem:[%s296 + $0x19] sm:$0x7f]
      %v329 = vld [vmem:[%s296 + $0x21] sm:$0x7f]
      %v330 = vld [vmem:[%s296 + $0x29] sm:$0x7f]
      %v331 = vld [vmem:[%s296 + $0x31] sm:$0x7f]
      %v332 = vld [vmem:[%s296 + $0x39] sm:$0x7f]
      %v333 = vld [vmem:[%s296 + $0x41] sm:$0x7f]
      %v334 = vld [vmem:[%s296 + $0x49] sm:$0x7f]
      %v335 = vld [vmem:[%s296 + $0x51] sm:$0x7f]
      %v336 = vld [vmem:[%s296 + $0x59] sm:$0x7f]
      %v337 = vld [vmem:[%s296 + $0x61] sm:$0x7f]
      %v338 = vld [vmem:[%s296 + $0x69] sm:$0x7f]
      %s339 = smul.u32 %s43, 18
      %s340 = sadd.s32 %s339, 1
      %s341 = smul.u32 %s340, 3
      %s342 = sld [smem:[#allocation2 + %s341]]
      %s343 = sadd.s32 %s341, 1
      %s344 = sld [smem:[#allocation2 + %s343]]
      %s345 = sadd.s32 %s341, 2
      %s346 = sld [smem:[#allocation2 + %s345]]
      %v347 = vstv %s342
      %v348 = vmul.f32 %v347, %v282
      %v349 = vmul.f32 %v347, %v283
      %v350 = vmul.f32 %v347, %v284
      %v351 = vmul.f32 %v347, %v285
      %v352 = vmul.f32 %v347, %v286
      %v353 = vmul.f32 %v347, %v287
      %v354 = vmul.f32 %v347, %v288
      %v355 = vmul.f32 %v347, %v289
      %v356 = vmul.f32 %v347, %v290
      %v357 = vmul.f32 %v347, %v291
      %v358 = vmul.f32 %v347, %v292
      %v359 = vmul.f32 %v347, %v293
      %v360 = vmul.f32 %v347, %v294
      %v361 = vmul.f32 %v347, %v295
      %v362 = vadd.f32 %v183, %v348
      %v363 = vadd.f32 %v184, %v349
      %v364 = vadd.f32 %v185, %v350
      %v365 = vadd.f32 %v186, %v351
      %v366 = vadd.f32 %v187, %v352
      %v367 = vadd.f32 %v188, %v353
      %v368 = vadd.f32 %v189, %v354
      %v369 = vadd.f32 %v190, %v355
      %v370 = vadd.f32 %v191, %v356
      %v371 = vadd.f32 %v192, %v357
      %v372 = vadd.f32 %v193, %v358
      %v373 = vadd.f32 %v194, %v359
      %v374 = vadd.f32 %v195, %v360
      %v375 = vadd.f32 %v196, %v361
      %v376 = vstv %s344
      %v377 = vmul.f32 %v376, %v297
      %v378 = vmul.f32 %v376, %v298
      %v379 = vmul.f32 %v376, %v299
      %v380 = vmul.f32 %v376, %v300
      %v381 = vmul.f32 %v376, %v301
      %v382 = vmul.f32 %v376, %v302
      %v383 = vmul.f32 %v376, %v303
      %v384 = vmul.f32 %v376, %v304
      %v385 = vmul.f32 %v376, %v305
      %v386 = vmul.f32 %v376, %v306
      %v387 = vmul.f32 %v376, %v307
      %v388 = vmul.f32 %v376, %v308
      %v389 = vmul.f32 %v376, %v309
      %v390 = vmul.f32 %v376, %v310
      %v391 = vadd.f32 %v362, %v377
      %v392 = vadd.f32 %v363, %v378
      %v393 = vadd.f32 %v364, %v379
      %v394 = vadd.f32 %v365, %v380
      %v395 = vadd.f32 %v366, %v381
      %v396 = vadd.f32 %v367, %v382
      %v397 = vadd.f32 %v368, %v383
      %v398 = vadd.f32 %v369, %v384
      %v399 = vadd.f32 %v370, %v385
      %v400 = vadd.f32 %v371, %v386
      %v401 = vadd.f32 %v372, %v387
      %v402 = vadd.f32 %v373, %v388
      %v403 = vadd.f32 %v374, %v389
      %v404 = vadd.f32 %v375, %v390
      %v405 = vstv %s346
      %v406 = vmul.f32 %v405, %v311
      %v407 = vmul.f32 %v405, %v312
      %v408 = vmul.f32 %v405, %v313
      %v409 = vmul.f32 %v405, %v314
      %v410 = vmul.f32 %v405, %v315
      %v411 = vmul.f32 %v405, %v316
      %v412 = vmul.f32 %v405, %v317
      %v413 = vmul.f32 %v405, %v318
      %v414 = vmul.f32 %v405, %v319
      %v415 = vmul.f32 %v405, %v320
      %v416 = vmul.f32 %v405, %v321
      %v417 = vmul.f32 %v405, %v322
      %v418 = vmul.f32 %v405, %v323
      %v419 = vmul.f32 %v405, %v324
      %v420 = vadd.f32 %v391, %v406
      %v421 = vadd.f32 %v392, %v407
      %v422 = vadd.f32 %v393, %v408
      %v423 = vadd.f32 %v394, %v409
      %v424 = vadd.f32 %v395, %v410
      %v425 = vadd.f32 %v396, %v411
      %v426 = vadd.f32 %v397, %v412
      %v427 = vadd.f32 %v398, %v413
      %v428 = vadd.f32 %v399, %v414
      %v429 = vadd.f32 %v400, %v415
      %v430 = vadd.f32 %v401, %v416
      %v431 = vadd.f32 %v402, %v417
      %v432 = vadd.f32 %v403, %v418
      %v433 = vadd.f32 %v404, %v419
      %v434 = vmul.f32 %v347, %v297
      %v435 = vmul.f32 %v347, %v298
      %v436 = vmul.f32 %v347, %v299
      %v437 = vmul.f32 %v347, %v300
      %v438 = vmul.f32 %v347, %v301
      %v439 = vmul.f32 %v347, %v302
      %v440 = vmul.f32 %v347, %v303
      %v441 = vmul.f32 %v347, %v304
      %v442 = vmul.f32 %v347, %v305
      %v443 = vmul.f32 %v347, %v306
      %v444 = vmul.f32 %v347, %v307
      %v445 = vmul.f32 %v347, %v308
      %v446 = vmul.f32 %v347, %v309
      %v447 = vmul.f32 %v347, %v310
      %v448 = vadd.f32 %v267, %v434
      %v449 = vadd.f32 %v268, %v435
      %v450 = vadd.f32 %v269, %v436
      %v451 = vadd.f32 %v270, %v437
      %v452 = vadd.f32 %v271, %v438
      %v453 = vadd.f32 %v272, %v439
      %v454 = vadd.f32 %v273, %v440
      %v455 = vadd.f32 %v274, %v441
      %v456 = vadd.f32 %v275, %v442
      %v457 = vadd.f32 %v276, %v443
      %v458 = vadd.f32 %v277, %v444
      %v459 = vadd.f32 %v278, %v445
      %v460 = vadd.f32 %v279, %v446
      %v461 = vadd.f32 %v280, %v447
      %v462 = vmul.f32 %v376, %v311
      %v463 = vmul.f32 %v376, %v312
      %v464 = vmul.f32 %v376, %v313
      %v465 = vmul.f32 %v376, %v314
      %v466 = vmul.f32 %v376, %v315
      %v467 = vmul.f32 %v376, %v316
      %v468 = vmul.f32 %v376, %v317
      %v469 = vmul.f32 %v376, %v318
      %v470 = vmul.f32 %v376, %v319
      %v471 = vmul.f32 %v376, %v320
      %v472 = vmul.f32 %v376, %v321
      %v473 = vmul.f32 %v376, %v322
      %v474 = vmul.f32 %v376, %v323
      %v475 = vmul.f32 %v376, %v324
      %v476 = vadd.f32 %v448, %v462
      %v477 = vadd.f32 %v449, %v463
      %v478 = vadd.f32 %v450, %v464
      %v479 = vadd.f32 %v451, %v465
      %v480 = vadd.f32 %v452, %v466
      %v481 = vadd.f32 %v453, %v467
      %v482 = vadd.f32 %v454, %v468
      %v483 = vadd.f32 %v455, %v469
      %v484 = vadd.f32 %v456, %v470
      %v485 = vadd.f32 %v457, %v471
      %v486 = vadd.f32 %v458, %v472
      %v487 = vadd.f32 %v459, %v473
      %v488 = vadd.f32 %v460, %v474
      %v489 = vadd.f32 %v461, %v475
      %v490 = vmul.f32 %v405, %v325
      %v491 = vmul.f32 %v405, %v326
      %v492 = vmul.f32 %v405, %v327
      %v493 = vmul.f32 %v405, %v328
      %v494 = vmul.f32 %v405, %v329
      %v495 = vmul.f32 %v405, %v330
      %v496 = vmul.f32 %v405, %v331
      %v497 = vmul.f32 %v405, %v332
      %v498 = vmul.f32 %v405, %v333
      %v499 = vmul.f32 %v405, %v334
      %v500 = vmul.f32 %v405, %v335
      %v501 = vmul.f32 %v405, %v336
      %v502 = vmul.f32 %v405, %v337
      %v503 = vmul.f32 %v405, %v338
      %v504 = vadd.f32 %v476, %v490
      %v505 = vadd.f32 %v477, %v491
      %v506 = vadd.f32 %v478, %v492
      %v507 = vadd.f32 %v479, %v493
      %v508 = vadd.f32 %v480, %v494
      %v509 = vadd.f32 %v481, %v495
      %v510 = vadd.f32 %v482, %v496
      %v511 = vadd.f32 %v483, %v497
      %v512 = vadd.f32 %v484, %v498
      %v513 = vadd.f32 %v485, %v499
      %v514 = vadd.f32 %v486, %v500
      %v515 = vadd.f32 %v487, %v501
      %v516 = vadd.f32 %v488, %v502
      %v517 = vadd.f32 %v489, %v503
      %s518 = scalar_lea.vmem %s2, 16
      %v519 = vld [vmem:[%s518] sm:$0x7f]
      %v520 = vld [vmem:[%s518 + $0x8] sm:$0x7f]
      %v521 = vld [vmem:[%s518 + $0x10] sm:$0x7f]
      %v522 = vld [vmem:[%s518 + $0x18] sm:$0x7f]
      %v523 = vld [vmem:[%s518 + $0x20] sm:$0x7f]
      %v524 = vld [vmem:[%s518 + $0x28] sm:$0x7f]
      %v525 = vld [vmem:[%s518 + $0x30] sm:$0x7f]
      %v526 = vld [vmem:[%s518 + $0x38] sm:$0x7f]
      %v527 = vld [vmem:[%s518 + $0x40] sm:$0x7f]
      %v528 = vld [vmem:[%s518 + $0x48] sm:$0x7f]
      %v529 = vld [vmem:[%s518 + $0x50] sm:$0x7f]
      %v530 = vld [vmem:[%s518 + $0x58] sm:$0x7f]
      %v531 = vld [vmem:[%s518 + $0x60] sm:$0x7f]
      %v532 = vld [vmem:[%s518 + $0x68] sm:$0x7f]
      %s533 = scalar_lea.vmem %s3, 16
      %v534 = vld [vmem:[%s533] sm:$0x7f]
      %v535 = vld [vmem:[%s533 + $0x8] sm:$0x7f]
      %v536 = vld [vmem:[%s533 + $0x10] sm:$0x7f]
      %v537 = vld [vmem:[%s533 + $0x18] sm:$0x7f]
      %v538 = vld [vmem:[%s533 + $0x20] sm:$0x7f]
      %v539 = vld [vmem:[%s533 + $0x28] sm:$0x7f]
      %v540 = vld [vmem:[%s533 + $0x30] sm:$0x7f]
      %v541 = vld [vmem:[%s533 + $0x38] sm:$0x7f]
      %v542 = vld [vmem:[%s533 + $0x40] sm:$0x7f]
      %v543 = vld [vmem:[%s533 + $0x48] sm:$0x7f]
      %v544 = vld [vmem:[%s533 + $0x50] sm:$0x7f]
      %v545 = vld [vmem:[%s533 + $0x58] sm:$0x7f]
      %v546 = vld [vmem:[%s533 + $0x60] sm:$0x7f]
      %v547 = vld [vmem:[%s533 + $0x68] sm:$0x7f]
      %v548 = vld [vmem:[%s518 + $0x1] sm:$0x7f]
      %v549 = vld [vmem:[%s518 + $0x9] sm:$0x7f]
      %v550 = vld [vmem:[%s518 + $0x11] sm:$0x7f]
      %v551 = vld [vmem:[%s518 + $0x19] sm:$0x7f]
      %v552 = vld [vmem:[%s518 + $0x21] sm:$0x7f]
      %v553 = vld [vmem:[%s518 + $0x29] sm:$0x7f]
      %v554 = vld [vmem:[%s518 + $0x31] sm:$0x7f]
      %v555 = vld [vmem:[%s518 + $0x39] sm:$0x7f]
      %v556 = vld [vmem:[%s518 + $0x41] sm:$0x7f]
      %v557 = vld [vmem:[%s518 + $0x49] sm:$0x7f]
      %v558 = vld [vmem:[%s518 + $0x51] sm:$0x7f]
      %v559 = vld [vmem:[%s518 + $0x59] sm:$0x7f]
      %v560 = vld [vmem:[%s518 + $0x61] sm:$0x7f]
      %v561 = vld [vmem:[%s518 + $0x69] sm:$0x7f]
      %v562 = vld [vmem:[%s533 + $0x1] sm:$0x7f]
      %v563 = vld [vmem:[%s533 + $0x9] sm:$0x7f]
      %v564 = vld [vmem:[%s533 + $0x11] sm:$0x7f]
      %v565 = vld [vmem:[%s533 + $0x19] sm:$0x7f]
      %v566 = vld [vmem:[%s533 + $0x21] sm:$0x7f]
      %v567 = vld [vmem:[%s533 + $0x29] sm:$0x7f]
      %v568 = vld [vmem:[%s533 + $0x31] sm:$0x7f]
      %v569 = vld [vmem:[%s533 + $0x39] sm:$0x7f]
      %v570 = vld [vmem:[%s533 + $0x41] sm:$0x7f]
      %v571 = vld [vmem:[%s533 + $0x49] sm:$0x7f]
      %v572 = vld [vmem:[%s533 + $0x51] sm:$0x7f]
      %v573 = vld [vmem:[%s533 + $0x59] sm:$0x7f]
      %v574 = vld [vmem:[%s533 + $0x61] sm:$0x7f]
      %v575 = vld [vmem:[%s533 + $0x69] sm:$0x7f]
      %s576 = sadd.s32 %s339, 2
      %s577 = smul.u32 %s576, 3
      %s578 = sld [smem:[#allocation2 + %s577]]
      %s579 = sadd.s32 %s577, 1
      %s580 = sld [smem:[#allocation2 + %s579]]
      %s581 = sadd.s32 %s577, 2
      %s582 = sld [smem:[#allocation2 + %s581]]
      %v583 = vstv %s578
      %v584 = vmul.f32 %v583, %v519
      %v585 = vmul.f32 %v583, %v520
      %v586 = vmul.f32 %v583, %v521
      %v587 = vmul.f32 %v583, %v522
      %v588 = vmul.f32 %v583, %v523
      %v589 = vmul.f32 %v583, %v524
      %v590 = vmul.f32 %v583, %v525
      %v591 = vmul.f32 %v583, %v526
      %v592 = vmul.f32 %v583, %v527
      %v593 = vmul.f32 %v583, %v528
      %v594 = vmul.f32 %v583, %v529
      %v595 = vmul.f32 %v583, %v530
      %v596 = vmul.f32 %v583, %v531
      %v597 = vmul.f32 %v583, %v532
      %v598 = vadd.f32 %v420, %v584
      %v599 = vadd.f32 %v421, %v585
      %v600 = vadd.f32 %v422, %v586
      %v601 = vadd.f32 %v423, %v587
      %v602 = vadd.f32 %v424, %v588
      %v603 = vadd.f32 %v425, %v589
      %v604 = vadd.f32 %v426, %v590
      %v605 = vadd.f32 %v427, %v591
      %v606 = vadd.f32 %v428, %v592
      %v607 = vadd.f32 %v429, %v593
      %v608 = vadd.f32 %v430, %v594
      %v609 = vadd.f32 %v431, %v595
      %v610 = vadd.f32 %v432, %v596
      %v611 = vadd.f32 %v433, %v597
      %v612 = vstv %s580
      %v613 = vmul.f32 %v612, %v534
      %v614 = vmul.f32 %v612, %v535
      %v615 = vmul.f32 %v612, %v536
      %v616 = vmul.f32 %v612, %v537
      %v617 = vmul.f32 %v612, %v538
      %v618 = vmul.f32 %v612, %v539
      %v619 = vmul.f32 %v612, %v540
      %v620 = vmul.f32 %v612, %v541
      %v621 = vmul.f32 %v612, %v542
      %v622 = vmul.f32 %v612, %v543
      %v623 = vmul.f32 %v612, %v544
      %v624 = vmul.f32 %v612, %v545
      %v625 = vmul.f32 %v612, %v546
      %v626 = vmul.f32 %v612, %v547
      %v627 = vadd.f32 %v598, %v613
      %v628 = vadd.f32 %v599, %v614
      %v629 = vadd.f32 %v600, %v615
      %v630 = vadd.f32 %v601, %v616
      %v631 = vadd.f32 %v602, %v617
      %v632 = vadd.f32 %v603, %v618
      %v633 = vadd.f32 %v604, %v619
      %v634 = vadd.f32 %v605, %v620
      %v635 = vadd.f32 %v606, %v621
      %v636 = vadd.f32 %v607, %v622
      %v637 = vadd.f32 %v608, %v623
      %v638 = vadd.f32 %v609, %v624
      %v639 = vadd.f32 %v610, %v625
      %v640 = vadd.f32 %v611, %v626
      %v641 = vstv %s582
      %v642 = vmul.f32 %v641, %v548
      %v643 = vmul.f32 %v641, %v549
      %v644 = vmul.f32 %v641, %v550
      %v645 = vmul.f32 %v641, %v551
      %v646 = vmul.f32 %v641, %v552
      %v647 = vmul.f32 %v641, %v553
      %v648 = vmul.f32 %v641, %v554
      %v649 = vmul.f32 %v641, %v555
      %v650 = vmul.f32 %v641, %v556
      %v651 = vmul.f32 %v641, %v557
      %v652 = vmul.f32 %v641, %v558
      %v653 = vmul.f32 %v641, %v559
      %v654 = vmul.f32 %v641, %v560
      %v655 = vmul.f32 %v641, %v561
      %v656 = vadd.f32 %v627, %v642
      %v657 = vadd.f32 %v628, %v643
      %v658 = vadd.f32 %v629, %v644
      %v659 = vadd.f32 %v630, %v645
      %v660 = vadd.f32 %v631, %v646
      %v661 = vadd.f32 %v632, %v647
      %v662 = vadd.f32 %v633, %v648
      %v663 = vadd.f32 %v634, %v649
      %v664 = vadd.f32 %v635, %v650
      %v665 = vadd.f32 %v636, %v651
      %v666 = vadd.f32 %v637, %v652
      %v667 = vadd.f32 %v638, %v653
      %v668 = vadd.f32 %v639, %v654
      %v669 = vadd.f32 %v640, %v655
      %v670 = vmul.f32 %v583, %v534
      %v671 = vmul.f32 %v583, %v535
      %v672 = vmul.f32 %v583, %v536
      %v673 = vmul.f32 %v583, %v537
      %v674 = vmul.f32 %v583, %v538
      %v675 = vmul.f32 %v583, %v539
      %v676 = vmul.f32 %v583, %v540
      %v677 = vmul.f32 %v583, %v541
      %v678 = vmul.f32 %v583, %v542
      %v679 = vmul.f32 %v583, %v543
      %v680 = vmul.f32 %v583, %v544
      %v681 = vmul.f32 %v583, %v545
      %v682 = vmul.f32 %v583, %v546
      %v683 = vmul.f32 %v583, %v547
      %v684 = vadd.f32 %v504, %v670
      %v685 = vadd.f32 %v505, %v671
      %v686 = vadd.f32 %v506, %v672
      %v687 = vadd.f32 %v507, %v673
      %v688 = vadd.f32 %v508, %v674
      %v689 = vadd.f32 %v509, %v675
      %v690 = vadd.f32 %v510, %v676
      %v691 = vadd.f32 %v511, %v677
      %v692 = vadd.f32 %v512, %v678
      %v693 = vadd.f32 %v513, %v679
      %v694 = vadd.f32 %v514, %v680
      %v695 = vadd.f32 %v515, %v681
      %v696 = vadd.f32 %v516, %v682
      %v697 = vadd.f32 %v517, %v683
      %v698 = vmul.f32 %v612, %v548
      %v699 = vmul.f32 %v612, %v549
      %v700 = vmul.f32 %v612, %v550
      %v701 = vmul.f32 %v612, %v551
      %v702 = vmul.f32 %v612, %v552
      %v703 = vmul.f32 %v612, %v553
      %v704 = vmul.f32 %v612, %v554
      %v705 = vmul.f32 %v612, %v555
      %v706 = vmul.f32 %v612, %v556
      %v707 = vmul.f32 %v612, %v557
      %v708 = vmul.f32 %v612, %v558
      %v709 = vmul.f32 %v612, %v559
      %v710 = vmul.f32 %v612, %v560
      %v711 = vmul.f32 %v612, %v561
      %v712 = vadd.f32 %v684, %v698
      %v713 = vadd.f32 %v685, %v699
      %v714 = vadd.f32 %v686, %v700
      %v715 = vadd.f32 %v687, %v701
      %v716 = vadd.f32 %v688, %v702
      %v717 = vadd.f32 %v689, %v703
      %v718 = vadd.f32 %v690, %v704
      %v719 = vadd.f32 %v691, %v705
      %v720 = vadd.f32 %v692, %v706
      %v721 = vadd.f32 %v693, %v707
      %v722 = vadd.f32 %v694, %v708
      %v723 = vadd.f32 %v695, %v709
      %v724 = vadd.f32 %v696, %v710
      %v725 = vadd.f32 %v697, %v711
      %v726 = vmul.f32 %v641, %v562
      %v727 = vmul.f32 %v641, %v563
      %v728 = vmul.f32 %v641, %v564
      %v729 = vmul.f32 %v641, %v565
      %v730 = vmul.f32 %v641, %v566
      %v731 = vmul.f32 %v641, %v567
      %v732 = vmul.f32 %v641, %v568
      %v733 = vmul.f32 %v641, %v569
      %v734 = vmul.f32 %v641, %v570
      %v735 = vmul.f32 %v641, %v571
      %v736 = vmul.f32 %v641, %v572
      %v737 = vmul.f32 %v641, %v573
      %v738 = vmul.f32 %v641, %v574
      %v739 = vmul.f32 %v641, %v575
      %v740 = vadd.f32 %v712, %v726
      %v741 = vadd.f32 %v713, %v727
      %v742 = vadd.f32 %v714, %v728
      %v743 = vadd.f32 %v715, %v729
      %v744 = vadd.f32 %v716, %v730
      %v745 = vadd.f32 %v717, %v731
      %v746 = vadd.f32 %v718, %v732
      %v747 = vadd.f32 %v719, %v733
      %v748 = vadd.f32 %v720, %v734
      %v749 = vadd.f32 %v721, %v735
      %v750 = vadd.f32 %v722, %v736
      %v751 = vadd.f32 %v723, %v737
      %v752 = vadd.f32 %v724, %v738
      %v753 = vadd.f32 %v725, %v739
      %s754 = scalar_lea.vmem %s2, 128
      %v755 = vld [vmem:[%s754] sm:$0x7f]
      %v756 = vld [vmem:[%s754 + $0x8] sm:$0x7f]
      %v757 = vld [vmem:[%s754 + $0x10] sm:$0x7f]
      %v758 = vld [vmem:[%s754 + $0x18] sm:$0x7f]
      %v759 = vld [vmem:[%s754 + $0x20] sm:$0x7f]
      %v760 = vld [vmem:[%s754 + $0x28] sm:$0x7f]
      %v761 = vld [vmem:[%s754 + $0x30] sm:$0x7f]
      %v762 = vld [vmem:[%s754 + $0x38] sm:$0x7f]
      %v763 = vld [vmem:[%s754 + $0x40] sm:$0x7f]
      %v764 = vld [vmem:[%s754 + $0x48] sm:$0x7f]
      %v765 = vld [vmem:[%s754 + $0x50] sm:$0x7f]
      %v766 = vld [vmem:[%s754 + $0x58] sm:$0x7f]
      %v767 = vld [vmem:[%s754 + $0x60] sm:$0x7f]
      %v768 = vld [vmem:[%s754 + $0x68] sm:$0x7f]
      %s769 = scalar_lea.vmem %s3, 128
      %v770 = vld [vmem:[%s769] sm:$0x7f]
      %v771 = vld [vmem:[%s769 + $0x8] sm:$0x7f]
      %v772 = vld [vmem:[%s769 + $0x10] sm:$0x7f]
      %v773 = vld [vmem:[%s769 + $0x18] sm:$0x7f]
      %v774 = vld [vmem:[%s769 + $0x20] sm:$0x7f]
      %v775 = vld [vmem:[%s769 + $0x28] sm:$0x7f]
      %v776 = vld [vmem:[%s769 + $0x30] sm:$0x7f]
      %v777 = vld [vmem:[%s769 + $0x38] sm:$0x7f]
      %v778 = vld [vmem:[%s769 + $0x40] sm:$0x7f]
      %v779 = vld [vmem:[%s769 + $0x48] sm:$0x7f]
      %v780 = vld [vmem:[%s769 + $0x50] sm:$0x7f]
      %v781 = vld [vmem:[%s769 + $0x58] sm:$0x7f]
      %v782 = vld [vmem:[%s769 + $0x60] sm:$0x7f]
      %v783 = vld [vmem:[%s769 + $0x68] sm:$0x7f]
      %v784 = vld [vmem:[%s754 + $0x1] sm:$0x7f]
      %v785 = vld [vmem:[%s754 + $0x9] sm:$0x7f]
      %v786 = vld [vmem:[%s754 + $0x11] sm:$0x7f]
      %v787 = vld [vmem:[%s754 + $0x19] sm:$0x7f]
      %v788 = vld [vmem:[%s754 + $0x21] sm:$0x7f]
      %v789 = vld [vmem:[%s754 + $0x29] sm:$0x7f]
      %v790 = vld [vmem:[%s754 + $0x31] sm:$0x7f]
      %v791 = vld [vmem:[%s754 + $0x39] sm:$0x7f]
      %v792 = vld [vmem:[%s754 + $0x41] sm:$0x7f]
      %v793 = vld [vmem:[%s754 + $0x49] sm:$0x7f]
      %v794 = vld [vmem:[%s754 + $0x51] sm:$0x7f]
      %v795 = vld [vmem:[%s754 + $0x59] sm:$0x7f]
      %v796 = vld [vmem:[%s754 + $0x61] sm:$0x7f]
      %v797 = vld [vmem:[%s754 + $0x69] sm:$0x7f]
      %v798 = vld [vmem:[%s769 + $0x1] sm:$0x7f]
      %v799 = vld [vmem:[%s769 + $0x9] sm:$0x7f]
      %v800 = vld [vmem:[%s769 + $0x11] sm:$0x7f]
      %v801 = vld [vmem:[%s769 + $0x19] sm:$0x7f]
      %v802 = vld [vmem:[%s769 + $0x21] sm:$0x7f]
      %v803 = vld [vmem:[%s769 + $0x29] sm:$0x7f]
      %v804 = vld [vmem:[%s769 + $0x31] sm:$0x7f]
      %v805 = vld [vmem:[%s769 + $0x39] sm:$0x7f]
      %v806 = vld [vmem:[%s769 + $0x41] sm:$0x7f]
      %v807 = vld [vmem:[%s769 + $0x49] sm:$0x7f]
      %v808 = vld [vmem:[%s769 + $0x51] sm:$0x7f]
      %v809 = vld [vmem:[%s769 + $0x59] sm:$0x7f]
      %v810 = vld [vmem:[%s769 + $0x61] sm:$0x7f]
      %v811 = vld [vmem:[%s769 + $0x69] sm:$0x7f]
      %s812 = smul.u32 %s43, 6
      %s813 = sadd.s32 %s812, 1
      %s814 = smul.u32 %s813, 9
      %s815 = sld [smem:[#allocation2 + %s814]]
      %s816 = sadd.s32 %s814, 1
      %s817 = sld [smem:[#allocation2 + %s816]]
      %s818 = sadd.s32 %s814, 2
      %s819 = sld [smem:[#allocation2 + %s818]]
      %v820 = vstv %s815
      %v821 = vmul.f32 %v820, %v755
      %v822 = vmul.f32 %v820, %v756
      %v823 = vmul.f32 %v820, %v757
      %v824 = vmul.f32 %v820, %v758
      %v825 = vmul.f32 %v820, %v759
      %v826 = vmul.f32 %v820, %v760
      %v827 = vmul.f32 %v820, %v761
      %v828 = vmul.f32 %v820, %v762
      %v829 = vmul.f32 %v820, %v763
      %v830 = vmul.f32 %v820, %v764
      %v831 = vmul.f32 %v820, %v765
      %v832 = vmul.f32 %v820, %v766
      %v833 = vmul.f32 %v820, %v767
      %v834 = vmul.f32 %v820, %v768
      %v835 = vadd.f32 %v656, %v821
      %v836 = vadd.f32 %v657, %v822
      %v837 = vadd.f32 %v658, %v823
      %v838 = vadd.f32 %v659, %v824
      %v839 = vadd.f32 %v660, %v825
      %v840 = vadd.f32 %v661, %v826
      %v841 = vadd.f32 %v662, %v827
      %v842 = vadd.f32 %v663, %v828
      %v843 = vadd.f32 %v664, %v829
      %v844 = vadd.f32 %v665, %v830
      %v845 = vadd.f32 %v666, %v831
      %v846 = vadd.f32 %v667, %v832
      %v847 = vadd.f32 %v668, %v833
      %v848 = vadd.f32 %v669, %v834
      %v849 = vstv %s817
      %v850 = vmul.f32 %v849, %v770
      %v851 = vmul.f32 %v849, %v771
      %v852 = vmul.f32 %v849, %v772
      %v853 = vmul.f32 %v849, %v773
      %v854 = vmul.f32 %v849, %v774
      %v855 = vmul.f32 %v849, %v775
      %v856 = vmul.f32 %v849, %v776
      %v857 = vmul.f32 %v849, %v777
      %v858 = vmul.f32 %v849, %v778
      %v859 = vmul.f32 %v849, %v779
      %v860 = vmul.f32 %v849, %v780
      %v861 = vmul.f32 %v849, %v781
      %v862 = vmul.f32 %v849, %v782
      %v863 = vmul.f32 %v849, %v783
      %v864 = vadd.f32 %v835, %v850
      %v865 = vadd.f32 %v836, %v851
      %v866 = vadd.f32 %v837, %v852
      %v867 = vadd.f32 %v838, %v853
      %v868 = vadd.f32 %v839, %v854
      %v869 = vadd.f32 %v840, %v855
      %v870 = vadd.f32 %v841, %v856
      %v871 = vadd.f32 %v842, %v857
      %v872 = vadd.f32 %v843, %v858
      %v873 = vadd.f32 %v844, %v859
      %v874 = vadd.f32 %v845, %v860
      %v875 = vadd.f32 %v846, %v861
      %v876 = vadd.f32 %v847, %v862
      %v877 = vadd.f32 %v848, %v863
      %v878 = vstv %s819
      %v879 = vmul.f32 %v878, %v784
      %v880 = vmul.f32 %v878, %v785
      %v881 = vmul.f32 %v878, %v786
      %v882 = vmul.f32 %v878, %v787
      %v883 = vmul.f32 %v878, %v788
      %v884 = vmul.f32 %v878, %v789
      %v885 = vmul.f32 %v878, %v790
      %v886 = vmul.f32 %v878, %v791
      %v887 = vmul.f32 %v878, %v792
      %v888 = vmul.f32 %v878, %v793
      %v889 = vmul.f32 %v878, %v794
      %v890 = vmul.f32 %v878, %v795
      %v891 = vmul.f32 %v878, %v796
      %v892 = vmul.f32 %v878, %v797
      %v893 = vadd.f32 %v864, %v879
      %v894 = vadd.f32 %v865, %v880
      %v895 = vadd.f32 %v866, %v881
      %v896 = vadd.f32 %v867, %v882
      %v897 = vadd.f32 %v868, %v883
      %v898 = vadd.f32 %v869, %v884
      %v899 = vadd.f32 %v870, %v885
      %v900 = vadd.f32 %v871, %v886
      %v901 = vadd.f32 %v872, %v887
      %v902 = vadd.f32 %v873, %v888
      %v903 = vadd.f32 %v874, %v889
      %v904 = vadd.f32 %v875, %v890
      %v905 = vadd.f32 %v876, %v891
      %v906 = vadd.f32 %v877, %v892
      %v907 = vmul.f32 %v820, %v770
      %v908 = vmul.f32 %v820, %v771
      %v909 = vmul.f32 %v820, %v772
      %v910 = vmul.f32 %v820, %v773
      %v911 = vmul.f32 %v820, %v774
      %v912 = vmul.f32 %v820, %v775
      %v913 = vmul.f32 %v820, %v776
      %v914 = vmul.f32 %v820, %v777
      %v915 = vmul.f32 %v820, %v778
      %v916 = vmul.f32 %v820, %v779
      %v917 = vmul.f32 %v820, %v780
      %v918 = vmul.f32 %v820, %v781
      %v919 = vmul.f32 %v820, %v782
      %v920 = vmul.f32 %v820, %v783
      %v921 = vadd.f32 %v740, %v907
      %v922 = vadd.f32 %v741, %v908
      %v923 = vadd.f32 %v742, %v909
      %v924 = vadd.f32 %v743, %v910
      %v925 = vadd.f32 %v744, %v911
      %v926 = vadd.f32 %v745, %v912
      %v927 = vadd.f32 %v746, %v913
      %v928 = vadd.f32 %v747, %v914
      %v929 = vadd.f32 %v748, %v915
      %v930 = vadd.f32 %v749, %v916
      %v931 = vadd.f32 %v750, %v917
      %v932 = vadd.f32 %v751, %v918
      %v933 = vadd.f32 %v752, %v919
      %v934 = vadd.f32 %v753, %v920
      %v935 = vmul.f32 %v849, %v784
      %v936 = vmul.f32 %v849, %v785
      %v937 = vmul.f32 %v849, %v786
      %v938 = vmul.f32 %v849, %v787
      %v939 = vmul.f32 %v849, %v788
      %v940 = vmul.f32 %v849, %v789
      %v941 = vmul.f32 %v849, %v790
      %v942 = vmul.f32 %v849, %v791
      %v943 = vmul.f32 %v849, %v792
      %v944 = vmul.f32 %v849, %v793
      %v945 = vmul.f32 %v849, %v794
      %v946 = vmul.f32 %v849, %v795
      %v947 = vmul.f32 %v849, %v796
      %v948 = vmul.f32 %v849, %v797
      %v949 = vadd.f32 %v921, %v935
      %v950 = vadd.f32 %v922, %v936
      %v951 = vadd.f32 %v923, %v937
      %v952 = vadd.f32 %v924, %v938
      %v953 = vadd.f32 %v925, %v939
      %v954 = vadd.f32 %v926, %v940
      %v955 = vadd.f32 %v927, %v941
      %v956 = vadd.f32 %v928, %v942
      %v957 = vadd.f32 %v929, %v943
      %v958 = vadd.f32 %v930, %v944
      %v959 = vadd.f32 %v931, %v945
      %v960 = vadd.f32 %v932, %v946
      %v961 = vadd.f32 %v933, %v947
      %v962 = vadd.f32 %v934, %v948
      %v963 = vmul.f32 %v878, %v798
      %v964 = vmul.f32 %v878, %v799
      %v965 = vmul.f32 %v878, %v800
      %v966 = vmul.f32 %v878, %v801
      %v967 = vmul.f32 %v878, %v802
      %v968 = vmul.f32 %v878, %v803
      %v969 = vmul.f32 %v878, %v804
      %v970 = vmul.f32 %v878, %v805
      %v971 = vmul.f32 %v878, %v806
      %v972 = vmul.f32 %v878, %v807
      %v973 = vmul.f32 %v878, %v808
      %v974 = vmul.f32 %v878, %v809
      %v975 = vmul.f32 %v878, %v810
      %v976 = vmul.f32 %v878, %v811
      %v977 = vadd.f32 %v949, %v963
      %v978 = vadd.f32 %v950, %v964
      %v979 = vadd.f32 %v951, %v965
      %v980 = vadd.f32 %v952, %v966
      %v981 = vadd.f32 %v953, %v967
      %v982 = vadd.f32 %v954, %v968
      %v983 = vadd.f32 %v955, %v969
      %v984 = vadd.f32 %v956, %v970
      %v985 = vadd.f32 %v957, %v971
      %v986 = vadd.f32 %v958, %v972
      %v987 = vadd.f32 %v959, %v973
      %v988 = vadd.f32 %v960, %v974
      %v989 = vadd.f32 %v961, %v975
      %v990 = vadd.f32 %v962, %v976
      %s991 = scalar_lea.vmem %s2, 136
      %v992 = vld [vmem:[%s991] sm:$0x7f]
      %v993 = vld [vmem:[%s991 + $0x8] sm:$0x7f]
      %v994 = vld [vmem:[%s991 + $0x10] sm:$0x7f]
      %v995 = vld [vmem:[%s991 + $0x18] sm:$0x7f]
      %v996 = vld [vmem:[%s991 + $0x20] sm:$0x7f]
      %v997 = vld [vmem:[%s991 + $0x28] sm:$0x7f]
      %v998 = vld [vmem:[%s991 + $0x30] sm:$0x7f]
      %v999 = vld [vmem:[%s991 + $0x38] sm:$0x7f]
      %v1000 = vld [vmem:[%s991 + $0x40] sm:$0x7f]
      %v1001 = vld [vmem:[%s991 + $0x48] sm:$0x7f]
      %v1002 = vld [vmem:[%s991 + $0x50] sm:$0x7f]
      %v1003 = vld [vmem:[%s991 + $0x58] sm:$0x7f]
      %v1004 = vld [vmem:[%s991 + $0x60] sm:$0x7f]
      %v1005 = vld [vmem:[%s991 + $0x68] sm:$0x7f]
      %s1006 = scalar_lea.vmem %s3, 136
      %v1007 = vld [vmem:[%s1006] sm:$0x7f]
      %v1008 = vld [vmem:[%s1006 + $0x8] sm:$0x7f]
      %v1009 = vld [vmem:[%s1006 + $0x10] sm:$0x7f]
      %v1010 = vld [vmem:[%s1006 + $0x18] sm:$0x7f]
      %v1011 = vld [vmem:[%s1006 + $0x20] sm:$0x7f]
      %v1012 = vld [vmem:[%s1006 + $0x28] sm:$0x7f]
      %v1013 = vld [vmem:[%s1006 + $0x30] sm:$0x7f]
      %v1014 = vld [vmem:[%s1006 + $0x38] sm:$0x7f]
      %v1015 = vld [vmem:[%s1006 + $0x40] sm:$0x7f]
      %v1016 = vld [vmem:[%s1006 + $0x48] sm:$0x7f]
      %v1017 = vld [vmem:[%s1006 + $0x50] sm:$0x7f]
      %v1018 = vld [vmem:[%s1006 + $0x58] sm:$0x7f]
      %v1019 = vld [vmem:[%s1006 + $0x60] sm:$0x7f]
      %v1020 = vld [vmem:[%s1006 + $0x68] sm:$0x7f]
      %v1021 = vld [vmem:[%s991 + $0x1] sm:$0x7f]
      %v1022 = vld [vmem:[%s991 + $0x9] sm:$0x7f]
      %v1023 = vld [vmem:[%s991 + $0x11] sm:$0x7f]
      %v1024 = vld [vmem:[%s991 + $0x19] sm:$0x7f]
      %v1025 = vld [vmem:[%s991 + $0x21] sm:$0x7f]
      %v1026 = vld [vmem:[%s991 + $0x29] sm:$0x7f]
      %v1027 = vld [vmem:[%s991 + $0x31] sm:$0x7f]
      %v1028 = vld [vmem:[%s991 + $0x39] sm:$0x7f]
      %v1029 = vld [vmem:[%s991 + $0x41] sm:$0x7f]
      %v1030 = vld [vmem:[%s991 + $0x49] sm:$0x7f]
      %v1031 = vld [vmem:[%s991 + $0x51] sm:$0x7f]
      %v1032 = vld [vmem:[%s991 + $0x59] sm:$0x7f]
      %v1033 = vld [vmem:[%s991 + $0x61] sm:$0x7f]
      %v1034 = vld [vmem:[%s991 + $0x69] sm:$0x7f]
      %v1035 = vld [vmem:[%s1006 + $0x1] sm:$0x7f]
      %v1036 = vld [vmem:[%s1006 + $0x9] sm:$0x7f]
      %v1037 = vld [vmem:[%s1006 + $0x11] sm:$0x7f]
      %v1038 = vld [vmem:[%s1006 + $0x19] sm:$0x7f]
      %v1039 = vld [vmem:[%s1006 + $0x21] sm:$0x7f]
      %v1040 = vld [vmem:[%s1006 + $0x29] sm:$0x7f]
      %v1041 = vld [vmem:[%s1006 + $0x31] sm:$0x7f]
      %v1042 = vld [vmem:[%s1006 + $0x39] sm:$0x7f]
      %v1043 = vld [vmem:[%s1006 + $0x41] sm:$0x7f]
      %v1044 = vld [vmem:[%s1006 + $0x49] sm:$0x7f]
      %v1045 = vld [vmem:[%s1006 + $0x51] sm:$0x7f]
      %v1046 = vld [vmem:[%s1006 + $0x59] sm:$0x7f]
      %v1047 = vld [vmem:[%s1006 + $0x61] sm:$0x7f]
      %v1048 = vld [vmem:[%s1006 + $0x69] sm:$0x7f]
      %s1049 = smul.u32 %s813, 3
      %s1050 = sadd.s32 %s1049, 1
      %s1051 = smul.u32 %s1050, 3
      %s1052 = sld [smem:[#allocation2 + %s1051]]
      %s1053 = sadd.s32 %s1051, 1
      %s1054 = sld [smem:[#allocation2 + %s1053]]
      %s1055 = sadd.s32 %s1051, 2
      %s1056 = sld [smem:[#allocation2 + %s1055]]
      %v1057 = vstv %s1052
      %v1058 = vmul.f32 %v1057, %v992
      %v1059 = vmul.f32 %v1057, %v993
      %v1060 = vmul.f32 %v1057, %v994
      %v1061 = vmul.f32 %v1057, %v995
      %v1062 = vmul.f32 %v1057, %v996
      %v1063 = vmul.f32 %v1057, %v997
      %v1064 = vmul.f32 %v1057, %v998
      %v1065 = vmul.f32 %v1057, %v999
      %v1066 = vmul.f32 %v1057, %v1000
      %v1067 = vmul.f32 %v1057, %v1001
      %v1068 = vmul.f32 %v1057, %v1002
      %v1069 = vmul.f32 %v1057, %v1003
      %v1070 = vmul.f32 %v1057, %v1004
      %v1071 = vmul.f32 %v1057, %v1005
      %v1072 = vadd.f32 %v893, %v1058
      %v1073 = vadd.f32 %v894, %v1059
      %v1074 = vadd.f32 %v895, %v1060
      %v1075 = vadd.f32 %v896, %v1061
      %v1076 = vadd.f32 %v897, %v1062
      %v1077 = vadd.f32 %v898, %v1063
      %v1078 = vadd.f32 %v899, %v1064
      %v1079 = vadd.f32 %v900, %v1065
      %v1080 = vadd.f32 %v901, %v1066
      %v1081 = vadd.f32 %v902, %v1067
      %v1082 = vadd.f32 %v903, %v1068
      %v1083 = vadd.f32 %v904, %v1069
      %v1084 = vadd.f32 %v905, %v1070
      %v1085 = vadd.f32 %v906, %v1071
      %v1086 = vstv %s1054
      %v1087 = vmul.f32 %v1086, %v1007
      %v1088 = vmul.f32 %v1086, %v1008
      %v1089 = vmul.f32 %v1086, %v1009
      %v1090 = vmul.f32 %v1086, %v1010
      %v1091 = vmul.f32 %v1086, %v1011
      %v1092 = vmul.f32 %v1086, %v1012
      %v1093 = vmul.f32 %v1086, %v1013
      %v1094 = vmul.f32 %v1086, %v1014
      %v1095 = vmul.f32 %v1086, %v1015
      %v1096 = vmul.f32 %v1086, %v1016
      %v1097 = vmul.f32 %v1086, %v1017
      %v1098 = vmul.f32 %v1086, %v1018
      %v1099 = vmul.f32 %v1086, %v1019
      %v1100 = vmul.f32 %v1086, %v1020
      %v1101 = vadd.f32 %v1072, %v1087
      %v1102 = vadd.f32 %v1073, %v1088
      %v1103 = vadd.f32 %v1074, %v1089
      %v1104 = vadd.f32 %v1075, %v1090
      %v1105 = vadd.f32 %v1076, %v1091
      %v1106 = vadd.f32 %v1077, %v1092
      %v1107 = vadd.f32 %v1078, %v1093
      %v1108 = vadd.f32 %v1079, %v1094
      %v1109 = vadd.f32 %v1080, %v1095
      %v1110 = vadd.f32 %v1081, %v1096
      %v1111 = vadd.f32 %v1082, %v1097
      %v1112 = vadd.f32 %v1083, %v1098
      %v1113 = vadd.f32 %v1084, %v1099
      %v1114 = vadd.f32 %v1085, %v1100
      %v1115 = vstv %s1056
      %v1116 = vmul.f32 %v1115, %v1021
      %v1117 = vmul.f32 %v1115, %v1022
      %v1118 = vmul.f32 %v1115, %v1023
      %v1119 = vmul.f32 %v1115, %v1024
      %v1120 = vmul.f32 %v1115, %v1025
      %v1121 = vmul.f32 %v1115, %v1026
      %v1122 = vmul.f32 %v1115, %v1027
      %v1123 = vmul.f32 %v1115, %v1028
      %v1124 = vmul.f32 %v1115, %v1029
      %v1125 = vmul.f32 %v1115, %v1030
      %v1126 = vmul.f32 %v1115, %v1031
      %v1127 = vmul.f32 %v1115, %v1032
      %v1128 = vmul.f32 %v1115, %v1033
      %v1129 = vmul.f32 %v1115, %v1034
      %v1130 = vadd.f32 %v1101, %v1116
      %v1131 = vadd.f32 %v1102, %v1117
      %v1132 = vadd.f32 %v1103, %v1118
      %v1133 = vadd.f32 %v1104, %v1119
      %v1134 = vadd.f32 %v1105, %v1120
      %v1135 = vadd.f32 %v1106, %v1121
      %v1136 = vadd.f32 %v1107, %v1122
      %v1137 = vadd.f32 %v1108, %v1123
      %v1138 = vadd.f32 %v1109, %v1124
      %v1139 = vadd.f32 %v1110, %v1125
      %v1140 = vadd.f32 %v1111, %v1126
      %v1141 = vadd.f32 %v1112, %v1127
      %v1142 = vadd.f32 %v1113, %v1128
      %v1143 = vadd.f32 %v1114, %v1129
      %v1144 = vmul.f32 %v1057, %v1007
      %v1145 = vmul.f32 %v1057, %v1008
      %v1146 = vmul.f32 %v1057, %v1009
      %v1147 = vmul.f32 %v1057, %v1010
      %v1148 = vmul.f32 %v1057, %v1011
      %v1149 = vmul.f32 %v1057, %v1012
      %v1150 = vmul.f32 %v1057, %v1013
      %v1151 = vmul.f32 %v1057, %v1014
      %v1152 = vmul.f32 %v1057, %v1015
      %v1153 = vmul.f32 %v1057, %v1016
      %v1154 = vmul.f32 %v1057, %v1017
      %v1155 = vmul.f32 %v1057, %v1018
      %v1156 = vmul.f32 %v1057, %v1019
      %v1157 = vmul.f32 %v1057, %v1020
      %v1158 = vadd.f32 %v977, %v1144
      %v1159 = vadd.f32 %v978, %v1145
      %v1160 = vadd.f32 %v979, %v1146
      %v1161 = vadd.f32 %v980, %v1147
      %v1162 = vadd.f32 %v981, %v1148
      %v1163 = vadd.f32 %v982, %v1149
      %v1164 = vadd.f32 %v983, %v1150
      %v1165 = vadd.f32 %v984, %v1151
      %v1166 = vadd.f32 %v985, %v1152
      %v1167 = vadd.f32 %v986, %v1153
      %v1168 = vadd.f32 %v987, %v1154
      %v1169 = vadd.f32 %v988, %v1155
      %v1170 = vadd.f32 %v989, %v1156
      %v1171 = vadd.f32 %v990, %v1157
      %v1172 = vmul.f32 %v1086, %v1021
      %v1173 = vmul.f32 %v1086, %v1022
      %v1174 = vmul.f32 %v1086, %v1023
      %v1175 = vmul.f32 %v1086, %v1024
      %v1176 = vmul.f32 %v1086, %v1025
      %v1177 = vmul.f32 %v1086, %v1026
      %v1178 = vmul.f32 %v1086, %v1027
      %v1179 = vmul.f32 %v1086, %v1028
      %v1180 = vmul.f32 %v1086, %v1029
      %v1181 = vmul.f32 %v1086, %v1030
      %v1182 = vmul.f32 %v1086, %v1031
      %v1183 = vmul.f32 %v1086, %v1032
      %v1184 = vmul.f32 %v1086, %v1033
      %v1185 = vmul.f32 %v1086, %v1034
      %v1186 = vadd.f32 %v1158, %v1172
      %v1187 = vadd.f32 %v1159, %v1173
      %v1188 = vadd.f32 %v1160, %v1174
      %v1189 = vadd.f32 %v1161, %v1175
      %v1190 = vadd.f32 %v1162, %v1176
      %v1191 = vadd.f32 %v1163, %v1177
      %v1192 = vadd.f32 %v1164, %v1178
      %v1193 = vadd.f32 %v1165, %v1179
      %v1194 = vadd.f32 %v1166, %v1180
      %v1195 = vadd.f32 %v1167, %v1181
      %v1196 = vadd.f32 %v1168, %v1182
      %v1197 = vadd.f32 %v1169, %v1183
      %v1198 = vadd.f32 %v1170, %v1184
      %v1199 = vadd.f32 %v1171, %v1185
      %v1200 = vmul.f32 %v1115, %v1035
      %v1201 = vmul.f32 %v1115, %v1036
      %v1202 = vmul.f32 %v1115, %v1037
      %v1203 = vmul.f32 %v1115, %v1038
      %v1204 = vmul.f32 %v1115, %v1039
      %v1205 = vmul.f32 %v1115, %v1040
      %v1206 = vmul.f32 %v1115, %v1041
      %v1207 = vmul.f32 %v1115, %v1042
      %v1208 = vmul.f32 %v1115, %v1043
      %v1209 = vmul.f32 %v1115, %v1044
      %v1210 = vmul.f32 %v1115, %v1045
      %v1211 = vmul.f32 %v1115, %v1046
      %v1212 = vmul.f32 %v1115, %v1047
      %v1213 = vmul.f32 %v1115, %v1048
      %v1214 = vadd.f32 %v1186, %v1200
      %v1215 = vadd.f32 %v1187, %v1201
      %v1216 = vadd.f32 %v1188, %v1202
      %v1217 = vadd.f32 %v1189, %v1203
      %v1218 = vadd.f32 %v1190, %v1204
      %v1219 = vadd.f32 %v1191, %v1205
      %v1220 = vadd.f32 %v1192, %v1206
      %v1221 = vadd.f32 %v1193, %v1207
      %v1222 = vadd.f32 %v1194, %v1208
      %v1223 = vadd.f32 %v1195, %v1209
      %v1224 = vadd.f32 %v1196, %v1210
      %v1225 = vadd.f32 %v1197, %v1211
      %v1226 = vadd.f32 %v1198, %v1212
      %v1227 = vadd.f32 %v1199, %v1213
      %s1228 = scalar_lea.vmem %s2, 144
      %v1229 = vld [vmem:[%s1228] sm:$0x7f]
      %v1230 = vld [vmem:[%s1228 + $0x8] sm:$0x7f]
      %v1231 = vld [vmem:[%s1228 + $0x10] sm:$0x7f]
      %v1232 = vld [vmem:[%s1228 + $0x18] sm:$0x7f]
      %v1233 = vld [vmem:[%s1228 + $0x20] sm:$0x7f]
      %v1234 = vld [vmem:[%s1228 + $0x28] sm:$0x7f]
      %v1235 = vld [vmem:[%s1228 + $0x30] sm:$0x7f]
      %v1236 = vld [vmem:[%s1228 + $0x38] sm:$0x7f]
      %v1237 = vld [vmem:[%s1228 + $0x40] sm:$0x7f]
      %v1238 = vld [vmem:[%s1228 + $0x48] sm:$0x7f]
      %v1239 = vld [vmem:[%s1228 + $0x50] sm:$0x7f]
      %v1240 = vld [vmem:[%s1228 + $0x58] sm:$0x7f]
      %v1241 = vld [vmem:[%s1228 + $0x60] sm:$0x7f]
      %v1242 = vld [vmem:[%s1228 + $0x68] sm:$0x7f]
      %s1243 = scalar_lea.vmem %s3, 144
      %v1244 = vld [vmem:[%s1243] sm:$0x7f]
      %v1245 = vld [vmem:[%s1243 + $0x8] sm:$0x7f]
      %v1246 = vld [vmem:[%s1243 + $0x10] sm:$0x7f]
      %v1247 = vld [vmem:[%s1243 + $0x18] sm:$0x7f]
      %v1248 = vld [vmem:[%s1243 + $0x20] sm:$0x7f]
      %v1249 = vld [vmem:[%s1243 + $0x28] sm:$0x7f]
      %v1250 = vld [vmem:[%s1243 + $0x30] sm:$0x7f]
      %v1251 = vld [vmem:[%s1243 + $0x38] sm:$0x7f]
      %v1252 = vld [vmem:[%s1243 + $0x40] sm:$0x7f]
      %v1253 = vld [vmem:[%s1243 + $0x48] sm:$0x7f]
      %v1254 = vld [vmem:[%s1243 + $0x50] sm:$0x7f]
      %v1255 = vld [vmem:[%s1243 + $0x58] sm:$0x7f]
      %v1256 = vld [vmem:[%s1243 + $0x60] sm:$0x7f]
      %v1257 = vld [vmem:[%s1243 + $0x68] sm:$0x7f]
      %v1258 = vld [vmem:[%s1228 + $0x1] sm:$0x7f]
      %v1259 = vld [vmem:[%s1228 + $0x9] sm:$0x7f]
      %v1260 = vld [vmem:[%s1228 + $0x11] sm:$0x7f]
      %v1261 = vld [vmem:[%s1228 + $0x19] sm:$0x7f]
      %v1262 = vld [vmem:[%s1228 + $0x21] sm:$0x7f]
      %v1263 = vld [vmem:[%s1228 + $0x29] sm:$0x7f]
      %v1264 = vld [vmem:[%s1228 + $0x31] sm:$0x7f]
      %v1265 = vld [vmem:[%s1228 + $0x39] sm:$0x7f]
      %v1266 = vld [vmem:[%s1228 + $0x41] sm:$0x7f]
      %v1267 = vld [vmem:[%s1228 + $0x49] sm:$0x7f]
      %v1268 = vld [vmem:[%s1228 + $0x51] sm:$0x7f]
      %v1269 = vld [vmem:[%s1228 + $0x59] sm:$0x7f]
      %v1270 = vld [vmem:[%s1228 + $0x61] sm:$0x7f]
      %v1271 = vld [vmem:[%s1228 + $0x69] sm:$0x7f]
      %v1272 = vld [vmem:[%s1243 + $0x1] sm:$0x7f]
      %v1273 = vld [vmem:[%s1243 + $0x9] sm:$0x7f]
      %v1274 = vld [vmem:[%s1243 + $0x11] sm:$0x7f]
      %v1275 = vld [vmem:[%s1243 + $0x19] sm:$0x7f]
      %v1276 = vld [vmem:[%s1243 + $0x21] sm:$0x7f]
      %v1277 = vld [vmem:[%s1243 + $0x29] sm:$0x7f]
      %v1278 = vld [vmem:[%s1243 + $0x31] sm:$0x7f]
      %v1279 = vld [vmem:[%s1243 + $0x39] sm:$0x7f]
      %v1280 = vld [vmem:[%s1243 + $0x41] sm:$0x7f]
      %v1281 = vld [vmem:[%s1243 + $0x49] sm:$0x7f]
      %v1282 = vld [vmem:[%s1243 + $0x51] sm:$0x7f]
      %v1283 = vld [vmem:[%s1243 + $0x59] sm:$0x7f]
      %v1284 = vld [vmem:[%s1243 + $0x61] sm:$0x7f]
      %v1285 = vld [vmem:[%s1243 + $0x69] sm:$0x7f]
      %s1286 = sadd.s32 %s1049, 2
      %s1287 = smul.u32 %s1286, 3
      %s1288 = sld [smem:[#allocation2 + %s1287]]
      %s1289 = sadd.s32 %s1287, 1
      %s1290 = sld [smem:[#allocation2 + %s1289]]
      %s1291 = sadd.s32 %s1287, 2
      %s1292 = sld [smem:[#allocation2 + %s1291]]
      %v1293 = vstv %s1288
      %v1294 = vmul.f32 %v1293, %v1229
      %v1295 = vmul.f32 %v1293, %v1230
      %v1296 = vmul.f32 %v1293, %v1231
      %v1297 = vmul.f32 %v1293, %v1232
      %v1298 = vmul.f32 %v1293, %v1233
      %v1299 = vmul.f32 %v1293, %v1234
      %v1300 = vmul.f32 %v1293, %v1235
      %v1301 = vmul.f32 %v1293, %v1236
      %v1302 = vmul.f32 %v1293, %v1237
      %v1303 = vmul.f32 %v1293, %v1238
      %v1304 = vmul.f32 %v1293, %v1239
      %v1305 = vmul.f32 %v1293, %v1240
      %v1306 = vmul.f32 %v1293, %v1241
      %v1307 = vmul.f32 %v1293, %v1242
      %v1308 = vadd.f32 %v1130, %v1294
      %v1309 = vadd.f32 %v1131, %v1295
      %v1310 = vadd.f32 %v1132, %v1296
      %v1311 = vadd.f32 %v1133, %v1297
      %v1312 = vadd.f32 %v1134, %v1298
      %v1313 = vadd.f32 %v1135, %v1299
      %v1314 = vadd.f32 %v1136, %v1300
      %v1315 = vadd.f32 %v1137, %v1301
      %v1316 = vadd.f32 %v1138, %v1302
      %v1317 = vadd.f32 %v1139, %v1303
      %v1318 = vadd.f32 %v1140, %v1304
      %v1319 = vadd.f32 %v1141, %v1305
      %v1320 = vadd.f32 %v1142, %v1306
      %v1321 = vadd.f32 %v1143, %v1307
      %v1322 = vstv %s1290
      %v1323 = vmul.f32 %v1322, %v1244
      %v1324 = vmul.f32 %v1322, %v1245
      %v1325 = vmul.f32 %v1322, %v1246
      %v1326 = vmul.f32 %v1322, %v1247
      %v1327 = vmul.f32 %v1322, %v1248
      %v1328 = vmul.f32 %v1322, %v1249
      %v1329 = vmul.f32 %v1322, %v1250
      %v1330 = vmul.f32 %v1322, %v1251
      %v1331 = vmul.f32 %v1322, %v1252
      %v1332 = vmul.f32 %v1322, %v1253
      %v1333 = vmul.f32 %v1322, %v1254
      %v1334 = vmul.f32 %v1322, %v1255
      %v1335 = vmul.f32 %v1322, %v1256
      %v1336 = vmul.f32 %v1322, %v1257
      %v1337 = vadd.f32 %v1308, %v1323
      %v1338 = vadd.f32 %v1309, %v1324
      %v1339 = vadd.f32 %v1310, %v1325
      %v1340 = vadd.f32 %v1311, %v1326
      %v1341 = vadd.f32 %v1312, %v1327
      %v1342 = vadd.f32 %v1313, %v1328
      %v1343 = vadd.f32 %v1314, %v1329
      %v1344 = vadd.f32 %v1315, %v1330
      %v1345 = vadd.f32 %v1316, %v1331
      %v1346 = vadd.f32 %v1317, %v1332
      %v1347 = vadd.f32 %v1318, %v1333
      %v1348 = vadd.f32 %v1319, %v1334
      %v1349 = vadd.f32 %v1320, %v1335
      %v1350 = vadd.f32 %v1321, %v1336
      %v1351 = vstv %s1292
      %v1352 = vmul.f32 %v1351, %v1258
      %v1353 = vmul.f32 %v1351, %v1259
      %v1354 = vmul.f32 %v1351, %v1260
      %v1355 = vmul.f32 %v1351, %v1261
      %v1356 = vmul.f32 %v1351, %v1262
      %v1357 = vmul.f32 %v1351, %v1263
      %v1358 = vmul.f32 %v1351, %v1264
      %v1359 = vmul.f32 %v1351, %v1265
      %v1360 = vmul.f32 %v1351, %v1266
      %v1361 = vmul.f32 %v1351, %v1267
      %v1362 = vmul.f32 %v1351, %v1268
      %v1363 = vmul.f32 %v1351, %v1269
      %v1364 = vmul.f32 %v1351, %v1270
      %v1365 = vmul.f32 %v1351, %v1271
      %v1366 = vadd.f32 %v1337, %v1352
      %v1367 = vadd.f32 %v1338, %v1353
      %v1368 = vadd.f32 %v1339, %v1354
      %v1369 = vadd.f32 %v1340, %v1355
      %v1370 = vadd.f32 %v1341, %v1356
      %v1371 = vadd.f32 %v1342, %v1357
      %v1372 = vadd.f32 %v1343, %v1358
      %v1373 = vadd.f32 %v1344, %v1359
      %v1374 = vadd.f32 %v1345, %v1360
      %v1375 = vadd.f32 %v1346, %v1361
      %v1376 = vadd.f32 %v1347, %v1362
      %v1377 = vadd.f32 %v1348, %v1363
      %v1378 = vadd.f32 %v1349, %v1364
      %v1379 = vadd.f32 %v1350, %v1365
      %v1380 = vmul.f32 %v1293, %v1244
      %v1381 = vmul.f32 %v1293, %v1245
      %v1382 = vmul.f32 %v1293, %v1246
      %v1383 = vmul.f32 %v1293, %v1247
      %v1384 = vmul.f32 %v1293, %v1248
      %v1385 = vmul.f32 %v1293, %v1249
      %v1386 = vmul.f32 %v1293, %v1250
      %v1387 = vmul.f32 %v1293, %v1251
      %v1388 = vmul.f32 %v1293, %v1252
      %v1389 = vmul.f32 %v1293, %v1253
      %v1390 = vmul.f32 %v1293, %v1254
      %v1391 = vmul.f32 %v1293, %v1255
      %v1392 = vmul.f32 %v1293, %v1256
      %v1393 = vmul.f32 %v1293, %v1257
      %v1394 = vadd.f32 %v1214, %v1380
      %v1395 = vadd.f32 %v1215, %v1381
      %v1396 = vadd.f32 %v1216, %v1382
      %v1397 = vadd.f32 %v1217, %v1383
      %v1398 = vadd.f32 %v1218, %v1384
      %v1399 = vadd.f32 %v1219, %v1385
      %v1400 = vadd.f32 %v1220, %v1386
      %v1401 = vadd.f32 %v1221, %v1387
      %v1402 = vadd.f32 %v1222, %v1388
      %v1403 = vadd.f32 %v1223, %v1389
      %v1404 = vadd.f32 %v1224, %v1390
      %v1405 = vadd.f32 %v1225, %v1391
      %v1406 = vadd.f32 %v1226, %v1392
      %v1407 = vadd.f32 %v1227, %v1393
      %v1408 = vmul.f32 %v1322, %v1258
      %v1409 = vmul.f32 %v1322, %v1259
      %v1410 = vmul.f32 %v1322, %v1260
      %v1411 = vmul.f32 %v1322, %v1261
      %v1412 = vmul.f32 %v1322, %v1262
      %v1413 = vmul.f32 %v1322, %v1263
      %v1414 = vmul.f32 %v1322, %v1264
      %v1415 = vmul.f32 %v1322, %v1265
      %v1416 = vmul.f32 %v1322, %v1266
      %v1417 = vmul.f32 %v1322, %v1267
      %v1418 = vmul.f32 %v1322, %v1268
      %v1419 = vmul.f32 %v1322, %v1269
      %v1420 = vmul.f32 %v1322, %v1270
      %v1421 = vmul.f32 %v1322, %v1271
      %v1422 = vadd.f32 %v1394, %v1408
      %v1423 = vadd.f32 %v1395, %v1409
      %v1424 = vadd.f32 %v1396, %v1410
      %v1425 = vadd.f32 %v1397, %v1411
      %v1426 = vadd.f32 %v1398, %v1412
      %v1427 = vadd.f32 %v1399, %v1413
      %v1428 = vadd.f32 %v1400, %v1414
      %v1429 = vadd.f32 %v1401, %v1415
      %v1430 = vadd.f32 %v1402, %v1416
      %v1431 = vadd.f32 %v1403, %v1417
      %v1432 = vadd.f32 %v1404, %v1418
      %v1433 = vadd.f32 %v1405, %v1419
      %v1434 = vadd.f32 %v1406, %v1420
      %v1435 = vadd.f32 %v1407, %v1421
      %v1436 = vmul.f32 %v1351, %v1272
      %v1437 = vmul.f32 %v1351, %v1273
      %v1438 = vmul.f32 %v1351, %v1274
      %v1439 = vmul.f32 %v1351, %v1275
      %v1440 = vmul.f32 %v1351, %v1276
      %v1441 = vmul.f32 %v1351, %v1277
      %v1442 = vmul.f32 %v1351, %v1278
      %v1443 = vmul.f32 %v1351, %v1279
      %v1444 = vmul.f32 %v1351, %v1280
      %v1445 = vmul.f32 %v1351, %v1281
      %v1446 = vmul.f32 %v1351, %v1282
      %v1447 = vmul.f32 %v1351, %v1283
      %v1448 = vmul.f32 %v1351, %v1284
      %v1449 = vmul.f32 %v1351, %v1285
      %v1450 = vadd.f32 %v1422, %v1436
      %v1451 = vadd.f32 %v1423, %v1437
      %v1452 = vadd.f32 %v1424, %v1438
      %v1453 = vadd.f32 %v1425, %v1439
      %v1454 = vadd.f32 %v1426, %v1440
      %v1455 = vadd.f32 %v1427, %v1441
      %v1456 = vadd.f32 %v1428, %v1442
      %v1457 = vadd.f32 %v1429, %v1443
      %v1458 = vadd.f32 %v1430, %v1444
      %v1459 = vadd.f32 %v1431, %v1445
      %v1460 = vadd.f32 %v1432, %v1446
      %v1461 = vadd.f32 %v1433, %v1447
      %v1462 = vadd.f32 %v1434, %v1448
      %v1463 = vadd.f32 %v1435, %v1449
      %s1464 = scalar_lea.vmem %s2, 256
      %v1465 = vld [vmem:[%s1464] sm:$0x7f]
      %v1466 = vld [vmem:[%s1464 + $0x8] sm:$0x7f]
      %v1467 = vld [vmem:[%s1464 + $0x10] sm:$0x7f]
      %v1468 = vld [vmem:[%s1464 + $0x18] sm:$0x7f]
      %v1469 = vld [vmem:[%s1464 + $0x20] sm:$0x7f]
      %v1470 = vld [vmem:[%s1464 + $0x28] sm:$0x7f]
      %v1471 = vld [vmem:[%s1464 + $0x30] sm:$0x7f]
      %v1472 = vld [vmem:[%s1464 + $0x38] sm:$0x7f]
      %v1473 = vld [vmem:[%s1464 + $0x40] sm:$0x7f]
      %v1474 = vld [vmem:[%s1464 + $0x48] sm:$0x7f]
      %v1475 = vld [vmem:[%s1464 + $0x50] sm:$0x7f]
      %v1476 = vld [vmem:[%s1464 + $0x58] sm:$0x7f]
      %v1477 = vld [vmem:[%s1464 + $0x60] sm:$0x7f]
      %v1478 = vld [vmem:[%s1464 + $0x68] sm:$0x7f]
      %s1479 = scalar_lea.vmem %s3, 256
      %v1480 = vld [vmem:[%s1479] sm:$0x7f]
      %v1481 = vld [vmem:[%s1479 + $0x8] sm:$0x7f]
      %v1482 = vld [vmem:[%s1479 + $0x10] sm:$0x7f]
      %v1483 = vld [vmem:[%s1479 + $0x18] sm:$0x7f]
      %v1484 = vld [vmem:[%s1479 + $0x20] sm:$0x7f]
      %v1485 = vld [vmem:[%s1479 + $0x28] sm:$0x7f]
      %v1486 = vld [vmem:[%s1479 + $0x30] sm:$0x7f]
      %v1487 = vld [vmem:[%s1479 + $0x38] sm:$0x7f]
      %v1488 = vld [vmem:[%s1479 + $0x40] sm:$0x7f]
      %v1489 = vld [vmem:[%s1479 + $0x48] sm:$0x7f]
      %v1490 = vld [vmem:[%s1479 + $0x50] sm:$0x7f]
      %v1491 = vld [vmem:[%s1479 + $0x58] sm:$0x7f]
      %v1492 = vld [vmem:[%s1479 + $0x60] sm:$0x7f]
      %v1493 = vld [vmem:[%s1479 + $0x68] sm:$0x7f]
      %v1494 = vld [vmem:[%s1464 + $0x1] sm:$0x7f]
      %v1495 = vld [vmem:[%s1464 + $0x9] sm:$0x7f]
      %v1496 = vld [vmem:[%s1464 + $0x11] sm:$0x7f]
      %v1497 = vld [vmem:[%s1464 + $0x19] sm:$0x7f]
      %v1498 = vld [vmem:[%s1464 + $0x21] sm:$0x7f]
      %v1499 = vld [vmem:[%s1464 + $0x29] sm:$0x7f]
      %v1500 = vld [vmem:[%s1464 + $0x31] sm:$0x7f]
      %v1501 = vld [vmem:[%s1464 + $0x39] sm:$0x7f]
      %v1502 = vld [vmem:[%s1464 + $0x41] sm:$0x7f]
      %v1503 = vld [vmem:[%s1464 + $0x49] sm:$0x7f]
      %v1504 = vld [vmem:[%s1464 + $0x51] sm:$0x7f]
      %v1505 = vld [vmem:[%s1464 + $0x59] sm:$0x7f]
      %v1506 = vld [vmem:[%s1464 + $0x61] sm:$0x7f]
      %v1507 = vld [vmem:[%s1464 + $0x69] sm:$0x7f]
      %v1508 = vld [vmem:[%s1479 + $0x1] sm:$0x7f]
      %v1509 = vld [vmem:[%s1479 + $0x9] sm:$0x7f]
      %v1510 = vld [vmem:[%s1479 + $0x11] sm:$0x7f]
      %v1511 = vld [vmem:[%s1479 + $0x19] sm:$0x7f]
      %v1512 = vld [vmem:[%s1479 + $0x21] sm:$0x7f]
      %v1513 = vld [vmem:[%s1479 + $0x29] sm:$0x7f]
      %v1514 = vld [vmem:[%s1479 + $0x31] sm:$0x7f]
      %v1515 = vld [vmem:[%s1479 + $0x39] sm:$0x7f]
      %v1516 = vld [vmem:[%s1479 + $0x41] sm:$0x7f]
      %v1517 = vld [vmem:[%s1479 + $0x49] sm:$0x7f]
      %v1518 = vld [vmem:[%s1479 + $0x51] sm:$0x7f]
      %v1519 = vld [vmem:[%s1479 + $0x59] sm:$0x7f]
      %v1520 = vld [vmem:[%s1479 + $0x61] sm:$0x7f]
      %v1521 = vld [vmem:[%s1479 + $0x69] sm:$0x7f]
      %s1522 = sadd.s32 %s812, 2
      %s1523 = smul.u32 %s1522, 9
      %s1524 = sld [smem:[#allocation2 + %s1523]]
      %s1525 = sadd.s32 %s1523, 1
      %s1526 = sld [smem:[#allocation2 + %s1525]]
      %s1527 = sadd.s32 %s1523, 2
      %s1528 = sld [smem:[#allocation2 + %s1527]]
      %v1529 = vstv %s1524
      %v1530 = vmul.f32 %v1529, %v1465
      %v1531 = vmul.f32 %v1529, %v1466
      %v1532 = vmul.f32 %v1529, %v1467
      %v1533 = vmul.f32 %v1529, %v1468
      %v1534 = vmul.f32 %v1529, %v1469
      %v1535 = vmul.f32 %v1529, %v1470
      %v1536 = vmul.f32 %v1529, %v1471
      %v1537 = vmul.f32 %v1529, %v1472
      %v1538 = vmul.f32 %v1529, %v1473
      %v1539 = vmul.f32 %v1529, %v1474
      %v1540 = vmul.f32 %v1529, %v1475
      %v1541 = vmul.f32 %v1529, %v1476
      %v1542 = vmul.f32 %v1529, %v1477
      %v1543 = vmul.f32 %v1529, %v1478
      %v1544 = vadd.f32 %v1366, %v1530
      %v1545 = vadd.f32 %v1367, %v1531
      %v1546 = vadd.f32 %v1368, %v1532
      %v1547 = vadd.f32 %v1369, %v1533
      %v1548 = vadd.f32 %v1370, %v1534
      %v1549 = vadd.f32 %v1371, %v1535
      %v1550 = vadd.f32 %v1372, %v1536
      %v1551 = vadd.f32 %v1373, %v1537
      %v1552 = vadd.f32 %v1374, %v1538
      %v1553 = vadd.f32 %v1375, %v1539
      %v1554 = vadd.f32 %v1376, %v1540
      %v1555 = vadd.f32 %v1377, %v1541
      %v1556 = vadd.f32 %v1378, %v1542
      %v1557 = vadd.f32 %v1379, %v1543
      %v1558 = vstv %s1526
      %v1559 = vmul.f32 %v1558, %v1480
      %v1560 = vmul.f32 %v1558, %v1481
      %v1561 = vmul.f32 %v1558, %v1482
      %v1562 = vmul.f32 %v1558, %v1483
      %v1563 = vmul.f32 %v1558, %v1484
      %v1564 = vmul.f32 %v1558, %v1485
      %v1565 = vmul.f32 %v1558, %v1486
      %v1566 = vmul.f32 %v1558, %v1487
      %v1567 = vmul.f32 %v1558, %v1488
      %v1568 = vmul.f32 %v1558, %v1489
      %v1569 = vmul.f32 %v1558, %v1490
      %v1570 = vmul.f32 %v1558, %v1491
      %v1571 = vmul.f32 %v1558, %v1492
      %v1572 = vmul.f32 %v1558, %v1493
      %v1573 = vadd.f32 %v1544, %v1559
      %v1574 = vadd.f32 %v1545, %v1560
      %v1575 = vadd.f32 %v1546, %v1561
      %v1576 = vadd.f32 %v1547, %v1562
      %v1577 = vadd.f32 %v1548, %v1563
      %v1578 = vadd.f32 %v1549, %v1564
      %v1579 = vadd.f32 %v1550, %v1565
      %v1580 = vadd.f32 %v1551, %v1566
      %v1581 = vadd.f32 %v1552, %v1567
      %v1582 = vadd.f32 %v1553, %v1568
      %v1583 = vadd.f32 %v1554, %v1569
      %v1584 = vadd.f32 %v1555, %v1570
      %v1585 = vadd.f32 %v1556, %v1571
      %v1586 = vadd.f32 %v1557, %v1572
      %v1587 = vstv %s1528
      %v1588 = vmul.f32 %v1587, %v1494
      %v1589 = vmul.f32 %v1587, %v1495
      %v1590 = vmul.f32 %v1587, %v1496
      %v1591 = vmul.f32 %v1587, %v1497
      %v1592 = vmul.f32 %v1587, %v1498
      %v1593 = vmul.f32 %v1587, %v1499
      %v1594 = vmul.f32 %v1587, %v1500
      %v1595 = vmul.f32 %v1587, %v1501
      %v1596 = vmul.f32 %v1587, %v1502
      %v1597 = vmul.f32 %v1587, %v1503
      %v1598 = vmul.f32 %v1587, %v1504
      %v1599 = vmul.f32 %v1587, %v1505
      %v1600 = vmul.f32 %v1587, %v1506
      %v1601 = vmul.f32 %v1587, %v1507
      %v1602 = vadd.f32 %v1573, %v1588
      %v1603 = vadd.f32 %v1574, %v1589
      %v1604 = vadd.f32 %v1575, %v1590
      %v1605 = vadd.f32 %v1576, %v1591
      %v1606 = vadd.f32 %v1577, %v1592
      %v1607 = vadd.f32 %v1578, %v1593
      %v1608 = vadd.f32 %v1579, %v1594
      %v1609 = vadd.f32 %v1580, %v1595
      %v1610 = vadd.f32 %v1581, %v1596
      %v1611 = vadd.f32 %v1582, %v1597
      %v1612 = vadd.f32 %v1583, %v1598
      %v1613 = vadd.f32 %v1584, %v1599
      %v1614 = vadd.f32 %v1585, %v1600
      %v1615 = vadd.f32 %v1586, %v1601
      %v1616 = vmul.f32 %v1529, %v1480
      %v1617 = vmul.f32 %v1529, %v1481
      %v1618 = vmul.f32 %v1529, %v1482
      %v1619 = vmul.f32 %v1529, %v1483
      %v1620 = vmul.f32 %v1529, %v1484
      %v1621 = vmul.f32 %v1529, %v1485
      %v1622 = vmul.f32 %v1529, %v1486
      %v1623 = vmul.f32 %v1529, %v1487
      %v1624 = vmul.f32 %v1529, %v1488
      %v1625 = vmul.f32 %v1529, %v1489
      %v1626 = vmul.f32 %v1529, %v1490
      %v1627 = vmul.f32 %v1529, %v1491
      %v1628 = vmul.f32 %v1529, %v1492
      %v1629 = vmul.f32 %v1529, %v1493
      %v1630 = vadd.f32 %v1450, %v1616
      %v1631 = vadd.f32 %v1451, %v1617
      %v1632 = vadd.f32 %v1452, %v1618
      %v1633 = vadd.f32 %v1453, %v1619
      %v1634 = vadd.f32 %v1454, %v1620
      %v1635 = vadd.f32 %v1455, %v1621
      %v1636 = vadd.f32 %v1456, %v1622
      %v1637 = vadd.f32 %v1457, %v1623
      %v1638 = vadd.f32 %v1458, %v1624
      %v1639 = vadd.f32 %v1459, %v1625
      %v1640 = vadd.f32 %v1460, %v1626
      %v1641 = vadd.f32 %v1461, %v1627
      %v1642 = vadd.f32 %v1462, %v1628
      %v1643 = vadd.f32 %v1463, %v1629
      %v1644 = vmul.f32 %v1558, %v1494
      %v1645 = vmul.f32 %v1558, %v1495
      %v1646 = vmul.f32 %v1558, %v1496
      %v1647 = vmul.f32 %v1558, %v1497
      %v1648 = vmul.f32 %v1558, %v1498
      %v1649 = vmul.f32 %v1558, %v1499
      %v1650 = vmul.f32 %v1558, %v1500
      %v1651 = vmul.f32 %v1558, %v1501
      %v1652 = vmul.f32 %v1558, %v1502
      %v1653 = vmul.f32 %v1558, %v1503
      %v1654 = vmul.f32 %v1558, %v1504
      %v1655 = vmul.f32 %v1558, %v1505
      %v1656 = vmul.f32 %v1558, %v1506
      %v1657 = vmul.f32 %v1558, %v1507
      %v1658 = vadd.f32 %v1630, %v1644
      %v1659 = vadd.f32 %v1631, %v1645
      %v1660 = vadd.f32 %v1632, %v1646
      %v1661 = vadd.f32 %v1633, %v1647
      %v1662 = vadd.f32 %v1634, %v1648
      %v1663 = vadd.f32 %v1635, %v1649
      %v1664 = vadd.f32 %v1636, %v1650
      %v1665 = vadd.f32 %v1637, %v1651
      %v1666 = vadd.f32 %v1638, %v1652
      %v1667 = vadd.f32 %v1639, %v1653
      %v1668 = vadd.f32 %v1640, %v1654
      %v1669 = vadd.f32 %v1641, %v1655
      %v1670 = vadd.f32 %v1642, %v1656
      %v1671 = vadd.f32 %v1643, %v1657
      %v1672 = vmul.f32 %v1587, %v1508
      %v1673 = vmul.f32 %v1587, %v1509
      %v1674 = vmul.f32 %v1587, %v1510
      %v1675 = vmul.f32 %v1587, %v1511
      %v1676 = vmul.f32 %v1587, %v1512
      %v1677 = vmul.f32 %v1587, %v1513
      %v1678 = vmul.f32 %v1587, %v1514
      %v1679 = vmul.f32 %v1587, %v1515
      %v1680 = vmul.f32 %v1587, %v1516
      %v1681 = vmul.f32 %v1587, %v1517
      %v1682 = vmul.f32 %v1587, %v1518
      %v1683 = vmul.f32 %v1587, %v1519
      %v1684 = vmul.f32 %v1587, %v1520
      %v1685 = vmul.f32 %v1587, %v1521
      %v1686 = vadd.f32 %v1658, %v1672
      %v1687 = vadd.f32 %v1659, %v1673
      %v1688 = vadd.f32 %v1660, %v1674
      %v1689 = vadd.f32 %v1661, %v1675
      %v1690 = vadd.f32 %v1662, %v1676
      %v1691 = vadd.f32 %v1663, %v1677
      %v1692 = vadd.f32 %v1664, %v1678
      %v1693 = vadd.f32 %v1665, %v1679
      %v1694 = vadd.f32 %v1666, %v1680
      %v1695 = vadd.f32 %v1667, %v1681
      %v1696 = vadd.f32 %v1668, %v1682
      %v1697 = vadd.f32 %v1669, %v1683
      %v1698 = vadd.f32 %v1670, %v1684
      %v1699 = vadd.f32 %v1671, %v1685
      %s1700 = scalar_lea.vmem %s2, 264
      %v1701 = vld [vmem:[%s1700] sm:$0x7f]
      %v1702 = vld [vmem:[%s1700 + $0x8] sm:$0x7f]
      %v1703 = vld [vmem:[%s1700 + $0x10] sm:$0x7f]
      %v1704 = vld [vmem:[%s1700 + $0x18] sm:$0x7f]
      %v1705 = vld [vmem:[%s1700 + $0x20] sm:$0x7f]
      %v1706 = vld [vmem:[%s1700 + $0x28] sm:$0x7f]
      %v1707 = vld [vmem:[%s1700 + $0x30] sm:$0x7f]
      %v1708 = vld [vmem:[%s1700 + $0x38] sm:$0x7f]
      %v1709 = vld [vmem:[%s1700 + $0x40] sm:$0x7f]
      %v1710 = vld [vmem:[%s1700 + $0x48] sm:$0x7f]
      %v1711 = vld [vmem:[%s1700 + $0x50] sm:$0x7f]
      %v1712 = vld [vmem:[%s1700 + $0x58] sm:$0x7f]
      %v1713 = vld [vmem:[%s1700 + $0x60] sm:$0x7f]
      %v1714 = vld [vmem:[%s1700 + $0x68] sm:$0x7f]
      %s1715 = scalar_lea.vmem %s3, 264
      %v1716 = vld [vmem:[%s1715] sm:$0x7f]
      %v1717 = vld [vmem:[%s1715 + $0x8] sm:$0x7f]
      %v1718 = vld [vmem:[%s1715 + $0x10] sm:$0x7f]
      %v1719 = vld [vmem:[%s1715 + $0x18] sm:$0x7f]
      %v1720 = vld [vmem:[%s1715 + $0x20] sm:$0x7f]
      %v1721 = vld [vmem:[%s1715 + $0x28] sm:$0x7f]
      %v1722 = vld [vmem:[%s1715 + $0x30] sm:$0x7f]
      %v1723 = vld [vmem:[%s1715 + $0x38] sm:$0x7f]
      %v1724 = vld [vmem:[%s1715 + $0x40] sm:$0x7f]
      %v1725 = vld [vmem:[%s1715 + $0x48] sm:$0x7f]
      %v1726 = vld [vmem:[%s1715 + $0x50] sm:$0x7f]
      %v1727 = vld [vmem:[%s1715 + $0x58] sm:$0x7f]
      %v1728 = vld [vmem:[%s1715 + $0x60] sm:$0x7f]
      %v1729 = vld [vmem:[%s1715 + $0x68] sm:$0x7f]
      %v1730 = vld [vmem:[%s1700 + $0x1] sm:$0x7f]
      %v1731 = vld [vmem:[%s1700 + $0x9] sm:$0x7f]
      %v1732 = vld [vmem:[%s1700 + $0x11] sm:$0x7f]
      %v1733 = vld [vmem:[%s1700 + $0x19] sm:$0x7f]
      %v1734 = vld [vmem:[%s1700 + $0x21] sm:$0x7f]
      %v1735 = vld [vmem:[%s1700 + $0x29] sm:$0x7f]
      %v1736 = vld [vmem:[%s1700 + $0x31] sm:$0x7f]
      %v1737 = vld [vmem:[%s1700 + $0x39] sm:$0x7f]
      %v1738 = vld [vmem:[%s1700 + $0x41] sm:$0x7f]
      %v1739 = vld [vmem:[%s1700 + $0x49] sm:$0x7f]
      %v1740 = vld [vmem:[%s1700 + $0x51] sm:$0x7f]
      %v1741 = vld [vmem:[%s1700 + $0x59] sm:$0x7f]
      %v1742 = vld [vmem:[%s1700 + $0x61] sm:$0x7f]
      %v1743 = vld [vmem:[%s1700 + $0x69] sm:$0x7f]
      %v1744 = vld [vmem:[%s1715 + $0x1] sm:$0x7f]
      %v1745 = vld [vmem:[%s1715 + $0x9] sm:$0x7f]
      %v1746 = vld [vmem:[%s1715 + $0x11] sm:$0x7f]
      %v1747 = vld [vmem:[%s1715 + $0x19] sm:$0x7f]
      %v1748 = vld [vmem:[%s1715 + $0x21] sm:$0x7f]
      %v1749 = vld [vmem:[%s1715 + $0x29] sm:$0x7f]
      %v1750 = vld [vmem:[%s1715 + $0x31] sm:$0x7f]
      %v1751 = vld [vmem:[%s1715 + $0x39] sm:$0x7f]
      %v1752 = vld [vmem:[%s1715 + $0x41] sm:$0x7f]
      %v1753 = vld [vmem:[%s1715 + $0x49] sm:$0x7f]
      %v1754 = vld [vmem:[%s1715 + $0x51] sm:$0x7f]
      %v1755 = vld [vmem:[%s1715 + $0x59] sm:$0x7f]
      %v1756 = vld [vmem:[%s1715 + $0x61] sm:$0x7f]
      %v1757 = vld [vmem:[%s1715 + $0x69] sm:$0x7f]
      %s1758 = smul.u32 %s1522, 3
      %s1759 = sadd.s32 %s1758, 1
      %s1760 = smul.u32 %s1759, 3
      %s1761 = sld [smem:[#allocation2 + %s1760]]
      %s1762 = sadd.s32 %s1760, 1
      %s1763 = sld [smem:[#allocation2 + %s1762]]
      %s1764 = sadd.s32 %s1760, 2
      %s1765 = sld [smem:[#allocation2 + %s1764]]
      %v1766 = vstv %s1761
      %v1767 = vmul.f32 %v1766, %v1701
      %v1768 = vmul.f32 %v1766, %v1702
      %v1769 = vmul.f32 %v1766, %v1703
      %v1770 = vmul.f32 %v1766, %v1704
      %v1771 = vmul.f32 %v1766, %v1705
      %v1772 = vmul.f32 %v1766, %v1706
      %v1773 = vmul.f32 %v1766, %v1707
      %v1774 = vmul.f32 %v1766, %v1708
      %v1775 = vmul.f32 %v1766, %v1709
      %v1776 = vmul.f32 %v1766, %v1710
      %v1777 = vmul.f32 %v1766, %v1711
      %v1778 = vmul.f32 %v1766, %v1712
      %v1779 = vmul.f32 %v1766, %v1713
      %v1780 = vmul.f32 %v1766, %v1714
      %v1781 = vadd.f32 %v1602, %v1767
      %v1782 = vadd.f32 %v1603, %v1768
      %v1783 = vadd.f32 %v1604, %v1769
      %v1784 = vadd.f32 %v1605, %v1770
      %v1785 = vadd.f32 %v1606, %v1771
      %v1786 = vadd.f32 %v1607, %v1772
      %v1787 = vadd.f32 %v1608, %v1773
      %v1788 = vadd.f32 %v1609, %v1774
      %v1789 = vadd.f32 %v1610, %v1775
      %v1790 = vadd.f32 %v1611, %v1776
      %v1791 = vadd.f32 %v1612, %v1777
      %v1792 = vadd.f32 %v1613, %v1778
      %v1793 = vadd.f32 %v1614, %v1779
      %v1794 = vadd.f32 %v1615, %v1780
      %v1795 = vstv %s1763
      %v1796 = vmul.f32 %v1795, %v1716
      %v1797 = vmul.f32 %v1795, %v1717
      %v1798 = vmul.f32 %v1795, %v1718
      %v1799 = vmul.f32 %v1795, %v1719
      %v1800 = vmul.f32 %v1795, %v1720
      %v1801 = vmul.f32 %v1795, %v1721
      %v1802 = vmul.f32 %v1795, %v1722
      %v1803 = vmul.f32 %v1795, %v1723
      %v1804 = vmul.f32 %v1795, %v1724
      %v1805 = vmul.f32 %v1795, %v1725
      %v1806 = vmul.f32 %v1795, %v1726
      %v1807 = vmul.f32 %v1795, %v1727
      %v1808 = vmul.f32 %v1795, %v1728
      %v1809 = vmul.f32 %v1795, %v1729
      %v1810 = vadd.f32 %v1781, %v1796
      %v1811 = vadd.f32 %v1782, %v1797
      %v1812 = vadd.f32 %v1783, %v1798
      %v1813 = vadd.f32 %v1784, %v1799
      %v1814 = vadd.f32 %v1785, %v1800
      %v1815 = vadd.f32 %v1786, %v1801
      %v1816 = vadd.f32 %v1787, %v1802
      %v1817 = vadd.f32 %v1788, %v1803
      %v1818 = vadd.f32 %v1789, %v1804
      %v1819 = vadd.f32 %v1790, %v1805
      %v1820 = vadd.f32 %v1791, %v1806
      %v1821 = vadd.f32 %v1792, %v1807
      %v1822 = vadd.f32 %v1793, %v1808
      %v1823 = vadd.f32 %v1794, %v1809
      %v1824 = vstv %s1765
      %v1825 = vmul.f32 %v1824, %v1730
      %v1826 = vmul.f32 %v1824, %v1731
      %v1827 = vmul.f32 %v1824, %v1732
      %v1828 = vmul.f32 %v1824, %v1733
      %v1829 = vmul.f32 %v1824, %v1734
      %v1830 = vmul.f32 %v1824, %v1735
      %v1831 = vmul.f32 %v1824, %v1736
      %v1832 = vmul.f32 %v1824, %v1737
      %v1833 = vmul.f32 %v1824, %v1738
      %v1834 = vmul.f32 %v1824, %v1739
      %v1835 = vmul.f32 %v1824, %v1740
      %v1836 = vmul.f32 %v1824, %v1741
      %v1837 = vmul.f32 %v1824, %v1742
      %v1838 = vmul.f32 %v1824, %v1743
      %v1839 = vadd.f32 %v1810, %v1825
      %v1840 = vadd.f32 %v1811, %v1826
      %v1841 = vadd.f32 %v1812, %v1827
      %v1842 = vadd.f32 %v1813, %v1828
      %v1843 = vadd.f32 %v1814, %v1829
      %v1844 = vadd.f32 %v1815, %v1830
      %v1845 = vadd.f32 %v1816, %v1831
      %v1846 = vadd.f32 %v1817, %v1832
      %v1847 = vadd.f32 %v1818, %v1833
      %v1848 = vadd.f32 %v1819, %v1834
      %v1849 = vadd.f32 %v1820, %v1835
      %v1850 = vadd.f32 %v1821, %v1836
      %v1851 = vadd.f32 %v1822, %v1837
      %v1852 = vadd.f32 %v1823, %v1838
      %v1853 = vmul.f32 %v1766, %v1716
      %v1854 = vmul.f32 %v1766, %v1717
      %v1855 = vmul.f32 %v1766, %v1718
      %v1856 = vmul.f32 %v1766, %v1719
      %v1857 = vmul.f32 %v1766, %v1720
      %v1858 = vmul.f32 %v1766, %v1721
      %v1859 = vmul.f32 %v1766, %v1722
      %v1860 = vmul.f32 %v1766, %v1723
      %v1861 = vmul.f32 %v1766, %v1724
      %v1862 = vmul.f32 %v1766, %v1725
      %v1863 = vmul.f32 %v1766, %v1726
      %v1864 = vmul.f32 %v1766, %v1727
      %v1865 = vmul.f32 %v1766, %v1728
      %v1866 = vmul.f32 %v1766, %v1729
      %v1867 = vadd.f32 %v1686, %v1853
      %v1868 = vadd.f32 %v1687, %v1854
      %v1869 = vadd.f32 %v1688, %v1855
      %v1870 = vadd.f32 %v1689, %v1856
      %v1871 = vadd.f32 %v1690, %v1857
      %v1872 = vadd.f32 %v1691, %v1858
      %v1873 = vadd.f32 %v1692, %v1859
      %v1874 = vadd.f32 %v1693, %v1860
      %v1875 = vadd.f32 %v1694, %v1861
      %v1876 = vadd.f32 %v1695, %v1862
      %v1877 = vadd.f32 %v1696, %v1863
      %v1878 = vadd.f32 %v1697, %v1864
      %v1879 = vadd.f32 %v1698, %v1865
      %v1880 = vadd.f32 %v1699, %v1866
      %v1881 = vmul.f32 %v1795, %v1730
      %v1882 = vmul.f32 %v1795, %v1731
      %v1883 = vmul.f32 %v1795, %v1732
      %v1884 = vmul.f32 %v1795, %v1733
      %v1885 = vmul.f32 %v1795, %v1734
      %v1886 = vmul.f32 %v1795, %v1735
      %v1887 = vmul.f32 %v1795, %v1736
      %v1888 = vmul.f32 %v1795, %v1737
      %v1889 = vmul.f32 %v1795, %v1738
      %v1890 = vmul.f32 %v1795, %v1739
      %v1891 = vmul.f32 %v1795, %v1740
      %v1892 = vmul.f32 %v1795, %v1741
      %v1893 = vmul.f32 %v1795, %v1742
      %v1894 = vmul.f32 %v1795, %v1743
      %v1895 = vadd.f32 %v1867, %v1881
      %v1896 = vadd.f32 %v1868, %v1882
      %v1897 = vadd.f32 %v1869, %v1883
      %v1898 = vadd.f32 %v1870, %v1884
      %v1899 = vadd.f32 %v1871, %v1885
      %v1900 = vadd.f32 %v1872, %v1886
      %v1901 = vadd.f32 %v1873, %v1887
      %v1902 = vadd.f32 %v1874, %v1888
      %v1903 = vadd.f32 %v1875, %v1889
      %v1904 = vadd.f32 %v1876, %v1890
      %v1905 = vadd.f32 %v1877, %v1891
      %v1906 = vadd.f32 %v1878, %v1892
      %v1907 = vadd.f32 %v1879, %v1893
      %v1908 = vadd.f32 %v1880, %v1894
      %v1909 = vmul.f32 %v1824, %v1744
      %v1910 = vmul.f32 %v1824, %v1745
      %v1911 = vmul.f32 %v1824, %v1746
      %v1912 = vmul.f32 %v1824, %v1747
      %v1913 = vmul.f32 %v1824, %v1748
      %v1914 = vmul.f32 %v1824, %v1749
      %v1915 = vmul.f32 %v1824, %v1750
      %v1916 = vmul.f32 %v1824, %v1751
      %v1917 = vmul.f32 %v1824, %v1752
      %v1918 = vmul.f32 %v1824, %v1753
      %v1919 = vmul.f32 %v1824, %v1754
      %v1920 = vmul.f32 %v1824, %v1755
      %v1921 = vmul.f32 %v1824, %v1756
      %v1922 = vmul.f32 %v1824, %v1757
      %v1923 = vadd.f32 %v1895, %v1909
      %v1924 = vadd.f32 %v1896, %v1910
      %v1925 = vadd.f32 %v1897, %v1911
      %v1926 = vadd.f32 %v1898, %v1912
      %v1927 = vadd.f32 %v1899, %v1913
      %v1928 = vadd.f32 %v1900, %v1914
      %v1929 = vadd.f32 %v1901, %v1915
      %v1930 = vadd.f32 %v1902, %v1916
      %v1931 = vadd.f32 %v1903, %v1917
      %v1932 = vadd.f32 %v1904, %v1918
      %v1933 = vadd.f32 %v1905, %v1919
      %v1934 = vadd.f32 %v1906, %v1920
      %v1935 = vadd.f32 %v1907, %v1921
      %v1936 = vadd.f32 %v1908, %v1922
      %s1937 = scalar_lea.vmem %s2, 272
      %v1938 = vld [vmem:[%s1937] sm:$0x7f]
      %v1939 = vld [vmem:[%s1937 + $0x8] sm:$0x7f]
      %v1940 = vld [vmem:[%s1937 + $0x10] sm:$0x7f]
      %v1941 = vld [vmem:[%s1937 + $0x18] sm:$0x7f]
      %v1942 = vld [vmem:[%s1937 + $0x20] sm:$0x7f]
      %v1943 = vld [vmem:[%s1937 + $0x28] sm:$0x7f]
      %v1944 = vld [vmem:[%s1937 + $0x30] sm:$0x7f]
      %v1945 = vld [vmem:[%s1937 + $0x38] sm:$0x7f]
      %v1946 = vld [vmem:[%s1937 + $0x40] sm:$0x7f]
      %v1947 = vld [vmem:[%s1937 + $0x48] sm:$0x7f]
      %v1948 = vld [vmem:[%s1937 + $0x50] sm:$0x7f]
      %v1949 = vld [vmem:[%s1937 + $0x58] sm:$0x7f]
      %v1950 = vld [vmem:[%s1937 + $0x60] sm:$0x7f]
      %v1951 = vld [vmem:[%s1937 + $0x68] sm:$0x7f]
      %s1952 = scalar_lea.vmem %s3, 272
      %v1953 = vld [vmem:[%s1952] sm:$0x7f]
      %v1954 = vld [vmem:[%s1952 + $0x8] sm:$0x7f]
      %v1955 = vld [vmem:[%s1952 + $0x10] sm:$0x7f]
      %v1956 = vld [vmem:[%s1952 + $0x18] sm:$0x7f]
      %v1957 = vld [vmem:[%s1952 + $0x20] sm:$0x7f]
      %v1958 = vld [vmem:[%s1952 + $0x28] sm:$0x7f]
      %v1959 = vld [vmem:[%s1952 + $0x30] sm:$0x7f]
      %v1960 = vld [vmem:[%s1952 + $0x38] sm:$0x7f]
      %v1961 = vld [vmem:[%s1952 + $0x40] sm:$0x7f]
      %v1962 = vld [vmem:[%s1952 + $0x48] sm:$0x7f]
      %v1963 = vld [vmem:[%s1952 + $0x50] sm:$0x7f]
      %v1964 = vld [vmem:[%s1952 + $0x58] sm:$0x7f]
      %v1965 = vld [vmem:[%s1952 + $0x60] sm:$0x7f]
      %v1966 = vld [vmem:[%s1952 + $0x68] sm:$0x7f]
      %v1967 = vld [vmem:[%s1937 + $0x1] sm:$0x7f]
      %v1968 = vld [vmem:[%s1937 + $0x9] sm:$0x7f]
      %v1969 = vld [vmem:[%s1937 + $0x11] sm:$0x7f]
      %v1970 = vld [vmem:[%s1937 + $0x19] sm:$0x7f]
      %v1971 = vld [vmem:[%s1937 + $0x21] sm:$0x7f]
      %v1972 = vld [vmem:[%s1937 + $0x29] sm:$0x7f]
      %v1973 = vld [vmem:[%s1937 + $0x31] sm:$0x7f]
      %v1974 = vld [vmem:[%s1937 + $0x39] sm:$0x7f]
      %v1975 = vld [vmem:[%s1937 + $0x41] sm:$0x7f]
      %v1976 = vld [vmem:[%s1937 + $0x49] sm:$0x7f]
      %v1977 = vld [vmem:[%s1937 + $0x51] sm:$0x7f]
      %v1978 = vld [vmem:[%s1937 + $0x59] sm:$0x7f]
      %v1979 = vld [vmem:[%s1937 + $0x61] sm:$0x7f]
      %v1980 = vld [vmem:[%s1937 + $0x69] sm:$0x7f]
      %v1981 = vld [vmem:[%s1952 + $0x1] sm:$0x7f]
      %v1982 = vld [vmem:[%s1952 + $0x9] sm:$0x7f]
      %v1983 = vld [vmem:[%s1952 + $0x11] sm:$0x7f]
      %v1984 = vld [vmem:[%s1952 + $0x19] sm:$0x7f]
      %v1985 = vld [vmem:[%s1952 + $0x21] sm:$0x7f]
      %v1986 = vld [vmem:[%s1952 + $0x29] sm:$0x7f]
      %v1987 = vld [vmem:[%s1952 + $0x31] sm:$0x7f]
      %v1988 = vld [vmem:[%s1952 + $0x39] sm:$0x7f]
      %v1989 = vld [vmem:[%s1952 + $0x41] sm:$0x7f]
      %v1990 = vld [vmem:[%s1952 + $0x49] sm:$0x7f]
      %v1991 = vld [vmem:[%s1952 + $0x51] sm:$0x7f]
      %v1992 = vld [vmem:[%s1952 + $0x59] sm:$0x7f]
      %v1993 = vld [vmem:[%s1952 + $0x61] sm:$0x7f]
      %v1994 = vld [vmem:[%s1952 + $0x69] sm:$0x7f]
      %s1995 = sadd.s32 %s1758, 2
      %s1996 = smul.u32 %s1995, 3
      %s1997 = sld [smem:[#allocation2 + %s1996]]
      %s1998 = sadd.s32 %s1996, 1
      %s1999 = sld [smem:[#allocation2 + %s1998]]
      %s2000 = sadd.s32 %s1996, 2
      %s2001 = sld [smem:[#allocation2 + %s2000]]
      %v2002 = vstv %s1997
      %v2003 = vmul.f32 %v2002, %v1938
      %v2004 = vmul.f32 %v2002, %v1939
      %v2005 = vmul.f32 %v2002, %v1940
      %v2006 = vmul.f32 %v2002, %v1941
      %v2007 = vmul.f32 %v2002, %v1942
      %v2008 = vmul.f32 %v2002, %v1943
      %v2009 = vmul.f32 %v2002, %v1944
      %v2010 = vmul.f32 %v2002, %v1945
      %v2011 = vmul.f32 %v2002, %v1946
      %v2012 = vmul.f32 %v2002, %v1947
      %v2013 = vmul.f32 %v2002, %v1948
      %v2014 = vmul.f32 %v2002, %v1949
      %v2015 = vmul.f32 %v2002, %v1950
      %v2016 = vmul.f32 %v2002, %v1951
      %v2017 = vadd.f32 %v1839, %v2003
      %v2018 = vadd.f32 %v1840, %v2004
      %v2019 = vadd.f32 %v1841, %v2005
      %v2020 = vadd.f32 %v1842, %v2006
      %v2021 = vadd.f32 %v1843, %v2007
      %v2022 = vadd.f32 %v1844, %v2008
      %v2023 = vadd.f32 %v1845, %v2009
      %v2024 = vadd.f32 %v1846, %v2010
      %v2025 = vadd.f32 %v1847, %v2011
      %v2026 = vadd.f32 %v1848, %v2012
      %v2027 = vadd.f32 %v1849, %v2013
      %v2028 = vadd.f32 %v1850, %v2014
      %v2029 = vadd.f32 %v1851, %v2015
      %v2030 = vadd.f32 %v1852, %v2016
      %v2031 = vstv %s1999
      %v2032 = vmul.f32 %v2031, %v1953
      %v2033 = vmul.f32 %v2031, %v1954
      %v2034 = vmul.f32 %v2031, %v1955
      %v2035 = vmul.f32 %v2031, %v1956
      %v2036 = vmul.f32 %v2031, %v1957
      %v2037 = vmul.f32 %v2031, %v1958
      %v2038 = vmul.f32 %v2031, %v1959
      %v2039 = vmul.f32 %v2031, %v1960
      %v2040 = vmul.f32 %v2031, %v1961
      %v2041 = vmul.f32 %v2031, %v1962
      %v2042 = vmul.f32 %v2031, %v1963
      %v2043 = vmul.f32 %v2031, %v1964
      %v2044 = vmul.f32 %v2031, %v1965
      %v2045 = vmul.f32 %v2031, %v1966
      %v2046 = vadd.f32 %v2017, %v2032
      %v2047 = vadd.f32 %v2018, %v2033
      %v2048 = vadd.f32 %v2019, %v2034
      %v2049 = vadd.f32 %v2020, %v2035
      %v2050 = vadd.f32 %v2021, %v2036
      %v2051 = vadd.f32 %v2022, %v2037
      %v2052 = vadd.f32 %v2023, %v2038
      %v2053 = vadd.f32 %v2024, %v2039
      %v2054 = vadd.f32 %v2025, %v2040
      %v2055 = vadd.f32 %v2026, %v2041
      %v2056 = vadd.f32 %v2027, %v2042
      %v2057 = vadd.f32 %v2028, %v2043
      %v2058 = vadd.f32 %v2029, %v2044
      %v2059 = vadd.f32 %v2030, %v2045
      %v2060 = vstv %s2001
      %v2061 = vmul.f32 %v2060, %v1967
      %v2062 = vmul.f32 %v2060, %v1968
      %v2063 = vmul.f32 %v2060, %v1969
      %v2064 = vmul.f32 %v2060, %v1970
      %v2065 = vmul.f32 %v2060, %v1971
      %v2066 = vmul.f32 %v2060, %v1972
      %v2067 = vmul.f32 %v2060, %v1973
      %v2068 = vmul.f32 %v2060, %v1974
      %v2069 = vmul.f32 %v2060, %v1975
      %v2070 = vmul.f32 %v2060, %v1976
      %v2071 = vmul.f32 %v2060, %v1977
      %v2072 = vmul.f32 %v2060, %v1978
      %v2073 = vmul.f32 %v2060, %v1979
      %v2074 = vmul.f32 %v2060, %v1980
      %v2075 = vadd.f32 %v2046, %v2061
      %v2076 = vadd.f32 %v2047, %v2062
      %v2077 = vadd.f32 %v2048, %v2063
      %v2078 = vadd.f32 %v2049, %v2064
      %v2079 = vadd.f32 %v2050, %v2065
      %v2080 = vadd.f32 %v2051, %v2066
      %v2081 = vadd.f32 %v2052, %v2067
      %v2082 = vadd.f32 %v2053, %v2068
      %v2083 = vadd.f32 %v2054, %v2069
      %v2084 = vadd.f32 %v2055, %v2070
      %v2085 = vadd.f32 %v2056, %v2071
      %v2086 = vadd.f32 %v2057, %v2072
      %v2087 = vadd.f32 %v2058, %v2073
      %v2088 = vadd.f32 %v2059, %v2074
      %v2089 = vmul.f32 %v2002, %v1953
      %v2090 = vmul.f32 %v2002, %v1954
      %v2091 = vmul.f32 %v2002, %v1955
      %v2092 = vmul.f32 %v2002, %v1956
      %v2093 = vmul.f32 %v2002, %v1957
      %v2094 = vmul.f32 %v2002, %v1958
      %v2095 = vmul.f32 %v2002, %v1959
      %v2096 = vmul.f32 %v2002, %v1960
      %v2097 = vmul.f32 %v2002, %v1961
      %v2098 = vmul.f32 %v2002, %v1962
      %v2099 = vmul.f32 %v2002, %v1963
      %v2100 = vmul.f32 %v2002, %v1964
      %v2101 = vmul.f32 %v2002, %v1965
      %v2102 = vmul.f32 %v2002, %v1966
      %v2103 = vadd.f32 %v1923, %v2089
      %v2104 = vadd.f32 %v1924, %v2090
      %v2105 = vadd.f32 %v1925, %v2091
      %v2106 = vadd.f32 %v1926, %v2092
      %v2107 = vadd.f32 %v1927, %v2093
      %v2108 = vadd.f32 %v1928, %v2094
      %v2109 = vadd.f32 %v1929, %v2095
      %v2110 = vadd.f32 %v1930, %v2096
      %v2111 = vadd.f32 %v1931, %v2097
      %v2112 = vadd.f32 %v1932, %v2098
      %v2113 = vadd.f32 %v1933, %v2099
      %v2114 = vadd.f32 %v1934, %v2100
      %v2115 = vadd.f32 %v1935, %v2101
      %v2116 = vadd.f32 %v1936, %v2102
      %v2117 = vmul.f32 %v2031, %v1967
      %v2118 = vmul.f32 %v2031, %v1968
      %v2119 = vmul.f32 %v2031, %v1969
      %v2120 = vmul.f32 %v2031, %v1970
      %v2121 = vmul.f32 %v2031, %v1971
      %v2122 = vmul.f32 %v2031, %v1972
      %v2123 = vmul.f32 %v2031, %v1973
      %v2124 = vmul.f32 %v2031, %v1974
      %v2125 = vmul.f32 %v2031, %v1975
      %v2126 = vmul.f32 %v2031, %v1976
      %v2127 = vmul.f32 %v2031, %v1977
      %v2128 = vmul.f32 %v2031, %v1978
      %v2129 = vmul.f32 %v2031, %v1979
      %v2130 = vmul.f32 %v2031, %v1980
      %v2131 = vadd.f32 %v2103, %v2117
      %v2132 = vadd.f32 %v2104, %v2118
      %v2133 = vadd.f32 %v2105, %v2119
      %v2134 = vadd.f32 %v2106, %v2120
      %v2135 = vadd.f32 %v2107, %v2121
      %v2136 = vadd.f32 %v2108, %v2122
      %v2137 = vadd.f32 %v2109, %v2123
      %v2138 = vadd.f32 %v2110, %v2124
      %v2139 = vadd.f32 %v2111, %v2125
      %v2140 = vadd.f32 %v2112, %v2126
      %v2141 = vadd.f32 %v2113, %v2127
      %v2142 = vadd.f32 %v2114, %v2128
      %v2143 = vadd.f32 %v2115, %v2129
      %v2144 = vadd.f32 %v2116, %v2130
      %v2145 = vmul.f32 %v2060, %v1981
      %v2146 = vmul.f32 %v2060, %v1982
      %v2147 = vmul.f32 %v2060, %v1983
      %v2148 = vmul.f32 %v2060, %v1984
      %v2149 = vmul.f32 %v2060, %v1985
      %v2150 = vmul.f32 %v2060, %v1986
      %v2151 = vmul.f32 %v2060, %v1987
      %v2152 = vmul.f32 %v2060, %v1988
      %v2153 = vmul.f32 %v2060, %v1989
      %v2154 = vmul.f32 %v2060, %v1990
      %v2155 = vmul.f32 %v2060, %v1991
      %v2156 = vmul.f32 %v2060, %v1992
      %v2157 = vmul.f32 %v2060, %v1993
      %v2158 = vmul.f32 %v2060, %v1994
      %v2159 = vadd.f32 %v2131, %v2145
      %v2160 = vadd.f32 %v2132, %v2146
      %v2161 = vadd.f32 %v2133, %v2147
      %v2162 = vadd.f32 %v2134, %v2148
      %v2163 = vadd.f32 %v2135, %v2149
      %v2164 = vadd.f32 %v2136, %v2150
      %v2165 = vadd.f32 %v2137, %v2151
      %v2166 = vadd.f32 %v2138, %v2152
      %v2167 = vadd.f32 %v2139, %v2153
      %v2168 = vadd.f32 %v2140, %v2154
      %v2169 = vadd.f32 %v2141, %v2155
      %v2170 = vadd.f32 %v2142, %v2156
      %v2171 = vadd.f32 %v2143, %v2157
      %v2172 = vadd.f32 %v2144, %v2158
      %s2173 = scalar_lea.vmem %s2, 384
      %v2174 = vld [vmem:[%s2173] sm:$0x7f]
      %v2175 = vld [vmem:[%s2173 + $0x8] sm:$0x7f]
      %v2176 = vld [vmem:[%s2173 + $0x10] sm:$0x7f]
      %v2177 = vld [vmem:[%s2173 + $0x18] sm:$0x7f]
      %v2178 = vld [vmem:[%s2173 + $0x20] sm:$0x7f]
      %v2179 = vld [vmem:[%s2173 + $0x28] sm:$0x7f]
      %v2180 = vld [vmem:[%s2173 + $0x30] sm:$0x7f]
      %v2181 = vld [vmem:[%s2173 + $0x38] sm:$0x7f]
      %v2182 = vld [vmem:[%s2173 + $0x40] sm:$0x7f]
      %v2183 = vld [vmem:[%s2173 + $0x48] sm:$0x7f]
      %v2184 = vld [vmem:[%s2173 + $0x50] sm:$0x7f]
      %v2185 = vld [vmem:[%s2173 + $0x58] sm:$0x7f]
      %v2186 = vld [vmem:[%s2173 + $0x60] sm:$0x7f]
      %v2187 = vld [vmem:[%s2173 + $0x68] sm:$0x7f]
      %s2188 = scalar_lea.vmem %s3, 384
      %v2189 = vld [vmem:[%s2188] sm:$0x7f]
      %v2190 = vld [vmem:[%s2188 + $0x8] sm:$0x7f]
      %v2191 = vld [vmem:[%s2188 + $0x10] sm:$0x7f]
      %v2192 = vld [vmem:[%s2188 + $0x18] sm:$0x7f]
      %v2193 = vld [vmem:[%s2188 + $0x20] sm:$0x7f]
      %v2194 = vld [vmem:[%s2188 + $0x28] sm:$0x7f]
      %v2195 = vld [vmem:[%s2188 + $0x30] sm:$0x7f]
      %v2196 = vld [vmem:[%s2188 + $0x38] sm:$0x7f]
      %v2197 = vld [vmem:[%s2188 + $0x40] sm:$0x7f]
      %v2198 = vld [vmem:[%s2188 + $0x48] sm:$0x7f]
      %v2199 = vld [vmem:[%s2188 + $0x50] sm:$0x7f]
      %v2200 = vld [vmem:[%s2188 + $0x58] sm:$0x7f]
      %v2201 = vld [vmem:[%s2188 + $0x60] sm:$0x7f]
      %v2202 = vld [vmem:[%s2188 + $0x68] sm:$0x7f]
      %v2203 = vld [vmem:[%s2173 + $0x1] sm:$0x7f]
      %v2204 = vld [vmem:[%s2173 + $0x9] sm:$0x7f]
      %v2205 = vld [vmem:[%s2173 + $0x11] sm:$0x7f]
      %v2206 = vld [vmem:[%s2173 + $0x19] sm:$0x7f]
      %v2207 = vld [vmem:[%s2173 + $0x21] sm:$0x7f]
      %v2208 = vld [vmem:[%s2173 + $0x29] sm:$0x7f]
      %v2209 = vld [vmem:[%s2173 + $0x31] sm:$0x7f]
      %v2210 = vld [vmem:[%s2173 + $0x39] sm:$0x7f]
      %v2211 = vld [vmem:[%s2173 + $0x41] sm:$0x7f]
      %v2212 = vld [vmem:[%s2173 + $0x49] sm:$0x7f]
      %v2213 = vld [vmem:[%s2173 + $0x51] sm:$0x7f]
      %v2214 = vld [vmem:[%s2173 + $0x59] sm:$0x7f]
      %v2215 = vld [vmem:[%s2173 + $0x61] sm:$0x7f]
      %v2216 = vld [vmem:[%s2173 + $0x69] sm:$0x7f]
      %v2217 = vld [vmem:[%s2188 + $0x1] sm:$0x7f]
      %v2218 = vld [vmem:[%s2188 + $0x9] sm:$0x7f]
      %v2219 = vld [vmem:[%s2188 + $0x11] sm:$0x7f]
      %v2220 = vld [vmem:[%s2188 + $0x19] sm:$0x7f]
      %v2221 = vld [vmem:[%s2188 + $0x21] sm:$0x7f]
      %v2222 = vld [vmem:[%s2188 + $0x29] sm:$0x7f]
      %v2223 = vld [vmem:[%s2188 + $0x31] sm:$0x7f]
      %v2224 = vld [vmem:[%s2188 + $0x39] sm:$0x7f]
      %v2225 = vld [vmem:[%s2188 + $0x41] sm:$0x7f]
      %v2226 = vld [vmem:[%s2188 + $0x49] sm:$0x7f]
      %v2227 = vld [vmem:[%s2188 + $0x51] sm:$0x7f]
      %v2228 = vld [vmem:[%s2188 + $0x59] sm:$0x7f]
      %v2229 = vld [vmem:[%s2188 + $0x61] sm:$0x7f]
      %v2230 = vld [vmem:[%s2188 + $0x69] sm:$0x7f]
      %s2231 = sadd.s32 %s812, 3
      %s2232 = smul.u32 %s2231, 9
      %s2233 = sld [smem:[#allocation2 + %s2232]]
      %s2234 = sadd.s32 %s2232, 1
      %s2235 = sld [smem:[#allocation2 + %s2234]]
      %s2236 = sadd.s32 %s2232, 2
      %s2237 = sld [smem:[#allocation2 + %s2236]]
      %v2238 = vstv %s2233
      %v2239 = vmul.f32 %v2238, %v2174
      %v2240 = vmul.f32 %v2238, %v2175
      %v2241 = vmul.f32 %v2238, %v2176
      %v2242 = vmul.f32 %v2238, %v2177
      %v2243 = vmul.f32 %v2238, %v2178
      %v2244 = vmul.f32 %v2238, %v2179
      %v2245 = vmul.f32 %v2238, %v2180
      %v2246 = vmul.f32 %v2238, %v2181
      %v2247 = vmul.f32 %v2238, %v2182
      %v2248 = vmul.f32 %v2238, %v2183
      %v2249 = vmul.f32 %v2238, %v2184
      %v2250 = vmul.f32 %v2238, %v2185
      %v2251 = vmul.f32 %v2238, %v2186
      %v2252 = vmul.f32 %v2238, %v2187
      %v2253 = vadd.f32 %v2075, %v2239
      %v2254 = vadd.f32 %v2076, %v2240
      %v2255 = vadd.f32 %v2077, %v2241
      %v2256 = vadd.f32 %v2078, %v2242
      %v2257 = vadd.f32 %v2079, %v2243
      %v2258 = vadd.f32 %v2080, %v2244
      %v2259 = vadd.f32 %v2081, %v2245
      %v2260 = vadd.f32 %v2082, %v2246
      %v2261 = vadd.f32 %v2083, %v2247
      %v2262 = vadd.f32 %v2084, %v2248
      %v2263 = vadd.f32 %v2085, %v2249
      %v2264 = vadd.f32 %v2086, %v2250
      %v2265 = vadd.f32 %v2087, %v2251
      %v2266 = vadd.f32 %v2088, %v2252
      %v2267 = vstv %s2235
      %v2268 = vmul.f32 %v2267, %v2189
      %v2269 = vmul.f32 %v2267, %v2190
      %v2270 = vmul.f32 %v2267, %v2191
      %v2271 = vmul.f32 %v2267, %v2192
      %v2272 = vmul.f32 %v2267, %v2193
      %v2273 = vmul.f32 %v2267, %v2194
      %v2274 = vmul.f32 %v2267, %v2195
      %v2275 = vmul.f32 %v2267, %v2196
      %v2276 = vmul.f32 %v2267, %v2197
      %v2277 = vmul.f32 %v2267, %v2198
      %v2278 = vmul.f32 %v2267, %v2199
      %v2279 = vmul.f32 %v2267, %v2200
      %v2280 = vmul.f32 %v2267, %v2201
      %v2281 = vmul.f32 %v2267, %v2202
      %v2282 = vadd.f32 %v2253, %v2268
      %v2283 = vadd.f32 %v2254, %v2269
      %v2284 = vadd.f32 %v2255, %v2270
      %v2285 = vadd.f32 %v2256, %v2271
      %v2286 = vadd.f32 %v2257, %v2272
      %v2287 = vadd.f32 %v2258, %v2273
      %v2288 = vadd.f32 %v2259, %v2274
      %v2289 = vadd.f32 %v2260, %v2275
      %v2290 = vadd.f32 %v2261, %v2276
      %v2291 = vadd.f32 %v2262, %v2277
      %v2292 = vadd.f32 %v2263, %v2278
      %v2293 = vadd.f32 %v2264, %v2279
      %v2294 = vadd.f32 %v2265, %v2280
      %v2295 = vadd.f32 %v2266, %v2281
      %v2296 = vstv %s2237
      %v2297 = vmul.f32 %v2296, %v2203
      %v2298 = vmul.f32 %v2296, %v2204
      %v2299 = vmul.f32 %v2296, %v2205
      %v2300 = vmul.f32 %v2296, %v2206
      %v2301 = vmul.f32 %v2296, %v2207
      %v2302 = vmul.f32 %v2296, %v2208
      %v2303 = vmul.f32 %v2296, %v2209
      %v2304 = vmul.f32 %v2296, %v2210
      %v2305 = vmul.f32 %v2296, %v2211
      %v2306 = vmul.f32 %v2296, %v2212
      %v2307 = vmul.f32 %v2296, %v2213
      %v2308 = vmul.f32 %v2296, %v2214
      %v2309 = vmul.f32 %v2296, %v2215
      %v2310 = vmul.f32 %v2296, %v2216
      %v2311 = vadd.f32 %v2282, %v2297
      %v2312 = vadd.f32 %v2283, %v2298
      %v2313 = vadd.f32 %v2284, %v2299
      %v2314 = vadd.f32 %v2285, %v2300
      %v2315 = vadd.f32 %v2286, %v2301
      %v2316 = vadd.f32 %v2287, %v2302
      %v2317 = vadd.f32 %v2288, %v2303
      %v2318 = vadd.f32 %v2289, %v2304
      %v2319 = vadd.f32 %v2290, %v2305
      %v2320 = vadd.f32 %v2291, %v2306
      %v2321 = vadd.f32 %v2292, %v2307
      %v2322 = vadd.f32 %v2293, %v2308
      %v2323 = vadd.f32 %v2294, %v2309
      %v2324 = vadd.f32 %v2295, %v2310
      %v2325 = vmul.f32 %v2238, %v2189
      %v2326 = vmul.f32 %v2238, %v2190
      %v2327 = vmul.f32 %v2238, %v2191
      %v2328 = vmul.f32 %v2238, %v2192
      %v2329 = vmul.f32 %v2238, %v2193
      %v2330 = vmul.f32 %v2238, %v2194
      %v2331 = vmul.f32 %v2238, %v2195
      %v2332 = vmul.f32 %v2238, %v2196
      %v2333 = vmul.f32 %v2238, %v2197
      %v2334 = vmul.f32 %v2238, %v2198
      %v2335 = vmul.f32 %v2238, %v2199
      %v2336 = vmul.f32 %v2238, %v2200
      %v2337 = vmul.f32 %v2238, %v2201
      %v2338 = vmul.f32 %v2238, %v2202
      %v2339 = vadd.f32 %v2159, %v2325
      %v2340 = vadd.f32 %v2160, %v2326
      %v2341 = vadd.f32 %v2161, %v2327
      %v2342 = vadd.f32 %v2162, %v2328
      %v2343 = vadd.f32 %v2163, %v2329
      %v2344 = vadd.f32 %v2164, %v2330
      %v2345 = vadd.f32 %v2165, %v2331
      %v2346 = vadd.f32 %v2166, %v2332
      %v2347 = vadd.f32 %v2167, %v2333
      %v2348 = vadd.f32 %v2168, %v2334
      %v2349 = vadd.f32 %v2169, %v2335
      %v2350 = vadd.f32 %v2170, %v2336
      %v2351 = vadd.f32 %v2171, %v2337
      %v2352 = vadd.f32 %v2172, %v2338
      %v2353 = vmul.f32 %v2267, %v2203
      %v2354 = vmul.f32 %v2267, %v2204
      %v2355 = vmul.f32 %v2267, %v2205
      %v2356 = vmul.f32 %v2267, %v2206
      %v2357 = vmul.f32 %v2267, %v2207
      %v2358 = vmul.f32 %v2267, %v2208
      %v2359 = vmul.f32 %v2267, %v2209
      %v2360 = vmul.f32 %v2267, %v2210
      %v2361 = vmul.f32 %v2267, %v2211
      %v2362 = vmul.f32 %v2267, %v2212
      %v2363 = vmul.f32 %v2267, %v2213
      %v2364 = vmul.f32 %v2267, %v2214
      %v2365 = vmul.f32 %v2267, %v2215
      %v2366 = vmul.f32 %v2267, %v2216
      %v2367 = vadd.f32 %v2339, %v2353
      %v2368 = vadd.f32 %v2340, %v2354
      %v2369 = vadd.f32 %v2341, %v2355
      %v2370 = vadd.f32 %v2342, %v2356
      %v2371 = vadd.f32 %v2343, %v2357
      %v2372 = vadd.f32 %v2344, %v2358
      %v2373 = vadd.f32 %v2345, %v2359
      %v2374 = vadd.f32 %v2346, %v2360
      %v2375 = vadd.f32 %v2347, %v2361
      %v2376 = vadd.f32 %v2348, %v2362
      %v2377 = vadd.f32 %v2349, %v2363
      %v2378 = vadd.f32 %v2350, %v2364
      %v2379 = vadd.f32 %v2351, %v2365
      %v2380 = vadd.f32 %v2352, %v2366
      %v2381 = vmul.f32 %v2296, %v2217
      %v2382 = vmul.f32 %v2296, %v2218
      %v2383 = vmul.f32 %v2296, %v2219
      %v2384 = vmul.f32 %v2296, %v2220
      %v2385 = vmul.f32 %v2296, %v2221
      %v2386 = vmul.f32 %v2296, %v2222
      %v2387 = vmul.f32 %v2296, %v2223
      %v2388 = vmul.f32 %v2296, %v2224
      %v2389 = vmul.f32 %v2296, %v2225
      %v2390 = vmul.f32 %v2296, %v2226
      %v2391 = vmul.f32 %v2296, %v2227
      %v2392 = vmul.f32 %v2296, %v2228
      %v2393 = vmul.f32 %v2296, %v2229
      %v2394 = vmul.f32 %v2296, %v2230
      %v2395 = vadd.f32 %v2367, %v2381
      %v2396 = vadd.f32 %v2368, %v2382
      %v2397 = vadd.f32 %v2369, %v2383
      %v2398 = vadd.f32 %v2370, %v2384
      %v2399 = vadd.f32 %v2371, %v2385
      %v2400 = vadd.f32 %v2372, %v2386
      %v2401 = vadd.f32 %v2373, %v2387
      %v2402 = vadd.f32 %v2374, %v2388
      %v2403 = vadd.f32 %v2375, %v2389
      %v2404 = vadd.f32 %v2376, %v2390
      %v2405 = vadd.f32 %v2377, %v2391
      %v2406 = vadd.f32 %v2378, %v2392
      %v2407 = vadd.f32 %v2379, %v2393
      %v2408 = vadd.f32 %v2380, %v2394
      %s2409 = scalar_lea.vmem %s2, 392
      %v2410 = vld [vmem:[%s2409] sm:$0x7f]
      %v2411 = vld [vmem:[%s2409 + $0x8] sm:$0x7f]
      %v2412 = vld [vmem:[%s2409 + $0x10] sm:$0x7f]
      %v2413 = vld [vmem:[%s2409 + $0x18] sm:$0x7f]
      %v2414 = vld [vmem:[%s2409 + $0x20] sm:$0x7f]
      %v2415 = vld [vmem:[%s2409 + $0x28] sm:$0x7f]
      %v2416 = vld [vmem:[%s2409 + $0x30] sm:$0x7f]
      %v2417 = vld [vmem:[%s2409 + $0x38] sm:$0x7f]
      %v2418 = vld [vmem:[%s2409 + $0x40] sm:$0x7f]
      %v2419 = vld [vmem:[%s2409 + $0x48] sm:$0x7f]
      %v2420 = vld [vmem:[%s2409 + $0x50] sm:$0x7f]
      %v2421 = vld [vmem:[%s2409 + $0x58] sm:$0x7f]
      %v2422 = vld [vmem:[%s2409 + $0x60] sm:$0x7f]
      %v2423 = vld [vmem:[%s2409 + $0x68] sm:$0x7f]
      %s2424 = scalar_lea.vmem %s3, 392
      %v2425 = vld [vmem:[%s2424] sm:$0x7f]
      %v2426 = vld [vmem:[%s2424 + $0x8] sm:$0x7f]
      %v2427 = vld [vmem:[%s2424 + $0x10] sm:$0x7f]
      %v2428 = vld [vmem:[%s2424 + $0x18] sm:$0x7f]
      %v2429 = vld [vmem:[%s2424 + $0x20] sm:$0x7f]
      %v2430 = vld [vmem:[%s2424 + $0x28] sm:$0x7f]
      %v2431 = vld [vmem:[%s2424 + $0x30] sm:$0x7f]
      %v2432 = vld [vmem:[%s2424 + $0x38] sm:$0x7f]
      %v2433 = vld [vmem:[%s2424 + $0x40] sm:$0x7f]
      %v2434 = vld [vmem:[%s2424 + $0x48] sm:$0x7f]
      %v2435 = vld [vmem:[%s2424 + $0x50] sm:$0x7f]
      %v2436 = vld [vmem:[%s2424 + $0x58] sm:$0x7f]
      %v2437 = vld [vmem:[%s2424 + $0x60] sm:$0x7f]
      %v2438 = vld [vmem:[%s2424 + $0x68] sm:$0x7f]
      %v2439 = vld [vmem:[%s2409 + $0x1] sm:$0x7f]
      %v2440 = vld [vmem:[%s2409 + $0x9] sm:$0x7f]
      %v2441 = vld [vmem:[%s2409 + $0x11] sm:$0x7f]
      %v2442 = vld [vmem:[%s2409 + $0x19] sm:$0x7f]
      %v2443 = vld [vmem:[%s2409 + $0x21] sm:$0x7f]
      %v2444 = vld [vmem:[%s2409 + $0x29] sm:$0x7f]
      %v2445 = vld [vmem:[%s2409 + $0x31] sm:$0x7f]
      %v2446 = vld [vmem:[%s2409 + $0x39] sm:$0x7f]
      %v2447 = vld [vmem:[%s2409 + $0x41] sm:$0x7f]
      %v2448 = vld [vmem:[%s2409 + $0x49] sm:$0x7f]
      %v2449 = vld [vmem:[%s2409 + $0x51] sm:$0x7f]
      %v2450 = vld [vmem:[%s2409 + $0x59] sm:$0x7f]
      %v2451 = vld [vmem:[%s2409 + $0x61] sm:$0x7f]
      %v2452 = vld [vmem:[%s2409 + $0x69] sm:$0x7f]
      %v2453 = vld [vmem:[%s2424 + $0x1] sm:$0x7f]
      %v2454 = vld [vmem:[%s2424 + $0x9] sm:$0x7f]
      %v2455 = vld [vmem:[%s2424 + $0x11] sm:$0x7f]
      %v2456 = vld [vmem:[%s2424 + $0x19] sm:$0x7f]
      %v2457 = vld [vmem:[%s2424 + $0x21] sm:$0x7f]
      %v2458 = vld [vmem:[%s2424 + $0x29] sm:$0x7f]
      %v2459 = vld [vmem:[%s2424 + $0x31] sm:$0x7f]
      %v2460 = vld [vmem:[%s2424 + $0x39] sm:$0x7f]
      %v2461 = vld [vmem:[%s2424 + $0x41] sm:$0x7f]
      %v2462 = vld [vmem:[%s2424 + $0x49] sm:$0x7f]
      %v2463 = vld [vmem:[%s2424 + $0x51] sm:$0x7f]
      %v2464 = vld [vmem:[%s2424 + $0x59] sm:$0x7f]
      %v2465 = vld [vmem:[%s2424 + $0x61] sm:$0x7f]
      %v2466 = vld [vmem:[%s2424 + $0x69] sm:$0x7f]
      %s2467 = smul.u32 %s2231, 3
      %s2468 = sadd.s32 %s2467, 1
      %s2469 = smul.u32 %s2468, 3
      %s2470 = sld [smem:[#allocation2 + %s2469]]
      %s2471 = sadd.s32 %s2469, 1
      %s2472 = sld [smem:[#allocation2 + %s2471]]
      %s2473 = sadd.s32 %s2469, 2
      %s2474 = sld [smem:[#allocation2 + %s2473]]
      %v2475 = vstv %s2470
      %v2476 = vmul.f32 %v2475, %v2410
      %v2477 = vmul.f32 %v2475, %v2411
      %v2478 = vmul.f32 %v2475, %v2412
      %v2479 = vmul.f32 %v2475, %v2413
      %v2480 = vmul.f32 %v2475, %v2414
      %v2481 = vmul.f32 %v2475, %v2415
      %v2482 = vmul.f32 %v2475, %v2416
      %v2483 = vmul.f32 %v2475, %v2417
      %v2484 = vmul.f32 %v2475, %v2418
      %v2485 = vmul.f32 %v2475, %v2419
      %v2486 = vmul.f32 %v2475, %v2420
      %v2487 = vmul.f32 %v2475, %v2421
      %v2488 = vmul.f32 %v2475, %v2422
      %v2489 = vmul.f32 %v2475, %v2423
      %v2490 = vadd.f32 %v2311, %v2476
      %v2491 = vadd.f32 %v2312, %v2477
      %v2492 = vadd.f32 %v2313, %v2478
      %v2493 = vadd.f32 %v2314, %v2479
      %v2494 = vadd.f32 %v2315, %v2480
      %v2495 = vadd.f32 %v2316, %v2481
      %v2496 = vadd.f32 %v2317, %v2482
      %v2497 = vadd.f32 %v2318, %v2483
      %v2498 = vadd.f32 %v2319, %v2484
      %v2499 = vadd.f32 %v2320, %v2485
      %v2500 = vadd.f32 %v2321, %v2486
      %v2501 = vadd.f32 %v2322, %v2487
      %v2502 = vadd.f32 %v2323, %v2488
      %v2503 = vadd.f32 %v2324, %v2489
      %v2504 = vstv %s2472
      %v2505 = vmul.f32 %v2504, %v2425
      %v2506 = vmul.f32 %v2504, %v2426
      %v2507 = vmul.f32 %v2504, %v2427
      %v2508 = vmul.f32 %v2504, %v2428
      %v2509 = vmul.f32 %v2504, %v2429
      %v2510 = vmul.f32 %v2504, %v2430
      %v2511 = vmul.f32 %v2504, %v2431
      %v2512 = vmul.f32 %v2504, %v2432
      %v2513 = vmul.f32 %v2504, %v2433
      %v2514 = vmul.f32 %v2504, %v2434
      %v2515 = vmul.f32 %v2504, %v2435
      %v2516 = vmul.f32 %v2504, %v2436
      %v2517 = vmul.f32 %v2504, %v2437
      %v2518 = vmul.f32 %v2504, %v2438
      %v2519 = vadd.f32 %v2490, %v2505
      %v2520 = vadd.f32 %v2491, %v2506
      %v2521 = vadd.f32 %v2492, %v2507
      %v2522 = vadd.f32 %v2493, %v2508
      %v2523 = vadd.f32 %v2494, %v2509
      %v2524 = vadd.f32 %v2495, %v2510
      %v2525 = vadd.f32 %v2496, %v2511
      %v2526 = vadd.f32 %v2497, %v2512
      %v2527 = vadd.f32 %v2498, %v2513
      %v2528 = vadd.f32 %v2499, %v2514
      %v2529 = vadd.f32 %v2500, %v2515
      %v2530 = vadd.f32 %v2501, %v2516
      %v2531 = vadd.f32 %v2502, %v2517
      %v2532 = vadd.f32 %v2503, %v2518
      %v2533 = vstv %s2474
      %v2534 = vmul.f32 %v2533, %v2439
      %v2535 = vmul.f32 %v2533, %v2440
      %v2536 = vmul.f32 %v2533, %v2441
      %v2537 = vmul.f32 %v2533, %v2442
      %v2538 = vmul.f32 %v2533, %v2443
      %v2539 = vmul.f32 %v2533, %v2444
      %v2540 = vmul.f32 %v2533, %v2445
      %v2541 = vmul.f32 %v2533, %v2446
      %v2542 = vmul.f32 %v2533, %v2447
      %v2543 = vmul.f32 %v2533, %v2448
      %v2544 = vmul.f32 %v2533, %v2449
      %v2545 = vmul.f32 %v2533, %v2450
      %v2546 = vmul.f32 %v2533, %v2451
      %v2547 = vmul.f32 %v2533, %v2452
      %v2548 = vadd.f32 %v2519, %v2534
      %v2549 = vadd.f32 %v2520, %v2535
      %v2550 = vadd.f32 %v2521, %v2536
      %v2551 = vadd.f32 %v2522, %v2537
      %v2552 = vadd.f32 %v2523, %v2538
      %v2553 = vadd.f32 %v2524, %v2539
      %v2554 = vadd.f32 %v2525, %v2540
      %v2555 = vadd.f32 %v2526, %v2541
      %v2556 = vadd.f32 %v2527, %v2542
      %v2557 = vadd.f32 %v2528, %v2543
      %v2558 = vadd.f32 %v2529, %v2544
      %v2559 = vadd.f32 %v2530, %v2545
      %v2560 = vadd.f32 %v2531, %v2546
      %v2561 = vadd.f32 %v2532, %v2547
      %v2562 = vmul.f32 %v2475, %v2425
      %v2563 = vmul.f32 %v2475, %v2426
      %v2564 = vmul.f32 %v2475, %v2427
      %v2565 = vmul.f32 %v2475, %v2428
      %v2566 = vmul.f32 %v2475, %v2429
      %v2567 = vmul.f32 %v2475, %v2430
      %v2568 = vmul.f32 %v2475, %v2431
      %v2569 = vmul.f32 %v2475, %v2432
      %v2570 = vmul.f32 %v2475, %v2433
      %v2571 = vmul.f32 %v2475, %v2434
      %v2572 = vmul.f32 %v2475, %v2435
      %v2573 = vmul.f32 %v2475, %v2436
      %v2574 = vmul.f32 %v2475, %v2437
      %v2575 = vmul.f32 %v2475, %v2438
      %v2576 = vadd.f32 %v2395, %v2562
      %v2577 = vadd.f32 %v2396, %v2563
      %v2578 = vadd.f32 %v2397, %v2564
      %v2579 = vadd.f32 %v2398, %v2565
      %v2580 = vadd.f32 %v2399, %v2566
      %v2581 = vadd.f32 %v2400, %v2567
      %v2582 = vadd.f32 %v2401, %v2568
      %v2583 = vadd.f32 %v2402, %v2569
      %v2584 = vadd.f32 %v2403, %v2570
      %v2585 = vadd.f32 %v2404, %v2571
      %v2586 = vadd.f32 %v2405, %v2572
      %v2587 = vadd.f32 %v2406, %v2573
      %v2588 = vadd.f32 %v2407, %v2574
      %v2589 = vadd.f32 %v2408, %v2575
      %v2590 = vmul.f32 %v2504, %v2439
      %v2591 = vmul.f32 %v2504, %v2440
      %v2592 = vmul.f32 %v2504, %v2441
      %v2593 = vmul.f32 %v2504, %v2442
      %v2594 = vmul.f32 %v2504, %v2443
      %v2595 = vmul.f32 %v2504, %v2444
      %v2596 = vmul.f32 %v2504, %v2445
      %v2597 = vmul.f32 %v2504, %v2446
      %v2598 = vmul.f32 %v2504, %v2447
      %v2599 = vmul.f32 %v2504, %v2448
      %v2600 = vmul.f32 %v2504, %v2449
      %v2601 = vmul.f32 %v2504, %v2450
      %v2602 = vmul.f32 %v2504, %v2451
      %v2603 = vmul.f32 %v2504, %v2452
      %v2604 = vadd.f32 %v2576, %v2590
      %v2605 = vadd.f32 %v2577, %v2591
      %v2606 = vadd.f32 %v2578, %v2592
      %v2607 = vadd.f32 %v2579, %v2593
      %v2608 = vadd.f32 %v2580, %v2594
      %v2609 = vadd.f32 %v2581, %v2595
      %v2610 = vadd.f32 %v2582, %v2596
      %v2611 = vadd.f32 %v2583, %v2597
      %v2612 = vadd.f32 %v2584, %v2598
      %v2613 = vadd.f32 %v2585, %v2599
      %v2614 = vadd.f32 %v2586, %v2600
      %v2615 = vadd.f32 %v2587, %v2601
      %v2616 = vadd.f32 %v2588, %v2602
      %v2617 = vadd.f32 %v2589, %v2603
      %v2618 = vmul.f32 %v2533, %v2453
      %v2619 = vmul.f32 %v2533, %v2454
      %v2620 = vmul.f32 %v2533, %v2455
      %v2621 = vmul.f32 %v2533, %v2456
      %v2622 = vmul.f32 %v2533, %v2457
      %v2623 = vmul.f32 %v2533, %v2458
      %v2624 = vmul.f32 %v2533, %v2459
      %v2625 = vmul.f32 %v2533, %v2460
      %v2626 = vmul.f32 %v2533, %v2461
      %v2627 = vmul.f32 %v2533, %v2462
      %v2628 = vmul.f32 %v2533, %v2463
      %v2629 = vmul.f32 %v2533, %v2464
      %v2630 = vmul.f32 %v2533, %v2465
      %v2631 = vmul.f32 %v2533, %v2466
      %v2632 = vadd.f32 %v2604, %v2618
      %v2633 = vadd.f32 %v2605, %v2619
      %v2634 = vadd.f32 %v2606, %v2620
      %v2635 = vadd.f32 %v2607, %v2621
      %v2636 = vadd.f32 %v2608, %v2622
      %v2637 = vadd.f32 %v2609, %v2623
      %v2638 = vadd.f32 %v2610, %v2624
      %v2639 = vadd.f32 %v2611, %v2625
      %v2640 = vadd.f32 %v2612, %v2626
      %v2641 = vadd.f32 %v2613, %v2627
      %v2642 = vadd.f32 %v2614, %v2628
      %v2643 = vadd.f32 %v2615, %v2629
      %v2644 = vadd.f32 %v2616, %v2630
      %v2645 = vadd.f32 %v2617, %v2631
      %s2646 = scalar_lea.vmem %s2, 400
      %v2647 = vld [vmem:[%s2646] sm:$0x7f]
      %v2648 = vld [vmem:[%s2646 + $0x8] sm:$0x7f]
      %v2649 = vld [vmem:[%s2646 + $0x10] sm:$0x7f]
      %v2650 = vld [vmem:[%s2646 + $0x18] sm:$0x7f]
      %v2651 = vld [vmem:[%s2646 + $0x20] sm:$0x7f]
      %v2652 = vld [vmem:[%s2646 + $0x28] sm:$0x7f]
      %v2653 = vld [vmem:[%s2646 + $0x30] sm:$0x7f]
      %v2654 = vld [vmem:[%s2646 + $0x38] sm:$0x7f]
      %v2655 = vld [vmem:[%s2646 + $0x40] sm:$0x7f]
      %v2656 = vld [vmem:[%s2646 + $0x48] sm:$0x7f]
      %v2657 = vld [vmem:[%s2646 + $0x50] sm:$0x7f]
      %v2658 = vld [vmem:[%s2646 + $0x58] sm:$0x7f]
      %v2659 = vld [vmem:[%s2646 + $0x60] sm:$0x7f]
      %v2660 = vld [vmem:[%s2646 + $0x68] sm:$0x7f]
      %s2661 = scalar_lea.vmem %s3, 400
      %v2662 = vld [vmem:[%s2661] sm:$0x7f]
      %v2663 = vld [vmem:[%s2661 + $0x8] sm:$0x7f]
      %v2664 = vld [vmem:[%s2661 + $0x10] sm:$0x7f]
      %v2665 = vld [vmem:[%s2661 + $0x18] sm:$0x7f]
      %v2666 = vld [vmem:[%s2661 + $0x20] sm:$0x7f]
      %v2667 = vld [vmem:[%s2661 + $0x28] sm:$0x7f]
      %v2668 = vld [vmem:[%s2661 + $0x30] sm:$0x7f]
      %v2669 = vld [vmem:[%s2661 + $0x38] sm:$0x7f]
      %v2670 = vld [vmem:[%s2661 + $0x40] sm:$0x7f]
      %v2671 = vld [vmem:[%s2661 + $0x48] sm:$0x7f]
      %v2672 = vld [vmem:[%s2661 + $0x50] sm:$0x7f]
      %v2673 = vld [vmem:[%s2661 + $0x58] sm:$0x7f]
      %v2674 = vld [vmem:[%s2661 + $0x60] sm:$0x7f]
      %v2675 = vld [vmem:[%s2661 + $0x68] sm:$0x7f]
      %v2676 = vld [vmem:[%s2646 + $0x1] sm:$0x7f]
      %v2677 = vld [vmem:[%s2646 + $0x9] sm:$0x7f]
      %v2678 = vld [vmem:[%s2646 + $0x11] sm:$0x7f]
      %v2679 = vld [vmem:[%s2646 + $0x19] sm:$0x7f]
      %v2680 = vld [vmem:[%s2646 + $0x21] sm:$0x7f]
      %v2681 = vld [vmem:[%s2646 + $0x29] sm:$0x7f]
      %v2682 = vld [vmem:[%s2646 + $0x31] sm:$0x7f]
      %v2683 = vld [vmem:[%s2646 + $0x39] sm:$0x7f]
      %v2684 = vld [vmem:[%s2646 + $0x41] sm:$0x7f]
      %v2685 = vld [vmem:[%s2646 + $0x49] sm:$0x7f]
      %v2686 = vld [vmem:[%s2646 + $0x51] sm:$0x7f]
      %v2687 = vld [vmem:[%s2646 + $0x59] sm:$0x7f]
      %v2688 = vld [vmem:[%s2646 + $0x61] sm:$0x7f]
      %v2689 = vld [vmem:[%s2646 + $0x69] sm:$0x7f]
      %v2690 = vld [vmem:[%s2661 + $0x1] sm:$0x7f]
      %v2691 = vld [vmem:[%s2661 + $0x9] sm:$0x7f]
      %v2692 = vld [vmem:[%s2661 + $0x11] sm:$0x7f]
      %v2693 = vld [vmem:[%s2661 + $0x19] sm:$0x7f]
      %v2694 = vld [vmem:[%s2661 + $0x21] sm:$0x7f]
      %v2695 = vld [vmem:[%s2661 + $0x29] sm:$0x7f]
      %v2696 = vld [vmem:[%s2661 + $0x31] sm:$0x7f]
      %v2697 = vld [vmem:[%s2661 + $0x39] sm:$0x7f]
      %v2698 = vld [vmem:[%s2661 + $0x41] sm:$0x7f]
      %v2699 = vld [vmem:[%s2661 + $0x49] sm:$0x7f]
      %v2700 = vld [vmem:[%s2661 + $0x51] sm:$0x7f]
      %v2701 = vld [vmem:[%s2661 + $0x59] sm:$0x7f]
      %v2702 = vld [vmem:[%s2661 + $0x61] sm:$0x7f]
      %v2703 = vld [vmem:[%s2661 + $0x69] sm:$0x7f]
      %s2704 = sadd.s32 %s2467, 2
      %s2705 = smul.u32 %s2704, 3
      %s2706 = sld [smem:[#allocation2 + %s2705]]
      %s2707 = sadd.s32 %s2705, 1
      %s2708 = sld [smem:[#allocation2 + %s2707]]
      %s2709 = sadd.s32 %s2705, 2
      %s2710 = sld [smem:[#allocation2 + %s2709]]
      %v2711 = vstv %s2706
      %v2712 = vmul.f32 %v2711, %v2647
      %v2713 = vmul.f32 %v2711, %v2648
      %v2714 = vmul.f32 %v2711, %v2649
      %v2715 = vmul.f32 %v2711, %v2650
      %v2716 = vmul.f32 %v2711, %v2651
      %v2717 = vmul.f32 %v2711, %v2652
      %v2718 = vmul.f32 %v2711, %v2653
      %v2719 = vmul.f32 %v2711, %v2654
      %v2720 = vmul.f32 %v2711, %v2655
      %v2721 = vmul.f32 %v2711, %v2656
      %v2722 = vmul.f32 %v2711, %v2657
      %v2723 = vmul.f32 %v2711, %v2658
      %v2724 = vmul.f32 %v2711, %v2659
      %v2725 = vmul.f32 %v2711, %v2660
      %v2726 = vadd.f32 %v2548, %v2712
      %v2727 = vadd.f32 %v2549, %v2713
      %v2728 = vadd.f32 %v2550, %v2714
      %v2729 = vadd.f32 %v2551, %v2715
      %v2730 = vadd.f32 %v2552, %v2716
      %v2731 = vadd.f32 %v2553, %v2717
      %v2732 = vadd.f32 %v2554, %v2718
      %v2733 = vadd.f32 %v2555, %v2719
      %v2734 = vadd.f32 %v2556, %v2720
      %v2735 = vadd.f32 %v2557, %v2721
      %v2736 = vadd.f32 %v2558, %v2722
      %v2737 = vadd.f32 %v2559, %v2723
      %v2738 = vadd.f32 %v2560, %v2724
      %v2739 = vadd.f32 %v2561, %v2725
      %v2740 = vstv %s2708
      %v2741 = vmul.f32 %v2740, %v2662
      %v2742 = vmul.f32 %v2740, %v2663
      %v2743 = vmul.f32 %v2740, %v2664
      %v2744 = vmul.f32 %v2740, %v2665
      %v2745 = vmul.f32 %v2740, %v2666
      %v2746 = vmul.f32 %v2740, %v2667
      %v2747 = vmul.f32 %v2740, %v2668
      %v2748 = vmul.f32 %v2740, %v2669
      %v2749 = vmul.f32 %v2740, %v2670
      %v2750 = vmul.f32 %v2740, %v2671
      %v2751 = vmul.f32 %v2740, %v2672
      %v2752 = vmul.f32 %v2740, %v2673
      %v2753 = vmul.f32 %v2740, %v2674
      %v2754 = vmul.f32 %v2740, %v2675
      %v2755 = vadd.f32 %v2726, %v2741
      %v2756 = vadd.f32 %v2727, %v2742
      %v2757 = vadd.f32 %v2728, %v2743
      %v2758 = vadd.f32 %v2729, %v2744
      %v2759 = vadd.f32 %v2730, %v2745
      %v2760 = vadd.f32 %v2731, %v2746
      %v2761 = vadd.f32 %v2732, %v2747
      %v2762 = vadd.f32 %v2733, %v2748
      %v2763 = vadd.f32 %v2734, %v2749
      %v2764 = vadd.f32 %v2735, %v2750
      %v2765 = vadd.f32 %v2736, %v2751
      %v2766 = vadd.f32 %v2737, %v2752
      %v2767 = vadd.f32 %v2738, %v2753
      %v2768 = vadd.f32 %v2739, %v2754
      %v2769 = vstv %s2710
      %v2770 = vmul.f32 %v2769, %v2676
      %v2771 = vmul.f32 %v2769, %v2677
      %v2772 = vmul.f32 %v2769, %v2678
      %v2773 = vmul.f32 %v2769, %v2679
      %v2774 = vmul.f32 %v2769, %v2680
      %v2775 = vmul.f32 %v2769, %v2681
      %v2776 = vmul.f32 %v2769, %v2682
      %v2777 = vmul.f32 %v2769, %v2683
      %v2778 = vmul.f32 %v2769, %v2684
      %v2779 = vmul.f32 %v2769, %v2685
      %v2780 = vmul.f32 %v2769, %v2686
      %v2781 = vmul.f32 %v2769, %v2687
      %v2782 = vmul.f32 %v2769, %v2688
      %v2783 = vmul.f32 %v2769, %v2689
      %v2784 = vadd.f32 %v2755, %v2770
      %v2785 = vadd.f32 %v2756, %v2771
      %v2786 = vadd.f32 %v2757, %v2772
      %v2787 = vadd.f32 %v2758, %v2773
      %v2788 = vadd.f32 %v2759, %v2774
      %v2789 = vadd.f32 %v2760, %v2775
      %v2790 = vadd.f32 %v2761, %v2776
      %v2791 = vadd.f32 %v2762, %v2777
      %v2792 = vadd.f32 %v2763, %v2778
      %v2793 = vadd.f32 %v2764, %v2779
      %v2794 = vadd.f32 %v2765, %v2780
      %v2795 = vadd.f32 %v2766, %v2781
      %v2796 = vadd.f32 %v2767, %v2782
      %v2797 = vadd.f32 %v2768, %v2783
      %v2798 = vmul.f32 %v2711, %v2662
      %v2799 = vmul.f32 %v2711, %v2663
      %v2800 = vmul.f32 %v2711, %v2664
      %v2801 = vmul.f32 %v2711, %v2665
      %v2802 = vmul.f32 %v2711, %v2666
      %v2803 = vmul.f32 %v2711, %v2667
      %v2804 = vmul.f32 %v2711, %v2668
      %v2805 = vmul.f32 %v2711, %v2669
      %v2806 = vmul.f32 %v2711, %v2670
      %v2807 = vmul.f32 %v2711, %v2671
      %v2808 = vmul.f32 %v2711, %v2672
      %v2809 = vmul.f32 %v2711, %v2673
      %v2810 = vmul.f32 %v2711, %v2674
      %v2811 = vmul.f32 %v2711, %v2675
      %v2812 = vadd.f32 %v2632, %v2798
      %v2813 = vadd.f32 %v2633, %v2799
      %v2814 = vadd.f32 %v2634, %v2800
      %v2815 = vadd.f32 %v2635, %v2801
      %v2816 = vadd.f32 %v2636, %v2802
      %v2817 = vadd.f32 %v2637, %v2803
      %v2818 = vadd.f32 %v2638, %v2804
      %v2819 = vadd.f32 %v2639, %v2805
      %v2820 = vadd.f32 %v2640, %v2806
      %v2821 = vadd.f32 %v2641, %v2807
      %v2822 = vadd.f32 %v2642, %v2808
      %v2823 = vadd.f32 %v2643, %v2809
      %v2824 = vadd.f32 %v2644, %v2810
      %v2825 = vadd.f32 %v2645, %v2811
      %v2826 = vmul.f32 %v2740, %v2676
      %v2827 = vmul.f32 %v2740, %v2677
      %v2828 = vmul.f32 %v2740, %v2678
      %v2829 = vmul.f32 %v2740, %v2679
      %v2830 = vmul.f32 %v2740, %v2680
      %v2831 = vmul.f32 %v2740, %v2681
      %v2832 = vmul.f32 %v2740, %v2682
      %v2833 = vmul.f32 %v2740, %v2683
      %v2834 = vmul.f32 %v2740, %v2684
      %v2835 = vmul.f32 %v2740, %v2685
      %v2836 = vmul.f32 %v2740, %v2686
      %v2837 = vmul.f32 %v2740, %v2687
      %v2838 = vmul.f32 %v2740, %v2688
      %v2839 = vmul.f32 %v2740, %v2689
      %v2840 = vadd.f32 %v2812, %v2826
      %v2841 = vadd.f32 %v2813, %v2827
      %v2842 = vadd.f32 %v2814, %v2828
      %v2843 = vadd.f32 %v2815, %v2829
      %v2844 = vadd.f32 %v2816, %v2830
      %v2845 = vadd.f32 %v2817, %v2831
      %v2846 = vadd.f32 %v2818, %v2832
      %v2847 = vadd.f32 %v2819, %v2833
      %v2848 = vadd.f32 %v2820, %v2834
      %v2849 = vadd.f32 %v2821, %v2835
      %v2850 = vadd.f32 %v2822, %v2836
      %v2851 = vadd.f32 %v2823, %v2837
      %v2852 = vadd.f32 %v2824, %v2838
      %v2853 = vadd.f32 %v2825, %v2839
      %v2854 = vmul.f32 %v2769, %v2690
      %v2855 = vmul.f32 %v2769, %v2691
      %v2856 = vmul.f32 %v2769, %v2692
      %v2857 = vmul.f32 %v2769, %v2693
      %v2858 = vmul.f32 %v2769, %v2694
      %v2859 = vmul.f32 %v2769, %v2695
      %v2860 = vmul.f32 %v2769, %v2696
      %v2861 = vmul.f32 %v2769, %v2697
      %v2862 = vmul.f32 %v2769, %v2698
      %v2863 = vmul.f32 %v2769, %v2699
      %v2864 = vmul.f32 %v2769, %v2700
      %v2865 = vmul.f32 %v2769, %v2701
      %v2866 = vmul.f32 %v2769, %v2702
      %v2867 = vmul.f32 %v2769, %v2703
      %v2868 = vadd.f32 %v2840, %v2854
      %v2869 = vadd.f32 %v2841, %v2855
      %v2870 = vadd.f32 %v2842, %v2856
      %v2871 = vadd.f32 %v2843, %v2857
      %v2872 = vadd.f32 %v2844, %v2858
      %v2873 = vadd.f32 %v2845, %v2859
      %v2874 = vadd.f32 %v2846, %v2860
      %v2875 = vadd.f32 %v2847, %v2861
      %v2876 = vadd.f32 %v2848, %v2862
      %v2877 = vadd.f32 %v2849, %v2863
      %v2878 = vadd.f32 %v2850, %v2864
      %v2879 = vadd.f32 %v2851, %v2865
      %v2880 = vadd.f32 %v2852, %v2866
      %v2881 = vadd.f32 %v2853, %v2867
      %s2882 = scalar_lea.vmem %s2, 512
      %v2883 = vld [vmem:[%s2882] sm:$0x7f]
      %v2884 = vld [vmem:[%s2882 + $0x8] sm:$0x7f]
      %v2885 = vld [vmem:[%s2882 + $0x10] sm:$0x7f]
      %v2886 = vld [vmem:[%s2882 + $0x18] sm:$0x7f]
      %v2887 = vld [vmem:[%s2882 + $0x20] sm:$0x7f]
      %v2888 = vld [vmem:[%s2882 + $0x28] sm:$0x7f]
      %v2889 = vld [vmem:[%s2882 + $0x30] sm:$0x7f]
      %v2890 = vld [vmem:[%s2882 + $0x38] sm:$0x7f]
      %v2891 = vld [vmem:[%s2882 + $0x40] sm:$0x7f]
      %v2892 = vld [vmem:[%s2882 + $0x48] sm:$0x7f]
      %v2893 = vld [vmem:[%s2882 + $0x50] sm:$0x7f]
      %v2894 = vld [vmem:[%s2882 + $0x58] sm:$0x7f]
      %v2895 = vld [vmem:[%s2882 + $0x60] sm:$0x7f]
      %v2896 = vld [vmem:[%s2882 + $0x68] sm:$0x7f]
      %s2897 = scalar_lea.vmem %s3, 512
      %v2898 = vld [vmem:[%s2897] sm:$0x7f]
      %v2899 = vld [vmem:[%s2897 + $0x8] sm:$0x7f]
      %v2900 = vld [vmem:[%s2897 + $0x10] sm:$0x7f]
      %v2901 = vld [vmem:[%s2897 + $0x18] sm:$0x7f]
      %v2902 = vld [vmem:[%s2897 + $0x20] sm:$0x7f]
      %v2903 = vld [vmem:[%s2897 + $0x28] sm:$0x7f]
      %v2904 = vld [vmem:[%s2897 + $0x30] sm:$0x7f]
      %v2905 = vld [vmem:[%s2897 + $0x38] sm:$0x7f]
      %v2906 = vld [vmem:[%s2897 + $0x40] sm:$0x7f]
      %v2907 = vld [vmem:[%s2897 + $0x48] sm:$0x7f]
      %v2908 = vld [vmem:[%s2897 + $0x50] sm:$0x7f]
      %v2909 = vld [vmem:[%s2897 + $0x58] sm:$0x7f]
      %v2910 = vld [vmem:[%s2897 + $0x60] sm:$0x7f]
      %v2911 = vld [vmem:[%s2897 + $0x68] sm:$0x7f]
      %v2912 = vld [vmem:[%s2882 + $0x1] sm:$0x7f]
      %v2913 = vld [vmem:[%s2882 + $0x9] sm:$0x7f]
      %v2914 = vld [vmem:[%s2882 + $0x11] sm:$0x7f]
      %v2915 = vld [vmem:[%s2882 + $0x19] sm:$0x7f]
      %v2916 = vld [vmem:[%s2882 + $0x21] sm:$0x7f]
      %v2917 = vld [vmem:[%s2882 + $0x29] sm:$0x7f]
      %v2918 = vld [vmem:[%s2882 + $0x31] sm:$0x7f]
      %v2919 = vld [vmem:[%s2882 + $0x39] sm:$0x7f]
      %v2920 = vld [vmem:[%s2882 + $0x41] sm:$0x7f]
      %v2921 = vld [vmem:[%s2882 + $0x49] sm:$0x7f]
      %v2922 = vld [vmem:[%s2882 + $0x51] sm:$0x7f]
      %v2923 = vld [vmem:[%s2882 + $0x59] sm:$0x7f]
      %v2924 = vld [vmem:[%s2882 + $0x61] sm:$0x7f]
      %v2925 = vld [vmem:[%s2882 + $0x69] sm:$0x7f]
      %v2926 = vld [vmem:[%s2897 + $0x1] sm:$0x7f]
      %v2927 = vld [vmem:[%s2897 + $0x9] sm:$0x7f]
      %v2928 = vld [vmem:[%s2897 + $0x11] sm:$0x7f]
      %v2929 = vld [vmem:[%s2897 + $0x19] sm:$0x7f]
      %v2930 = vld [vmem:[%s2897 + $0x21] sm:$0x7f]
      %v2931 = vld [vmem:[%s2897 + $0x29] sm:$0x7f]
      %v2932 = vld [vmem:[%s2897 + $0x31] sm:$0x7f]
      %v2933 = vld [vmem:[%s2897 + $0x39] sm:$0x7f]
      %v2934 = vld [vmem:[%s2897 + $0x41] sm:$0x7f]
      %v2935 = vld [vmem:[%s2897 + $0x49] sm:$0x7f]
      %v2936 = vld [vmem:[%s2897 + $0x51] sm:$0x7f]
      %v2937 = vld [vmem:[%s2897 + $0x59] sm:$0x7f]
      %v2938 = vld [vmem:[%s2897 + $0x61] sm:$0x7f]
      %v2939 = vld [vmem:[%s2897 + $0x69] sm:$0x7f]
      %s2940 = sadd.s32 %s812, 4
      %s2941 = smul.u32 %s2940, 9
      %s2942 = sld [smem:[#allocation2 + %s2941]]
      %s2943 = sadd.s32 %s2941, 1
      %s2944 = sld [smem:[#allocation2 + %s2943]]
      %s2945 = sadd.s32 %s2941, 2
      %s2946 = sld [smem:[#allocation2 + %s2945]]
      %v2947 = vstv %s2942
      %v2948 = vmul.f32 %v2947, %v2883
      %v2949 = vmul.f32 %v2947, %v2884
      %v2950 = vmul.f32 %v2947, %v2885
      %v2951 = vmul.f32 %v2947, %v2886
      %v2952 = vmul.f32 %v2947, %v2887
      %v2953 = vmul.f32 %v2947, %v2888
      %v2954 = vmul.f32 %v2947, %v2889
      %v2955 = vmul.f32 %v2947, %v2890
      %v2956 = vmul.f32 %v2947, %v2891
      %v2957 = vmul.f32 %v2947, %v2892
      %v2958 = vmul.f32 %v2947, %v2893
      %v2959 = vmul.f32 %v2947, %v2894
      %v2960 = vmul.f32 %v2947, %v2895
      %v2961 = vmul.f32 %v2947, %v2896
      %v2962 = vadd.f32 %v2784, %v2948
      %v2963 = vadd.f32 %v2785, %v2949
      %v2964 = vadd.f32 %v2786, %v2950
      %v2965 = vadd.f32 %v2787, %v2951
      %v2966 = vadd.f32 %v2788, %v2952
      %v2967 = vadd.f32 %v2789, %v2953
      %v2968 = vadd.f32 %v2790, %v2954
      %v2969 = vadd.f32 %v2791, %v2955
      %v2970 = vadd.f32 %v2792, %v2956
      %v2971 = vadd.f32 %v2793, %v2957
      %v2972 = vadd.f32 %v2794, %v2958
      %v2973 = vadd.f32 %v2795, %v2959
      %v2974 = vadd.f32 %v2796, %v2960
      %v2975 = vadd.f32 %v2797, %v2961
      %v2976 = vstv %s2944
      %v2977 = vmul.f32 %v2976, %v2898
      %v2978 = vmul.f32 %v2976, %v2899
      %v2979 = vmul.f32 %v2976, %v2900
      %v2980 = vmul.f32 %v2976, %v2901
      %v2981 = vmul.f32 %v2976, %v2902
      %v2982 = vmul.f32 %v2976, %v2903
      %v2983 = vmul.f32 %v2976, %v2904
      %v2984 = vmul.f32 %v2976, %v2905
      %v2985 = vmul.f32 %v2976, %v2906
      %v2986 = vmul.f32 %v2976, %v2907
      %v2987 = vmul.f32 %v2976, %v2908
      %v2988 = vmul.f32 %v2976, %v2909
      %v2989 = vmul.f32 %v2976, %v2910
      %v2990 = vmul.f32 %v2976, %v2911
      %v2991 = vadd.f32 %v2962, %v2977
      %v2992 = vadd.f32 %v2963, %v2978
      %v2993 = vadd.f32 %v2964, %v2979
      %v2994 = vadd.f32 %v2965, %v2980
      %v2995 = vadd.f32 %v2966, %v2981
      %v2996 = vadd.f32 %v2967, %v2982
      %v2997 = vadd.f32 %v2968, %v2983
      %v2998 = vadd.f32 %v2969, %v2984
      %v2999 = vadd.f32 %v2970, %v2985
      %v3000 = vadd.f32 %v2971, %v2986
      %v3001 = vadd.f32 %v2972, %v2987
      %v3002 = vadd.f32 %v2973, %v2988
      %v3003 = vadd.f32 %v2974, %v2989
      %v3004 = vadd.f32 %v2975, %v2990
      %v3005 = vstv %s2946
      %v3006 = vmul.f32 %v3005, %v2912
      %v3007 = vmul.f32 %v3005, %v2913
      %v3008 = vmul.f32 %v3005, %v2914
      %v3009 = vmul.f32 %v3005, %v2915
      %v3010 = vmul.f32 %v3005, %v2916
      %v3011 = vmul.f32 %v3005, %v2917
      %v3012 = vmul.f32 %v3005, %v2918
      %v3013 = vmul.f32 %v3005, %v2919
      %v3014 = vmul.f32 %v3005, %v2920
      %v3015 = vmul.f32 %v3005, %v2921
      %v3016 = vmul.f32 %v3005, %v2922
      %v3017 = vmul.f32 %v3005, %v2923
      %v3018 = vmul.f32 %v3005, %v2924
      %v3019 = vmul.f32 %v3005, %v2925
      %v3020 = vadd.f32 %v2991, %v3006
      %v3021 = vadd.f32 %v2992, %v3007
      %v3022 = vadd.f32 %v2993, %v3008
      %v3023 = vadd.f32 %v2994, %v3009
      %v3024 = vadd.f32 %v2995, %v3010
      %v3025 = vadd.f32 %v2996, %v3011
      %v3026 = vadd.f32 %v2997, %v3012
      %v3027 = vadd.f32 %v2998, %v3013
      %v3028 = vadd.f32 %v2999, %v3014
      %v3029 = vadd.f32 %v3000, %v3015
      %v3030 = vadd.f32 %v3001, %v3016
      %v3031 = vadd.f32 %v3002, %v3017
      %v3032 = vadd.f32 %v3003, %v3018
      %v3033 = vadd.f32 %v3004, %v3019
      %v3034 = vmul.f32 %v2947, %v2898
      %v3035 = vmul.f32 %v2947, %v2899
      %v3036 = vmul.f32 %v2947, %v2900
      %v3037 = vmul.f32 %v2947, %v2901
      %v3038 = vmul.f32 %v2947, %v2902
      %v3039 = vmul.f32 %v2947, %v2903
      %v3040 = vmul.f32 %v2947, %v2904
      %v3041 = vmul.f32 %v2947, %v2905
      %v3042 = vmul.f32 %v2947, %v2906
      %v3043 = vmul.f32 %v2947, %v2907
      %v3044 = vmul.f32 %v2947, %v2908
      %v3045 = vmul.f32 %v2947, %v2909
      %v3046 = vmul.f32 %v2947, %v2910
      %v3047 = vmul.f32 %v2947, %v2911
      %v3048 = vadd.f32 %v2868, %v3034
      %v3049 = vadd.f32 %v2869, %v3035
      %v3050 = vadd.f32 %v2870, %v3036
      %v3051 = vadd.f32 %v2871, %v3037
      %v3052 = vadd.f32 %v2872, %v3038
      %v3053 = vadd.f32 %v2873, %v3039
      %v3054 = vadd.f32 %v2874, %v3040
      %v3055 = vadd.f32 %v2875, %v3041
      %v3056 = vadd.f32 %v2876, %v3042
      %v3057 = vadd.f32 %v2877, %v3043
      %v3058 = vadd.f32 %v2878, %v3044
      %v3059 = vadd.f32 %v2879, %v3045
      %v3060 = vadd.f32 %v2880, %v3046
      %v3061 = vadd.f32 %v2881, %v3047
      %v3062 = vmul.f32 %v2976, %v2912
      %v3063 = vmul.f32 %v2976, %v2913
      %v3064 = vmul.f32 %v2976, %v2914
      %v3065 = vmul.f32 %v2976, %v2915
      %v3066 = vmul.f32 %v2976, %v2916
      %v3067 = vmul.f32 %v2976, %v2917
      %v3068 = vmul.f32 %v2976, %v2918
      %v3069 = vmul.f32 %v2976, %v2919
      %v3070 = vmul.f32 %v2976, %v2920
      %v3071 = vmul.f32 %v2976, %v2921
      %v3072 = vmul.f32 %v2976, %v2922
      %v3073 = vmul.f32 %v2976, %v2923
      %v3074 = vmul.f32 %v2976, %v2924
      %v3075 = vmul.f32 %v2976, %v2925
      %v3076 = vadd.f32 %v3048, %v3062
      %v3077 = vadd.f32 %v3049, %v3063
      %v3078 = vadd.f32 %v3050, %v3064
      %v3079 = vadd.f32 %v3051, %v3065
      %v3080 = vadd.f32 %v3052, %v3066
      %v3081 = vadd.f32 %v3053, %v3067
      %v3082 = vadd.f32 %v3054, %v3068
      %v3083 = vadd.f32 %v3055, %v3069
      %v3084 = vadd.f32 %v3056, %v3070
      %v3085 = vadd.f32 %v3057, %v3071
      %v3086 = vadd.f32 %v3058, %v3072
      %v3087 = vadd.f32 %v3059, %v3073
      %v3088 = vadd.f32 %v3060, %v3074
      %v3089 = vadd.f32 %v3061, %v3075
      %v3090 = vmul.f32 %v3005, %v2926
      %v3091 = vmul.f32 %v3005, %v2927
      %v3092 = vmul.f32 %v3005, %v2928
      %v3093 = vmul.f32 %v3005, %v2929
      %v3094 = vmul.f32 %v3005, %v2930
      %v3095 = vmul.f32 %v3005, %v2931
      %v3096 = vmul.f32 %v3005, %v2932
      %v3097 = vmul.f32 %v3005, %v2933
      %v3098 = vmul.f32 %v3005, %v2934
      %v3099 = vmul.f32 %v3005, %v2935
      %v3100 = vmul.f32 %v3005, %v2936
      %v3101 = vmul.f32 %v3005, %v2937
      %v3102 = vmul.f32 %v3005, %v2938
      %v3103 = vmul.f32 %v3005, %v2939
      %v3104 = vadd.f32 %v3076, %v3090
      %v3105 = vadd.f32 %v3077, %v3091
      %v3106 = vadd.f32 %v3078, %v3092
      %v3107 = vadd.f32 %v3079, %v3093
      %v3108 = vadd.f32 %v3080, %v3094
      %v3109 = vadd.f32 %v3081, %v3095
      %v3110 = vadd.f32 %v3082, %v3096
      %v3111 = vadd.f32 %v3083, %v3097
      %v3112 = vadd.f32 %v3084, %v3098
      %v3113 = vadd.f32 %v3085, %v3099
      %v3114 = vadd.f32 %v3086, %v3100
      %v3115 = vadd.f32 %v3087, %v3101
      %v3116 = vadd.f32 %v3088, %v3102
      %v3117 = vadd.f32 %v3089, %v3103
      %s3118 = scalar_lea.vmem %s2, 520
      %v3119 = vld [vmem:[%s3118] sm:$0x7f]
      %v3120 = vld [vmem:[%s3118 + $0x8] sm:$0x7f]
      %v3121 = vld [vmem:[%s3118 + $0x10] sm:$0x7f]
      %v3122 = vld [vmem:[%s3118 + $0x18] sm:$0x7f]
      %v3123 = vld [vmem:[%s3118 + $0x20] sm:$0x7f]
      %v3124 = vld [vmem:[%s3118 + $0x28] sm:$0x7f]
      %v3125 = vld [vmem:[%s3118 + $0x30] sm:$0x7f]
      %v3126 = vld [vmem:[%s3118 + $0x38] sm:$0x7f]
      %v3127 = vld [vmem:[%s3118 + $0x40] sm:$0x7f]
      %v3128 = vld [vmem:[%s3118 + $0x48] sm:$0x7f]
      %v3129 = vld [vmem:[%s3118 + $0x50] sm:$0x7f]
      %v3130 = vld [vmem:[%s3118 + $0x58] sm:$0x7f]
      %v3131 = vld [vmem:[%s3118 + $0x60] sm:$0x7f]
      %v3132 = vld [vmem:[%s3118 + $0x68] sm:$0x7f]
      %s3133 = scalar_lea.vmem %s3, 520
      %v3134 = vld [vmem:[%s3133] sm:$0x7f]
      %v3135 = vld [vmem:[%s3133 + $0x8] sm:$0x7f]
      %v3136 = vld [vmem:[%s3133 + $0x10] sm:$0x7f]
      %v3137 = vld [vmem:[%s3133 + $0x18] sm:$0x7f]
      %v3138 = vld [vmem:[%s3133 + $0x20] sm:$0x7f]
      %v3139 = vld [vmem:[%s3133 + $0x28] sm:$0x7f]
      %v3140 = vld [vmem:[%s3133 + $0x30] sm:$0x7f]
      %v3141 = vld [vmem:[%s3133 + $0x38] sm:$0x7f]
      %v3142 = vld [vmem:[%s3133 + $0x40] sm:$0x7f]
      %v3143 = vld [vmem:[%s3133 + $0x48] sm:$0x7f]
      %v3144 = vld [vmem:[%s3133 + $0x50] sm:$0x7f]
      %v3145 = vld [vmem:[%s3133 + $0x58] sm:$0x7f]
      %v3146 = vld [vmem:[%s3133 + $0x60] sm:$0x7f]
      %v3147 = vld [vmem:[%s3133 + $0x68] sm:$0x7f]
      %v3148 = vld [vmem:[%s3118 + $0x1] sm:$0x7f]
      %v3149 = vld [vmem:[%s3118 + $0x9] sm:$0x7f]
      %v3150 = vld [vmem:[%s3118 + $0x11] sm:$0x7f]
      %v3151 = vld [vmem:[%s3118 + $0x19] sm:$0x7f]
      %v3152 = vld [vmem:[%s3118 + $0x21] sm:$0x7f]
      %v3153 = vld [vmem:[%s3118 + $0x29] sm:$0x7f]
      %v3154 = vld [vmem:[%s3118 + $0x31] sm:$0x7f]
      %v3155 = vld [vmem:[%s3118 + $0x39] sm:$0x7f]
      %v3156 = vld [vmem:[%s3118 + $0x41] sm:$0x7f]
      %v3157 = vld [vmem:[%s3118 + $0x49] sm:$0x7f]
      %v3158 = vld [vmem:[%s3118 + $0x51] sm:$0x7f]
      %v3159 = vld [vmem:[%s3118 + $0x59] sm:$0x7f]
      %v3160 = vld [vmem:[%s3118 + $0x61] sm:$0x7f]
      %v3161 = vld [vmem:[%s3118 + $0x69] sm:$0x7f]
      %v3162 = vld [vmem:[%s3133 + $0x1] sm:$0x7f]
      %v3163 = vld [vmem:[%s3133 + $0x9] sm:$0x7f]
      %v3164 = vld [vmem:[%s3133 + $0x11] sm:$0x7f]
      %v3165 = vld [vmem:[%s3133 + $0x19] sm:$0x7f]
      %v3166 = vld [vmem:[%s3133 + $0x21] sm:$0x7f]
      %v3167 = vld [vmem:[%s3133 + $0x29] sm:$0x7f]
      %v3168 = vld [vmem:[%s3133 + $0x31] sm:$0x7f]
      %v3169 = vld [vmem:[%s3133 + $0x39] sm:$0x7f]
      %v3170 = vld [vmem:[%s3133 + $0x41] sm:$0x7f]
      %v3171 = vld [vmem:[%s3133 + $0x49] sm:$0x7f]
      %v3172 = vld [vmem:[%s3133 + $0x51] sm:$0x7f]
      %v3173 = vld [vmem:[%s3133 + $0x59] sm:$0x7f]
      %v3174 = vld [vmem:[%s3133 + $0x61] sm:$0x7f]
      %v3175 = vld [vmem:[%s3133 + $0x69] sm:$0x7f]
      %s3176 = smul.u32 %s2940, 3
      %s3177 = sadd.s32 %s3176, 1
      %s3178 = smul.u32 %s3177, 3
      %s3179 = sld [smem:[#allocation2 + %s3178]]
      %s3180 = sadd.s32 %s3178, 1
      %s3181 = sld [smem:[#allocation2 + %s3180]]
      %s3182 = sadd.s32 %s3178, 2
      %s3183 = sld [smem:[#allocation2 + %s3182]]
      %v3184 = vstv %s3179
      %v3185 = vmul.f32 %v3184, %v3119
      %v3186 = vmul.f32 %v3184, %v3120
      %v3187 = vmul.f32 %v3184, %v3121
      %v3188 = vmul.f32 %v3184, %v3122
      %v3189 = vmul.f32 %v3184, %v3123
      %v3190 = vmul.f32 %v3184, %v3124
      %v3191 = vmul.f32 %v3184, %v3125
      %v3192 = vmul.f32 %v3184, %v3126
      %v3193 = vmul.f32 %v3184, %v3127
      %v3194 = vmul.f32 %v3184, %v3128
      %v3195 = vmul.f32 %v3184, %v3129
      %v3196 = vmul.f32 %v3184, %v3130
      %v3197 = vmul.f32 %v3184, %v3131
      %v3198 = vmul.f32 %v3184, %v3132
      %v3199 = vadd.f32 %v3020, %v3185
      %v3200 = vadd.f32 %v3021, %v3186
      %v3201 = vadd.f32 %v3022, %v3187
      %v3202 = vadd.f32 %v3023, %v3188
      %v3203 = vadd.f32 %v3024, %v3189
      %v3204 = vadd.f32 %v3025, %v3190
      %v3205 = vadd.f32 %v3026, %v3191
      %v3206 = vadd.f32 %v3027, %v3192
      %v3207 = vadd.f32 %v3028, %v3193
      %v3208 = vadd.f32 %v3029, %v3194
      %v3209 = vadd.f32 %v3030, %v3195
      %v3210 = vadd.f32 %v3031, %v3196
      %v3211 = vadd.f32 %v3032, %v3197
      %v3212 = vadd.f32 %v3033, %v3198
      %v3213 = vstv %s3181
      %v3214 = vmul.f32 %v3213, %v3134
      %v3215 = vmul.f32 %v3213, %v3135
      %v3216 = vmul.f32 %v3213, %v3136
      %v3217 = vmul.f32 %v3213, %v3137
      %v3218 = vmul.f32 %v3213, %v3138
      %v3219 = vmul.f32 %v3213, %v3139
      %v3220 = vmul.f32 %v3213, %v3140
      %v3221 = vmul.f32 %v3213, %v3141
      %v3222 = vmul.f32 %v3213, %v3142
      %v3223 = vmul.f32 %v3213, %v3143
      %v3224 = vmul.f32 %v3213, %v3144
      %v3225 = vmul.f32 %v3213, %v3145
      %v3226 = vmul.f32 %v3213, %v3146
      %v3227 = vmul.f32 %v3213, %v3147
      %v3228 = vadd.f32 %v3199, %v3214
      %v3229 = vadd.f32 %v3200, %v3215
      %v3230 = vadd.f32 %v3201, %v3216
      %v3231 = vadd.f32 %v3202, %v3217
      %v3232 = vadd.f32 %v3203, %v3218
      %v3233 = vadd.f32 %v3204, %v3219
      %v3234 = vadd.f32 %v3205, %v3220
      %v3235 = vadd.f32 %v3206, %v3221
      %v3236 = vadd.f32 %v3207, %v3222
      %v3237 = vadd.f32 %v3208, %v3223
      %v3238 = vadd.f32 %v3209, %v3224
      %v3239 = vadd.f32 %v3210, %v3225
      %v3240 = vadd.f32 %v3211, %v3226
      %v3241 = vadd.f32 %v3212, %v3227
      %v3242 = vstv %s3183
      %v3243 = vmul.f32 %v3242, %v3148
      %v3244 = vmul.f32 %v3242, %v3149
      %v3245 = vmul.f32 %v3242, %v3150
      %v3246 = vmul.f32 %v3242, %v3151
      %v3247 = vmul.f32 %v3242, %v3152
      %v3248 = vmul.f32 %v3242, %v3153
      %v3249 = vmul.f32 %v3242, %v3154
      %v3250 = vmul.f32 %v3242, %v3155
      %v3251 = vmul.f32 %v3242, %v3156
      %v3252 = vmul.f32 %v3242, %v3157
      %v3253 = vmul.f32 %v3242, %v3158
      %v3254 = vmul.f32 %v3242, %v3159
      %v3255 = vmul.f32 %v3242, %v3160
      %v3256 = vmul.f32 %v3242, %v3161
      %v3257 = vadd.f32 %v3228, %v3243
      %v3258 = vadd.f32 %v3229, %v3244
      %v3259 = vadd.f32 %v3230, %v3245
      %v3260 = vadd.f32 %v3231, %v3246
      %v3261 = vadd.f32 %v3232, %v3247
      %v3262 = vadd.f32 %v3233, %v3248
      %v3263 = vadd.f32 %v3234, %v3249
      %v3264 = vadd.f32 %v3235, %v3250
      %v3265 = vadd.f32 %v3236, %v3251
      %v3266 = vadd.f32 %v3237, %v3252
      %v3267 = vadd.f32 %v3238, %v3253
      %v3268 = vadd.f32 %v3239, %v3254
      %v3269 = vadd.f32 %v3240, %v3255
      %v3270 = vadd.f32 %v3241, %v3256
      %v3271 = vmul.f32 %v3184, %v3134
      %v3272 = vmul.f32 %v3184, %v3135
      %v3273 = vmul.f32 %v3184, %v3136
      %v3274 = vmul.f32 %v3184, %v3137
      %v3275 = vmul.f32 %v3184, %v3138
      %v3276 = vmul.f32 %v3184, %v3139
      %v3277 = vmul.f32 %v3184, %v3140
      %v3278 = vmul.f32 %v3184, %v3141
      %v3279 = vmul.f32 %v3184, %v3142
      %v3280 = vmul.f32 %v3184, %v3143
      %v3281 = vmul.f32 %v3184, %v3144
      %v3282 = vmul.f32 %v3184, %v3145
      %v3283 = vmul.f32 %v3184, %v3146
      %v3284 = vmul.f32 %v3184, %v3147
      %v3285 = vadd.f32 %v3104, %v3271
      %v3286 = vadd.f32 %v3105, %v3272
      %v3287 = vadd.f32 %v3106, %v3273
      %v3288 = vadd.f32 %v3107, %v3274
      %v3289 = vadd.f32 %v3108, %v3275
      %v3290 = vadd.f32 %v3109, %v3276
      %v3291 = vadd.f32 %v3110, %v3277
      %v3292 = vadd.f32 %v3111, %v3278
      %v3293 = vadd.f32 %v3112, %v3279
      %v3294 = vadd.f32 %v3113, %v3280
      %v3295 = vadd.f32 %v3114, %v3281
      %v3296 = vadd.f32 %v3115, %v3282
      %v3297 = vadd.f32 %v3116, %v3283
      %v3298 = vadd.f32 %v3117, %v3284
      %v3299 = vmul.f32 %v3213, %v3148
      %v3300 = vmul.f32 %v3213, %v3149
      %v3301 = vmul.f32 %v3213, %v3150
      %v3302 = vmul.f32 %v3213, %v3151
      %v3303 = vmul.f32 %v3213, %v3152
      %v3304 = vmul.f32 %v3213, %v3153
      %v3305 = vmul.f32 %v3213, %v3154
      %v3306 = vmul.f32 %v3213, %v3155
      %v3307 = vmul.f32 %v3213, %v3156
      %v3308 = vmul.f32 %v3213, %v3157
      %v3309 = vmul.f32 %v3213, %v3158
      %v3310 = vmul.f32 %v3213, %v3159
      %v3311 = vmul.f32 %v3213, %v3160
      %v3312 = vmul.f32 %v3213, %v3161
      %v3313 = vadd.f32 %v3285, %v3299
      %v3314 = vadd.f32 %v3286, %v3300
      %v3315 = vadd.f32 %v3287, %v3301
      %v3316 = vadd.f32 %v3288, %v3302
      %v3317 = vadd.f32 %v3289, %v3303
      %v3318 = vadd.f32 %v3290, %v3304
      %v3319 = vadd.f32 %v3291, %v3305
      %v3320 = vadd.f32 %v3292, %v3306
      %v3321 = vadd.f32 %v3293, %v3307
      %v3322 = vadd.f32 %v3294, %v3308
      %v3323 = vadd.f32 %v3295, %v3309
      %v3324 = vadd.f32 %v3296, %v3310
      %v3325 = vadd.f32 %v3297, %v3311
      %v3326 = vadd.f32 %v3298, %v3312
      %v3327 = vmul.f32 %v3242, %v3162
      %v3328 = vmul.f32 %v3242, %v3163
      %v3329 = vmul.f32 %v3242, %v3164
      %v3330 = vmul.f32 %v3242, %v3165
      %v3331 = vmul.f32 %v3242, %v3166
      %v3332 = vmul.f32 %v3242, %v3167
      %v3333 = vmul.f32 %v3242, %v3168
      %v3334 = vmul.f32 %v3242, %v3169
      %v3335 = vmul.f32 %v3242, %v3170
      %v3336 = vmul.f32 %v3242, %v3171
      %v3337 = vmul.f32 %v3242, %v3172
      %v3338 = vmul.f32 %v3242, %v3173
      %v3339 = vmul.f32 %v3242, %v3174
      %v3340 = vmul.f32 %v3242, %v3175
      %v3341 = vadd.f32 %v3313, %v3327
      %v3342 = vadd.f32 %v3314, %v3328
      %v3343 = vadd.f32 %v3315, %v3329
      %v3344 = vadd.f32 %v3316, %v3330
      %v3345 = vadd.f32 %v3317, %v3331
      %v3346 = vadd.f32 %v3318, %v3332
      %v3347 = vadd.f32 %v3319, %v3333
      %v3348 = vadd.f32 %v3320, %v3334
      %v3349 = vadd.f32 %v3321, %v3335
      %v3350 = vadd.f32 %v3322, %v3336
      %v3351 = vadd.f32 %v3323, %v3337
      %v3352 = vadd.f32 %v3324, %v3338
      %v3353 = vadd.f32 %v3325, %v3339
      %v3354 = vadd.f32 %v3326, %v3340
      %s3355 = scalar_lea.vmem %s2, 528
      %v3356 = vld [vmem:[%s3355] sm:$0x7f]
      %v3357 = vld [vmem:[%s3355 + $0x8] sm:$0x7f]
      %v3358 = vld [vmem:[%s3355 + $0x10] sm:$0x7f]
      %v3359 = vld [vmem:[%s3355 + $0x18] sm:$0x7f]
      %v3360 = vld [vmem:[%s3355 + $0x20] sm:$0x7f]
      %v3361 = vld [vmem:[%s3355 + $0x28] sm:$0x7f]
      %v3362 = vld [vmem:[%s3355 + $0x30] sm:$0x7f]
      %v3363 = vld [vmem:[%s3355 + $0x38] sm:$0x7f]
      %v3364 = vld [vmem:[%s3355 + $0x40] sm:$0x7f]
      %v3365 = vld [vmem:[%s3355 + $0x48] sm:$0x7f]
      %v3366 = vld [vmem:[%s3355 + $0x50] sm:$0x7f]
      %v3367 = vld [vmem:[%s3355 + $0x58] sm:$0x7f]
      %v3368 = vld [vmem:[%s3355 + $0x60] sm:$0x7f]
      %v3369 = vld [vmem:[%s3355 + $0x68] sm:$0x7f]
      %s3370 = scalar_lea.vmem %s3, 528
      %v3371 = vld [vmem:[%s3370] sm:$0x7f]
      %v3372 = vld [vmem:[%s3370 + $0x8] sm:$0x7f]
      %v3373 = vld [vmem:[%s3370 + $0x10] sm:$0x7f]
      %v3374 = vld [vmem:[%s3370 + $0x18] sm:$0x7f]
      %v3375 = vld [vmem:[%s3370 + $0x20] sm:$0x7f]
      %v3376 = vld [vmem:[%s3370 + $0x28] sm:$0x7f]
      %v3377 = vld [vmem:[%s3370 + $0x30] sm:$0x7f]
      %v3378 = vld [vmem:[%s3370 + $0x38] sm:$0x7f]
      %v3379 = vld [vmem:[%s3370 + $0x40] sm:$0x7f]
      %v3380 = vld [vmem:[%s3370 + $0x48] sm:$0x7f]
      %v3381 = vld [vmem:[%s3370 + $0x50] sm:$0x7f]
      %v3382 = vld [vmem:[%s3370 + $0x58] sm:$0x7f]
      %v3383 = vld [vmem:[%s3370 + $0x60] sm:$0x7f]
      %v3384 = vld [vmem:[%s3370 + $0x68] sm:$0x7f]
      %v3385 = vld [vmem:[%s3355 + $0x1] sm:$0x7f]
      %v3386 = vld [vmem:[%s3355 + $0x9] sm:$0x7f]
      %v3387 = vld [vmem:[%s3355 + $0x11] sm:$0x7f]
      %v3388 = vld [vmem:[%s3355 + $0x19] sm:$0x7f]
      %v3389 = vld [vmem:[%s3355 + $0x21] sm:$0x7f]
      %v3390 = vld [vmem:[%s3355 + $0x29] sm:$0x7f]
      %v3391 = vld [vmem:[%s3355 + $0x31] sm:$0x7f]
      %v3392 = vld [vmem:[%s3355 + $0x39] sm:$0x7f]
      %v3393 = vld [vmem:[%s3355 + $0x41] sm:$0x7f]
      %v3394 = vld [vmem:[%s3355 + $0x49] sm:$0x7f]
      %v3395 = vld [vmem:[%s3355 + $0x51] sm:$0x7f]
      %v3396 = vld [vmem:[%s3355 + $0x59] sm:$0x7f]
      %v3397 = vld [vmem:[%s3355 + $0x61] sm:$0x7f]
      %v3398 = vld [vmem:[%s3355 + $0x69] sm:$0x7f]
      %v3399 = vld [vmem:[%s3370 + $0x1] sm:$0x7f]
      %v3400 = vld [vmem:[%s3370 + $0x9] sm:$0x7f]
      %v3401 = vld [vmem:[%s3370 + $0x11] sm:$0x7f]
      %v3402 = vld [vmem:[%s3370 + $0x19] sm:$0x7f]
      %v3403 = vld [vmem:[%s3370 + $0x21] sm:$0x7f]
      %v3404 = vld [vmem:[%s3370 + $0x29] sm:$0x7f]
      %v3405 = vld [vmem:[%s3370 + $0x31] sm:$0x7f]
      %v3406 = vld [vmem:[%s3370 + $0x39] sm:$0x7f]
      %v3407 = vld [vmem:[%s3370 + $0x41] sm:$0x7f]
      %v3408 = vld [vmem:[%s3370 + $0x49] sm:$0x7f]
      %v3409 = vld [vmem:[%s3370 + $0x51] sm:$0x7f]
      %v3410 = vld [vmem:[%s3370 + $0x59] sm:$0x7f]
      %v3411 = vld [vmem:[%s3370 + $0x61] sm:$0x7f]
      %v3412 = vld [vmem:[%s3370 + $0x69] sm:$0x7f]
      %s3413 = sadd.s32 %s3176, 2
      %s3414 = smul.u32 %s3413, 3
      %s3415 = sld [smem:[#allocation2 + %s3414]]
      %s3416 = sadd.s32 %s3414, 1
      %s3417 = sld [smem:[#allocation2 + %s3416]]
      %s3418 = sadd.s32 %s3414, 2
      %s3419 = sld [smem:[#allocation2 + %s3418]]
      %v3420 = vstv %s3415
      %v3421 = vmul.f32 %v3420, %v3356
      %v3422 = vmul.f32 %v3420, %v3357
      %v3423 = vmul.f32 %v3420, %v3358
      %v3424 = vmul.f32 %v3420, %v3359
      %v3425 = vmul.f32 %v3420, %v3360
      %v3426 = vmul.f32 %v3420, %v3361
      %v3427 = vmul.f32 %v3420, %v3362
      %v3428 = vmul.f32 %v3420, %v3363
      %v3429 = vmul.f32 %v3420, %v3364
      %v3430 = vmul.f32 %v3420, %v3365
      %v3431 = vmul.f32 %v3420, %v3366
      %v3432 = vmul.f32 %v3420, %v3367
      %v3433 = vmul.f32 %v3420, %v3368
      %v3434 = vmul.f32 %v3420, %v3369
      %v3435 = vadd.f32 %v3257, %v3421
      %v3436 = vadd.f32 %v3258, %v3422
      %v3437 = vadd.f32 %v3259, %v3423
      %v3438 = vadd.f32 %v3260, %v3424
      %v3439 = vadd.f32 %v3261, %v3425
      %v3440 = vadd.f32 %v3262, %v3426
      %v3441 = vadd.f32 %v3263, %v3427
      %v3442 = vadd.f32 %v3264, %v3428
      %v3443 = vadd.f32 %v3265, %v3429
      %v3444 = vadd.f32 %v3266, %v3430
      %v3445 = vadd.f32 %v3267, %v3431
      %v3446 = vadd.f32 %v3268, %v3432
      %v3447 = vadd.f32 %v3269, %v3433
      %v3448 = vadd.f32 %v3270, %v3434
      %v3449 = vstv %s3417
      %v3450 = vmul.f32 %v3449, %v3371
      %v3451 = vmul.f32 %v3449, %v3372
      %v3452 = vmul.f32 %v3449, %v3373
      %v3453 = vmul.f32 %v3449, %v3374
      %v3454 = vmul.f32 %v3449, %v3375
      %v3455 = vmul.f32 %v3449, %v3376
      %v3456 = vmul.f32 %v3449, %v3377
      %v3457 = vmul.f32 %v3449, %v3378
      %v3458 = vmul.f32 %v3449, %v3379
      %v3459 = vmul.f32 %v3449, %v3380
      %v3460 = vmul.f32 %v3449, %v3381
      %v3461 = vmul.f32 %v3449, %v3382
      %v3462 = vmul.f32 %v3449, %v3383
      %v3463 = vmul.f32 %v3449, %v3384
      %v3464 = vadd.f32 %v3435, %v3450
      %v3465 = vadd.f32 %v3436, %v3451
      %v3466 = vadd.f32 %v3437, %v3452
      %v3467 = vadd.f32 %v3438, %v3453
      %v3468 = vadd.f32 %v3439, %v3454
      %v3469 = vadd.f32 %v3440, %v3455
      %v3470 = vadd.f32 %v3441, %v3456
      %v3471 = vadd.f32 %v3442, %v3457
      %v3472 = vadd.f32 %v3443, %v3458
      %v3473 = vadd.f32 %v3444, %v3459
      %v3474 = vadd.f32 %v3445, %v3460
      %v3475 = vadd.f32 %v3446, %v3461
      %v3476 = vadd.f32 %v3447, %v3462
      %v3477 = vadd.f32 %v3448, %v3463
      %v3478 = vstv %s3419
      %v3479 = vmul.f32 %v3478, %v3385
      %v3480 = vmul.f32 %v3478, %v3386
      %v3481 = vmul.f32 %v3478, %v3387
      %v3482 = vmul.f32 %v3478, %v3388
      %v3483 = vmul.f32 %v3478, %v3389
      %v3484 = vmul.f32 %v3478, %v3390
      %v3485 = vmul.f32 %v3478, %v3391
      %v3486 = vmul.f32 %v3478, %v3392
      %v3487 = vmul.f32 %v3478, %v3393
      %v3488 = vmul.f32 %v3478, %v3394
      %v3489 = vmul.f32 %v3478, %v3395
      %v3490 = vmul.f32 %v3478, %v3396
      %v3491 = vmul.f32 %v3478, %v3397
      %v3492 = vmul.f32 %v3478, %v3398
      %v3493 = vadd.f32 %v3464, %v3479
      %v3494 = vadd.f32 %v3465, %v3480
      %v3495 = vadd.f32 %v3466, %v3481
      %v3496 = vadd.f32 %v3467, %v3482
      %v3497 = vadd.f32 %v3468, %v3483
      %v3498 = vadd.f32 %v3469, %v3484
      %v3499 = vadd.f32 %v3470, %v3485
      %v3500 = vadd.f32 %v3471, %v3486
      %v3501 = vadd.f32 %v3472, %v3487
      %v3502 = vadd.f32 %v3473, %v3488
      %v3503 = vadd.f32 %v3474, %v3489
      %v3504 = vadd.f32 %v3475, %v3490
      %v3505 = vadd.f32 %v3476, %v3491
      %v3506 = vadd.f32 %v3477, %v3492
      %v3507 = vmul.f32 %v3420, %v3371
      %v3508 = vmul.f32 %v3420, %v3372
      %v3509 = vmul.f32 %v3420, %v3373
      %v3510 = vmul.f32 %v3420, %v3374
      %v3511 = vmul.f32 %v3420, %v3375
      %v3512 = vmul.f32 %v3420, %v3376
      %v3513 = vmul.f32 %v3420, %v3377
      %v3514 = vmul.f32 %v3420, %v3378
      %v3515 = vmul.f32 %v3420, %v3379
      %v3516 = vmul.f32 %v3420, %v3380
      %v3517 = vmul.f32 %v3420, %v3381
      %v3518 = vmul.f32 %v3420, %v3382
      %v3519 = vmul.f32 %v3420, %v3383
      %v3520 = vmul.f32 %v3420, %v3384
      %v3521 = vadd.f32 %v3341, %v3507
      %v3522 = vadd.f32 %v3342, %v3508
      %v3523 = vadd.f32 %v3343, %v3509
      %v3524 = vadd.f32 %v3344, %v3510
      %v3525 = vadd.f32 %v3345, %v3511
      %v3526 = vadd.f32 %v3346, %v3512
      %v3527 = vadd.f32 %v3347, %v3513
      %v3528 = vadd.f32 %v3348, %v3514
      %v3529 = vadd.f32 %v3349, %v3515
      %v3530 = vadd.f32 %v3350, %v3516
      %v3531 = vadd.f32 %v3351, %v3517
      %v3532 = vadd.f32 %v3352, %v3518
      %v3533 = vadd.f32 %v3353, %v3519
      %v3534 = vadd.f32 %v3354, %v3520
      %v3535 = vmul.f32 %v3449, %v3385
      %v3536 = vmul.f32 %v3449, %v3386
      %v3537 = vmul.f32 %v3449, %v3387
      %v3538 = vmul.f32 %v3449, %v3388
      %v3539 = vmul.f32 %v3449, %v3389
      %v3540 = vmul.f32 %v3449, %v3390
      %v3541 = vmul.f32 %v3449, %v3391
      %v3542 = vmul.f32 %v3449, %v3392
      %v3543 = vmul.f32 %v3449, %v3393
      %v3544 = vmul.f32 %v3449, %v3394
      %v3545 = vmul.f32 %v3449, %v3395
      %v3546 = vmul.f32 %v3449, %v3396
      %v3547 = vmul.f32 %v3449, %v3397
      %v3548 = vmul.f32 %v3449, %v3398
      %v3549 = vadd.f32 %v3521, %v3535
      %v3550 = vadd.f32 %v3522, %v3536
      %v3551 = vadd.f32 %v3523, %v3537
      %v3552 = vadd.f32 %v3524, %v3538
      %v3553 = vadd.f32 %v3525, %v3539
      %v3554 = vadd.f32 %v3526, %v3540
      %v3555 = vadd.f32 %v3527, %v3541
      %v3556 = vadd.f32 %v3528, %v3542
      %v3557 = vadd.f32 %v3529, %v3543
      %v3558 = vadd.f32 %v3530, %v3544
      %v3559 = vadd.f32 %v3531, %v3545
      %v3560 = vadd.f32 %v3532, %v3546
      %v3561 = vadd.f32 %v3533, %v3547
      %v3562 = vadd.f32 %v3534, %v3548
      %v3563 = vmul.f32 %v3478, %v3399
      %v3564 = vmul.f32 %v3478, %v3400
      %v3565 = vmul.f32 %v3478, %v3401
      %v3566 = vmul.f32 %v3478, %v3402
      %v3567 = vmul.f32 %v3478, %v3403
      %v3568 = vmul.f32 %v3478, %v3404
      %v3569 = vmul.f32 %v3478, %v3405
      %v3570 = vmul.f32 %v3478, %v3406
      %v3571 = vmul.f32 %v3478, %v3407
      %v3572 = vmul.f32 %v3478, %v3408
      %v3573 = vmul.f32 %v3478, %v3409
      %v3574 = vmul.f32 %v3478, %v3410
      %v3575 = vmul.f32 %v3478, %v3411
      %v3576 = vmul.f32 %v3478, %v3412
      %v3577 = vadd.f32 %v3549, %v3563
      %v3578 = vadd.f32 %v3550, %v3564
      %v3579 = vadd.f32 %v3551, %v3565
      %v3580 = vadd.f32 %v3552, %v3566
      %v3581 = vadd.f32 %v3553, %v3567
      %v3582 = vadd.f32 %v3554, %v3568
      %v3583 = vadd.f32 %v3555, %v3569
      %v3584 = vadd.f32 %v3556, %v3570
      %v3585 = vadd.f32 %v3557, %v3571
      %v3586 = vadd.f32 %v3558, %v3572
      %v3587 = vadd.f32 %v3559, %v3573
      %v3588 = vadd.f32 %v3560, %v3574
      %v3589 = vadd.f32 %v3561, %v3575
      %v3590 = vadd.f32 %v3562, %v3576
      %s3591 = scalar_lea.vmem %s2, 640
      %v3592 = vld [vmem:[%s3591] sm:$0x7f]
      %v3593 = vld [vmem:[%s3591 + $0x8] sm:$0x7f]
      %v3594 = vld [vmem:[%s3591 + $0x10] sm:$0x7f]
      %v3595 = vld [vmem:[%s3591 + $0x18] sm:$0x7f]
      %v3596 = vld [vmem:[%s3591 + $0x20] sm:$0x7f]
      %v3597 = vld [vmem:[%s3591 + $0x28] sm:$0x7f]
      %v3598 = vld [vmem:[%s3591 + $0x30] sm:$0x7f]
      %v3599 = vld [vmem:[%s3591 + $0x38] sm:$0x7f]
      %v3600 = vld [vmem:[%s3591 + $0x40] sm:$0x7f]
      %v3601 = vld [vmem:[%s3591 + $0x48] sm:$0x7f]
      %v3602 = vld [vmem:[%s3591 + $0x50] sm:$0x7f]
      %v3603 = vld [vmem:[%s3591 + $0x58] sm:$0x7f]
      %v3604 = vld [vmem:[%s3591 + $0x60] sm:$0x7f]
      %v3605 = vld [vmem:[%s3591 + $0x68] sm:$0x7f]
      %s3606 = scalar_lea.vmem %s3, 640
      %v3607 = vld [vmem:[%s3606] sm:$0x7f]
      %v3608 = vld [vmem:[%s3606 + $0x8] sm:$0x7f]
      %v3609 = vld [vmem:[%s3606 + $0x10] sm:$0x7f]
      %v3610 = vld [vmem:[%s3606 + $0x18] sm:$0x7f]
      %v3611 = vld [vmem:[%s3606 + $0x20] sm:$0x7f]
      %v3612 = vld [vmem:[%s3606 + $0x28] sm:$0x7f]
      %v3613 = vld [vmem:[%s3606 + $0x30] sm:$0x7f]
      %v3614 = vld [vmem:[%s3606 + $0x38] sm:$0x7f]
      %v3615 = vld [vmem:[%s3606 + $0x40] sm:$0x7f]
      %v3616 = vld [vmem:[%s3606 + $0x48] sm:$0x7f]
      %v3617 = vld [vmem:[%s3606 + $0x50] sm:$0x7f]
      %v3618 = vld [vmem:[%s3606 + $0x58] sm:$0x7f]
      %v3619 = vld [vmem:[%s3606 + $0x60] sm:$0x7f]
      %v3620 = vld [vmem:[%s3606 + $0x68] sm:$0x7f]
      %v3621 = vld [vmem:[%s3591 + $0x1] sm:$0x7f]
      %v3622 = vld [vmem:[%s3591 + $0x9] sm:$0x7f]
      %v3623 = vld [vmem:[%s3591 + $0x11] sm:$0x7f]
      %v3624 = vld [vmem:[%s3591 + $0x19] sm:$0x7f]
      %v3625 = vld [vmem:[%s3591 + $0x21] sm:$0x7f]
      %v3626 = vld [vmem:[%s3591 + $0x29] sm:$0x7f]
      %v3627 = vld [vmem:[%s3591 + $0x31] sm:$0x7f]
      %v3628 = vld [vmem:[%s3591 + $0x39] sm:$0x7f]
      %v3629 = vld [vmem:[%s3591 + $0x41] sm:$0x7f]
      %v3630 = vld [vmem:[%s3591 + $0x49] sm:$0x7f]
      %v3631 = vld [vmem:[%s3591 + $0x51] sm:$0x7f]
      %v3632 = vld [vmem:[%s3591 + $0x59] sm:$0x7f]
      %v3633 = vld [vmem:[%s3591 + $0x61] sm:$0x7f]
      %v3634 = vld [vmem:[%s3591 + $0x69] sm:$0x7f]
      %v3635 = vld [vmem:[%s3606 + $0x1] sm:$0x7f]
      %v3636 = vld [vmem:[%s3606 + $0x9] sm:$0x7f]
      %v3637 = vld [vmem:[%s3606 + $0x11] sm:$0x7f]
      %v3638 = vld [vmem:[%s3606 + $0x19] sm:$0x7f]
      %v3639 = vld [vmem:[%s3606 + $0x21] sm:$0x7f]
      %v3640 = vld [vmem:[%s3606 + $0x29] sm:$0x7f]
      %v3641 = vld [vmem:[%s3606 + $0x31] sm:$0x7f]
      %v3642 = vld [vmem:[%s3606 + $0x39] sm:$0x7f]
      %v3643 = vld [vmem:[%s3606 + $0x41] sm:$0x7f]
      %v3644 = vld [vmem:[%s3606 + $0x49] sm:$0x7f]
      %v3645 = vld [vmem:[%s3606 + $0x51] sm:$0x7f]
      %v3646 = vld [vmem:[%s3606 + $0x59] sm:$0x7f]
      %v3647 = vld [vmem:[%s3606 + $0x61] sm:$0x7f]
      %v3648 = vld [vmem:[%s3606 + $0x69] sm:$0x7f]
      %s3649 = sadd.s32 %s812, 5
      %s3650 = smul.u32 %s3649, 9
      %s3651 = sld [smem:[#allocation2 + %s3650]]
      %s3652 = sadd.s32 %s3650, 1
      %s3653 = sld [smem:[#allocation2 + %s3652]]
      %s3654 = sadd.s32 %s3650, 2
      %s3655 = sld [smem:[#allocation2 + %s3654]]
      %v3656 = vstv %s3651
      %v3657 = vmul.f32 %v3656, %v3592
      %v3658 = vmul.f32 %v3656, %v3593
      %v3659 = vmul.f32 %v3656, %v3594
      %v3660 = vmul.f32 %v3656, %v3595
      %v3661 = vmul.f32 %v3656, %v3596
      %v3662 = vmul.f32 %v3656, %v3597
      %v3663 = vmul.f32 %v3656, %v3598
      %v3664 = vmul.f32 %v3656, %v3599
      %v3665 = vmul.f32 %v3656, %v3600
      %v3666 = vmul.f32 %v3656, %v3601
      %v3667 = vmul.f32 %v3656, %v3602
      %v3668 = vmul.f32 %v3656, %v3603
      %v3669 = vmul.f32 %v3656, %v3604
      %v3670 = vmul.f32 %v3656, %v3605
      %v3671 = vadd.f32 %v3493, %v3657
      %v3672 = vadd.f32 %v3494, %v3658
      %v3673 = vadd.f32 %v3495, %v3659
      %v3674 = vadd.f32 %v3496, %v3660
      %v3675 = vadd.f32 %v3497, %v3661
      %v3676 = vadd.f32 %v3498, %v3662
      %v3677 = vadd.f32 %v3499, %v3663
      %v3678 = vadd.f32 %v3500, %v3664
      %v3679 = vadd.f32 %v3501, %v3665
      %v3680 = vadd.f32 %v3502, %v3666
      %v3681 = vadd.f32 %v3503, %v3667
      %v3682 = vadd.f32 %v3504, %v3668
      %v3683 = vadd.f32 %v3505, %v3669
      %v3684 = vadd.f32 %v3506, %v3670
      %v3685 = vstv %s3653
      %v3686 = vmul.f32 %v3685, %v3607
      %v3687 = vmul.f32 %v3685, %v3608
      %v3688 = vmul.f32 %v3685, %v3609
      %v3689 = vmul.f32 %v3685, %v3610
      %v3690 = vmul.f32 %v3685, %v3611
      %v3691 = vmul.f32 %v3685, %v3612
      %v3692 = vmul.f32 %v3685, %v3613
      %v3693 = vmul.f32 %v3685, %v3614
      %v3694 = vmul.f32 %v3685, %v3615
      %v3695 = vmul.f32 %v3685, %v3616
      %v3696 = vmul.f32 %v3685, %v3617
      %v3697 = vmul.f32 %v3685, %v3618
      %v3698 = vmul.f32 %v3685, %v3619
      %v3699 = vmul.f32 %v3685, %v3620
      %v3700 = vadd.f32 %v3671, %v3686
      %v3701 = vadd.f32 %v3672, %v3687
      %v3702 = vadd.f32 %v3673, %v3688
      %v3703 = vadd.f32 %v3674, %v3689
      %v3704 = vadd.f32 %v3675, %v3690
      %v3705 = vadd.f32 %v3676, %v3691
      %v3706 = vadd.f32 %v3677, %v3692
      %v3707 = vadd.f32 %v3678, %v3693
      %v3708 = vadd.f32 %v3679, %v3694
      %v3709 = vadd.f32 %v3680, %v3695
      %v3710 = vadd.f32 %v3681, %v3696
      %v3711 = vadd.f32 %v3682, %v3697
      %v3712 = vadd.f32 %v3683, %v3698
      %v3713 = vadd.f32 %v3684, %v3699
      %v3714 = vstv %s3655
      %v3715 = vmul.f32 %v3714, %v3621
      %v3716 = vmul.f32 %v3714, %v3622
      %v3717 = vmul.f32 %v3714, %v3623
      %v3718 = vmul.f32 %v3714, %v3624
      %v3719 = vmul.f32 %v3714, %v3625
      %v3720 = vmul.f32 %v3714, %v3626
      %v3721 = vmul.f32 %v3714, %v3627
      %v3722 = vmul.f32 %v3714, %v3628
      %v3723 = vmul.f32 %v3714, %v3629
      %v3724 = vmul.f32 %v3714, %v3630
      %v3725 = vmul.f32 %v3714, %v3631
      %v3726 = vmul.f32 %v3714, %v3632
      %v3727 = vmul.f32 %v3714, %v3633
      %v3728 = vmul.f32 %v3714, %v3634
      %v3729 = vadd.f32 %v3700, %v3715
      %v3730 = vadd.f32 %v3701, %v3716
      %v3731 = vadd.f32 %v3702, %v3717
      %v3732 = vadd.f32 %v3703, %v3718
      %v3733 = vadd.f32 %v3704, %v3719
      %v3734 = vadd.f32 %v3705, %v3720
      %v3735 = vadd.f32 %v3706, %v3721
      %v3736 = vadd.f32 %v3707, %v3722
      %v3737 = vadd.f32 %v3708, %v3723
      %v3738 = vadd.f32 %v3709, %v3724
      %v3739 = vadd.f32 %v3710, %v3725
      %v3740 = vadd.f32 %v3711, %v3726
      %v3741 = vadd.f32 %v3712, %v3727
      %v3742 = vadd.f32 %v3713, %v3728
      %v3743 = vmul.f32 %v3656, %v3607
      %v3744 = vmul.f32 %v3656, %v3608
      %v3745 = vmul.f32 %v3656, %v3609
      %v3746 = vmul.f32 %v3656, %v3610
      %v3747 = vmul.f32 %v3656, %v3611
      %v3748 = vmul.f32 %v3656, %v3612
      %v3749 = vmul.f32 %v3656, %v3613
      %v3750 = vmul.f32 %v3656, %v3614
      %v3751 = vmul.f32 %v3656, %v3615
      %v3752 = vmul.f32 %v3656, %v3616
      %v3753 = vmul.f32 %v3656, %v3617
      %v3754 = vmul.f32 %v3656, %v3618
      %v3755 = vmul.f32 %v3656, %v3619
      %v3756 = vmul.f32 %v3656, %v3620
      %v3757 = vadd.f32 %v3577, %v3743
      %v3758 = vadd.f32 %v3578, %v3744
      %v3759 = vadd.f32 %v3579, %v3745
      %v3760 = vadd.f32 %v3580, %v3746
      %v3761 = vadd.f32 %v3581, %v3747
      %v3762 = vadd.f32 %v3582, %v3748
      %v3763 = vadd.f32 %v3583, %v3749
      %v3764 = vadd.f32 %v3584, %v3750
      %v3765 = vadd.f32 %v3585, %v3751
      %v3766 = vadd.f32 %v3586, %v3752
      %v3767 = vadd.f32 %v3587, %v3753
      %v3768 = vadd.f32 %v3588, %v3754
      %v3769 = vadd.f32 %v3589, %v3755
      %v3770 = vadd.f32 %v3590, %v3756
      %v3771 = vmul.f32 %v3685, %v3621
      %v3772 = vmul.f32 %v3685, %v3622
      %v3773 = vmul.f32 %v3685, %v3623
      %v3774 = vmul.f32 %v3685, %v3624
      %v3775 = vmul.f32 %v3685, %v3625
      %v3776 = vmul.f32 %v3685, %v3626
      %v3777 = vmul.f32 %v3685, %v3627
      %v3778 = vmul.f32 %v3685, %v3628
      %v3779 = vmul.f32 %v3685, %v3629
      %v3780 = vmul.f32 %v3685, %v3630
      %v3781 = vmul.f32 %v3685, %v3631
      %v3782 = vmul.f32 %v3685, %v3632
      %v3783 = vmul.f32 %v3685, %v3633
      %v3784 = vmul.f32 %v3685, %v3634
      %v3785 = vadd.f32 %v3757, %v3771
      %v3786 = vadd.f32 %v3758, %v3772
      %v3787 = vadd.f32 %v3759, %v3773
      %v3788 = vadd.f32 %v3760, %v3774
      %v3789 = vadd.f32 %v3761, %v3775
      %v3790 = vadd.f32 %v3762, %v3776
      %v3791 = vadd.f32 %v3763, %v3777
      %v3792 = vadd.f32 %v3764, %v3778
      %v3793 = vadd.f32 %v3765, %v3779
      %v3794 = vadd.f32 %v3766, %v3780
      %v3795 = vadd.f32 %v3767, %v3781
      %v3796 = vadd.f32 %v3768, %v3782
      %v3797 = vadd.f32 %v3769, %v3783
      %v3798 = vadd.f32 %v3770, %v3784
      %v3799 = vmul.f32 %v3714, %v3635
      %v3800 = vmul.f32 %v3714, %v3636
      %v3801 = vmul.f32 %v3714, %v3637
      %v3802 = vmul.f32 %v3714, %v3638
      %v3803 = vmul.f32 %v3714, %v3639
      %v3804 = vmul.f32 %v3714, %v3640
      %v3805 = vmul.f32 %v3714, %v3641
      %v3806 = vmul.f32 %v3714, %v3642
      %v3807 = vmul.f32 %v3714, %v3643
      %v3808 = vmul.f32 %v3714, %v3644
      %v3809 = vmul.f32 %v3714, %v3645
      %v3810 = vmul.f32 %v3714, %v3646
      %v3811 = vmul.f32 %v3714, %v3647
      %v3812 = vmul.f32 %v3714, %v3648
      %v3813 = vadd.f32 %v3785, %v3799
      %v3814 = vadd.f32 %v3786, %v3800
      %v3815 = vadd.f32 %v3787, %v3801
      %v3816 = vadd.f32 %v3788, %v3802
      %v3817 = vadd.f32 %v3789, %v3803
      %v3818 = vadd.f32 %v3790, %v3804
      %v3819 = vadd.f32 %v3791, %v3805
      %v3820 = vadd.f32 %v3792, %v3806
      %v3821 = vadd.f32 %v3793, %v3807
      %v3822 = vadd.f32 %v3794, %v3808
      %v3823 = vadd.f32 %v3795, %v3809
      %v3824 = vadd.f32 %v3796, %v3810
      %v3825 = vadd.f32 %v3797, %v3811
      %v3826 = vadd.f32 %v3798, %v3812
      %s3827 = scalar_lea.vmem %s2, 648
      %v3828 = vld [vmem:[%s3827] sm:$0x7f]
      %v3829 = vld [vmem:[%s3827 + $0x8] sm:$0x7f]
      %v3830 = vld [vmem:[%s3827 + $0x10] sm:$0x7f]
      %v3831 = vld [vmem:[%s3827 + $0x18] sm:$0x7f]
      %v3832 = vld [vmem:[%s3827 + $0x20] sm:$0x7f]
      %v3833 = vld [vmem:[%s3827 + $0x28] sm:$0x7f]
      %v3834 = vld [vmem:[%s3827 + $0x30] sm:$0x7f]
      %v3835 = vld [vmem:[%s3827 + $0x38] sm:$0x7f]
      %v3836 = vld [vmem:[%s3827 + $0x40] sm:$0x7f]
      %v3837 = vld [vmem:[%s3827 + $0x48] sm:$0x7f]
      %v3838 = vld [vmem:[%s3827 + $0x50] sm:$0x7f]
      %v3839 = vld [vmem:[%s3827 + $0x58] sm:$0x7f]
      %v3840 = vld [vmem:[%s3827 + $0x60] sm:$0x7f]
      %v3841 = vld [vmem:[%s3827 + $0x68] sm:$0x7f]
      %s3842 = scalar_lea.vmem %s3, 648
      %v3843 = vld [vmem:[%s3842] sm:$0x7f]
      %v3844 = vld [vmem:[%s3842 + $0x8] sm:$0x7f]
      %v3845 = vld [vmem:[%s3842 + $0x10] sm:$0x7f]
      %v3846 = vld [vmem:[%s3842 + $0x18] sm:$0x7f]
      %v3847 = vld [vmem:[%s3842 + $0x20] sm:$0x7f]
      %v3848 = vld [vmem:[%s3842 + $0x28] sm:$0x7f]
      %v3849 = vld [vmem:[%s3842 + $0x30] sm:$0x7f]
      %v3850 = vld [vmem:[%s3842 + $0x38] sm:$0x7f]
      %v3851 = vld [vmem:[%s3842 + $0x40] sm:$0x7f]
      %v3852 = vld [vmem:[%s3842 + $0x48] sm:$0x7f]
      %v3853 = vld [vmem:[%s3842 + $0x50] sm:$0x7f]
      %v3854 = vld [vmem:[%s3842 + $0x58] sm:$0x7f]
      %v3855 = vld [vmem:[%s3842 + $0x60] sm:$0x7f]
      %v3856 = vld [vmem:[%s3842 + $0x68] sm:$0x7f]
      %v3857 = vld [vmem:[%s3827 + $0x1] sm:$0x7f]
      %v3858 = vld [vmem:[%s3827 + $0x9] sm:$0x7f]
      %v3859 = vld [vmem:[%s3827 + $0x11] sm:$0x7f]
      %v3860 = vld [vmem:[%s3827 + $0x19] sm:$0x7f]
      %v3861 = vld [vmem:[%s3827 + $0x21] sm:$0x7f]
      %v3862 = vld [vmem:[%s3827 + $0x29] sm:$0x7f]
      %v3863 = vld [vmem:[%s3827 + $0x31] sm:$0x7f]
      %v3864 = vld [vmem:[%s3827 + $0x39] sm:$0x7f]
      %v3865 = vld [vmem:[%s3827 + $0x41] sm:$0x7f]
      %v3866 = vld [vmem:[%s3827 + $0x49] sm:$0x7f]
      %v3867 = vld [vmem:[%s3827 + $0x51] sm:$0x7f]
      %v3868 = vld [vmem:[%s3827 + $0x59] sm:$0x7f]
      %v3869 = vld [vmem:[%s3827 + $0x61] sm:$0x7f]
      %v3870 = vld [vmem:[%s3827 + $0x69] sm:$0x7f]
      %v3871 = vld [vmem:[%s3842 + $0x1] sm:$0x7f]
      %v3872 = vld [vmem:[%s3842 + $0x9] sm:$0x7f]
      %v3873 = vld [vmem:[%s3842 + $0x11] sm:$0x7f]
      %v3874 = vld [vmem:[%s3842 + $0x19] sm:$0x7f]
      %v3875 = vld [vmem:[%s3842 + $0x21] sm:$0x7f]
      %v3876 = vld [vmem:[%s3842 + $0x29] sm:$0x7f]
      %v3877 = vld [vmem:[%s3842 + $0x31] sm:$0x7f]
      %v3878 = vld [vmem:[%s3842 + $0x39] sm:$0x7f]
      %v3879 = vld [vmem:[%s3842 + $0x41] sm:$0x7f]
      %v3880 = vld [vmem:[%s3842 + $0x49] sm:$0x7f]
      %v3881 = vld [vmem:[%s3842 + $0x51] sm:$0x7f]
      %v3882 = vld [vmem:[%s3842 + $0x59] sm:$0x7f]
      %v3883 = vld [vmem:[%s3842 + $0x61] sm:$0x7f]
      %v3884 = vld [vmem:[%s3842 + $0x69] sm:$0x7f]
      %s3885 = smul.u32 %s3649, 3
      %s3886 = sadd.s32 %s3885, 1
      %s3887 = smul.u32 %s3886, 3
      %s3888 = sld [smem:[#allocation2 + %s3887]]
      %s3889 = sadd.s32 %s3887, 1
      %s3890 = sld [smem:[#allocation2 + %s3889]]
      %s3891 = sadd.s32 %s3887, 2
      %s3892 = sld [smem:[#allocation2 + %s3891]]
      %v3893 = vstv %s3888
      %v3894 = vmul.f32 %v3893, %v3828
      %v3895 = vmul.f32 %v3893, %v3829
      %v3896 = vmul.f32 %v3893, %v3830
      %v3897 = vmul.f32 %v3893, %v3831
      %v3898 = vmul.f32 %v3893, %v3832
      %v3899 = vmul.f32 %v3893, %v3833
      %v3900 = vmul.f32 %v3893, %v3834
      %v3901 = vmul.f32 %v3893, %v3835
      %v3902 = vmul.f32 %v3893, %v3836
      %v3903 = vmul.f32 %v3893, %v3837
      %v3904 = vmul.f32 %v3893, %v3838
      %v3905 = vmul.f32 %v3893, %v3839
      %v3906 = vmul.f32 %v3893, %v3840
      %v3907 = vmul.f32 %v3893, %v3841
      %v3908 = vadd.f32 %v3729, %v3894
      %v3909 = vadd.f32 %v3730, %v3895
      %v3910 = vadd.f32 %v3731, %v3896
      %v3911 = vadd.f32 %v3732, %v3897
      %v3912 = vadd.f32 %v3733, %v3898
      %v3913 = vadd.f32 %v3734, %v3899
      %v3914 = vadd.f32 %v3735, %v3900
      %v3915 = vadd.f32 %v3736, %v3901
      %v3916 = vadd.f32 %v3737, %v3902
      %v3917 = vadd.f32 %v3738, %v3903
      %v3918 = vadd.f32 %v3739, %v3904
      %v3919 = vadd.f32 %v3740, %v3905
      %v3920 = vadd.f32 %v3741, %v3906
      %v3921 = vadd.f32 %v3742, %v3907
      %v3922 = vstv %s3890
      %v3923 = vmul.f32 %v3922, %v3843
      %v3924 = vmul.f32 %v3922, %v3844
      %v3925 = vmul.f32 %v3922, %v3845
      %v3926 = vmul.f32 %v3922, %v3846
      %v3927 = vmul.f32 %v3922, %v3847
      %v3928 = vmul.f32 %v3922, %v3848
      %v3929 = vmul.f32 %v3922, %v3849
      %v3930 = vmul.f32 %v3922, %v3850
      %v3931 = vmul.f32 %v3922, %v3851
      %v3932 = vmul.f32 %v3922, %v3852
      %v3933 = vmul.f32 %v3922, %v3853
      %v3934 = vmul.f32 %v3922, %v3854
      %v3935 = vmul.f32 %v3922, %v3855
      %v3936 = vmul.f32 %v3922, %v3856
      %v3937 = vadd.f32 %v3908, %v3923
      %v3938 = vadd.f32 %v3909, %v3924
      %v3939 = vadd.f32 %v3910, %v3925
      %v3940 = vadd.f32 %v3911, %v3926
      %v3941 = vadd.f32 %v3912, %v3927
      %v3942 = vadd.f32 %v3913, %v3928
      %v3943 = vadd.f32 %v3914, %v3929
      %v3944 = vadd.f32 %v3915, %v3930
      %v3945 = vadd.f32 %v3916, %v3931
      %v3946 = vadd.f32 %v3917, %v3932
      %v3947 = vadd.f32 %v3918, %v3933
      %v3948 = vadd.f32 %v3919, %v3934
      %v3949 = vadd.f32 %v3920, %v3935
      %v3950 = vadd.f32 %v3921, %v3936
      %v3951 = vstv %s3892
      %v3952 = vmul.f32 %v3951, %v3857
      %v3953 = vmul.f32 %v3951, %v3858
      %v3954 = vmul.f32 %v3951, %v3859
      %v3955 = vmul.f32 %v3951, %v3860
      %v3956 = vmul.f32 %v3951, %v3861
      %v3957 = vmul.f32 %v3951, %v3862
      %v3958 = vmul.f32 %v3951, %v3863
      %v3959 = vmul.f32 %v3951, %v3864
      %v3960 = vmul.f32 %v3951, %v3865
      %v3961 = vmul.f32 %v3951, %v3866
      %v3962 = vmul.f32 %v3951, %v3867
      %v3963 = vmul.f32 %v3951, %v3868
      %v3964 = vmul.f32 %v3951, %v3869
      %v3965 = vmul.f32 %v3951, %v3870
      %v3966 = vadd.f32 %v3937, %v3952
      %v3967 = vadd.f32 %v3938, %v3953
      %v3968 = vadd.f32 %v3939, %v3954
      %v3969 = vadd.f32 %v3940, %v3955
      %v3970 = vadd.f32 %v3941, %v3956
      %v3971 = vadd.f32 %v3942, %v3957
      %v3972 = vadd.f32 %v3943, %v3958
      %v3973 = vadd.f32 %v3944, %v3959
      %v3974 = vadd.f32 %v3945, %v3960
      %v3975 = vadd.f32 %v3946, %v3961
      %v3976 = vadd.f32 %v3947, %v3962
      %v3977 = vadd.f32 %v3948, %v3963
      %v3978 = vadd.f32 %v3949, %v3964
      %v3979 = vadd.f32 %v3950, %v3965
      %v3980 = vmul.f32 %v3893, %v3843
      %v3981 = vmul.f32 %v3893, %v3844
      %v3982 = vmul.f32 %v3893, %v3845
      %v3983 = vmul.f32 %v3893, %v3846
      %v3984 = vmul.f32 %v3893, %v3847
      %v3985 = vmul.f32 %v3893, %v3848
      %v3986 = vmul.f32 %v3893, %v3849
      %v3987 = vmul.f32 %v3893, %v3850
      %v3988 = vmul.f32 %v3893, %v3851
      %v3989 = vmul.f32 %v3893, %v3852
      %v3990 = vmul.f32 %v3893, %v3853
      %v3991 = vmul.f32 %v3893, %v3854
      %v3992 = vmul.f32 %v3893, %v3855
      %v3993 = vmul.f32 %v3893, %v3856
      %v3994 = vadd.f32 %v3813, %v3980
      %v3995 = vadd.f32 %v3814, %v3981
      %v3996 = vadd.f32 %v3815, %v3982
      %v3997 = vadd.f32 %v3816, %v3983
      %v3998 = vadd.f32 %v3817, %v3984
      %v3999 = vadd.f32 %v3818, %v3985
      %v4000 = vadd.f32 %v3819, %v3986
      %v4001 = vadd.f32 %v3820, %v3987
      %v4002 = vadd.f32 %v3821, %v3988
      %v4003 = vadd.f32 %v3822, %v3989
      %v4004 = vadd.f32 %v3823, %v3990
      %v4005 = vadd.f32 %v3824, %v3991
      %v4006 = vadd.f32 %v3825, %v3992
      %v4007 = vadd.f32 %v3826, %v3993
      %v4008 = vmul.f32 %v3922, %v3857
      %v4009 = vmul.f32 %v3922, %v3858
      %v4010 = vmul.f32 %v3922, %v3859
      %v4011 = vmul.f32 %v3922, %v3860
      %v4012 = vmul.f32 %v3922, %v3861
      %v4013 = vmul.f32 %v3922, %v3862
      %v4014 = vmul.f32 %v3922, %v3863
      %v4015 = vmul.f32 %v3922, %v3864
      %v4016 = vmul.f32 %v3922, %v3865
      %v4017 = vmul.f32 %v3922, %v3866
      %v4018 = vmul.f32 %v3922, %v3867
      %v4019 = vmul.f32 %v3922, %v3868
      %v4020 = vmul.f32 %v3922, %v3869
      %v4021 = vmul.f32 %v3922, %v3870
      %v4022 = vadd.f32 %v3994, %v4008
      %v4023 = vadd.f32 %v3995, %v4009
      %v4024 = vadd.f32 %v3996, %v4010
      %v4025 = vadd.f32 %v3997, %v4011
      %v4026 = vadd.f32 %v3998, %v4012
      %v4027 = vadd.f32 %v3999, %v4013
      %v4028 = vadd.f32 %v4000, %v4014
      %v4029 = vadd.f32 %v4001, %v4015
      %v4030 = vadd.f32 %v4002, %v4016
      %v4031 = vadd.f32 %v4003, %v4017
      %v4032 = vadd.f32 %v4004, %v4018
      %v4033 = vadd.f32 %v4005, %v4019
      %v4034 = vadd.f32 %v4006, %v4020
      %v4035 = vadd.f32 %v4007, %v4021
      %v4036 = vmul.f32 %v3951, %v3871
      %v4037 = vmul.f32 %v3951, %v3872
      %v4038 = vmul.f32 %v3951, %v3873
      %v4039 = vmul.f32 %v3951, %v3874
      %v4040 = vmul.f32 %v3951, %v3875
      %v4041 = vmul.f32 %v3951, %v3876
      %v4042 = vmul.f32 %v3951, %v3877
      %v4043 = vmul.f32 %v3951, %v3878
      %v4044 = vmul.f32 %v3951, %v3879
      %v4045 = vmul.f32 %v3951, %v3880
      %v4046 = vmul.f32 %v3951, %v3881
      %v4047 = vmul.f32 %v3951, %v3882
      %v4048 = vmul.f32 %v3951, %v3883
      %v4049 = vmul.f32 %v3951, %v3884
      %v4050 = vadd.f32 %v4022, %v4036
      %v4051 = vadd.f32 %v4023, %v4037
      %v4052 = vadd.f32 %v4024, %v4038
      %v4053 = vadd.f32 %v4025, %v4039
      %v4054 = vadd.f32 %v4026, %v4040
      %v4055 = vadd.f32 %v4027, %v4041
      %v4056 = vadd.f32 %v4028, %v4042
      %v4057 = vadd.f32 %v4029, %v4043
      %v4058 = vadd.f32 %v4030, %v4044
      %v4059 = vadd.f32 %v4031, %v4045
      %v4060 = vadd.f32 %v4032, %v4046
      %v4061 = vadd.f32 %v4033, %v4047
      %v4062 = vadd.f32 %v4034, %v4048
      %v4063 = vadd.f32 %v4035, %v4049
      %s4064 = scalar_lea.vmem %s2, 656
      %v4065 = vld [vmem:[%s4064] sm:$0x7f]
      %v4066 = vld [vmem:[%s4064 + $0x8] sm:$0x7f]
      %v4067 = vld [vmem:[%s4064 + $0x10] sm:$0x7f]
      %v4068 = vld [vmem:[%s4064 + $0x18] sm:$0x7f]
      %v4069 = vld [vmem:[%s4064 + $0x20] sm:$0x7f]
      %v4070 = vld [vmem:[%s4064 + $0x28] sm:$0x7f]
      %v4071 = vld [vmem:[%s4064 + $0x30] sm:$0x7f]
      %v4072 = vld [vmem:[%s4064 + $0x38] sm:$0x7f]
      %v4073 = vld [vmem:[%s4064 + $0x40] sm:$0x7f]
      %v4074 = vld [vmem:[%s4064 + $0x48] sm:$0x7f]
      %v4075 = vld [vmem:[%s4064 + $0x50] sm:$0x7f]
      %v4076 = vld [vmem:[%s4064 + $0x58] sm:$0x7f]
      %v4077 = vld [vmem:[%s4064 + $0x60] sm:$0x7f]
      %v4078 = vld [vmem:[%s4064 + $0x68] sm:$0x7f]
      %s4079 = scalar_lea.vmem %s3, 656
      %v4080 = vld [vmem:[%s4079] sm:$0x7f]
      %v4081 = vld [vmem:[%s4079 + $0x8] sm:$0x7f]
      %v4082 = vld [vmem:[%s4079 + $0x10] sm:$0x7f]
      %v4083 = vld [vmem:[%s4079 + $0x18] sm:$0x7f]
      %v4084 = vld [vmem:[%s4079 + $0x20] sm:$0x7f]
      %v4085 = vld [vmem:[%s4079 + $0x28] sm:$0x7f]
      %v4086 = vld [vmem:[%s4079 + $0x30] sm:$0x7f]
      %v4087 = vld [vmem:[%s4079 + $0x38] sm:$0x7f]
      %v4088 = vld [vmem:[%s4079 + $0x40] sm:$0x7f]
      %v4089 = vld [vmem:[%s4079 + $0x48] sm:$0x7f]
      %v4090 = vld [vmem:[%s4079 + $0x50] sm:$0x7f]
      %v4091 = vld [vmem:[%s4079 + $0x58] sm:$0x7f]
      %v4092 = vld [vmem:[%s4079 + $0x60] sm:$0x7f]
      %v4093 = vld [vmem:[%s4079 + $0x68] sm:$0x7f]
      %v4094 = vld [vmem:[%s4064 + $0x1] sm:$0x7f]
      %v4095 = vld [vmem:[%s4064 + $0x9] sm:$0x7f]
      %v4096 = vld [vmem:[%s4064 + $0x11] sm:$0x7f]
      %v4097 = vld [vmem:[%s4064 + $0x19] sm:$0x7f]
      %v4098 = vld [vmem:[%s4064 + $0x21] sm:$0x7f]
      %v4099 = vld [vmem:[%s4064 + $0x29] sm:$0x7f]
      %v4100 = vld [vmem:[%s4064 + $0x31] sm:$0x7f]
      %v4101 = vld [vmem:[%s4064 + $0x39] sm:$0x7f]
      %v4102 = vld [vmem:[%s4064 + $0x41] sm:$0x7f]
      %v4103 = vld [vmem:[%s4064 + $0x49] sm:$0x7f]
      %v4104 = vld [vmem:[%s4064 + $0x51] sm:$0x7f]
      %v4105 = vld [vmem:[%s4064 + $0x59] sm:$0x7f]
      %v4106 = vld [vmem:[%s4064 + $0x61] sm:$0x7f]
      %v4107 = vld [vmem:[%s4064 + $0x69] sm:$0x7f]
      %v4108 = vld [vmem:[%s4079 + $0x1] sm:$0x7f]
      %v4109 = vld [vmem:[%s4079 + $0x9] sm:$0x7f]
      %v4110 = vld [vmem:[%s4079 + $0x11] sm:$0x7f]
      %v4111 = vld [vmem:[%s4079 + $0x19] sm:$0x7f]
      %v4112 = vld [vmem:[%s4079 + $0x21] sm:$0x7f]
      %v4113 = vld [vmem:[%s4079 + $0x29] sm:$0x7f]
      %v4114 = vld [vmem:[%s4079 + $0x31] sm:$0x7f]
      %v4115 = vld [vmem:[%s4079 + $0x39] sm:$0x7f]
      %v4116 = vld [vmem:[%s4079 + $0x41] sm:$0x7f]
      %v4117 = vld [vmem:[%s4079 + $0x49] sm:$0x7f]
      %v4118 = vld [vmem:[%s4079 + $0x51] sm:$0x7f]
      %v4119 = vld [vmem:[%s4079 + $0x59] sm:$0x7f]
      %v4120 = vld [vmem:[%s4079 + $0x61] sm:$0x7f]
      %v4121 = vld [vmem:[%s4079 + $0x69] sm:$0x7f]
      %s4122 = sadd.s32 %s3885, 2
      %s4123 = smul.u32 %s4122, 3
      %s4124 = sld [smem:[#allocation2 + %s4123]]
      %s4125 = sadd.s32 %s4123, 1
      %s4126 = sld [smem:[#allocation2 + %s4125]]
      %s4127 = sadd.s32 %s4123, 2
      %s4128 = sld [smem:[#allocation2 + %s4127]]
      %v4129 = vstv %s4124
      %v4130 = vmul.f32 %v4129, %v4065
      %v4131 = vmul.f32 %v4129, %v4066
      %v4132 = vmul.f32 %v4129, %v4067
      %v4133 = vmul.f32 %v4129, %v4068
      %v4134 = vmul.f32 %v4129, %v4069
      %v4135 = vmul.f32 %v4129, %v4070
      %v4136 = vmul.f32 %v4129, %v4071
      %v4137 = vmul.f32 %v4129, %v4072
      %v4138 = vmul.f32 %v4129, %v4073
      %v4139 = vmul.f32 %v4129, %v4074
      %v4140 = vmul.f32 %v4129, %v4075
      %v4141 = vmul.f32 %v4129, %v4076
      %v4142 = vmul.f32 %v4129, %v4077
      %v4143 = vmul.f32 %v4129, %v4078
      %v4144 = vadd.f32 %v3966, %v4130
      %v4145 = vadd.f32 %v3967, %v4131
      %v4146 = vadd.f32 %v3968, %v4132
      %v4147 = vadd.f32 %v3969, %v4133
      %v4148 = vadd.f32 %v3970, %v4134
      %v4149 = vadd.f32 %v3971, %v4135
      %v4150 = vadd.f32 %v3972, %v4136
      %v4151 = vadd.f32 %v3973, %v4137
      %v4152 = vadd.f32 %v3974, %v4138
      %v4153 = vadd.f32 %v3975, %v4139
      %v4154 = vadd.f32 %v3976, %v4140
      %v4155 = vadd.f32 %v3977, %v4141
      %v4156 = vadd.f32 %v3978, %v4142
      %v4157 = vadd.f32 %v3979, %v4143
      %v4158 = vstv %s4126
      %v4159 = vmul.f32 %v4158, %v4080
      %v4160 = vmul.f32 %v4158, %v4081
      %v4161 = vmul.f32 %v4158, %v4082
      %v4162 = vmul.f32 %v4158, %v4083
      %v4163 = vmul.f32 %v4158, %v4084
      %v4164 = vmul.f32 %v4158, %v4085
      %v4165 = vmul.f32 %v4158, %v4086
      %v4166 = vmul.f32 %v4158, %v4087
      %v4167 = vmul.f32 %v4158, %v4088
      %v4168 = vmul.f32 %v4158, %v4089
      %v4169 = vmul.f32 %v4158, %v4090
      %v4170 = vmul.f32 %v4158, %v4091
      %v4171 = vmul.f32 %v4158, %v4092
      %v4172 = vmul.f32 %v4158, %v4093
      %v4173 = vadd.f32 %v4144, %v4159
      %v4174 = vadd.f32 %v4145, %v4160
      %v4175 = vadd.f32 %v4146, %v4161
      %v4176 = vadd.f32 %v4147, %v4162
      %v4177 = vadd.f32 %v4148, %v4163
      %v4178 = vadd.f32 %v4149, %v4164
      %v4179 = vadd.f32 %v4150, %v4165
      %v4180 = vadd.f32 %v4151, %v4166
      %v4181 = vadd.f32 %v4152, %v4167
      %v4182 = vadd.f32 %v4153, %v4168
      %v4183 = vadd.f32 %v4154, %v4169
      %v4184 = vadd.f32 %v4155, %v4170
      %v4185 = vadd.f32 %v4156, %v4171
      %v4186 = vadd.f32 %v4157, %v4172
      %v4187 = vstv %s4128
      %v4188 = vmul.f32 %v4187, %v4094
      %v4189 = vmul.f32 %v4187, %v4095
      %v4190 = vmul.f32 %v4187, %v4096
      %v4191 = vmul.f32 %v4187, %v4097
      %v4192 = vmul.f32 %v4187, %v4098
      %v4193 = vmul.f32 %v4187, %v4099
      %v4194 = vmul.f32 %v4187, %v4100
      %v4195 = vmul.f32 %v4187, %v4101
      %v4196 = vmul.f32 %v4187, %v4102
      %v4197 = vmul.f32 %v4187, %v4103
      %v4198 = vmul.f32 %v4187, %v4104
      %v4199 = vmul.f32 %v4187, %v4105
      %v4200 = vmul.f32 %v4187, %v4106
      %v4201 = vmul.f32 %v4187, %v4107
      %v4202 = vadd.f32 %v4173, %v4188
      %v4203 = vadd.f32 %v4174, %v4189
      %v4204 = vadd.f32 %v4175, %v4190
      %v4205 = vadd.f32 %v4176, %v4191
      %v4206 = vadd.f32 %v4177, %v4192
      %v4207 = vadd.f32 %v4178, %v4193
      %v4208 = vadd.f32 %v4179, %v4194
      %v4209 = vadd.f32 %v4180, %v4195
      %v4210 = vadd.f32 %v4181, %v4196
      %v4211 = vadd.f32 %v4182, %v4197
      %v4212 = vadd.f32 %v4183, %v4198
      %v4213 = vadd.f32 %v4184, %v4199
      %v4214 = vadd.f32 %v4185, %v4200
      %v4215 = vadd.f32 %v4186, %v4201
      %v4216 = vmul.f32 %v4129, %v4080
      %v4217 = vmul.f32 %v4129, %v4081
      %v4218 = vmul.f32 %v4129, %v4082
      %v4219 = vmul.f32 %v4129, %v4083
      %v4220 = vmul.f32 %v4129, %v4084
      %v4221 = vmul.f32 %v4129, %v4085
      %v4222 = vmul.f32 %v4129, %v4086
      %v4223 = vmul.f32 %v4129, %v4087
      %v4224 = vmul.f32 %v4129, %v4088
      %v4225 = vmul.f32 %v4129, %v4089
      %v4226 = vmul.f32 %v4129, %v4090
      %v4227 = vmul.f32 %v4129, %v4091
      %v4228 = vmul.f32 %v4129, %v4092
      %v4229 = vmul.f32 %v4129, %v4093
      %v4230 = vadd.f32 %v4050, %v4216
      %v4231 = vadd.f32 %v4051, %v4217
      %v4232 = vadd.f32 %v4052, %v4218
      %v4233 = vadd.f32 %v4053, %v4219
      %v4234 = vadd.f32 %v4054, %v4220
      %v4235 = vadd.f32 %v4055, %v4221
      %v4236 = vadd.f32 %v4056, %v4222
      %v4237 = vadd.f32 %v4057, %v4223
      %v4238 = vadd.f32 %v4058, %v4224
      %v4239 = vadd.f32 %v4059, %v4225
      %v4240 = vadd.f32 %v4060, %v4226
      %v4241 = vadd.f32 %v4061, %v4227
      %v4242 = vadd.f32 %v4062, %v4228
      %v4243 = vadd.f32 %v4063, %v4229
      %v4244 = vmul.f32 %v4158, %v4094
      %v4245 = vmul.f32 %v4158, %v4095
      %v4246 = vmul.f32 %v4158, %v4096
      %v4247 = vmul.f32 %v4158, %v4097
      %v4248 = vmul.f32 %v4158, %v4098
      %v4249 = vmul.f32 %v4158, %v4099
      %v4250 = vmul.f32 %v4158, %v4100
      %v4251 = vmul.f32 %v4158, %v4101
      %v4252 = vmul.f32 %v4158, %v4102
      %v4253 = vmul.f32 %v4158, %v4103
      %v4254 = vmul.f32 %v4158, %v4104
      %v4255 = vmul.f32 %v4158, %v4105
      %v4256 = vmul.f32 %v4158, %v4106
      %v4257 = vmul.f32 %v4158, %v4107
      %v4258 = vadd.f32 %v4230, %v4244
      %v4259 = vadd.f32 %v4231, %v4245
      %v4260 = vadd.f32 %v4232, %v4246
      %v4261 = vadd.f32 %v4233, %v4247
      %v4262 = vadd.f32 %v4234, %v4248
      %v4263 = vadd.f32 %v4235, %v4249
      %v4264 = vadd.f32 %v4236, %v4250
      %v4265 = vadd.f32 %v4237, %v4251
      %v4266 = vadd.f32 %v4238, %v4252
      %v4267 = vadd.f32 %v4239, %v4253
      %v4268 = vadd.f32 %v4240, %v4254
      %v4269 = vadd.f32 %v4241, %v4255
      %v4270 = vadd.f32 %v4242, %v4256
      %v4271 = vadd.f32 %v4243, %v4257
      %v4272 = vmul.f32 %v4187, %v4108
      %v4273 = vmul.f32 %v4187, %v4109
      %v4274 = vmul.f32 %v4187, %v4110
      %v4275 = vmul.f32 %v4187, %v4111
      %v4276 = vmul.f32 %v4187, %v4112
      %v4277 = vmul.f32 %v4187, %v4113
      %v4278 = vmul.f32 %v4187, %v4114
      %v4279 = vmul.f32 %v4187, %v4115
      %v4280 = vmul.f32 %v4187, %v4116
      %v4281 = vmul.f32 %v4187, %v4117
      %v4282 = vmul.f32 %v4187, %v4118
      %v4283 = vmul.f32 %v4187, %v4119
      %v4284 = vmul.f32 %v4187, %v4120
      %v4285 = vmul.f32 %v4187, %v4121
      %v4286 = vadd.f32 %v4258, %v4272
      %v4287 = vadd.f32 %v4259, %v4273
      %v4288 = vadd.f32 %v4260, %v4274
      %v4289 = vadd.f32 %v4261, %v4275
      %v4290 = vadd.f32 %v4262, %v4276
      %v4291 = vadd.f32 %v4263, %v4277
      %v4292 = vadd.f32 %v4264, %v4278
      %v4293 = vadd.f32 %v4265, %v4279
      %v4294 = vadd.f32 %v4266, %v4280
      %v4295 = vadd.f32 %v4267, %v4281
      %v4296 = vadd.f32 %v4268, %v4282
      %v4297 = vadd.f32 %v4269, %v4283
      %v4298 = vadd.f32 %v4270, %v4284
      %v4299 = vadd.f32 %v4271, %v4285
      %s4300 = sld [smem:[#allocation4 + %s43]]
      %v4301 = vstv %s4300
      %v4302 = vadd.f32 %v4202, %v4301
      %v4303 = vadd.f32 %v4203, %v4301
      %v4304 = vadd.f32 %v4204, %v4301
      %v4305 = vadd.f32 %v4205, %v4301
      %v4306 = vadd.f32 %v4206, %v4301
      %v4307 = vadd.f32 %v4207, %v4301
      %v4308 = vadd.f32 %v4208, %v4301
      %v4309 = vadd.f32 %v4209, %v4301
      %v4310 = vadd.f32 %v4210, %v4301
      %v4311 = vadd.f32 %v4211, %v4301
      %v4312 = vadd.f32 %v4212, %v4301
      %v4313 = vadd.f32 %v4213, %v4301
      %v4314 = vadd.f32 %v4214, %v4301
      %v4315 = vadd.f32 %v4215, %v4301
      %v4316 = vmax.f32 %v4302, 0.0
      %v4317 = vmax.f32 %v4303, 0.0
      %v4318 = vmax.f32 %v4304, 0.0
      %v4319 = vmax.f32 %v4305, 0.0
      %v4320 = vmax.f32 %v4306, 0.0
      %v4321 = vmax.f32 %v4307, 0.0
      %v4322 = vmax.f32 %v4308, 0.0
      %v4323 = vmax.f32 %v4309, 0.0
      %v4324 = vmax.f32 %v4310, 0.0
      %v4325 = vmax.f32 %v4311, 0.0
      %v4326 = vmax.f32 %v4312, 0.0
      %v4327 = vmax.f32 %v4313, 0.0
      %v4328 = vmax.f32 %v4314, 0.0
      %v4329 = vmax.f32 %v4315, 0.0
      %v4330 = vadd.f32 %v4286, %v4301
      %v4331 = vadd.f32 %v4287, %v4301
      %v4332 = vadd.f32 %v4288, %v4301
      %v4333 = vadd.f32 %v4289, %v4301
      %v4334 = vadd.f32 %v4290, %v4301
      %v4335 = vadd.f32 %v4291, %v4301
      %v4336 = vadd.f32 %v4292, %v4301
      %v4337 = vadd.f32 %v4293, %v4301
      %v4338 = vadd.f32 %v4294, %v4301
      %v4339 = vadd.f32 %v4295, %v4301
      %v4340 = vadd.f32 %v4296, %v4301
      %v4341 = vadd.f32 %v4297, %v4301
      %v4342 = vadd.f32 %v4298, %v4301
      %v4343 = vadd.f32 %v4299, %v4301
      %v4344 = vmax.f32 %v4330, 0.0
      %v4345 = vmax.f32 %v4331, 0.0
      %v4346 = vmax.f32 %v4332, 0.0
      %v4347 = vmax.f32 %v4333, 0.0
      %v4348 = vmax.f32 %v4334, 0.0
      %v4349 = vmax.f32 %v4335, 0.0
      %v4350 = vmax.f32 %v4336, 0.0
      %v4351 = vmax.f32 %v4337, 0.0
      %v4352 = vmax.f32 %v4338, 0.0
      %v4353 = vmax.f32 %v4339, 0.0
      %v4354 = vmax.f32 %v4340, 0.0
      %v4355 = vmax.f32 %v4341, 0.0
      %v4356 = vmax.f32 %v4342, 0.0
      %v4357 = vmax.f32 %v4343, 0.0
      %v4358 = vmax.f32 %v4316, %v4344
      %v4359 = vmax.f32 %v4317, %v4345
      %v4360 = vmax.f32 %v4318, %v4346
      %v4361 = vmax.f32 %v4319, %v4347
      %v4362 = vmax.f32 %v4320, %v4348
      %v4363 = vmax.f32 %v4321, %v4349
      %v4364 = vmax.f32 %v4322, %v4350
      %v4365 = vmax.f32 %v4323, %v4351
      %v4366 = vmax.f32 %v4324, %v4352
      %v4367 = vmax.f32 %v4325, %v4353
      %v4368 = vmax.f32 %v4326, %v4354
      %v4369 = vmax.f32 %v4327, %v4355
      %v4370 = vmax.f32 %v4328, %v4356
      %v4371 = vmax.f32 %v4329, %v4357
      %v4372 = vmax.f32 %v4358, %v4359
      %s4373 = smul.u32 %s43, 56
      %s4374 = scalar_lea.vmem %s4, %s4373
      %vm4375 = vcmask 63488
      %4376 = vst.msk [vmem:[%s4374] sm:$0x7f] %vm4375, %v4372
      %v4377 = vmax.f32 %v4360, %v4361
      %s4378 = sadd.s32 8, %s4373
      %s4379 = scalar_lea.vmem %s4, %s4378
      %4380 = vst.msk [vmem:[%s4379] sm:$0x7f] %vm4375, %v4377
      %v4381 = vmax.f32 %v4362, %v4363
      %s4382 = sadd.s32 16, %s4373
      %s4383 = scalar_lea.vmem %s4, %s4382
      %4384 = vst.msk [vmem:[%s4383] sm:$0x7f] %vm4375, %v4381
      %v4385 = vmax.f32 %v4364, %v4365
      %s4386 = sadd.s32 24, %s4373
      %s4387 = scalar_lea.vmem %s4, %s4386
      %4388 = vst.msk [vmem:[%s4387] sm:$0x7f] %vm4375, %v4385
      %v4389 = vmax.f32 %v4366, %v4367
      %s4390 = sadd.s32 32, %s4373
      %s4391 = scalar_lea.vmem %s4, %s4390
      %4392 = vst.msk [vmem:[%s4391] sm:$0x7f] %vm4375, %v4389
      %v4393 = vmax.f32 %v4368, %v4369
      %s4394 = sadd.s32 40, %s4373
      %s4395 = scalar_lea.vmem %s4, %s4394
      %4396 = vst.msk [vmem:[%s4395] sm:$0x7f] %vm4375, %v4393
      %v4397 = vmax.f32 %v4370, %v4371
      %s4398 = sadd.s32 48, %s4373
      %s4399 = scalar_lea.vmem %s4, %s4398
      %4400 = vst.msk [vmem:[%s4399] sm:$0x7f] %vm4375, %v4397
    $region30: #{mnist_cnn_forward.4} parent=1 // loop_footer
      %s47 = sadd.s32 1, %s43
    $region31: #{mnist_cnn_forward.4} parent=1 // loop_footer_branch
      %42 = sbr.rel target = $region27
    $region32: #{mnist_cnn_forward.4} parent=1 // loop_exit
      _
    // Predicated region
    $region33: #{mnist_cnn_forward.4} parent=1 // pred_check
      _
    $region34: #{mnist_cnn_forward.4} parent=1 // pred_check_branch
      %4402 = sbr.rel (0) target = $region36
    $region35: #{mnist_cnn_forward.4} parent=1 // pred_region
      _
    $region36: #{mnist_cnn_forward.4} parent=1 // pred_fallthru
      _
    // Predicated region
    $region37: #{mnist_cnn_forward.4} parent=1 // pred_check
      _
    $region38: #{mnist_cnn_forward.4} parent=1 // pred_check_branch
      %4404 = sbr.rel (0) target = $region40
    $region39: #{mnist_cnn_forward.4} parent=1 // pred_region
      _
    $region40: #{mnist_cnn_forward.4} parent=1 // pred_fallthru
      _
    %4405 = vsyncpa [#allocation3], 1
    %4406 = vsyncpa [#allocation5], 1

</llo_original>
